<compile_context>
chip_gen: v5e
topology: v5e:2x2
jax: 0.10.0
libtpu: 0.0.40
codegen_flags: <defaults>
</compile_context>

<pallas_src>
import functools
import math

import jax
import jax.numpy as jnp
from jax import lax
from jax.experimental import pallas as pl
from jax.experimental.pallas import tpu as pltpu

K_DIRS = 4  # row-major fwd, col-major fwd, row-major bwd, col-major bwd


# ------------------------------ small helpers ------------------------------

def _sigmoid(x):
    return 1.0 / (1.0 + jnp.exp(-x))


def _softplus(x):
    return jnp.maximum(x, 0.0) + jnp.log(1.0 + jnp.exp(-jnp.abs(x)))


def _row_tile(m):
    # biggest row tile <= 1024 that divides M (amortizes per-grid-step overhead)
    for t in (1024, 512, 256, 128, 64, 32, 16, 8):
        if m >= t and m % t == 0:
            return t
    return m


# ---------------- kernel: LayerNorm + in_proj (two lane-dense dots) ---------

def _ln_inproj_kernel(x_ref, g_ref, b_ref, wx_ref, wz_ref, x1_ref, z_ref):
    x = x_ref[...].astype(jnp.float32)
    mu = jnp.mean(x, axis=-1, keepdims=True)
    var = jnp.mean(jnp.square(x - mu), axis=-1, keepdims=True)
    xn = ((x - mu) * lax.rsqrt(var + 1e-5) * g_ref[...] + b_ref[...]
          ).astype(jnp.bfloat16)
    # two dots against pre-split weights -> no lane slice / relayout of the result
    x1_ref[...] = jnp.dot(xn, wx_ref[...], preferred_element_type=jnp.float32)
    z_ref[...] = jnp.dot(xn, wz_ref[...], preferred_element_type=jnp.float32)


def ln_inproj(x2d, gamma, beta, wx_bf16, wz_bf16):
    M, C = x2d.shape
    Dd = wx_bf16.shape[1]
    tm = _row_tile(M)
    assert M % tm == 0
    return pl.pallas_call(
        _ln_inproj_kernel,
        grid=(M // tm,),
        in_specs=[
            pl.BlockSpec((tm, C), lambda i: (i, 0)),
            pl.BlockSpec((1, C), lambda i: (0, 0)),
            pl.BlockSpec((1, C), lambda i: (0, 0)),
            pl.BlockSpec((C, Dd), lambda i: (0, 0)),
            pl.BlockSpec((C, Dd), lambda i: (0, 0)),
        ],
        out_specs=[
            pl.BlockSpec((tm, Dd), lambda i: (i, 0)),
            pl.BlockSpec((tm, Dd), lambda i: (i, 0)),
        ],
        out_shape=[
            jax.ShapeDtypeStruct((M, Dd), jnp.float32),
            jax.ShapeDtypeStruct((M, Dd), jnp.float32),
        ],
        compiler_params=pltpu.CompilerParams(dimension_semantics=("parallel",)),
    )(x2d, gamma.reshape(1, -1), beta.reshape(1, -1), wx_bf16, wz_bf16)


# ---------------- kernel: depthwise 3x3 conv + SiLU (in-kernel padding) -----

def _dwconv3x3_silu_kernel(x_ref, w_ref, b_ref, o_ref, pad_scr, *, H, W):
    D = o_ref.shape[-1]
    # zero-padded copy lives only in VMEM (no (B,H+2,W+2,D) HBM round-trip)
    pad_scr[...] = jnp.zeros_like(pad_scr)
    pad_scr[1:H + 1, 1:W + 1, :] = x_ref[0]
    acc = jnp.zeros((H, W, D), jnp.float32)
    for i in range(3):
        for j in range(3):
            # taps are ref slices (address arithmetic), not value slices
            acc = acc + pad_scr[i:i + H, j:j + W, :] * w_ref[3 * i + j:3 * i + j + 1, :]
    acc = acc + b_ref[...]
    o_ref[0] = (acc * _sigmoid(acc)).astype(o_ref.dtype)


def dwconv3x3_silu(x_nhwc, w33d, bias):
    B, H, W, D = x_nhwc.shape
    kernel = functools.partial(_dwconv3x3_silu_kernel, H=H, W=W)
    # TODO(synk): for large H, tile over (B, H-strips) with a 1-row halo.
    return pl.pallas_call(
        kernel,
        grid=(B,),
        in_specs=[
            pl.BlockSpec((1, H, W, D), lambda b: (b, 0, 0, 0)),
            pl.BlockSpec((9, D), lambda b: (0, 0)),
            pl.BlockSpec((1, D), lambda b: (0, 0)),
        ],
        out_specs=pl.BlockSpec((1, H, W, D), lambda b: (b, 0, 0, 0)),
        out_shape=jax.ShapeDtypeStruct((B, H, W, D), jnp.float32),
        scratch_shapes=[pltpu.VMEM((H + 2, W + 2, D), jnp.float32)],
        compiler_params=pltpu.CompilerParams(dimension_semantics=("parallel",)),
    )(x_nhwc, w33d.reshape(9, D), bias.reshape(1, D))


# -------- kernel: fused direction-proj + 2-chain selective scan -------------
# One grid step = (batch b, direction-group g, L-chunk c).  Group 0 = row-major
# ordering (fwd + bwd chains), group 1 = column-major ordering (fwd + bwd).
# dt/B/C are produced in-kernel from the chunk (no HBM round trip); only
# dA = exp(dt*A) is precomputed vectorized; B/C/dt*u are applied per 8-step
# block.  h is carried across chunks in VMEM scratch (reset at c==0).

def _scan_group_kernel(xf_ref, xb_ref, wdt_ref, wbc_ref, bias_ref, a_ref, d_ref,
                       yf_ref, yb_ref, dA_scr, dtx_scr, bc_scr, h_scr):
    Lc, Dd = xf_ref.shape[2], xf_ref.shape[3]
    N = a_ref.shape[2]
    nblk = Lc // 8

    @pl.when(pl.program_id(2) == 0)          # new (batch, group): restart chains
    def _init():
        h_scr[...] = jnp.zeros_like(h_scr)

    # -------- vectorized per-chunk precompute (chain 0 = fwd, 1 = bwd) -------
    for c, x_ref in ((0, xf_ref), (1, xb_ref)):
        x = x_ref[0, 0]                                           # (Lc, Dd) f32
        xb = x.astype(jnp.bfloat16)
        dt = _softplus(
            jnp.dot(xb, wdt_ref[0, c], preferred_element_type=jnp.float32)
            + bias_ref[0, c:c + 1, :])
        dA_scr[c] = jnp.exp(dt[:, None, :] * a_ref[0, c][None, :, :])
        dtx_scr[c] = dt * x
        bc_scr[c] = jnp.dot(xb, wbc_ref[0, c], preferred_element_type=jnp.float32)

    # -------- serial recurrence, 8 timesteps per inner block ----------------
    def block_body(blk, carry):
        hf, hb = carry
        tf = pl.multiple_of(blk * 8, 8)                 # forward block start
        tb = pl.multiple_of(Lc - 8 - blk * 8, 8)        # backward block start

        # forward chain: positions tf .. tf+7 (ascending)
        bcf = jnp.transpose(bc_scr[0, pl.ds(tf, 8), :])            # (2N, 8)
        uf = dtx_scr[0, pl.ds(tf, 8), :]                           # (8, Dd)
        rows = []
        for j in range(8):
            hf = dA_scr[0, tf + j] * hf + bcf[:N, j:j + 1] * uf[j:j + 1, :]
            rows.append(jnp.sum(bcf[N:, j:j + 1] * hf, axis=0, keepdims=True))
        yf_ref[0, 0, pl.ds(tf, 8), :] = jnp.concatenate(rows, axis=0)

        # backward chain: positions tb+7 .. tb (descending)
        bcb = jnp.transpose(bc_scr[1, pl.ds(tb, 8), :])            # (2N, 8)
        ub = dtx_scr[1, pl.ds(tb, 8), :]                           # (8, Dd)
        rows = []
        for j in range(8):
            p = 7 - j
            hb = dA_scr[1, tb + p] * hb + bcb[:N, p:p + 1] * ub[p:p + 1, :]
            rows.append(jnp.sum(bcb[N:, p:p + 1] * hb, axis=0, keepdims=True))
        yb_ref[0, 0, pl.ds(tb, 8), :] = jnp.concatenate(rows[::-1], axis=0)

        return hf, hb

    hf, hb = lax.fori_loop(0, nblk, block_body, (h_scr[0], h_scr[1]))
    h_scr[0] = hf
    h_scr[1] = hb

    # skip connection y += D_k * u, vectorized over the chunk
    yf_ref[0, 0] = yf_ref[0, 0] + d_ref[0, 0:1, :] * xf_ref[0, 0]
    yb_ref[0, 0] = yb_ref[0, 0] + d_ref[0, 1:2, :] * xb_ref[0, 0]


def selective_scan_groups(x_stack, wdt_bf16, wbc_bf16, dt_bias, a_stack, d_stack):
    Bn, G, L, Dd = x_stack.shape
    N = a_stack.shape[2]
    Lc = L if L <= 512 else 512                  # L-chunk (bounds VMEM scratch)
    assert L % Lc == 0 and Lc % 8 == 0
    nch = L // Lc
    yf, yb = pl.pallas_call(
        _scan_group_kernel,
        grid=(Bn, G, nch),
        in_specs=[
            pl.BlockSpec((1, 1, Lc, Dd), lambda b, g, c: (b, g, c, 0)),
            pl.BlockSpec((1, 1, Lc, Dd), lambda b, g, c: (b, g, nch - 1 - c, 0)),
            pl.BlockSpec((1, 2, Dd, Dd), lambda b, g, c: (g, 0, 0, 0)),
            pl.BlockSpec((1, 2, Dd, 2 * N), lambda b, g, c: (g, 0, 0, 0)),
            pl.BlockSpec((1, 2, Dd), lambda b, g, c: (g, 0, 0)),
            pl.BlockSpec((1, 2, N, Dd), lambda b, g, c: (g, 0, 0, 0)),
            pl.BlockSpec((1, 2, Dd), lambda b, g, c: (g, 0, 0)),
        ],
        out_specs=[
            pl.BlockSpec((1, 1, Lc, Dd), lambda b, g, c: (b, g, c, 0)),
            pl.BlockSpec((1, 1, Lc, Dd), lambda b, g, c: (b, g, nch - 1 - c, 0)),
        ],
        out_shape=[
            jax.ShapeDtypeStruct((Bn, G, L, Dd), jnp.float32),
            jax.ShapeDtypeStruct((Bn, G, L, Dd), jnp.float32),
        ],
        scratch_shapes=[
            pltpu.VMEM((2, Lc, N, Dd), jnp.float32),     # dA = exp(dt*A)
            pltpu.VMEM((2, Lc, Dd), jnp.float32),        # dt * u
            pltpu.VMEM((2, Lc, 2 * N), jnp.float32),     # [B | C]
            pltpu.VMEM((2, N, Dd), jnp.float32),         # carried ssm state
        ],
        compiler_params=pltpu.CompilerParams(
            dimension_semantics=("parallel", "parallel", "arbitrary")),
    )(x_stack, x_stack, wdt_bf16, wbc_bf16, dt_bias, a_stack, d_stack)
    return yf, yb


# ------- kernel: out-norm + SiLU gate + out_proj + residual add --------------

def _gate_outproj_kernel(y1_ref, y2_ref, z_ref, xin_ref, g_ref, b_ref, w_ref,
                         o_ref):
    y = y1_ref[...] + y2_ref[...]                      # row-part + col-part
    mu = jnp.mean(y, axis=-1, keepdims=True)
    var = jnp.mean(jnp.square(y - mu), axis=-1, keepdims=True)
    yn = (y - mu) * lax.rsqrt(var + 1e-5) * g_ref[...] + b_ref[...]
    z = z_ref[...]
    gated = yn * (z * _sigmoid(z))
    out = jnp.dot(gated.astype(jnp.bfloat16), w_ref[...],
                  preferred_element_type=jnp.float32)
    o_ref[...] = (out + xin_ref[...]).astype(o_ref.dtype)   # fused residual


def gate_outproj_residual(y1, y2, z2d, xin2d, gamma, beta, w_bf16):
    M, Dd = y1.shape
    C = w_bf16.shape[1]
    tm = _row_tile(M)
    assert M % tm == 0
    return pl.pallas_call(
        _gate_outproj_kernel,
        grid=(M // tm,),
        in_specs=[
            pl.BlockSpec((tm, Dd), lambda i: (i, 0)),
            pl.BlockSpec((tm, Dd), lambda i: (i, 0)),
            pl.BlockSpec((tm, Dd), lambda i: (i, 0)),
            pl.BlockSpec((tm, C), lambda i: (i, 0)),
            pl.BlockSpec((1, Dd), lambda i: (0, 0)),
            pl.BlockSpec((1, Dd), lambda i: (0, 0)),
            pl.BlockSpec((Dd, C), lambda i: (0, 0)),
        ],
        out_specs=pl.BlockSpec((tm, C), lambda i: (i, 0)),
        out_shape=jax.ShapeDtypeStruct((M, C), jnp.float32),
        compiler_params=pltpu.CompilerParams(dimension_semantics=("parallel",)),
    )(y1, y2, z2d, xin2d, gamma.reshape(1, -1), beta.reshape(1, -1), w_bf16)


# ------------------------------- model forward ------------------------------

def vssblock_forward(x, p):
    """x + SS2D(LayerNorm(x)) -- residual fused into the out-proj kernel."""
    B, H, W, C = x.shape
    Dd = p["conv_w"].shape[-1]
    L = H * W
    M = B * L

    x2d = x.reshape(M, C)
    x1, z = ln_inproj(x2d, p["ln_g"], p["ln_b"],
                      p["in_proj_wx_bf16"], p["in_proj_wz_bf16"])
    xc = dwconv3x3_silu(x1.reshape(B, H, W, Dd), p["conv_w"], p["conv_b"])

    # row-major and column-major orderings (replaces the per-step SMEM gather)
    x_row = xc.reshape(B, L, Dd)
    x_col = jnp.transpose(xc, (0, 2, 1, 3)).reshape(B, L, Dd)
    x_stack = jnp.stack([x_row, x_col], axis=1)                   # (B, 2, L, Dd)

    y_f, y_b = selective_scan_groups(x_stack, p["wdt_stack_bf16"],
                                     p["wbc_stack_bf16"], p["dt_bias_stack"],
                                     p["A_stack"], p["D_stack"])
    y_row = y_f[:, 0] + y_b[:, 0]                                 # row order
    y_col = y_f[:, 1] + y_b[:, 1]                                 # col order
    y_col = jnp.transpose(y_col.reshape(B, W, H, Dd), (0, 2, 1, 3)).reshape(B, L, Dd)

    out = gate_outproj_residual(y_row.reshape(M, Dd), y_col.reshape(M, Dd),
                                z, x2d, p["out_norm_g"], p["out_norm_b"],
                                p["out_proj_w_bf16"])
    return out.reshape(B, H, W, C)


def mewb1_forward(x, params):
    for p in params:                          # MEWB1: x = attn(x) + x
        x = vssblock_forward(x, p) + x
    return x


# ------------------------ pure-JAX reference (checking) ---------------------
# Mirrors the original stack / flip / transpose formulation.  Matmul operands
# are quantized to bf16 (fp32 accumulation) at the same points as the kernels.

def _mm_bf16(a, b):
    return jnp.dot(a.astype(jnp.bfloat16), b.astype(jnp.bfloat16),
                   preferred_element_type=jnp.float32)


def _layernorm_ref(x2d, gamma, beta):
    mu = jnp.mean(x2d, -1, keepdims=True)
    var = jnp.mean(jnp.square(x2d - mu), -1, keepdims=True)
    return (x2d - mu) * lax.rsqrt(var + 1e-5) * gamma[None, :] + beta[None, :]


def _dwconv3x3_silu_ref(x_nhwc, w33d, bias):
    out = lax.conv_general_dilated(
        x_nhwc, w33d[:, :, None, :], window_strides=(1, 1), padding="SAME",
        dimension_numbers=("NHWC", "HWIO", "NHWC"),
        feature_group_count=x_nhwc.shape[-1])
    out = out + bias[None, None, None, :]
    return out * _sigmoid(out)


def _selective_scan_ref(xs, dts, A, Bs, Cs, Ds, dt_bias):
    dt = _softplus(dts + dt_bias[None])
    dA = jnp.exp(dt[..., None, :] * A[None, :, None, :, :])
    dxB = (dt * xs)[..., None, :] * Bs[..., None]

    def stepf(h, inp):
        dA_t, dxB_t = inp
        h = dA_t * h + dxB_t
        return h, h

    dA_s, dxB_s = jnp.moveaxis(dA, 2, 0), jnp.moveaxis(dxB, 2, 0)
    h0 = jnp.zeros(dA_s.shape[1:], jnp.float32)
    _, hs = lax.scan(stepf, h0, (dA_s, dxB_s))
    hs = jnp.moveaxis(hs, 0, 2)
    return jnp.sum(hs * Cs[..., None], axis=-2) + xs * Ds[None]


def ss2d_forward_ref(xn, p):
    B, H, W, C = xn.shape
    Dd = p["conv_w"].shape[-1]
    N = p["A"].shape[1]
    L = H * W
    M = B * L

    xz = _mm_bf16(xn.reshape(M, C), p["in_proj_w"])
    x1, z = jnp.split(xz, 2, axis=-1)
    xc = _dwconv3x3_silu_ref(x1.reshape(B, H, W, Dd), p["conv_w"], p["conv_b"])

    x_hw = jnp.transpose(xc, (0, 3, 1, 2)).reshape(B, Dd, L)
    x_wh = jnp.transpose(xc, (0, 3, 2, 1)).reshape(B, Dd, L)
    x4 = jnp.stack([x_hw, x_wh, x_hw[..., ::-1], x_wh[..., ::-1]], axis=1)
    xs = jnp.transpose(x4, (0, 1, 3, 2))                         # (B,4,L,Dd)

    dts_l, Bs_l, Cs_l = [], [], []
    for k in range(K_DIRS):
        proj = _mm_bf16(xs[:, k].reshape(M, Dd), p["proj_w"][k])
        dts_l.append(proj[:, :Dd].reshape(B, L, Dd))
        Bs_l.append(proj[:, Dd:Dd + N].reshape(B, L, N))
        Cs_l.append(proj[:, Dd + N:].reshape(B, L, N))
    dts = jnp.stack(dts_l, axis=1)
    Bs = jnp.stack(Bs_l, axis=1)
    Cs = jnp.stack(Cs_l, axis=1)

    out_y = _selective_scan_ref(xs, dts, p["A"], Bs, Cs, p["Ds"], p["dt_bias"])
    out_y = jnp.transpose(out_y, (0, 1, 3, 2))                   # (B,K,Dd,L)

    inv_y = out_y[:, 2:4, :, ::-1]
    wh_y = jnp.transpose(out_y[:, 1].reshape(B, Dd, W, H), (0, 1, 3, 2)).reshape(B, Dd, L)
    invwh_y = jnp.transpose(inv_y[:, 1].reshape(B, Dd, W, H), (0, 1, 3, 2)).reshape(B, Dd, L)
    y = out_y[:, 0] + inv_y[:, 0] + wh_y + invwh_y

    y = jnp.transpose(y, (0, 2, 1)).reshape(M, Dd)
    yn = _layernorm_ref(y, p["out_norm_g"], p["out_norm_b"])
    gated = yn * (z * _sigmoid(z))
    out = _mm_bf16(gated, p["out_proj_w"])
    return out.reshape(B, H, W, C)


def mewb1_forward_ref(x, params):
    for p in params:
        xn = _layernorm_ref(x.reshape(-1, x.shape[-1]),
                            p["ln_g"], p["ln_b"]).reshape(x.shape)
        x = (x + ss2d_forward_ref(xn, p)) + x
    return x


# ------------------------------ parameter init ------------------------------

def init_layer_params(key, dim, d_state=16, expand=2):
    Dd = expand * dim
    dt_rank = max(1, math.ceil(dim / 16))
    K = K_DIRS
    N = d_state
    keys = jax.random.split(key, 8)

    def rnd(k, shape, scale):
        return scale * jax.random.normal(k, shape, jnp.float32)

    x_proj_dt = rnd(keys[0], (K, dt_rank, Dd), 1.0 / math.sqrt(Dd))
    x_proj_B = rnd(keys[1], (K, N, Dd), 1.0 / math.sqrt(Dd))
    x_proj_C = rnd(keys[2], (K, N, Dd), 1.0 / math.sqrt(Dd))
    dt_proj_w = rnd(keys[3], (K, Dd, dt_rank), 1.0 / math.sqrt(dt_rank))
    # exact fold of x_proj(dt-part) followed by dt_proj (both bias-free)
    folded_dt = jnp.einsum("krd,ker->kde", x_proj_dt, dt_proj_w)          # (K,Dd,Dd)
    proj_w = jnp.concatenate(
        [folded_dt, jnp.transpose(x_proj_B, (0, 2, 1)),
         jnp.transpose(x_proj_C, (0, 2, 1))], axis=-1)                    # (K,Dd,Dd+2N)

    # S4D-real init: A = -[1..N] per channel (stored pre-negated, layout (K,N,Dd))
    A = -jnp.broadcast_to(
        jnp.arange(1, N + 1, dtype=jnp.float32)[:, None], (K, N, Dd))
    Ds = jnp.ones((K, 1, Dd), jnp.float32)

    # dt bias = inverse-softplus of dt ~ LogUniform[1e-3, 1e-1]
    u = jax.random.uniform(keys[4], (K, 1, Dd), jnp.float32)
    dt_val = jnp.exp(u * (math.log(0.1) - math.log(0.001)) + math.log(0.001))
    dt_bias = dt_val + jnp.log(-jnp.expm1(-dt_val))

    in_proj_w = rnd(keys[5], (dim, 2 * Dd), 1.0 / math.sqrt(dim))
    out_proj_w = rnd(keys[7], (Dd, dim), 1.0 / math.sqrt(Dd))

    # kernel layout: directions grouped as (row:{fwd,bwd}, col:{fwd,bwd})
    def group(a):                               # (K, ...) -> (2, 2, ...)
        return jnp.stack([jnp.stack([a[0], a[2]]), jnp.stack([a[1], a[3]])])

    return dict(
        ln_g=jnp.ones((dim,), jnp.float32),
        ln_b=jnp.zeros((dim,), jnp.float32),
        in_proj_w=in_proj_w,
        conv_w=rnd(keys[6], (3, 3, Dd), 1.0 / 3.0),
        conv_b=jnp.zeros((Dd,), jnp.float32),
        proj_w=proj_w,
        A=A,
        Ds=Ds,
        dt_bias=dt_bias,
        out_norm_g=jnp.ones((Dd,), jnp.float32),
        out_norm_b=jnp.zeros((Dd,), jnp.float32),
        out_proj_w=out_proj_w,
        # derived, kernel-layout params
        in_proj_wx_bf16=in_proj_w[:, :Dd].astype(jnp.bfloat16),
        in_proj_wz_bf16=in_proj_w[:, Dd:].astype(jnp.bfloat16),
        out_proj_w_bf16=out_proj_w.astype(jnp.bfloat16),
        wdt_stack_bf16=group(proj_w[:, :, :Dd]).astype(jnp.bfloat16),
        wbc_stack_bf16=group(proj_w[:, :, Dd:]).astype(jnp.bfloat16),
        dt_bias_stack=group(dt_bias.reshape(K, Dd)),
        A_stack=group(A),
        D_stack=group(Ds.reshape(K, Dd)),
    )


# ----------------------------------- main -----------------------------------

if __name__ == "__main__":
    key = jax.random.PRNGKey(0)
    B, H, W, C = 2, 8, 8, 16        # NHWC input; dim=16, depth=2
    depth = 2
    kx, kp = jax.random.split(key)
    x = jax.random.normal(kx, (B, H, W, C), jnp.float32)
    params = [init_layer_params(k, C) for k in jax.random.split(kp, depth)]

    out = jax.jit(mewb1_forward)(x, params)
    out = jax.block_until_ready(out)
    assert out.shape == (B, H, W, C)
    assert bool(jnp.all(jnp.isfinite(out)))

    # cross-check against a pure-JAX reference of the same forward pass
    ref = jax.jit(mewb1_forward_ref)(x, params)
    ref = jax.block_until_ready(ref)
    err = float(jnp.max(jnp.abs(out - ref)) / (jnp.max(jnp.abs(ref)) + 1e-6))
    assert err < 1e-2, f"mismatch vs pure-JAX reference: rel err {err}"

    print("KERNEL_OK")
</pallas_src>

<mosaic_0001>
module attributes {stable_mosaic.version = 11 : i64} {
  func.func @_dwconv3x3_silu_kernel(%arg0: i32, %arg1: memref<1x8x8x32xf32, #tpu.memory_space<vmem>>, %arg2: memref<9x32xf32, #tpu.memory_space<vmem>>, %arg3: memref<1x32xf32, #tpu.memory_space<vmem>>, %arg4: memref<1x8x8x32xf32, #tpu.memory_space<vmem>>, %arg5: memref<10x10x32xf32, #tpu.memory_space<vmem>>) attributes {dimension_semantics = [#tpu.dimension_semantics<parallel>], iteration_bounds = array<i64: 2>, scalar_prefetch = 0 : i64, scratch_operands = 1 : i64, tpu.core_type = #tpu.core_type<tc>, window_params = [{transform_indices = @transform_0, window_bounds = array<i64: 1, 8, 8, 32>}, {pipeline_mode = #tpu.pipeline_mode<synchronous>, transform_indices = @transform_1, window_bounds = array<i64: 9, 32>}, {pipeline_mode = #tpu.pipeline_mode<synchronous>, transform_indices = @transform_2, window_bounds = array<i64: 1, 32>}, {transform_indices = @transform_3, window_bounds = array<i64: 1, 8, 8, 32>}]} {
    %cst = arith.constant 0.000000e+00 : f32
    %0 = vector.broadcast %cst : f32 to vector<10x10x32xf32>
    %c0 = arith.constant 0 : index
    %c0_0 = arith.constant 0 : index
    %c0_1 = arith.constant 0 : index
    %1 = vector.load %arg5[%c0, %c0_0, %c0_1] : memref<10x10x32xf32, #tpu.memory_space<vmem>>, vector<10x10x32xf32>
    tpu.vector_store %arg5[%c0, %c0_0, %c0_1], %0 {strides = array<i32>} : memref<10x10x32xf32, #tpu.memory_space<vmem>>, vector<10x10x32xf32>,
    %c0_2 = arith.constant 0 : index
    %c0_3 = arith.constant 0 : index
    %c0_4 = arith.constant 0 : index
    %c0_5 = arith.constant 0 : index
    %2 = vector.load %arg1[%c0_2, %c0_3, %c0_4, %c0_5] : memref<1x8x8x32xf32, #tpu.memory_space<vmem>>, vector<1x8x8x32xf32>
    %3 = vector.shape_cast %2 : vector<1x8x8x32xf32> to vector<8x8x32xf32>
    %c1 = arith.constant 1 : index
    %c1_6 = arith.constant 1 : index
    %c0_7 = arith.constant 0 : index
    %4 = vector.load %arg5[%c1, %c1_6, %c0_7] : memref<10x10x32xf32, #tpu.memory_space<vmem>>, vector<8x8x32xf32>
    tpu.vector_store %arg5[%c1, %c1_6, %c0_7], %3 {strides = array<i32>} : memref<10x10x32xf32, #tpu.memory_space<vmem>>, vector<8x8x32xf32>,
    %cst_8 = arith.constant 0.000000e+00 : f32
    %5 = vector.broadcast %cst_8 : f32 to vector<8x8x32xf32>
    %c0_9 = arith.constant 0 : index
    %c0_10 = arith.constant 0 : index
    %c0_11 = arith.constant 0 : index
    %6 = vector.load %arg5[%c0_9, %c0_10, %c0_11] : memref<10x10x32xf32, #tpu.memory_space<vmem>>, vector<8x8x32xf32>
    %c0_12 = arith.constant 0 : index
    %c0_13 = arith.constant 0 : index
    %7 = vector.load %arg2[%c0_12, %c0_13] : memref<9x32xf32, #tpu.memory_space<vmem>>, vector<1x32xf32>
    %8 = vector.shape_cast %7 : vector<1x32xf32> to vector<1x1x32xf32>
    %9 = vector.broadcast %8 : vector<1x1x32xf32> to vector<8x8x32xf32>
    %10 = arith.mulf %6, %9 : vector<8x8x32xf32>
    %11 = arith.addf %5, %10 : vector<8x8x32xf32>
    %c0_14 = arith.constant 0 : index
    %c1_15 = arith.constant 1 : index
    %c0_16 = arith.constant 0 : index
    %12 = vector.load %arg5[%c0_14, %c1_15, %c0_16] : memref<10x10x32xf32, #tpu.memory_space<vmem>>, vector<8x8x32xf32>
    %c1_17 = arith.constant 1 : index
    %c0_18 = arith.constant 0 : index
    %13 = vector.load %arg2[%c1_17, %c0_18] : memref<9x32xf32, #tpu.memory_space<vmem>>, vector<1x32xf32>
    %14 = vector.shape_cast %13 : vector<1x32xf32> to vector<1x1x32xf32>
    %15 = vector.broadcast %14 : vector<1x1x32xf32> to vector<8x8x32xf32>
    %16 = arith.mulf %12, %15 : vector<8x8x32xf32>
    %17 = arith.addf %11, %16 : vector<8x8x32xf32>
    %c0_19 = arith.constant 0 : index
    %c2 = arith.constant 2 : index
    %c0_20 = arith.constant 0 : index
    %18 = vector.load %arg5[%c0_19, %c2, %c0_20] : memref<10x10x32xf32, #tpu.memory_space<vmem>>, vector<8x8x32xf32>
    %c2_21 = arith.constant 2 : index
    %c0_22 = arith.constant 0 : index
    %19 = vector.load %arg2[%c2_21, %c0_22] : memref<9x32xf32, #tpu.memory_space<vmem>>, vector<1x32xf32>
    %20 = vector.shape_cast %19 : vector<1x32xf32> to vector<1x1x32xf32>
    %21 = vector.broadcast %20 : vector<1x1x32xf32> to vector<8x8x32xf32>
    %22 = arith.mulf %18, %21 : vector<8x8x32xf32>
    %23 = arith.addf %17, %22 : vector<8x8x32xf32>
    %c1_23 = arith.constant 1 : index
    %c0_24 = arith.constant 0 : index
    %c0_25 = arith.constant 0 : index
    %24 = vector.load %arg5[%c1_23, %c0_24, %c0_25] : memref<10x10x32xf32, #tpu.memory_space<vmem>>, vector<8x8x32xf32>
    %c3 = arith.constant 3 : index
    %c0_26 = arith.constant 0 : index
    %25 = vector.load %arg2[%c3, %c0_26] : memref<9x32xf32, #tpu.memory_space<vmem>>, vector<1x32xf32>
    %26 = vector.shape_cast %25 : vector<1x32xf32> to vector<1x1x32xf32>
    %27 = vector.broadcast %26 : vector<1x1x32xf32> to vector<8x8x32xf32>
    %28 = arith.mulf %24, %27 : vector<8x8x32xf32>
    %29 = arith.addf %23, %28 : vector<8x8x32xf32>
    %c1_27 = arith.constant 1 : index
    %c1_28 = arith.constant 1 : index
    %c0_29 = arith.constant 0 : index
    %30 = vector.load %arg5[%c1_27, %c1_28, %c0_29] : memref<10x10x32xf32, #tpu.memory_space<vmem>>, vector<8x8x32xf32>
    %c4 = arith.constant 4 : index
    %c0_30 = arith.constant 0 : index
    %31 = vector.load %arg2[%c4, %c0_30] : memref<9x32xf32, #tpu.memory_space<vmem>>, vector<1x32xf32>
    %32 = vector.shape_cast %31 : vector<1x32xf32> to vector<1x1x32xf32>
    %33 = vector.broadcast %32 : vector<1x1x32xf32> to vector<8x8x32xf32>
    %34 = arith.mulf %30, %33 : vector<8x8x32xf32>
    %35 = arith.addf %29, %34 : vector<8x8x32xf32>
    %c1_31 = arith.constant 1 : index
    %c2_32 = arith.constant 2 : index
    %c0_33 = arith.constant 0 : index
    %36 = vector.load %arg5[%c1_31, %c2_32, %c0_33] : memref<10x10x32xf32, #tpu.memory_space<vmem>>, vector<8x8x32xf32>
    %c5 = arith.constant 5 : index
    %c0_34 = arith.constant 0 : index
    %37 = vector.load %arg2[%c5, %c0_34] : memref<9x32xf32, #tpu.memory_space<vmem>>, vector<1x32xf32>
    %38 = vector.shape_cast %37 : vector<1x32xf32> to vector<1x1x32xf32>
    %39 = vector.broadcast %38 : vector<1x1x32xf32> to vector<8x8x32xf32>
    %40 = arith.mulf %36, %39 : vector<8x8x32xf32>
    %41 = arith.addf %35, %40 : vector<8x8x32xf32>
    %c2_35 = arith.constant 2 : index
    %c0_36 = arith.constant 0 : index
    %c0_37 = arith.constant 0 : index
    %42 = vector.load %arg5[%c2_35, %c0_36, %c0_37] : memref<10x10x32xf32, #tpu.memory_space<vmem>>, vector<8x8x32xf32>
    %c6 = arith.constant 6 : index
    %c0_38 = arith.constant 0 : index
    %43 = vector.load %arg2[%c6, %c0_38] : memref<9x32xf32, #tpu.memory_space<vmem>>, vector<1x32xf32>
    %44 = vector.shape_cast %43 : vector<1x32xf32> to vector<1x1x32xf32>
    %45 = vector.broadcast %44 : vector<1x1x32xf32> to vector<8x8x32xf32>
    %46 = arith.mulf %42, %45 : vector<8x8x32xf32>
    %47 = arith.addf %41, %46 : vector<8x8x32xf32>
    %c2_39 = arith.constant 2 : index
    %c1_40 = arith.constant 1 : index
    %c0_41 = arith.constant 0 : index
    %48 = vector.load %arg5[%c2_39, %c1_40, %c0_41] : memref<10x10x32xf32, #tpu.memory_space<vmem>>, vector<8x8x32xf32>
    %c7 = arith.constant 7 : index
    %c0_42 = arith.constant 0 : index
    %49 = vector.load %arg2[%c7, %c0_42] : memref<9x32xf32, #tpu.memory_space<vmem>>, vector<1x32xf32>
    %50 = vector.shape_cast %49 : vector<1x32xf32> to vector<1x1x32xf32>
    %51 = vector.broadcast %50 : vector<1x1x32xf32> to vector<8x8x32xf32>
    %52 = arith.mulf %48, %51 : vector<8x8x32xf32>
    %53 = arith.addf %47, %52 : vector<8x8x32xf32>
    %c2_43 = arith.constant 2 : index
    %c2_44 = arith.constant 2 : index
    %c0_45 = arith.constant 0 : index
    %54 = vector.load %arg5[%c2_43, %c2_44, %c0_45] : memref<10x10x32xf32, #tpu.memory_space<vmem>>, vector<8x8x32xf32>
    %c8 = arith.constant 8 : index
    %c0_46 = arith.constant 0 : index
    %55 = vector.load %arg2[%c8, %c0_46] : memref<9x32xf32, #tpu.memory_space<vmem>>, vector<1x32xf32>
    %56 = vector.shape_cast %55 : vector<1x32xf32> to vector<1x1x32xf32>
    %57 = vector.broadcast %56 : vector<1x1x32xf32> to vector<8x8x32xf32>
    %58 = arith.mulf %54, %57 : vector<8x8x32xf32>
    %59 = arith.addf %53, %58 : vector<8x8x32xf32>
    %c0_47 = arith.constant 0 : index
    %c0_48 = arith.constant 0 : index
    %60 = vector.load %arg3[%c0_47, %c0_48] : memref<1x32xf32, #tpu.memory_space<vmem>>, vector<1x32xf32>
    %61 = vector.shape_cast %60 : vector<1x32xf32> to vector<1x1x32xf32>
    %62 = vector.broadcast %61 : vector<1x1x32xf32> to vector<8x8x32xf32>
    %63 = arith.addf %59, %62 : vector<8x8x32xf32>
    %cst_49 = arith.constant 0.000000e+00 : f32
    %64 = vector.broadcast %cst_49 : f32 to vector<8x8x32xf32>
    %65 = arith.subf %64, %63 : vector<8x8x32xf32>
    %66 = math.exp %65 : vector<8x8x32xf32>
    %cst_50 = arith.constant 1.000000e+00 : f32
    %67 = vector.broadcast %cst_50 : f32 to vector<8x8x32xf32>
    %68 = arith.addf %67, %66 : vector<8x8x32xf32>
    %cst_51 = arith.constant 1.000000e+00 : f32
    %69 = vector.broadcast %cst_51 : f32 to vector<8x8x32xf32>
    %70 = arith.divf %69, %68 : vector<8x8x32xf32>
    %71 = arith.mulf %63, %70 : vector<8x8x32xf32>
    %c0_52 = arith.constant 0 : index
    %c0_53 = arith.constant 0 : index
    %c0_54 = arith.constant 0 : index
    %c0_55 = arith.constant 0 : index
    %72 = vector.load %arg4[%c0_52, %c0_53, %c0_54, %c0_55] : memref<1x8x8x32xf32, #tpu.memory_space<vmem>>, vector<1x8x8x32xf32>
    %73 = vector.shape_cast %72 : vector<1x8x8x32xf32> to vector<8x8x32xf32>
    %74 = vector.shape_cast %71 : vector<8x8x32xf32> to vector<1x8x8x32xf32>
    tpu.vector_store %arg4[%c0_52, %c0_53, %c0_54, %c0_55], %74 {strides = array<i32>} : memref<1x8x8x32xf32, #tpu.memory_space<vmem>>, vector<1x8x8x32xf32>,
    return
  }
  func.func @transform_0(%arg0: i32) -> (i32, i32, i32, i32) {
    %c0_i32 = arith.constant 0 : i32
    %c0_i32_0 = arith.constant 0 : i32
    %c0_i32_1 = arith.constant 0 : i32
    %c0_i32_2 = arith.constant 0 : i32
    return %arg0, %c0_i32, %c0_i32_0, %c0_i32_1 : i32, i32, i32, i32
  }
  func.func @transform_1(%arg0: i32) -> (i32, i32) {
    %c0_i32 = arith.constant 0 : i32
    %c0_i32_0 = arith.constant 0 : i32
    %c0_i32_1 = arith.constant 0 : i32
    return %c0_i32, %c0_i32_0 : i32, i32
  }
  func.func @transform_2(%arg0: i32) -> (i32, i32) {
    %c0_i32 = arith.constant 0 : i32
    %c0_i32_0 = arith.constant 0 : i32
    %c0_i32_1 = arith.constant 0 : i32
    return %c0_i32, %c0_i32_0 : i32, i32
  }
  func.func @transform_3(%arg0: i32) -> (i32, i32, i32, i32) {
    %c0_i32 = arith.constant 0 : i32
    %c0_i32_0 = arith.constant 0 : i32
    %c0_i32_1 = arith.constant 0 : i32
    %c0_i32_2 = arith.constant 0 : i32
    return %arg0, %c0_i32, %c0_i32_0, %c0_i32_1 : i32, i32, i32, i32
  }
}

module attributes {stable_mosaic.version = 11 : i64} {
  func.func @_ln_inproj_kernel(%arg0: i32, %arg1: memref<128x16xf32, #tpu.memory_space<vmem>>, %arg2: memref<1x16xf32, #tpu.memory_space<vmem>>, %arg3: memref<1x16xf32, #tpu.memory_space<vmem>>, %arg4: memref<16x32xbf16, #tpu.memory_space<vmem>>, %arg5: memref<16x32xbf16, #tpu.memory_space<vmem>>, %arg6: memref<128x32xf32, #tpu.memory_space<vmem>>, %arg7: memref<128x32xf32, #tpu.memory_space<vmem>>) attributes {dimension_semantics = [#tpu.dimension_semantics<parallel>], iteration_bounds = array<i64: 1>, scalar_prefetch = 0 : i64, scratch_operands = 0 : i64, tpu.core_type = #tpu.core_type<tc>, window_params = [{transform_indices = @transform_0, window_bounds = array<i64: 128, 16>}, {pipeline_mode = #tpu.pipeline_mode<synchronous>, transform_indices = @transform_1, window_bounds = array<i64: 1, 16>}, {pipeline_mode = #tpu.pipeline_mode<synchronous>, transform_indices = @transform_2, window_bounds = array<i64: 1, 16>}, {pipeline_mode = #tpu.pipeline_mode<synchronous>, transform_indices = @transform_3, window_bounds = array<i64: 16, 32>}, {pipeline_mode = #tpu.pipeline_mode<synchronous>, transform_indices = @transform_4, window_bounds = array<i64: 16, 32>}, {transform_indices = @transform_5, window_bounds = array<i64: 128, 32>}, {transform_indices = @transform_6, window_bounds = array<i64: 128, 32>}]} {
    %c0 = arith.constant 0 : index
    %c0_0 = arith.constant 0 : index
    %0 = vector.load %arg1[%c0, %c0_0] : memref<128x16xf32, #tpu.memory_space<vmem>>, vector<128x16xf32>
    %cst = arith.constant dense<0.000000e+00> : vector<128xf32>
    %1 = vector.multi_reduction <add>, %0, %cst [1] : vector<128x16xf32> to vector<128xf32>
    %2 = vector.shape_cast %1 : vector<128xf32> to vector<128x1xf32>
    %cst_1 = arith.constant 1.600000e+01 : f32
    %3 = vector.broadcast %cst_1 : f32 to vector<128x1xf32>
    %4 = arith.divf %2, %3 : vector<128x1xf32>
    %5 = vector.broadcast %4 : vector<128x1xf32> to vector<128x16xf32>
    %6 = arith.subf %0, %5 : vector<128x16xf32>
    %7 = arith.mulf %6, %6 : vector<128x16xf32>
    %cst_2 = arith.constant dense<0.000000e+00> : vector<128xf32>
    %8 = vector.multi_reduction <add>, %7, %cst_2 [1] : vector<128x16xf32> to vector<128xf32>
    %9 = vector.shape_cast %8 : vector<128xf32> to vector<128x1xf32>
    %cst_3 = arith.constant 1.600000e+01 : f32
    %10 = vector.broadcast %cst_3 : f32 to vector<128x1xf32>
    %11 = arith.divf %9, %10 : vector<128x1xf32>
    %12 = vector.broadcast %4 : vector<128x1xf32> to vector<128x16xf32>
    %13 = arith.subf %0, %12 : vector<128x16xf32>
    %cst_4 = arith.constant 9.99999974E-6 : f32
    %14 = vector.broadcast %cst_4 : f32 to vector<128x1xf32>
    %15 = arith.addf %11, %14 : vector<128x1xf32>
    %16 = math.rsqrt %15 : vector<128x1xf32>
    %17 = vector.broadcast %16 : vector<128x1xf32> to vector<128x16xf32>
    %18 = arith.mulf %13, %17 : vector<128x16xf32>
    %c0_5 = arith.constant 0 : index
    %c0_6 = arith.constant 0 : index
    %19 = vector.load %arg2[%c0_5, %c0_6] : memref<1x16xf32, #tpu.memory_space<vmem>>, vector<1x16xf32>
    %20 = vector.broadcast %19 : vector<1x16xf32> to vector<128x16xf32>
    %21 = arith.mulf %18, %20 : vector<128x16xf32>
    %c0_7 = arith.constant 0 : index
    %c0_8 = arith.constant 0 : index
    %22 = vector.load %arg3[%c0_7, %c0_8] : memref<1x16xf32, #tpu.memory_space<vmem>>, vector<1x16xf32>
    %23 = vector.broadcast %22 : vector<1x16xf32> to vector<128x16xf32>
    %24 = arith.addf %21, %23 : vector<128x16xf32>
    %25 = arith.truncf %24 : vector<128x16xf32> to vector<128x16xbf16>
    %c0_9 = arith.constant 0 : index
    %c0_10 = arith.constant 0 : index
    %26 = vector.load %arg4[%c0_9, %c0_10] : memref<16x32xbf16, #tpu.memory_space<vmem>>, vector<16x32xbf16>
    %cst_11 = arith.constant dense<0.000000e+00> : vector<128x32xf32>
    %27 = tpu.matmul %25, %26, %cst_11 {dimension_numbers = #tpu.dot_dimension_numbers<[1], [0], [0], [1], [0, 0, 1, 1], [], []>} : vector<128x16xbf16>, vector<16x32xbf16>, vector<128x32xf32> -> vector<128x32xf32>
    %c0_12 = arith.constant 0 : index
    %c0_13 = arith.constant 0 : index
    %28 = vector.load %arg6[%c0_12, %c0_13] : memref<128x32xf32, #tpu.memory_space<vmem>>, vector<128x32xf32>
    tpu.vector_store %arg6[%c0_12, %c0_13], %27 {strides = array<i32>} : memref<128x32xf32, #tpu.memory_space<vmem>>, vector<128x32xf32>,
    %c0_14 = arith.constant 0 : index
    %c0_15 = arith.constant 0 : index
    %29 = vector.load %arg5[%c0_14, %c0_15] : memref<16x32xbf16, #tpu.memory_space<vmem>>, vector<16x32xbf16>
    %cst_16 = arith.constant dense<0.000000e+00> : vector<128x32xf32>
    %30 = tpu.matmul %25, %29, %cst_16 {dimension_numbers = #tpu.dot_dimension_numbers<[1], [0], [0], [1], [0, 0, 1, 1], [], []>} : vector<128x16xbf16>, vector<16x32xbf16>, vector<128x32xf32> -> vector<128x32xf32>
    %c0_17 = arith.constant 0 : index
    %c0_18 = arith.constant 0 : index
    %31 = vector.load %arg7[%c0_17, %c0_18] : memref<128x32xf32, #tpu.memory_space<vmem>>, vector<128x32xf32>
    tpu.vector_store %arg7[%c0_17, %c0_18], %30 {strides = array<i32>} : memref<128x32xf32, #tpu.memory_space<vmem>>, vector<128x32xf32>,
    return
  }
  func.func @transform_0(%arg0: i32) -> (i32, i32) {
    %c0_i32 = arith.constant 0 : i32
    %c0_i32_0 = arith.constant 0 : i32
    return %arg0, %c0_i32 : i32, i32
  }
  func.func @transform_1(%arg0: i32) -> (i32, i32) {
    %c0_i32 = arith.constant 0 : i32
    %c0_i32_0 = arith.constant 0 : i32
    %c0_i32_1 = arith.constant 0 : i32
    return %c0_i32, %c0_i32_0 : i32, i32
  }
  func.func @transform_2(%arg0: i32) -> (i32, i32) {
    %c0_i32 = arith.constant 0 : i32
    %c0_i32_0 = arith.constant 0 : i32
    %c0_i32_1 = arith.constant 0 : i32
    return %c0_i32, %c0_i32_0 : i32, i32
  }
  func.func @transform_3(%arg0: i32) -> (i32, i32) {
    %c0_i32 = arith.constant 0 : i32
    %c0_i32_0 = arith.constant 0 : i32
    %c0_i32_1 = arith.constant 0 : i32
    return %c0_i32, %c0_i32_0 : i32, i32
  }
  func.func @transform_4(%arg0: i32) -> (i32, i32) {
    %c0_i32 = arith.constant 0 : i32
    %c0_i32_0 = arith.constant 0 : i32
    %c0_i32_1 = arith.constant 0 : i32
    return %c0_i32, %c0_i32_0 : i32, i32
  }
  func.func @transform_5(%arg0: i32) -> (i32, i32) {
    %c0_i32 = arith.constant 0 : i32
    %c0_i32_0 = arith.constant 0 : i32
    return %arg0, %c0_i32 : i32, i32
  }
  func.func @transform_6(%arg0: i32) -> (i32, i32) {
    %c0_i32 = arith.constant 0 : i32
    %c0_i32_0 = arith.constant 0 : i32
    return %arg0, %c0_i32 : i32, i32
  }
}

module attributes {stable_mosaic.version = 11 : i64} {
  func.func @_scan_group_kernel(%arg0: i32, %arg1: i32, %arg2: i32, %arg3: memref<1x1x64x32xf32, #tpu.memory_space<vmem>>, %arg4: memref<1x1x64x32xf32, #tpu.memory_space<vmem>>, %arg5: memref<1x2x32x32xbf16, #tpu.memory_space<vmem>>, %arg6: memref<1x2x32x32xbf16, #tpu.memory_space<vmem>>, %arg7: memref<1x2x32xf32, #tpu.memory_space<vmem>>, %arg8: memref<1x2x16x32xf32, #tpu.memory_space<vmem>>, %arg9: memref<1x2x32xf32, #tpu.memory_space<vmem>>, %arg10: memref<1x1x64x32xf32, #tpu.memory_space<vmem>>, %arg11: memref<1x1x64x32xf32, #tpu.memory_space<vmem>>, %arg12: memref<2x64x16x32xf32, #tpu.memory_space<vmem>>, %arg13: memref<2x64x32xf32, #tpu.memory_space<vmem>>, %arg14: memref<2x64x32xf32, #tpu.memory_space<vmem>>, %arg15: memref<2x16x32xf32, #tpu.memory_space<vmem>>) attributes {dimension_semantics = [#tpu.dimension_semantics<parallel>, #tpu.dimension_semantics<parallel>, #tpu.dimension_semantics<arbitrary>], iteration_bounds = array<i64: 2, 2, 1>, scalar_prefetch = 0 : i64, scratch_operands = 4 : i64, tpu.core_type = #tpu.core_type<tc>, window_params = [{transform_indices = @transform_0, window_bounds = array<i64: 1, 1, 64, 32>}, {transform_indices = @transform_1, window_bounds = array<i64: 1, 1, 64, 32>}, {transform_indices = @transform_2, window_bounds = array<i64: 1, 2, 32, 32>}, {transform_indices = @transform_3, window_bounds = array<i64: 1, 2, 32, 32>}, {transform_indices = @transform_4, window_bounds = array<i64: 1, 2, 32>}, {transform_indices = @transform_5, window_bounds = array<i64: 1, 2, 16, 32>}, {transform_indices = @transform_6, window_bounds = array<i64: 1, 2, 32>}, {transform_indices = @transform_7, window_bounds = array<i64: 1, 1, 64, 32>}, {transform_indices = @transform_8, window_bounds = array<i64: 1, 1, 64, 32>}]} {
    %c0_i32 = arith.constant 0 : i32
    %0 = arith.cmpi eq, %arg2, %c0_i32 : i32
    %1 = arith.extui %0 : i1 to i32
    %c0_i32_0 = arith.constant 0 : i32
    %2 = arith.cmpi ne, %1, %c0_i32_0 : i32
    scf.if %2 {
      %cst_110 = arith.constant 0.000000e+00 : f32
      %121 = vector.broadcast %cst_110 : f32 to vector<2x16x32xf32>
      %c0_111 = arith.constant 0 : index
      %c0_112 = arith.constant 0 : index
      %c0_113 = arith.constant 0 : index
      %122 = vector.load %arg15[%c0_111, %c0_112, %c0_113] : memref<2x16x32xf32, #tpu.memory_space<vmem>>, vector<2x16x32xf32>
      tpu.vector_store %arg15[%c0_111, %c0_112, %c0_113], %121 {strides = array<i32>} : memref<2x16x32xf32, #tpu.memory_space<vmem>>, vector<2x16x32xf32>,
    } else {
    }
    %c0 = arith.constant 0 : index
    %c0_1 = arith.constant 0 : index
    %c0_2 = arith.constant 0 : index
    %c0_3 = arith.constant 0 : index
    %3 = vector.load %arg3[%c0, %c0_1, %c0_2, %c0_3] : memref<1x1x64x32xf32, #tpu.memory_space<vmem>>, vector<1x1x64x32xf32>
    %4 = vector.shape_cast %3 : vector<1x1x64x32xf32> to vector<64x32xf32>
    %5 = arith.truncf %4 : vector<64x32xf32> to vector<64x32xbf16>
    %c0_4 = arith.constant 0 : index
    %c0_5 = arith.constant 0 : index
    %c0_6 = arith.constant 0 : index
    %c0_7 = arith.constant 0 : index
    %6 = vector.load %arg5[%c0_4, %c0_5, %c0_6, %c0_7] : memref<1x2x32x32xbf16, #tpu.memory_space<vmem>>, vector<1x1x32x32xbf16>
    %7 = vector.shape_cast %6 : vector<1x1x32x32xbf16> to vector<32x32xbf16>
    %cst = arith.constant dense<0.000000e+00> : vector<64x32xf32>
    %8 = tpu.matmul %5, %7, %cst {dimension_numbers = #tpu.dot_dimension_numbers<[1], [0], [0], [1], [0, 0, 1, 1], [], []>} : vector<64x32xbf16>, vector<32x32xbf16>, vector<64x32xf32> -> vector<64x32xf32>
    %c0_8 = arith.constant 0 : index
    %c0_9 = arith.constant 0 : index
    %c0_10 = arith.constant 0 : index
    %9 = vector.load %arg7[%c0_8, %c0_9, %c0_10] : memref<1x2x32xf32, #tpu.memory_space<vmem>>, vector<1x1x32xf32>
    %10 = vector.shape_cast %9 : vector<1x1x32xf32> to vector<1x32xf32>
    %11 = vector.broadcast %10 : vector<1x32xf32> to vector<64x32xf32>
    %12 = arith.addf %8, %11 : vector<64x32xf32>
    %cst_11 = arith.constant 0.000000e+00 : f32
    %13 = vector.broadcast %cst_11 : f32 to vector<64x32xf32>
    %14 = arith.maximumf %12, %13 : vector<64x32xf32>
    %15 = math.absf %12 : vector<64x32xf32>
    %cst_12 = arith.constant 0.000000e+00 : f32
    %16 = vector.broadcast %cst_12 : f32 to vector<64x32xf32>
    %17 = arith.subf %16, %15 : vector<64x32xf32>
    %18 = math.exp %17 : vector<64x32xf32>
    %cst_13 = arith.constant 1.000000e+00 : f32
    %19 = vector.broadcast %cst_13 : f32 to vector<64x32xf32>
    %20 = arith.addf %19, %18 : vector<64x32xf32>
    %21 = math.log %20 : vector<64x32xf32>
    %22 = arith.addf %14, %21 : vector<64x32xf32>
    %23 = vector.shape_cast %22 : vector<64x32xf32> to vector<64x1x32xf32>
    %c0_14 = arith.constant 0 : index
    %c0_15 = arith.constant 0 : index
    %c0_16 = arith.constant 0 : index
    %c0_17 = arith.constant 0 : index
    %24 = vector.load %arg8[%c0_14, %c0_15, %c0_16, %c0_17] : memref<1x2x16x32xf32, #tpu.memory_space<vmem>>, vector<1x1x16x32xf32>
    %25 = vector.shape_cast %24 : vector<1x1x16x32xf32> to vector<16x32xf32>
    %26 = vector.shape_cast %25 : vector<16x32xf32> to vector<1x16x32xf32>
    %27 = vector.broadcast %23 : vector<64x1x32xf32> to vector<64x16x32xf32>
    %28 = vector.broadcast %26 : vector<1x16x32xf32> to vector<64x16x32xf32>
    %29 = arith.mulf %27, %28 : vector<64x16x32xf32>
    %30 = math.exp %29 : vector<64x16x32xf32>
    %c0_18 = arith.constant 0 : index
    %c0_19 = arith.constant 0 : index
    %c0_20 = arith.constant 0 : index
    %c0_21 = arith.constant 0 : index
    %31 = vector.load %arg12[%c0_18, %c0_19, %c0_20, %c0_21] : memref<2x64x16x32xf32, #tpu.memory_space<vmem>>, vector<1x64x16x32xf32>
    %32 = vector.shape_cast %31 : vector<1x64x16x32xf32> to vector<64x16x32xf32>
    %33 = vector.shape_cast %30 : vector<64x16x32xf32> to vector<1x64x16x32xf32>
    tpu.vector_store %arg12[%c0_18, %c0_19, %c0_20, %c0_21], %33 {strides = array<i32>} : memref<2x64x16x32xf32, #tpu.memory_space<vmem>>, vector<1x64x16x32xf32>,
    %34 = arith.mulf %22, %4 : vector<64x32xf32>
    %c0_22 = arith.constant 0 : index
    %c0_23 = arith.constant 0 : index
    %c0_24 = arith.constant 0 : index
    %35 = vector.load %arg13[%c0_22, %c0_23, %c0_24] : memref<2x64x32xf32, #tpu.memory_space<vmem>>, vector<1x64x32xf32>
    %36 = vector.shape_cast %35 : vector<1x64x32xf32> to vector<64x32xf32>
    %37 = vector.shape_cast %34 : vector<64x32xf32> to vector<1x64x32xf32>
    tpu.vector_store %arg13[%c0_22, %c0_23, %c0_24], %37 {strides = array<i32>} : memref<2x64x32xf32, #tpu.memory_space<vmem>>, vector<1x64x32xf32>,
    %c0_25 = arith.constant 0 : index
    %c0_26 = arith.constant 0 : index
    %c0_27 = arith.constant 0 : index
    %c0_28 = arith.constant 0 : index
    %38 = vector.load %arg6[%c0_25, %c0_26, %c0_27, %c0_28] : memref<1x2x32x32xbf16, #tpu.memory_space<vmem>>, vector<1x1x32x32xbf16>
    %39 = vector.shape_cast %38 : vector<1x1x32x32xbf16> to vector<32x32xbf16>
    %cst_29 = arith.constant dense<0.000000e+00> : vector<64x32xf32>
    %40 = tpu.matmul %5, %39, %cst_29 {dimension_numbers = #tpu.dot_dimension_numbers<[1], [0], [0], [1], [0, 0, 1, 1], [], []>} : vector<64x32xbf16>, vector<32x32xbf16>, vector<64x32xf32> -> vector<64x32xf32>
    %c0_30 = arith.constant 0 : index
    %c0_31 = arith.constant 0 : index
    %c0_32 = arith.constant 0 : index
    %41 = vector.load %arg14[%c0_30, %c0_31, %c0_32] : memref<2x64x32xf32, #tpu.memory_space<vmem>>, vector<1x64x32xf32>
    %42 = vector.shape_cast %41 : vector<1x64x32xf32> to vector<64x32xf32>
    %43 = vector.shape_cast %40 : vector<64x32xf32> to vector<1x64x32xf32>
    tpu.vector_store %arg14[%c0_30, %c0_31, %c0_32], %43 {strides = array<i32>} : memref<2x64x32xf32, #tpu.memory_space<vmem>>, vector<1x64x32xf32>,
    %c0_33 = arith.constant 0 : index
    %c0_34 = arith.constant 0 : index
    %c0_35 = arith.constant 0 : index
    %c0_36 = arith.constant 0 : index
    %44 = vector.load %arg4[%c0_33, %c0_34, %c0_35, %c0_36] : memref<1x1x64x32xf32, #tpu.memory_space<vmem>>, vector<1x1x64x32xf32>
    %45 = vector.shape_cast %44 : vector<1x1x64x32xf32> to vector<64x32xf32>
    %46 = arith.truncf %45 : vector<64x32xf32> to vector<64x32xbf16>
    %c0_37 = arith.constant 0 : index
    %c1 = arith.constant 1 : index
    %c0_38 = arith.constant 0 : index
    %c0_39 = arith.constant 0 : index
    %47 = vector.load %arg5[%c0_37, %c1, %c0_38, %c0_39] : memref<1x2x32x32xbf16, #tpu.memory_space<vmem>>, vector<1x1x32x32xbf16>
    %48 = vector.shape_cast %47 : vector<1x1x32x32xbf16> to vector<32x32xbf16>
    %cst_40 = arith.constant dense<0.000000e+00> : vector<64x32xf32>
    %49 = tpu.matmul %46, %48, %cst_40 {dimension_numbers = #tpu.dot_dimension_numbers<[1], [0], [0], [1], [0, 0, 1, 1], [], []>} : vector<64x32xbf16>, vector<32x32xbf16>, vector<64x32xf32> -> vector<64x32xf32>
    %c0_41 = arith.constant 0 : index
    %c1_42 = arith.constant 1 : index
    %c0_43 = arith.constant 0 : index
    %50 = vector.load %arg7[%c0_41, %c1_42, %c0_43] : memref<1x2x32xf32, #tpu.memory_space<vmem>>, vector<1x1x32xf32>
    %51 = vector.shape_cast %50 : vector<1x1x32xf32> to vector<1x32xf32>
    %52 = vector.broadcast %51 : vector<1x32xf32> to vector<64x32xf32>
    %53 = arith.addf %49, %52 : vector<64x32xf32>
    %cst_44 = arith.constant 0.000000e+00 : f32
    %54 = vector.broadcast %cst_44 : f32 to vector<64x32xf32>
    %55 = arith.maximumf %53, %54 : vector<64x32xf32>
    %56 = math.absf %53 : vector<64x32xf32>
    %cst_45 = arith.constant 0.000000e+00 : f32
    %57 = vector.broadcast %cst_45 : f32 to vector<64x32xf32>
    %58 = arith.subf %57, %56 : vector<64x32xf32>
    %59 = math.exp %58 : vector<64x32xf32>
    %cst_46 = arith.constant 1.000000e+00 : f32
    %60 = vector.broadcast %cst_46 : f32 to vector<64x32xf32>
    %61 = arith.addf %60, %59 : vector<64x32xf32>
    %62 = math.log %61 : vector<64x32xf32>
    %63 = arith.addf %55, %62 : vector<64x32xf32>
    %64 = vector.shape_cast %63 : vector<64x32xf32> to vector<64x1x32xf32>
    %c0_47 = arith.constant 0 : index
    %c1_48 = arith.constant 1 : index
    %c0_49 = arith.constant 0 : index
    %c0_50 = arith.constant 0 : index
    %65 = vector.load %arg8[%c0_47, %c1_48, %c0_49, %c0_50] : memref<1x2x16x32xf32, #tpu.memory_space<vmem>>, vector<1x1x16x32xf32>
    %66 = vector.shape_cast %65 : vector<1x1x16x32xf32> to vector<16x32xf32>
    %67 = vector.shape_cast %66 : vector<16x32xf32> to vector<1x16x32xf32>
    %68 = vector.broadcast %64 : vector<64x1x32xf32> to vector<64x16x32xf32>
    %69 = vector.broadcast %67 : vector<1x16x32xf32> to vector<64x16x32xf32>
    %70 = arith.mulf %68, %69 : vector<64x16x32xf32>
    %71 = math.exp %70 : vector<64x16x32xf32>
    %c1_51 = arith.constant 1 : index
    %c0_52 = arith.constant 0 : index
    %c0_53 = arith.constant 0 : index
    %c0_54 = arith.constant 0 : index
    %72 = vector.load %arg12[%c1_51, %c0_52, %c0_53, %c0_54] : memref<2x64x16x32xf32, #tpu.memory_space<vmem>>, vector<1x64x16x32xf32>
    %73 = vector.shape_cast %72 : vector<1x64x16x32xf32> to vector<64x16x32xf32>
    %74 = vector.shape_cast %71 : vector<64x16x32xf32> to vector<1x64x16x32xf32>
    tpu.vector_store %arg12[%c1_51, %c0_52, %c0_53, %c0_54], %74 {strides = array<i32>} : memref<2x64x16x32xf32, #tpu.memory_space<vmem>>, vector<1x64x16x32xf32>,
    %75 = arith.mulf %63, %45 : vector<64x32xf32>
    %c1_55 = arith.constant 1 : index
    %c0_56 = arith.constant 0 : index
    %c0_57 = arith.constant 0 : index
    %76 = vector.load %arg13[%c1_55, %c0_56, %c0_57] : memref<2x64x32xf32, #tpu.memory_space<vmem>>, vector<1x64x32xf32>
    %77 = vector.shape_cast %76 : vector<1x64x32xf32> to vector<64x32xf32>
    %78 = vector.shape_cast %75 : vector<64x32xf32> to vector<1x64x32xf32>
    tpu.vector_store %arg13[%c1_55, %c0_56, %c0_57], %78 {strides = array<i32>} : memref<2x64x32xf32, #tpu.memory_space<vmem>>, vector<1x64x32xf32>,
    %c0_58 = arith.constant 0 : index
    %c1_59 = arith.constant 1 : index
    %c0_60 = arith.constant 0 : index
    %c0_61 = arith.constant 0 : index
    %79 = vector.load %arg6[%c0_58, %c1_59, %c0_60, %c0_61] : memref<1x2x32x32xbf16, #tpu.memory_space<vmem>>, vector<1x1x32x32xbf16>
    %80 = vector.shape_cast %79 : vector<1x1x32x32xbf16> to vector<32x32xbf16>
    %cst_62 = arith.constant dense<0.000000e+00> : vector<64x32xf32>
    %81 = tpu.matmul %46, %80, %cst_62 {dimension_numbers = #tpu.dot_dimension_numbers<[1], [0], [0], [1], [0, 0, 1, 1], [], []>} : vector<64x32xbf16>, vector<32x32xbf16>, vector<64x32xf32> -> vector<64x32xf32>
    %c1_63 = arith.constant 1 : index
    %c0_64 = arith.constant 0 : index
    %c0_65 = arith.constant 0 : index
    %82 = vector.load %arg14[%c1_63, %c0_64, %c0_65] : memref<2x64x32xf32, #tpu.memory_space<vmem>>, vector<1x64x32xf32>
    %83 = vector.shape_cast %82 : vector<1x64x32xf32> to vector<64x32xf32>
    %84 = vector.shape_cast %81 : vector<64x32xf32> to vector<1x64x32xf32>
    tpu.vector_store %arg14[%c1_63, %c0_64, %c0_65], %84 {strides = array<i32>} : memref<2x64x32xf32, #tpu.memory_space<vmem>>, vector<1x64x32xf32>,
    %c0_66 = arith.constant 0 : index
    %c0_67 = arith.constant 0 : index
    %c0_68 = arith.constant 0 : index
    %85 = vector.load %arg15[%c0_66, %c0_67, %c0_68] : memref<2x16x32xf32, #tpu.memory_space<vmem>>, vector<1x16x32xf32>
    %86 = vector.shape_cast %85 : vector<1x16x32xf32> to vector<16x32xf32>
    %c1_69 = arith.constant 1 : index
    %c0_70 = arith.constant 0 : index
    %c0_71 = arith.constant 0 : index
    %87 = vector.load %arg15[%c1_69, %c0_70, %c0_71] : memref<2x16x32xf32, #tpu.memory_space<vmem>>, vector<1x16x32xf32>
    %88 = vector.shape_cast %87 : vector<1x16x32xf32> to vector<16x32xf32>
    %c0_i32_72 = arith.constant 0 : i32
    %c8_i32 = arith.constant 8 : i32
    %89 = arith.addi %c0_i32_72, %c8_i32 : i32
    %c1_i32 = arith.constant 1 : i32
    %90:2 = scf.for %arg16 = %c0_i32_72 to %89 step %c1_i32 iter_args(%arg17 = %86, %arg18 = %88) -> (vector<16x32xf32>, vector<16x32xf32>)  : i32 {
      %c8_i32_110 = arith.constant 8 : i32
      %121 = arith.muli %arg16, %c8_i32_110 : i32
      %122 = tpu.assume_multiple %121, 8 : i32
      %c8_i32_111 = arith.constant 8 : i32
      %123 = arith.muli %arg16, %c8_i32_111 : i32
      %c56_i32 = arith.constant 56 : i32
      %124 = arith.subi %c56_i32, %123 : i32
      %125 = tpu.assume_multiple %124, 8 : i32
      %c0_112 = arith.constant 0 : index
      %126 = arith.index_cast %122 : i32 to index
      %c0_113 = arith.constant 0 : index
      %127 = vector.load %arg14[%c0_112, %126, %c0_113] : memref<2x64x32xf32, #tpu.memory_space<vmem>>, vector<1x8x32xf32>
      %128 = vector.shape_cast %127 : vector<1x8x32xf32> to vector<8x32xf32>
      %129 = tpu.transpose %128, [1, 0] : vector<8x32xf32> -> vector<32x8xf32>
      %c0_114 = arith.constant 0 : index
      %130 = arith.index_cast %122 : i32 to index
      %c0_115 = arith.constant 0 : index
      %131 = vector.load %arg13[%c0_114, %130, %c0_115] : memref<2x64x32xf32, #tpu.memory_space<vmem>>, vector<1x8x32xf32>
      %132 = vector.shape_cast %131 : vector<1x8x32xf32> to vector<8x32xf32>
      %c0_i32_116 = arith.constant 0 : i32
      %133 = arith.addi %122, %c0_i32_116 : i32
      %c0_117 = arith.constant 0 : index
      %134 = arith.index_cast %133 : i32 to index
      %c0_118 = arith.constant 0 : index
      %c0_119 = arith.constant 0 : index
      %135 = vector.load %arg12[%c0_117, %134, %c0_118, %c0_119] : memref<2x64x16x32xf32, #tpu.memory_space<vmem>>, vector<1x1x16x32xf32>
      %136 = vector.shape_cast %135 : vector<1x1x16x32xf32> to vector<16x32xf32>
      %137 = arith.mulf %136, %arg17 : vector<16x32xf32>
      %138 = vector.extract_strided_slice %129 {offsets = [0, 0], sizes = [16, 1], strides = [1, 1]} : vector<32x8xf32> to vector<16x1xf32>
      %139 = vector.extract_strided_slice %132 {offsets = [0, 0], sizes = [1, 32], strides = [1, 1]} : vector<8x32xf32> to vector<1x32xf32>
      %140 = vector.broadcast %138 : vector<16x1xf32> to vector<16x32xf32>
      %141 = vector.broadcast %139 : vector<1x32xf32> to vector<16x32xf32>
      %142 = arith.mulf %140, %141 : vector<16x32xf32>
      %143 = arith.addf %137, %142 : vector<16x32xf32>
      %144 = vector.extract_strided_slice %129 {offsets = [16, 0], sizes = [16, 1], strides = [1, 1]} : vector<32x8xf32> to vector<16x1xf32>
      %145 = vector.broadcast %144 : vector<16x1xf32> to vector<16x32xf32>
      %146 = arith.mulf %145, %143 : vector<16x32xf32>
      %cst_120 = arith.constant dense<0.000000e+00> : vector<32xf32>
      %147 = vector.multi_reduction <add>, %146, %cst_120 [0] : vector<16x32xf32> to vector<32xf32>
      %148 = vector.shape_cast %147 : vector<32xf32> to vector<1x32xf32>
      %c1_i32_121 = arith.constant 1 : i32
      %149 = arith.addi %122, %c1_i32_121 : i32
      %c0_122 = arith.constant 0 : index
      %150 = arith.index_cast %149 : i32 to index
      %c0_123 = arith.constant 0 : index
      %c0_124 = arith.constant 0 : index
      %151 = vector.load %arg12[%c0_122, %150, %c0_123, %c0_124] : memref<2x64x16x32xf32, #tpu.memory_space<vmem>>, vector<1x1x16x32xf32>
      %152 = vector.shape_cast %151 : vector<1x1x16x32xf32> to vector<16x32xf32>
      %153 = arith.mulf %152, %143 : vector<16x32xf32>
      %154 = vector.extract_strided_slice %129 {offsets = [0, 1], sizes = [16, 1], strides = [1, 1]} : vector<32x8xf32> to vector<16x1xf32>
      %155 = vector.extract_strided_slice %132 {offsets = [1, 0], sizes = [1, 32], strides = [1, 1]} : vector<8x32xf32> to vector<1x32xf32>
      %156 = vector.broadcast %154 : vector<16x1xf32> to vector<16x32xf32>
      %157 = vector.broadcast %155 : vector<1x32xf32> to vector<16x32xf32>
      %158 = arith.mulf %156, %157 : vector<16x32xf32>
      %159 = arith.addf %153, %158 : vector<16x32xf32>
      %160 = vector.extract_strided_slice %129 {offsets = [16, 1], sizes = [16, 1], strides = [1, 1]} : vector<32x8xf32> to vector<16x1xf32>
      %161 = vector.broadcast %160 : vector<16x1xf32> to vector<16x32xf32>
      %162 = arith.mulf %161, %159 : vector<16x32xf32>
      %cst_125 = arith.constant dense<0.000000e+00> : vector<32xf32>
      %163 = vector.multi_reduction <add>, %162, %cst_125 [0] : vector<16x32xf32> to vector<32xf32>
      %164 = vector.shape_cast %163 : vector<32xf32> to vector<1x32xf32>
      %c2_i32 = arith.constant 2 : i32
      %165 = arith.addi %122, %c2_i32 : i32
      %c0_126 = arith.constant 0 : index
      %166 = arith.index_cast %165 : i32 to index
      %c0_127 = arith.constant 0 : index
      %c0_128 = arith.constant 0 : index
      %167 = vector.load %arg12[%c0_126, %166, %c0_127, %c0_128] : memref<2x64x16x32xf32, #tpu.memory_space<vmem>>, vector<1x1x16x32xf32>
      %168 = vector.shape_cast %167 : vector<1x1x16x32xf32> to vector<16x32xf32>
      %169 = arith.mulf %168, %159 : vector<16x32xf32>
      %170 = vector.extract_strided_slice %129 {offsets = [0, 2], sizes = [16, 1], strides = [1, 1]} : vector<32x8xf32> to vector<16x1xf32>
      %171 = vector.extract_strided_slice %132 {offsets = [2, 0], sizes = [1, 32], strides = [1, 1]} : vector<8x32xf32> to vector<1x32xf32>
      %172 = vector.broadcast %170 : vector<16x1xf32> to vector<16x32xf32>
      %173 = vector.broadcast %171 : vector<1x32xf32> to vector<16x32xf32>
      %174 = arith.mulf %172, %173 : vector<16x32xf32>
      %175 = arith.addf %169, %174 : vector<16x32xf32>
      %176 = vector.extract_strided_slice %129 {offsets = [16, 2], sizes = [16, 1], strides = [1, 1]} : vector<32x8xf32> to vector<16x1xf32>
      %177 = vector.broadcast %176 : vector<16x1xf32> to vector<16x32xf32>
      %178 = arith.mulf %177, %175 : vector<16x32xf32>
      %cst_129 = arith.constant dense<0.000000e+00> : vector<32xf32>
      %179 = vector.multi_reduction <add>, %178, %cst_129 [0] : vector<16x32xf32> to vector<32xf32>
      %180 = vector.shape_cast %179 : vector<32xf32> to vector<1x32xf32>
      %c3_i32 = arith.constant 3 : i32
      %181 = arith.addi %122, %c3_i32 : i32
      %c0_130 = arith.constant 0 : index
      %182 = arith.index_cast %181 : i32 to index
      %c0_131 = arith.constant 0 : index
      %c0_132 = arith.constant 0 : index
      %183 = vector.load %arg12[%c0_130, %182, %c0_131, %c0_132] : memref<2x64x16x32xf32, #tpu.memory_space<vmem>>, vector<1x1x16x32xf32>
      %184 = vector.shape_cast %183 : vector<1x1x16x32xf32> to vector<16x32xf32>
      %185 = arith.mulf %184, %175 : vector<16x32xf32>
      %186 = vector.extract_strided_slice %129 {offsets = [0, 3], sizes = [16, 1], strides = [1, 1]} : vector<32x8xf32> to vector<16x1xf32>
      %187 = vector.extract_strided_slice %132 {offsets = [3, 0], sizes = [1, 32], strides = [1, 1]} : vector<8x32xf32> to vector<1x32xf32>
      %188 = vector.broadcast %186 : vector<16x1xf32> to vector<16x32xf32>
      %189 = vector.broadcast %187 : vector<1x32xf32> to vector<16x32xf32>
      %190 = arith.mulf %188, %189 : vector<16x32xf32>
      %191 = arith.addf %185, %190 : vector<16x32xf32>
      %192 = vector.extract_strided_slice %129 {offsets = [16, 3], sizes = [16, 1], strides = [1, 1]} : vector<32x8xf32> to vector<16x1xf32>
      %193 = vector.broadcast %192 : vector<16x1xf32> to vector<16x32xf32>
      %194 = arith.mulf %193, %191 : vector<16x32xf32>
      %cst_133 = arith.constant dense<0.000000e+00> : vector<32xf32>
      %195 = vector.multi_reduction <add>, %194, %cst_133 [0] : vector<16x32xf32> to vector<32xf32>
      %196 = vector.shape_cast %195 : vector<32xf32> to vector<1x32xf32>
      %c4_i32 = arith.constant 4 : i32
      %197 = arith.addi %122, %c4_i32 : i32
      %c0_134 = arith.constant 0 : index
      %198 = arith.index_cast %197 : i32 to index
      %c0_135 = arith.constant 0 : index
      %c0_136 = arith.constant 0 : index
      %199 = vector.load %arg12[%c0_134, %198, %c0_135, %c0_136] : memref<2x64x16x32xf32, #tpu.memory_space<vmem>>, vector<1x1x16x32xf32>
      %200 = vector.shape_cast %199 : vector<1x1x16x32xf32> to vector<16x32xf32>
      %201 = arith.mulf %200, %191 : vector<16x32xf32>
      %202 = vector.extract_strided_slice %129 {offsets = [0, 4], sizes = [16, 1], strides = [1, 1]} : vector<32x8xf32> to vector<16x1xf32>
      %203 = vector.extract_strided_slice %132 {offsets = [4, 0], sizes = [1, 32], strides = [1, 1]} : vector<8x32xf32> to vector<1x32xf32>
      %204 = vector.broadcast %202 : vector<16x1xf32> to vector<16x32xf32>
      %205 = vector.broadcast %203 : vector<1x32xf32> to vector<16x32xf32>
      %206 = arith.mulf %204, %205 : vector<16x32xf32>
      %207 = arith.addf %201, %206 : vector<16x32xf32>
      %208 = vector.extract_strided_slice %129 {offsets = [16, 4], sizes = [16, 1], strides = [1, 1]} : vector<32x8xf32> to vector<16x1xf32>
      %209 = vector.broadcast %208 : vector<16x1xf32> to vector<16x32xf32>
      %210 = arith.mulf %209, %207 : vector<16x32xf32>
      %cst_137 = arith.constant dense<0.000000e+00> : vector<32xf32>
      %211 = vector.multi_reduction <add>, %210, %cst_137 [0] : vector<16x32xf32> to vector<32xf32>
      %212 = vector.shape_cast %211 : vector<32xf32> to vector<1x32xf32>
      %c5_i32 = arith.constant 5 : i32
      %213 = arith.addi %122, %c5_i32 : i32
      %c0_138 = arith.constant 0 : index
      %214 = arith.index_cast %213 : i32 to index
      %c0_139 = arith.constant 0 : index
      %c0_140 = arith.constant 0 : index
      %215 = vector.load %arg12[%c0_138, %214, %c0_139, %c0_140] : memref<2x64x16x32xf32, #tpu.memory_space<vmem>>, vector<1x1x16x32xf32>
      %216 = vector.shape_cast %215 : vector<1x1x16x32xf32> to vector<16x32xf32>
      %217 = arith.mulf %216, %207 : vector<16x32xf32>
      %218 = vector.extract_strided_slice %129 {offsets = [0, 5], sizes = [16, 1], strides = [1, 1]} : vector<32x8xf32> to vector<16x1xf32>
      %219 = vector.extract_strided_slice %132 {offsets = [5, 0], sizes = [1, 32], strides = [1, 1]} : vector<8x32xf32> to vector<1x32xf32>
      %220 = vector.broadcast %218 : vector<16x1xf32> to vector<16x32xf32>
      %221 = vector.broadcast %219 : vector<1x32xf32> to vector<16x32xf32>
      %222 = arith.mulf %220, %221 : vector<16x32xf32>
      %223 = arith.addf %217, %222 : vector<16x32xf32>
      %224 = vector.extract_strided_slice %129 {offsets = [16, 5], sizes = [16, 1], strides = [1, 1]} : vector<32x8xf32> to vector<16x1xf32>
      %225 = vector.broadcast %224 : vector<16x1xf32> to vector<16x32xf32>
      %226 = arith.mulf %225, %223 : vector<16x32xf32>
      %cst_141 = arith.constant dense<0.000000e+00> : vector<32xf32>
      %227 = vector.multi_reduction <add>, %226, %cst_141 [0] : vector<16x32xf32> to vector<32xf32>
      %228 = vector.shape_cast %227 : vector<32xf32> to vector<1x32xf32>
      %c6_i32 = arith.constant 6 : i32
      %229 = arith.addi %122, %c6_i32 : i32
      %c0_142 = arith.constant 0 : index
      %230 = arith.index_cast %229 : i32 to index
      %c0_143 = arith.constant 0 : index
      %c0_144 = arith.constant 0 : index
      %231 = vector.load %arg12[%c0_142, %230, %c0_143, %c0_144] : memref<2x64x16x32xf32, #tpu.memory_space<vmem>>, vector<1x1x16x32xf32>
      %232 = vector.shape_cast %231 : vector<1x1x16x32xf32> to vector<16x32xf32>
      %233 = arith.mulf %232, %223 : vector<16x32xf32>
      %234 = vector.extract_strided_slice %129 {offsets = [0, 6], sizes = [16, 1], strides = [1, 1]} : vector<32x8xf32> to vector<16x1xf32>
      %235 = vector.extract_strided_slice %132 {offsets = [6, 0], sizes = [1, 32], strides = [1, 1]} : vector<8x32xf32> to vector<1x32xf32>
      %236 = vector.broadcast %234 : vector<16x1xf32> to vector<16x32xf32>
      %237 = vector.broadcast %235 : vector<1x32xf32> to vector<16x32xf32>
      %238 = arith.mulf %236, %237 : vector<16x32xf32>
      %239 = arith.addf %233, %238 : vector<16x32xf32>
      %240 = vector.extract_strided_slice %129 {offsets = [16, 6], sizes = [16, 1], strides = [1, 1]} : vector<32x8xf32> to vector<16x1xf32>
      %241 = vector.broadcast %240 : vector<16x1xf32> to vector<16x32xf32>
      %242 = arith.mulf %241, %239 : vector<16x32xf32>
      %cst_145 = arith.constant dense<0.000000e+00> : vector<32xf32>
      %243 = vector.multi_reduction <add>, %242, %cst_145 [0] : vector<16x32xf32> to vector<32xf32>
      %244 = vector.shape_cast %243 : vector<32xf32> to vector<1x32xf32>
      %c7_i32 = arith.constant 7 : i32
      %245 = arith.addi %122, %c7_i32 : i32
      %c0_146 = arith.constant 0 : index
      %246 = arith.index_cast %245 : i32 to index
      %c0_147 = arith.constant 0 : index
      %c0_148 = arith.constant 0 : index
      %247 = vector.load %arg12[%c0_146, %246, %c0_147, %c0_148] : memref<2x64x16x32xf32, #tpu.memory_space<vmem>>, vector<1x1x16x32xf32>
      %248 = vector.shape_cast %247 : vector<1x1x16x32xf32> to vector<16x32xf32>
      %249 = arith.mulf %248, %239 : vector<16x32xf32>
      %250 = vector.extract_strided_slice %129 {offsets = [0, 7], sizes = [16, 1], strides = [1, 1]} : vector<32x8xf32> to vector<16x1xf32>
      %251 = vector.extract_strided_slice %132 {offsets = [7, 0], sizes = [1, 32], strides = [1, 1]} : vector<8x32xf32> to vector<1x32xf32>
      %252 = vector.broadcast %250 : vector<16x1xf32> to vector<16x32xf32>
      %253 = vector.broadcast %251 : vector<1x32xf32> to vector<16x32xf32>
      %254 = arith.mulf %252, %253 : vector<16x32xf32>
      %255 = arith.addf %249, %254 : vector<16x32xf32>
      %256 = vector.extract_strided_slice %129 {offsets = [16, 7], sizes = [16, 1], strides = [1, 1]} : vector<32x8xf32> to vector<16x1xf32>
      %257 = vector.broadcast %256 : vector<16x1xf32> to vector<16x32xf32>
      %258 = arith.mulf %257, %255 : vector<16x32xf32>
      %cst_149 = arith.constant dense<0.000000e+00> : vector<32xf32>
      %259 = vector.multi_reduction <add>, %258, %cst_149 [0] : vector<16x32xf32> to vector<32xf32>
      %260 = vector.shape_cast %259 : vector<32xf32> to vector<1x32xf32>
      %261 = tpu.concatenate %148, %164, %180, %196, %212, %228, %244, %260 in 0 : vector<1x32xf32>, vector<1x32xf32>, vector<1x32xf32>, vector<1x32xf32>, vector<1x32xf32>, vector<1x32xf32>, vector<1x32xf32>, vector<1x32xf32> -> vector<8x32xf32>
      %c0_150 = arith.constant 0 : index
      %c0_151 = arith.constant 0 : index
      %262 = arith.index_cast %122 : i32 to index
      %c0_152 = arith.constant 0 : index
      %263 = vector.load %arg10[%c0_150, %c0_151, %262, %c0_152] : memref<1x1x64x32xf32, #tpu.memory_space<vmem>>, vector<1x1x8x32xf32>
      %264 = vector.shape_cast %263 : vector<1x1x8x32xf32> to vector<8x32xf32>
      %265 = vector.shape_cast %261 : vector<8x32xf32> to vector<1x1x8x32xf32>
      tpu.vector_store %arg10[%c0_150, %c0_151, %262, %c0_152], %265 {strides = array<i32>} : memref<1x1x64x32xf32, #tpu.memory_space<vmem>>, vector<1x1x8x32xf32>,
      %c1_153 = arith.constant 1 : index
      %266 = arith.index_cast %125 : i32 to index
      %c0_154 = arith.constant 0 : index
      %267 = vector.load %arg14[%c1_153, %266, %c0_154] : memref<2x64x32xf32, #tpu.memory_space<vmem>>, vector<1x8x32xf32>
      %268 = vector.shape_cast %267 : vector<1x8x32xf32> to vector<8x32xf32>
      %269 = tpu.transpose %268, [1, 0] : vector<8x32xf32> -> vector<32x8xf32>
      %c1_155 = arith.constant 1 : index
      %270 = arith.index_cast %125 : i32 to index
      %c0_156 = arith.constant 0 : index
      %271 = vector.load %arg13[%c1_155, %270, %c0_156] : memref<2x64x32xf32, #tpu.memory_space<vmem>>, vector<1x8x32xf32>
      %272 = vector.shape_cast %271 : vector<1x8x32xf32> to vector<8x32xf32>
      %c7_i32_157 = arith.constant 7 : i32
      %273 = arith.addi %125, %c7_i32_157 : i32
      %c1_158 = arith.constant 1 : index
      %274 = arith.index_cast %273 : i32 to index
      %c0_159 = arith.constant 0 : index
      %c0_160 = arith.constant 0 : index
      %275 = vector.load %arg12[%c1_158, %274, %c0_159, %c0_160] : memref<2x64x16x32xf32, #tpu.memory_space<vmem>>, vector<1x1x16x32xf32>
      %276 = vector.shape_cast %275 : vector<1x1x16x32xf32> to vector<16x32xf32>
      %277 = arith.mulf %276, %arg18 : vector<16x32xf32>
      %278 = vector.extract_strided_slice %269 {offsets = [0, 7], sizes = [16, 1], strides = [1, 1]} : vector<32x8xf32> to vector<16x1xf32>
      %279 = vector.extract_strided_slice %272 {offsets = [7, 0], sizes = [1, 32], strides = [1, 1]} : vector<8x32xf32> to vector<1x32xf32>
      %280 = vector.broadcast %278 : vector<16x1xf32> to vector<16x32xf32>
      %281 = vector.broadcast %279 : vector<1x32xf32> to vector<16x32xf32>
      %282 = arith.mulf %280, %281 : vector<16x32xf32>
      %283 = arith.addf %277, %282 : vector<16x32xf32>
      %284 = vector.extract_strided_slice %269 {offsets = [16, 7], sizes = [16, 1], strides = [1, 1]} : vector<32x8xf32> to vector<16x1xf32>
      %285 = vector.broadcast %284 : vector<16x1xf32> to vector<16x32xf32>
      %286 = arith.mulf %285, %283 : vector<16x32xf32>
      %cst_161 = arith.constant dense<0.000000e+00> : vector<32xf32>
      %287 = vector.multi_reduction <add>, %286, %cst_161 [0] : vector<16x32xf32> to vector<32xf32>
      %288 = vector.shape_cast %287 : vector<32xf32> to vector<1x32xf32>
      %c6_i32_162 = arith.constant 6 : i32
      %289 = arith.addi %125, %c6_i32_162 : i32
      %c1_163 = arith.constant 1 : index
      %290 = arith.index_cast %289 : i32 to index
      %c0_164 = arith.constant 0 : index
      %c0_165 = arith.constant 0 : index
      %291 = vector.load %arg12[%c1_163, %290, %c0_164, %c0_165] : memref<2x64x16x32xf32, #tpu.memory_space<vmem>>, vector<1x1x16x32xf32>
      %292 = vector.shape_cast %291 : vector<1x1x16x32xf32> to vector<16x32xf32>
      %293 = arith.mulf %292, %283 : vector<16x32xf32>
      %294 = vector.extract_strided_slice %269 {offsets = [0, 6], sizes = [16, 1], strides = [1, 1]} : vector<32x8xf32> to vector<16x1xf32>
      %295 = vector.extract_strided_slice %272 {offsets = [6, 0], sizes = [1, 32], strides = [1, 1]} : vector<8x32xf32> to vector<1x32xf32>
      %296 = vector.broadcast %294 : vector<16x1xf32> to vector<16x32xf32>
      %297 = vector.broadcast %295 : vector<1x32xf32> to vector<16x32xf32>
      %298 = arith.mulf %296, %297 : vector<16x32xf32>
      %299 = arith.addf %293, %298 : vector<16x32xf32>
      %300 = vector.extract_strided_slice %269 {offsets = [16, 6], sizes = [16, 1], strides = [1, 1]} : vector<32x8xf32> to vector<16x1xf32>
      %301 = vector.broadcast %300 : vector<16x1xf32> to vector<16x32xf32>
      %302 = arith.mulf %301, %299 : vector<16x32xf32>
      %cst_166 = arith.constant dense<0.000000e+00> : vector<32xf32>
      %303 = vector.multi_reduction <add>, %302, %cst_166 [0] : vector<16x32xf32> to vector<32xf32>
      %304 = vector.shape_cast %303 : vector<32xf32> to vector<1x32xf32>
      %c5_i32_167 = arith.constant 5 : i32
      %305 = arith.addi %125, %c5_i32_167 : i32
      %c1_168 = arith.constant 1 : index
      %306 = arith.index_cast %305 : i32 to index
      %c0_169 = arith.constant 0 : index
      %c0_170 = arith.constant 0 : index
      %307 = vector.load %arg12[%c1_168, %306, %c0_169, %c0_170] : memref<2x64x16x32xf32, #tpu.memory_space<vmem>>, vector<1x1x16x32xf32>
      %308 = vector.shape_cast %307 : vector<1x1x16x32xf32> to vector<16x32xf32>
      %309 = arith.mulf %308, %299 : vector<16x32xf32>
      %310 = vector.extract_strided_slice %269 {offsets = [0, 5], sizes = [16, 1], strides = [1, 1]} : vector<32x8xf32> to vector<16x1xf32>
      %311 = vector.extract_strided_slice %272 {offsets = [5, 0], sizes = [1, 32], strides = [1, 1]} : vector<8x32xf32> to vector<1x32xf32>
      %312 = vector.broadcast %310 : vector<16x1xf32> to vector<16x32xf32>
      %313 = vector.broadcast %311 : vector<1x32xf32> to vector<16x32xf32>
      %314 = arith.mulf %312, %313 : vector<16x32xf32>
      %315 = arith.addf %309, %314 : vector<16x32xf32>
      %316 = vector.extract_strided_slice %269 {offsets = [16, 5], sizes = [16, 1], strides = [1, 1]} : vector<32x8xf32> to vector<16x1xf32>
      %317 = vector.broadcast %316 : vector<16x1xf32> to vector<16x32xf32>
      %318 = arith.mulf %317, %315 : vector<16x32xf32>
      %cst_171 = arith.constant dense<0.000000e+00> : vector<32xf32>
      %319 = vector.multi_reduction <add>, %318, %cst_171 [0] : vector<16x32xf32> to vector<32xf32>
      %320 = vector.shape_cast %319 : vector<32xf32> to vector<1x32xf32>
      %c4_i32_172 = arith.constant 4 : i32
      %321 = arith.addi %125, %c4_i32_172 : i32
      %c1_173 = arith.constant 1 : index
      %322 = arith.index_cast %321 : i32 to index
      %c0_174 = arith.constant 0 : index
      %c0_175 = arith.constant 0 : index
      %323 = vector.load %arg12[%c1_173, %322, %c0_174, %c0_175] : memref<2x64x16x32xf32, #tpu.memory_space<vmem>>, vector<1x1x16x32xf32>
      %324 = vector.shape_cast %323 : vector<1x1x16x32xf32> to vector<16x32xf32>
      %325 = arith.mulf %324, %315 : vector<16x32xf32>
      %326 = vector.extract_strided_slice %269 {offsets = [0, 4], sizes = [16, 1], strides = [1, 1]} : vector<32x8xf32> to vector<16x1xf32>
      %327 = vector.extract_strided_slice %272 {offsets = [4, 0], sizes = [1, 32], strides = [1, 1]} : vector<8x32xf32> to vector<1x32xf32>
      %328 = vector.broadcast %326 : vector<16x1xf32> to vector<16x32xf32>
      %329 = vector.broadcast %327 : vector<1x32xf32> to vector<16x32xf32>
      %330 = arith.mulf %328, %329 : vector<16x32xf32>
      %331 = arith.addf %325, %330 : vector<16x32xf32>
      %332 = vector.extract_strided_slice %269 {offsets = [16, 4], sizes = [16, 1], strides = [1, 1]} : vector<32x8xf32> to vector<16x1xf32>
      %333 = vector.broadcast %332 : vector<16x1xf32> to vector<16x32xf32>
      %334 = arith.mulf %333, %331 : vector<16x32xf32>
      %cst_176 = arith.constant dense<0.000000e+00> : vector<32xf32>
      %335 = vector.multi_reduction <add>, %334, %cst_176 [0] : vector<16x32xf32> to vector<32xf32>
      %336 = vector.shape_cast %335 : vector<32xf32> to vector<1x32xf32>
      %c3_i32_177 = arith.constant 3 : i32
      %337 = arith.addi %125, %c3_i32_177 : i32
      %c1_178 = arith.constant 1 : index
      %338 = arith.index_cast %337 : i32 to index
      %c0_179 = arith.constant 0 : index
      %c0_180 = arith.constant 0 : index
      %339 = vector.load %arg12[%c1_178, %338, %c0_179, %c0_180] : memref<2x64x16x32xf32, #tpu.memory_space<vmem>>, vector<1x1x16x32xf32>
      %340 = vector.shape_cast %339 : vector<1x1x16x32xf32> to vector<16x32xf32>
      %341 = arith.mulf %340, %331 : vector<16x32xf32>
      %342 = vector.extract_strided_slice %269 {offsets = [0, 3], sizes = [16, 1], strides = [1, 1]} : vector<32x8xf32> to vector<16x1xf32>
      %343 = vector.extract_strided_slice %272 {offsets = [3, 0], sizes = [1, 32], strides = [1, 1]} : vector<8x32xf32> to vector<1x32xf32>
      %344 = vector.broadcast %342 : vector<16x1xf32> to vector<16x32xf32>
      %345 = vector.broadcast %343 : vector<1x32xf32> to vector<16x32xf32>
      %346 = arith.mulf %344, %345 : vector<16x32xf32>
      %347 = arith.addf %341, %346 : vector<16x32xf32>
      %348 = vector.extract_strided_slice %269 {offsets = [16, 3], sizes = [16, 1], strides = [1, 1]} : vector<32x8xf32> to vector<16x1xf32>
      %349 = vector.broadcast %348 : vector<16x1xf32> to vector<16x32xf32>
      %350 = arith.mulf %349, %347 : vector<16x32xf32>
      %cst_181 = arith.constant dense<0.000000e+00> : vector<32xf32>
      %351 = vector.multi_reduction <add>, %350, %cst_181 [0] : vector<16x32xf32> to vector<32xf32>
      %352 = vector.shape_cast %351 : vector<32xf32> to vector<1x32xf32>
      %c2_i32_182 = arith.constant 2 : i32
      %353 = arith.addi %125, %c2_i32_182 : i32
      %c1_183 = arith.constant 1 : index
      %354 = arith.index_cast %353 : i32 to index
      %c0_184 = arith.constant 0 : index
      %c0_185 = arith.constant 0 : index
      %355 = vector.load %arg12[%c1_183, %354, %c0_184, %c0_185] : memref<2x64x16x32xf32, #tpu.memory_space<vmem>>, vector<1x1x16x32xf32>
      %356 = vector.shape_cast %355 : vector<1x1x16x32xf32> to vector<16x32xf32>
      %357 = arith.mulf %356, %347 : vector<16x32xf32>
      %358 = vector.extract_strided_slice %269 {offsets = [0, 2], sizes = [16, 1], strides = [1, 1]} : vector<32x8xf32> to vector<16x1xf32>
      %359 = vector.extract_strided_slice %272 {offsets = [2, 0], sizes = [1, 32], strides = [1, 1]} : vector<8x32xf32> to vector<1x32xf32>
      %360 = vector.broadcast %358 : vector<16x1xf32> to vector<16x32xf32>
      %361 = vector.broadcast %359 : vector<1x32xf32> to vector<16x32xf32>
      %362 = arith.mulf %360, %361 : vector<16x32xf32>
      %363 = arith.addf %357, %362 : vector<16x32xf32>
      %364 = vector.extract_strided_slice %269 {offsets = [16, 2], sizes = [16, 1], strides = [1, 1]} : vector<32x8xf32> to vector<16x1xf32>
      %365 = vector.broadcast %364 : vector<16x1xf32> to vector<16x32xf32>
      %366 = arith.mulf %365, %363 : vector<16x32xf32>
      %cst_186 = arith.constant dense<0.000000e+00> : vector<32xf32>
      %367 = vector.multi_reduction <add>, %366, %cst_186 [0] : vector<16x32xf32> to vector<32xf32>
      %368 = vector.shape_cast %367 : vector<32xf32> to vector<1x32xf32>
      %c1_i32_187 = arith.constant 1 : i32
      %369 = arith.addi %125, %c1_i32_187 : i32
      %c1_188 = arith.constant 1 : index
      %370 = arith.index_cast %369 : i32 to index
      %c0_189 = arith.constant 0 : index
      %c0_190 = arith.constant 0 : index
      %371 = vector.load %arg12[%c1_188, %370, %c0_189, %c0_190] : memref<2x64x16x32xf32, #tpu.memory_space<vmem>>, vector<1x1x16x32xf32>
      %372 = vector.shape_cast %371 : vector<1x1x16x32xf32> to vector<16x32xf32>
      %373 = arith.mulf %372, %363 : vector<16x32xf32>
      %374 = vector.extract_strided_slice %269 {offsets = [0, 1], sizes = [16, 1], strides = [1, 1]} : vector<32x8xf32> to vector<16x1xf32>
      %375 = vector.extract_strided_slice %272 {offsets = [1, 0], sizes = [1, 32], strides = [1, 1]} : vector<8x32xf32> to vector<1x32xf32>
      %376 = vector.broadcast %374 : vector<16x1xf32> to vector<16x32xf32>
      %377 = vector.broadcast %375 : vector<1x32xf32> to vector<16x32xf32>
      %378 = arith.mulf %376, %377 : vector<16x32xf32>
      %379 = arith.addf %373, %378 : vector<16x32xf32>
      %380 = vector.extract_strided_slice %269 {offsets = [16, 1], sizes = [16, 1], strides = [1, 1]} : vector<32x8xf32> to vector<16x1xf32>
      %381 = vector.broadcast %380 : vector<16x1xf32> to vector<16x32xf32>
      %382 = arith.mulf %381, %379 : vector<16x32xf32>
      %cst_191 = arith.constant dense<0.000000e+00> : vector<32xf32>
      %383 = vector.multi_reduction <add>, %382, %cst_191 [0] : vector<16x32xf32> to vector<32xf32>
      %384 = vector.shape_cast %383 : vector<32xf32> to vector<1x32xf32>
      %c0_i32_192 = arith.constant 0 : i32
      %385 = arith.addi %125, %c0_i32_192 : i32
      %c1_193 = arith.constant 1 : index
      %386 = arith.index_cast %385 : i32 to index
      %c0_194 = arith.constant 0 : index
      %c0_195 = arith.constant 0 : index
      %387 = vector.load %arg12[%c1_193, %386, %c0_194, %c0_195] : memref<2x64x16x32xf32, #tpu.memory_space<vmem>>, vector<1x1x16x32xf32>
      %388 = vector.shape_cast %387 : vector<1x1x16x32xf32> to vector<16x32xf32>
      %389 = arith.mulf %388, %379 : vector<16x32xf32>
      %390 = vector.extract_strided_slice %269 {offsets = [0, 0], sizes = [16, 1], strides = [1, 1]} : vector<32x8xf32> to vector<16x1xf32>
      %391 = vector.extract_strided_slice %272 {offsets = [0, 0], sizes = [1, 32], strides = [1, 1]} : vector<8x32xf32> to vector<1x32xf32>
      %392 = vector.broadcast %390 : vector<16x1xf32> to vector<16x32xf32>
      %393 = vector.broadcast %391 : vector<1x32xf32> to vector<16x32xf32>
      %394 = arith.mulf %392, %393 : vector<16x32xf32>
      %395 = arith.addf %389, %394 : vector<16x32xf32>
      %396 = vector.extract_strided_slice %269 {offsets = [16, 0], sizes = [16, 1], strides = [1, 1]} : vector<32x8xf32> to vector<16x1xf32>
      %397 = vector.broadcast %396 : vector<16x1xf32> to vector<16x32xf32>
      %398 = arith.mulf %397, %395 : vector<16x32xf32>
      %cst_196 = arith.constant dense<0.000000e+00> : vector<32xf32>
      %399 = vector.multi_reduction <add>, %398, %cst_196 [0] : vector<16x32xf32> to vector<32xf32>
      %400 = vector.shape_cast %399 : vector<32xf32> to vector<1x32xf32>
      %401 = tpu.concatenate %400, %384, %368, %352, %336, %320, %304, %288 in 0 : vector<1x32xf32>, vector<1x32xf32>, vector<1x32xf32>, vector<1x32xf32>, vector<1x32xf32>, vector<1x32xf32>, vector<1x32xf32>, vector<1x32xf32> -> vector<8x32xf32>
      %c0_197 = arith.constant 0 : index
      %c0_198 = arith.constant 0 : index
      %402 = arith.index_cast %125 : i32 to index
      %c0_199 = arith.constant 0 : index
      %403 = vector.load %arg11[%c0_197, %c0_198, %402, %c0_199] : memref<1x1x64x32xf32, #tpu.memory_space<vmem>>, vector<1x1x8x32xf32>
      %404 = vector.shape_cast %403 : vector<1x1x8x32xf32> to vector<8x32xf32>
      %405 = vector.shape_cast %401 : vector<8x32xf32> to vector<1x1x8x32xf32>
      tpu.vector_store %arg11[%c0_197, %c0_198, %402, %c0_199], %405 {strides = array<i32>} : memref<1x1x64x32xf32, #tpu.memory_space<vmem>>, vector<1x1x8x32xf32>,
      scf.yield %255, %395 : vector<16x32xf32>, vector<16x32xf32>
    }
    %c8_i32_73 = arith.constant 8 : i32
    %c0_74 = arith.constant 0 : index
    %c0_75 = arith.constant 0 : index
    %c0_76 = arith.constant 0 : index
    %91 = vector.load %arg15[%c0_74, %c0_75, %c0_76] : memref<2x16x32xf32, #tpu.memory_space<vmem>>, vector<1x16x32xf32>
    %92 = vector.shape_cast %91 : vector<1x16x32xf32> to vector<16x32xf32>
    %93 = vector.shape_cast %90#0 : vector<16x32xf32> to vector<1x16x32xf32>
    tpu.vector_store %arg15[%c0_74, %c0_75, %c0_76], %93 {strides = array<i32>} : memref<2x16x32xf32, #tpu.memory_space<vmem>>, vector<1x16x32xf32>,
    %c1_77 = arith.constant 1 : index
    %c0_78 = arith.constant 0 : index
    %c0_79 = arith.constant 0 : index
    %94 = vector.load %arg15[%c1_77, %c0_78, %c0_79] : memref<2x16x32xf32, #tpu.memory_space<vmem>>, vector<1x16x32xf32>
    %95 = vector.shape_cast %94 : vector<1x16x32xf32> to vector<16x32xf32>
    %96 = vector.shape_cast %90#1 : vector<16x32xf32> to vector<1x16x32xf32>
    tpu.vector_store %arg15[%c1_77, %c0_78, %c0_79], %96 {strides = array<i32>} : memref<2x16x32xf32, #tpu.memory_space<vmem>>, vector<1x16x32xf32>,
    %c0_80 = arith.constant 0 : index
    %c0_81 = arith.constant 0 : index
    %c0_82 = arith.constant 0 : index
    %c0_83 = arith.constant 0 : index
    %97 = vector.load %arg10[%c0_80, %c0_81, %c0_82, %c0_83] : memref<1x1x64x32xf32, #tpu.memory_space<vmem>>, vector<1x1x64x32xf32>
    %98 = vector.shape_cast %97 : vector<1x1x64x32xf32> to vector<64x32xf32>
    %c0_84 = arith.constant 0 : index
    %c0_85 = arith.constant 0 : index
    %c0_86 = arith.constant 0 : index
    %99 = vector.load %arg9[%c0_84, %c0_85, %c0_86] : memref<1x2x32xf32, #tpu.memory_space<vmem>>, vector<1x1x32xf32>
    %100 = vector.shape_cast %99 : vector<1x1x32xf32> to vector<1x32xf32>
    %c0_87 = arith.constant 0 : index
    %c0_88 = arith.constant 0 : index
    %c0_89 = arith.constant 0 : index
    %c0_90 = arith.constant 0 : index
    %101 = vector.load %arg3[%c0_87, %c0_88, %c0_89, %c0_90] : memref<1x1x64x32xf32, #tpu.memory_space<vmem>>, vector<1x1x64x32xf32>
    %102 = vector.shape_cast %101 : vector<1x1x64x32xf32> to vector<64x32xf32>
    %103 = vector.broadcast %100 : vector<1x32xf32> to vector<64x32xf32>
    %104 = arith.mulf %103, %102 : vector<64x32xf32>
    %105 = arith.addf %98, %104 : vector<64x32xf32>
    %c0_91 = arith.constant 0 : index
    %c0_92 = arith.constant 0 : index
    %c0_93 = arith.constant 0 : index
    %c0_94 = arith.constant 0 : index
    %106 = vector.load %arg10[%c0_91, %c0_92, %c0_93, %c0_94] : memref<1x1x64x32xf32, #tpu.memory_space<vmem>>, vector<1x1x64x32xf32>
    %107 = vector.shape_cast %106 : vector<1x1x64x32xf32> to vector<64x32xf32>
    %108 = vector.shape_cast %105 : vector<64x32xf32> to vector<1x1x64x32xf32>
    tpu.vector_store %arg10[%c0_91, %c0_92, %c0_93, %c0_94], %108 {strides = array<i32>} : memref<1x1x64x32xf32, #tpu.memory_space<vmem>>, vector<1x1x64x32xf32>,
    %c0_95 = arith.constant 0 : index
    %c0_96 = arith.constant 0 : index
    %c0_97 = arith.constant 0 : index
    %c0_98 = arith.constant 0 : index
    %109 = vector.load %arg11[%c0_95, %c0_96, %c0_97, %c0_98] : memref<1x1x64x32xf32, #tpu.memory_space<vmem>>, vector<1x1x64x32xf32>
    %110 = vector.shape_cast %109 : vector<1x1x64x32xf32> to vector<64x32xf32>
    %c0_99 = arith.constant 0 : index
    %c1_100 = arith.constant 1 : index
    %c0_101 = arith.constant 0 : index
    %111 = vector.load %arg9[%c0_99, %c1_100, %c0_101] : memref<1x2x32xf32, #tpu.memory_space<vmem>>, vector<1x1x32xf32>
    %112 = vector.shape_cast %111 : vector<1x1x32xf32> to vector<1x32xf32>
    %c0_102 = arith.constant 0 : index
    %c0_103 = arith.constant 0 : index
    %c0_104 = arith.constant 0 : index
    %c0_105 = arith.constant 0 : index
    %113 = vector.load %arg4[%c0_102, %c0_103, %c0_104, %c0_105] : memref<1x1x64x32xf32, #tpu.memory_space<vmem>>, vector<1x1x64x32xf32>
    %114 = vector.shape_cast %113 : vector<1x1x64x32xf32> to vector<64x32xf32>
    %115 = vector.broadcast %112 : vector<1x32xf32> to vector<64x32xf32>
    %116 = arith.mulf %115, %114 : vector<64x32xf32>
    %117 = arith.addf %110, %116 : vector<64x32xf32>
    %c0_106 = arith.constant 0 : index
    %c0_107 = arith.constant 0 : index
    %c0_108 = arith.constant 0 : index
    %c0_109 = arith.constant 0 : index
    %118 = vector.load %arg11[%c0_106, %c0_107, %c0_108, %c0_109] : memref<1x1x64x32xf32, #tpu.memory_space<vmem>>, vector<1x1x64x32xf32>
    %119 = vector.shape_cast %118 : vector<1x1x64x32xf32> to vector<64x32xf32>
    %120 = vector.shape_cast %117 : vector<64x32xf32> to vector<1x1x64x32xf32>
    tpu.vector_store %arg11[%c0_106, %c0_107, %c0_108, %c0_109], %120 {strides = array<i32>} : memref<1x1x64x32xf32, #tpu.memory_space<vmem>>, vector<1x1x64x32xf32>,
    return
  }
  func.func @transform_0(%arg0: i32, %arg1: i32, %arg2: i32) -> (i32, i32, i32, i32) {
    %c0_i32 = arith.constant 0 : i32
    %c0_i32_0 = arith.constant 0 : i32
    return %arg0, %arg1, %arg2, %c0_i32 : i32, i32, i32, i32
  }
  func.func @transform_1(%arg0: i32, %arg1: i32, %arg2: i32) -> (i32, i32, i32, i32) {
    %c0_i32 = arith.constant 0 : i32
    %0 = arith.subi %c0_i32, %arg2 : i32
    %c0_i32_0 = arith.constant 0 : i32
    %c0_i32_1 = arith.constant 0 : i32
    return %arg0, %arg1, %0, %c0_i32_0 : i32, i32, i32, i32
  }
  func.func @transform_2(%arg0: i32, %arg1: i32, %arg2: i32) -> (i32, i32, i32, i32) {
    %c0_i32 = arith.constant 0 : i32
    %c0_i32_0 = arith.constant 0 : i32
    %c0_i32_1 = arith.constant 0 : i32
    %c0_i32_2 = arith.constant 0 : i32
    return %arg1, %c0_i32, %c0_i32_0, %c0_i32_1 : i32, i32, i32, i32
  }
  func.func @transform_3(%arg0: i32, %arg1: i32, %arg2: i32) -> (i32, i32, i32, i32) {
    %c0_i32 = arith.constant 0 : i32
    %c0_i32_0 = arith.constant 0 : i32
    %c0_i32_1 = arith.constant 0 : i32
    %c0_i32_2 = arith.constant 0 : i32
    return %arg1, %c0_i32, %c0_i32_0, %c0_i32_1 : i32, i32, i32, i32
  }
  func.func @transform_4(%arg0: i32, %arg1: i32, %arg2: i32) -> (i32, i32, i32) {
    %c0_i32 = arith.constant 0 : i32
    %c0_i32_0 = arith.constant 0 : i32
    %c0_i32_1 = arith.constant 0 : i32
    return %arg1, %c0_i32, %c0_i32_0 : i32, i32, i32
  }
  func.func @transform_5(%arg0: i32, %arg1: i32, %arg2: i32) -> (i32, i32, i32, i32) {
    %c0_i32 = arith.constant 0 : i32
    %c0_i32_0 = arith.constant 0 : i32
    %c0_i32_1 = arith.constant 0 : i32
    %c0_i32_2 = arith.constant 0 : i32
    return %arg1, %c0_i32, %c0_i32_0, %c0_i32_1 : i32, i32, i32, i32
  }
  func.func @transform_6(%arg0: i32, %arg1: i32, %arg2: i32) -> (i32, i32, i32) {
    %c0_i32 = arith.constant 0 : i32
    %c0_i32_0 = arith.constant 0 : i32
    %c0_i32_1 = arith.constant 0 : i32
    return %arg1, %c0_i32, %c0_i32_0 : i32, i32, i32
  }
  func.func @transform_7(%arg0: i32, %arg1: i32, %arg2: i32) -> (i32, i32, i32, i32) {
    %c0_i32 = arith.constant 0 : i32
    %c0_i32_0 = arith.constant 0 : i32
    return %arg0, %arg1, %arg2, %c0_i32 : i32, i32, i32, i32
  }
  func.func @transform_8(%arg0: i32, %arg1: i32, %arg2: i32) -> (i32, i32, i32, i32) {
    %c0_i32 = arith.constant 0 : i32
    %0 = arith.subi %c0_i32, %arg2 : i32
    %c0_i32_0 = arith.constant 0 : i32
    %c0_i32_1 = arith.constant 0 : i32
    return %arg0, %arg1, %0, %c0_i32_0 : i32, i32, i32, i32
  }
}

module attributes {stable_mosaic.version = 11 : i64} {
  func.func @_gate_outproj_kernel(%arg0: i32, %arg1: memref<128x32xf32, #tpu.memory_space<vmem>>, %arg2: memref<128x32xf32, #tpu.memory_space<vmem>>, %arg3: memref<128x32xf32, #tpu.memory_space<vmem>>, %arg4: memref<128x16xf32, #tpu.memory_space<vmem>>, %arg5: memref<1x32xf32, #tpu.memory_space<vmem>>, %arg6: memref<1x32xf32, #tpu.memory_space<vmem>>, %arg7: memref<32x16xbf16, #tpu.memory_space<vmem>>, %arg8: memref<128x16xf32, #tpu.memory_space<vmem>>) attributes {dimension_semantics = [#tpu.dimension_semantics<parallel>], iteration_bounds = array<i64: 1>, scalar_prefetch = 0 : i64, scratch_operands = 0 : i64, tpu.core_type = #tpu.core_type<tc>, window_params = [{transform_indices = @transform_0, window_bounds = array<i64: 128, 32>}, {transform_indices = @transform_1, window_bounds = array<i64: 128, 32>}, {transform_indices = @transform_2, window_bounds = array<i64: 128, 32>}, {transform_indices = @transform_3, window_bounds = array<i64: 128, 16>}, {pipeline_mode = #tpu.pipeline_mode<synchronous>, transform_indices = @transform_4, window_bounds = array<i64: 1, 32>}, {pipeline_mode = #tpu.pipeline_mode<synchronous>, transform_indices = @transform_5, window_bounds = array<i64: 1, 32>}, {pipeline_mode = #tpu.pipeline_mode<synchronous>, transform_indices = @transform_6, window_bounds = array<i64: 32, 16>}, {transform_indices = @transform_7, window_bounds = array<i64: 128, 16>}]} {
    %c0 = arith.constant 0 : index
    %c0_0 = arith.constant 0 : index
    %0 = vector.load %arg1[%c0, %c0_0] : memref<128x32xf32, #tpu.memory_space<vmem>>, vector<128x32xf32>
    %c0_1 = arith.constant 0 : index
    %c0_2 = arith.constant 0 : index
    %1 = vector.load %arg2[%c0_1, %c0_2] : memref<128x32xf32, #tpu.memory_space<vmem>>, vector<128x32xf32>
    %2 = arith.addf %0, %1 : vector<128x32xf32>
    %cst = arith.constant dense<0.000000e+00> : vector<128xf32>
    %3 = vector.multi_reduction <add>, %2, %cst [1] : vector<128x32xf32> to vector<128xf32>
    %4 = vector.shape_cast %3 : vector<128xf32> to vector<128x1xf32>
    %cst_3 = arith.constant 3.200000e+01 : f32
    %5 = vector.broadcast %cst_3 : f32 to vector<128x1xf32>
    %6 = arith.divf %4, %5 : vector<128x1xf32>
    %7 = vector.broadcast %6 : vector<128x1xf32> to vector<128x32xf32>
    %8 = arith.subf %2, %7 : vector<128x32xf32>
    %9 = arith.mulf %8, %8 : vector<128x32xf32>
    %cst_4 = arith.constant dense<0.000000e+00> : vector<128xf32>
    %10 = vector.multi_reduction <add>, %9, %cst_4 [1] : vector<128x32xf32> to vector<128xf32>
    %11 = vector.shape_cast %10 : vector<128xf32> to vector<128x1xf32>
    %cst_5 = arith.constant 3.200000e+01 : f32
    %12 = vector.broadcast %cst_5 : f32 to vector<128x1xf32>
    %13 = arith.divf %11, %12 : vector<128x1xf32>
    %14 = vector.broadcast %6 : vector<128x1xf32> to vector<128x32xf32>
    %15 = arith.subf %2, %14 : vector<128x32xf32>
    %cst_6 = arith.constant 9.99999974E-6 : f32
    %16 = vector.broadcast %cst_6 : f32 to vector<128x1xf32>
    %17 = arith.addf %13, %16 : vector<128x1xf32>
    %18 = math.rsqrt %17 : vector<128x1xf32>
    %19 = vector.broadcast %18 : vector<128x1xf32> to vector<128x32xf32>
    %20 = arith.mulf %15, %19 : vector<128x32xf32>
    %c0_7 = arith.constant 0 : index
    %c0_8 = arith.constant 0 : index
    %21 = vector.load %arg5[%c0_7, %c0_8] : memref<1x32xf32, #tpu.memory_space<vmem>>, vector<1x32xf32>
    %22 = vector.broadcast %21 : vector<1x32xf32> to vector<128x32xf32>
    %23 = arith.mulf %20, %22 : vector<128x32xf32>
    %c0_9 = arith.constant 0 : index
    %c0_10 = arith.constant 0 : index
    %24 = vector.load %arg6[%c0_9, %c0_10] : memref<1x32xf32, #tpu.memory_space<vmem>>, vector<1x32xf32>
    %25 = vector.broadcast %24 : vector<1x32xf32> to vector<128x32xf32>
    %26 = arith.addf %23, %25 : vector<128x32xf32>
    %c0_11 = arith.constant 0 : index
    %c0_12 = arith.constant 0 : index
    %27 = vector.load %arg3[%c0_11, %c0_12] : memref<128x32xf32, #tpu.memory_space<vmem>>, vector<128x32xf32>
    %cst_13 = arith.constant 0.000000e+00 : f32
    %28 = vector.broadcast %cst_13 : f32 to vector<128x32xf32>
    %29 = arith.subf %28, %27 : vector<128x32xf32>
    %30 = math.exp %29 : vector<128x32xf32>
    %cst_14 = arith.constant 1.000000e+00 : f32
    %31 = vector.broadcast %cst_14 : f32 to vector<128x32xf32>
    %32 = arith.addf %31, %30 : vector<128x32xf32>
    %cst_15 = arith.constant 1.000000e+00 : f32
    %33 = vector.broadcast %cst_15 : f32 to vector<128x32xf32>
    %34 = arith.divf %33, %32 : vector<128x32xf32>
    %35 = arith.mulf %27, %34 : vector<128x32xf32>
    %36 = arith.mulf %26, %35 : vector<128x32xf32>
    %37 = arith.truncf %36 : vector<128x32xf32> to vector<128x32xbf16>
    %c0_16 = arith.constant 0 : index
    %c0_17 = arith.constant 0 : index
    %38 = vector.load %arg7[%c0_16, %c0_17] : memref<32x16xbf16, #tpu.memory_space<vmem>>, vector<32x16xbf16>
    %cst_18 = arith.constant dense<0.000000e+00> : vector<128x16xf32>
    %39 = tpu.matmul %37, %38, %cst_18 {dimension_numbers = #tpu.dot_dimension_numbers<[1], [0], [0], [1], [0, 0, 1, 1], [], []>} : vector<128x32xbf16>, vector<32x16xbf16>, vector<128x16xf32> -> vector<128x16xf32>
    %c0_19 = arith.constant 0 : index
    %c0_20 = arith.constant 0 : index
    %40 = vector.load %arg4[%c0_19, %c0_20] : memref<128x16xf32, #tpu.memory_space<vmem>>, vector<128x16xf32>
    %41 = arith.addf %39, %40 : vector<128x16xf32>
    %c0_21 = arith.constant 0 : index
    %c0_22 = arith.constant 0 : index
    %42 = vector.load %arg8[%c0_21, %c0_22] : memref<128x16xf32, #tpu.memory_space<vmem>>, vector<128x16xf32>
    tpu.vector_store %arg8[%c0_21, %c0_22], %41 {strides = array<i32>} : memref<128x16xf32, #tpu.memory_space<vmem>>, vector<128x16xf32>,
    return
  }
  func.func @transform_0(%arg0: i32) -> (i32, i32) {
    %c0_i32 = arith.constant 0 : i32
    %c0_i32_0 = arith.constant 0 : i32
    return %arg0, %c0_i32 : i32, i32
  }
  func.func @transform_1(%arg0: i32) -> (i32, i32) {
    %c0_i32 = arith.constant 0 : i32
    %c0_i32_0 = arith.constant 0 : i32
    return %arg0, %c0_i32 : i32, i32
  }
  func.func @transform_2(%arg0: i32) -> (i32, i32) {
    %c0_i32 = arith.constant 0 : i32
    %c0_i32_0 = arith.constant 0 : i32
    return %arg0, %c0_i32 : i32, i32
  }
  func.func @transform_3(%arg0: i32) -> (i32, i32) {
    %c0_i32 = arith.constant 0 : i32
    %c0_i32_0 = arith.constant 0 : i32
    return %arg0, %c0_i32 : i32, i32
  }
  func.func @transform_4(%arg0: i32) -> (i32, i32) {
    %c0_i32 = arith.constant 0 : i32
    %c0_i32_0 = arith.constant 0 : i32
    %c0_i32_1 = arith.constant 0 : i32
    return %c0_i32, %c0_i32_0 : i32, i32
  }
  func.func @transform_5(%arg0: i32) -> (i32, i32) {
    %c0_i32 = arith.constant 0 : i32
    %c0_i32_0 = arith.constant 0 : i32
    %c0_i32_1 = arith.constant 0 : i32
    return %c0_i32, %c0_i32_0 : i32, i32
  }
  func.func @transform_6(%arg0: i32) -> (i32, i32) {
    %c0_i32 = arith.constant 0 : i32
    %c0_i32_0 = arith.constant 0 : i32
    %c0_i32_1 = arith.constant 0 : i32
    return %c0_i32, %c0_i32_0 : i32, i32
  }
  func.func @transform_7(%arg0: i32) -> (i32, i32) {
    %c0_i32 = arith.constant 0 : i32
    %c0_i32_0 = arith.constant 0 : i32
    return %arg0, %c0_i32 : i32, i32
  }
}

module attributes {stable_mosaic.version = 11 : i64} {
  func.func @_ln_inproj_kernel(%arg0: i32, %arg1: memref<128x16xf32, #tpu.memory_space<vmem>>, %arg2: memref<1x16xf32, #tpu.memory_space<vmem>>, %arg3: memref<1x16xf32, #tpu.memory_space<vmem>>, %arg4: memref<16x32xbf16, #tpu.memory_space<vmem>>, %arg5: memref<16x32xbf16, #tpu.memory_space<vmem>>, %arg6: memref<128x32xf32, #tpu.memory_space<vmem>>, %arg7: memref<128x32xf32, #tpu.memory_space<vmem>>) attributes {dimension_semantics = [#tpu.dimension_semantics<parallel>], iteration_bounds = array<i64: 1>, scalar_prefetch = 0 : i64, scratch_operands = 0 : i64, tpu.core_type = #tpu.core_type<tc>, window_params = [{transform_indices = @transform_0, window_bounds = array<i64: 128, 16>}, {pipeline_mode = #tpu.pipeline_mode<synchronous>, transform_indices = @transform_1, window_bounds = array<i64: 1, 16>}, {pipeline_mode = #tpu.pipeline_mode<synchronous>, transform_indices = @transform_2, window_bounds = array<i64: 1, 16>}, {pipeline_mode = #tpu.pipeline_mode<synchronous>, transform_indices = @transform_3, window_bounds = array<i64: 16, 32>}, {pipeline_mode = #tpu.pipeline_mode<synchronous>, transform_indices = @transform_4, window_bounds = array<i64: 16, 32>}, {transform_indices = @transform_5, window_bounds = array<i64: 128, 32>}, {transform_indices = @transform_6, window_bounds = array<i64: 128, 32>}]} {
    %c0 = arith.constant 0 : index
    %c0_0 = arith.constant 0 : index
    %0 = vector.load %arg1[%c0, %c0_0] : memref<128x16xf32, #tpu.memory_space<vmem>>, vector<128x16xf32>
    %cst = arith.constant dense<0.000000e+00> : vector<128xf32>
    %1 = vector.multi_reduction <add>, %0, %cst [1] : vector<128x16xf32> to vector<128xf32>
    %2 = vector.shape_cast %1 : vector<128xf32> to vector<128x1xf32>
    %cst_1 = arith.constant 1.600000e+01 : f32
    %3 = vector.broadcast %cst_1 : f32 to vector<128x1xf32>
    %4 = arith.divf %2, %3 : vector<128x1xf32>
    %5 = vector.broadcast %4 : vector<128x1xf32> to vector<128x16xf32>
    %6 = arith.subf %0, %5 : vector<128x16xf32>
    %7 = arith.mulf %6, %6 : vector<128x16xf32>
    %cst_2 = arith.constant dense<0.000000e+00> : vector<128xf32>
    %8 = vector.multi_reduction <add>, %7, %cst_2 [1] : vector<128x16xf32> to vector<128xf32>
    %9 = vector.shape_cast %8 : vector<128xf32> to vector<128x1xf32>
    %cst_3 = arith.constant 1.600000e+01 : f32
    %10 = vector.broadcast %cst_3 : f32 to vector<128x1xf32>
    %11 = arith.divf %9, %10 : vector<128x1xf32>
    %12 = vector.broadcast %4 : vector<128x1xf32> to vector<128x16xf32>
    %13 = arith.subf %0, %12 : vector<128x16xf32>
    %cst_4 = arith.constant 9.99999974E-6 : f32
    %14 = vector.broadcast %cst_4 : f32 to vector<128x1xf32>
    %15 = arith.addf %11, %14 : vector<128x1xf32>
    %16 = math.rsqrt %15 : vector<128x1xf32>
    %17 = vector.broadcast %16 : vector<128x1xf32> to vector<128x16xf32>
    %18 = arith.mulf %13, %17 : vector<128x16xf32>
    %c0_5 = arith.constant 0 : index
    %c0_6 = arith.constant 0 : index
    %19 = vector.load %arg2[%c0_5, %c0_6] : memref<1x16xf32, #tpu.memory_space<vmem>>, vector<1x16xf32>
    %20 = vector.broadcast %19 : vector<1x16xf32> to vector<128x16xf32>
    %21 = arith.mulf %18, %20 : vector<128x16xf32>
    %c0_7 = arith.constant 0 : index
    %c0_8 = arith.constant 0 : index
    %22 = vector.load %arg3[%c0_7, %c0_8] : memref<1x16xf32, #tpu.memory_space<vmem>>, vector<1x16xf32>
    %23 = vector.broadcast %22 : vector<1x16xf32> to vector<128x16xf32>
    %24 = arith.addf %21, %23 : vector<128x16xf32>
    %25 = arith.truncf %24 : vector<128x16xf32> to vector<128x16xbf16>
    %c0_9 = arith.constant 0 : index
    %c0_10 = arith.constant 0 : index
    %26 = vector.load %arg4[%c0_9, %c0_10] : memref<16x32xbf16, #tpu.memory_space<vmem>>, vector<16x32xbf16>
    %cst_11 = arith.constant dense<0.000000e+00> : vector<128x32xf32>
    %27 = tpu.matmul %25, %26, %cst_11 {dimension_numbers = #tpu.dot_dimension_numbers<[1], [0], [0], [1], [0, 0, 1, 1], [], []>} : vector<128x16xbf16>, vector<16x32xbf16>, vector<128x32xf32> -> vector<128x32xf32>
    %c0_12 = arith.constant 0 : index
    %c0_13 = arith.constant 0 : index
    %28 = vector.load %arg6[%c0_12, %c0_13] : memref<128x32xf32, #tpu.memory_space<vmem>>, vector<128x32xf32>
    tpu.vector_store %arg6[%c0_12, %c0_13], %27 {strides = array<i32>} : memref<128x32xf32, #tpu.memory_space<vmem>>, vector<128x32xf32>,
    %c0_14 = arith.constant 0 : index
    %c0_15 = arith.constant 0 : index
    %29 = vector.load %arg5[%c0_14, %c0_15] : memref<16x32xbf16, #tpu.memory_space<vmem>>, vector<16x32xbf16>
    %cst_16 = arith.constant dense<0.000000e+00> : vector<128x32xf32>
    %30 = tpu.matmul %25, %29, %cst_16 {dimension_numbers = #tpu.dot_dimension_numbers<[1], [0], [0], [1], [0, 0, 1, 1], [], []>} : vector<128x16xbf16>, vector<16x32xbf16>, vector<128x32xf32> -> vector<128x32xf32>
    %c0_17 = arith.constant 0 : index
    %c0_18 = arith.constant 0 : index
    %31 = vector.load %arg7[%c0_17, %c0_18] : memref<128x32xf32, #tpu.memory_space<vmem>>, vector<128x32xf32>
    tpu.vector_store %arg7[%c0_17, %c0_18], %30 {strides = array<i32>} : memref<128x32xf32, #tpu.memory_space<vmem>>, vector<128x32xf32>,
    return
  }
  func.func @transform_0(%arg0: i32) -> (i32, i32) {
    %c0_i32 = arith.constant 0 : i32
    %c0_i32_0 = arith.constant 0 : i32
    return %arg0, %c0_i32 : i32, i32
  }
  func.func @transform_1(%arg0: i32) -> (i32, i32) {
    %c0_i32 = arith.constant 0 : i32
    %c0_i32_0 = arith.constant 0 : i32
    %c0_i32_1 = arith.constant 0 : i32
    return %c0_i32, %c0_i32_0 : i32, i32
  }
  func.func @transform_2(%arg0: i32) -> (i32, i32) {
    %c0_i32 = arith.constant 0 : i32
    %c0_i32_0 = arith.constant 0 : i32
    %c0_i32_1 = arith.constant 0 : i32
    return %c0_i32, %c0_i32_0 : i32, i32
  }
  func.func @transform_3(%arg0: i32) -> (i32, i32) {
    %c0_i32 = arith.constant 0 : i32
    %c0_i32_0 = arith.constant 0 : i32
    %c0_i32_1 = arith.constant 0 : i32
    return %c0_i32, %c0_i32_0 : i32, i32
  }
  func.func @transform_4(%arg0: i32) -> (i32, i32) {
    %c0_i32 = arith.constant 0 : i32
    %c0_i32_0 = arith.constant 0 : i32
    %c0_i32_1 = arith.constant 0 : i32
    return %c0_i32, %c0_i32_0 : i32, i32
  }
  func.func @transform_5(%arg0: i32) -> (i32, i32) {
    %c0_i32 = arith.constant 0 : i32
    %c0_i32_0 = arith.constant 0 : i32
    return %arg0, %c0_i32 : i32, i32
  }
  func.func @transform_6(%arg0: i32) -> (i32, i32) {
    %c0_i32 = arith.constant 0 : i32
    %c0_i32_0 = arith.constant 0 : i32
    return %arg0, %c0_i32 : i32, i32
  }
}

</mosaic_0001>

<llo_original>
// kernel: mewb1_forward.9
$region0: #{mewb1_forward.9}
  #allocation0 [shape = 'u32[]', space=smem, size = 0x4, offset = 0x4, fixed_abs, tag = 'smem constant byte address 0x4 - core index']
  #allocation1 [shape = 'u32[72,128]{1,0:T(1,128)}', space=vmem, size = 0x9000, scoped, tag = 'internal scratch']
  #allocation2 [shape = 'f32[10,10,32]{2,1,0:T(8,128)}', space=vmem, size = 0x14000, scoped, tag = 'scratch operand']
  %s0 = inlined_call_operand.vmem [shape: f32[2,8,8,32], index: 0, kind: input, shape index: {}]
  %s1 = inlined_call_operand.vmem [shape: f32[9,32], index: 1, kind: input, shape index: {}]
  %s2 = inlined_call_operand.vmem [shape: f32[1,32], index: 2, kind: input, shape index: {}]
  %s3 = inlined_call_operand.vmem [shape: f32[2,8,8,32], index: 3, kind: output, shape index: {}]
  %s4 = sld [smem:[#allocation0]]
  $region45: #{mewb1_forward.9} parent=0
    _
  %s6 = ssub.s32 1, %s4
  %s7 = scalar_select 0, %s6, %s4
  loop: start=0, step=1, limit=4
  $region2: #{mewb1_forward.9} parent=0 // loop_pre_header
    _
  $region3: #{mewb1_forward.9} parent=0 // loop_header
    %s9 = sphi 0, %s13
    %p10 = scmp.ge.s32.totalorder %s9, 4
    %s19 = sphi 0, %s21
    %s22 = sphi 0, %s19
    %s23 = sphi 0, %s22
    %s39 = sphi 0, %s23
    %s43 = sphi 0, %s43
    %s45 = sphi 0, %s43
    %s46 = sphi 0, %s45
    %s60 = sphi 0, %s46
    %s64 = sphi 0, %s64
    %s66 = sphi 0, %s64
    %s67 = sphi 0, %s66
    %s81 = sphi 0, %s67
    %s87 = sphi 0, %s89
    %s90 = sphi 0, %s87
    %s91 = sphi 0, %s90
    %s107 = sphi 0, %s91
  $region4: #{mewb1_forward.9} parent=0 // loop_header_branch
    %12 = sbr.rel (%p10) target = $region8
  $region5: #{mewb1_forward.9} parent=0 // loop_body
    %s14 = ssub.s32 %s9, 1
    %s15 = ssub.s32 %s9, 2
    %s16 = sadd.s32 %s9, 1
    %s17 = ssub.s32 %s9, %s16
    %p18 = scmp.eq.s32.totalorder %s17, 0
    %s20 = sadd.s32 %s19, 1
    %s21 = scalar_select %p18, %s19, %s20
    %p24 = pneg %p18
    %p25 = scmp.eq.s32.totalorder %s9, 1
    %p26 = por %p24, %p25
    %p27 = scmp.ne.s32.totalorder %s19, %s22
    %p28 = scmp.eq.s32.totalorder %s9, 0
    %p29 = por %p27, %p28
    %p30 = scmp.ne.s32.totalorder %s19, %s22
    %p31 = scmp.eq.s32.totalorder %s14, 1
    %p32 = por %p30, %p31
    %p33 = scmp.ne.s32.totalorder %s22, %s23
    %p34 = scmp.eq.s32.totalorder %s14, 0
    %p35 = por %p33, %p34
    %p36 = scmp.ne.s32.totalorder %s22, %s23
    %p37 = scmp.eq.s32.totalorder %s15, 1
    %p38 = por %p36, %p37
    %p40 = scmp.ne.s32.totalorder %s23, %s39
    %p41 = scmp.eq.s32.totalorder %s15, 0
    %p42 = por %p40, %p41
    %s44 = sadd.s32 %s43, 1
    %p47 = scmp.eq.s32.totalorder %s9, 1
    %p48 = scmp.ne.s32.totalorder %s43, %s45
    %p49 = scmp.eq.s32.totalorder %s9, 0
    %p50 = por %p48, %p49
    %p51 = scmp.ne.s32.totalorder %s43, %s45
    %p52 = scmp.eq.s32.totalorder %s14, 1
    %p53 = por %p51, %p52
    %p54 = scmp.ne.s32.totalorder %s45, %s46
    %p55 = scmp.eq.s32.totalorder %s14, 0
    %p56 = por %p54, %p55
    %p57 = scmp.ne.s32.totalorder %s45, %s46
    %p58 = scmp.eq.s32.totalorder %s15, 1
    %p59 = por %p57, %p58
    %p61 = scmp.ne.s32.totalorder %s46, %s60
    %p62 = scmp.eq.s32.totalorder %s15, 0
    %p63 = por %p61, %p62
    %s65 = sadd.s32 %s64, 1
    %p68 = scmp.eq.s32.totalorder %s9, 1
    %p69 = scmp.ne.s32.totalorder %s64, %s66
    %p70 = scmp.eq.s32.totalorder %s9, 0
    %p71 = por %p69, %p70
    %p72 = scmp.ne.s32.totalorder %s64, %s66
    %p73 = scmp.eq.s32.totalorder %s14, 1
    %p74 = por %p72, %p73
    %p75 = scmp.ne.s32.totalorder %s66, %s67
    %p76 = scmp.eq.s32.totalorder %s14, 0
    %p77 = por %p75, %p76
    %p78 = scmp.ne.s32.totalorder %s66, %s67
    %p79 = scmp.eq.s32.totalorder %s15, 1
    %p80 = por %p78, %p79
    %p82 = scmp.ne.s32.totalorder %s67, %s81
    %p83 = scmp.eq.s32.totalorder %s15, 0
    %p84 = por %p82, %p83
    %s85 = ssub.s32 %s9, %s16
    %p86 = scmp.eq.s32.totalorder %s85, 0
    %s88 = sadd.s32 %s87, 1
    %s89 = scalar_select %p86, %s87, %s88
    %p92 = pneg %p86
    %p93 = scmp.eq.s32.totalorder %s9, 1
    %p94 = por %p92, %p93
    %p95 = scmp.ne.s32.totalorder %s87, %s90
    %p96 = scmp.eq.s32.totalorder %s9, 0
    %p97 = por %p95, %p96
    %p98 = scmp.ne.s32.totalorder %s87, %s90
    %p99 = scmp.eq.s32.totalorder %s14, 1
    %p100 = por %p98, %p99
    %p101 = scmp.ne.s32.totalorder %s90, %s91
    %p102 = scmp.eq.s32.totalorder %s14, 0
    %p103 = por %p101, %p102
    %p104 = scmp.ne.s32.totalorder %s90, %s91
    %p105 = scmp.eq.s32.totalorder %s15, 1
    %p106 = por %p104, %p105
    %p108 = scmp.ne.s32.totalorder %s91, %s107
    %p109 = scmp.eq.s32.totalorder %s15, 0
    %p110 = por %p108, %p109
    %p111 = scmp.le.s32.totalorder 1, %s9
    %p112 = scmp.lt.s32.totalorder %s9, 3
    %p113 = pnand %p111, %p112
    %p114 = pneg %p113
    // Predicated region
    $region9: #{mewb1_forward.9} parent=5 // pred_check
      _
    $region10: #{mewb1_forward.9} parent=5 // pred_check_branch
      %116 = sbr.rel (%p113) target = $region12
    $region11: #{mewb1_forward.9} parent=5 // pred_region
      %s117 = ssub.s32 %s9, 1
      // Predicated region
      $region13: #{mewb1_forward.9} parent=11 // pred_check
        %p118 = pneg %p56
      $region14: #{mewb1_forward.9} parent=11 // pred_check_branch
        %120 = sbr.rel (%p118) target = $region16
      $region15: #{mewb1_forward.9} parent=11 // pred_region
        _
      $region16: #{mewb1_forward.9} parent=11 // pred_fallthru
        _
      // Predicated region
      $region17: #{mewb1_forward.9} parent=11 // pred_check
        %p121 = pneg %p77
      $region18: #{mewb1_forward.9} parent=11 // pred_check_branch
        %123 = sbr.rel (%p121) target = $region20
      $region19: #{mewb1_forward.9} parent=11 // pred_region
        _
      $region20: #{mewb1_forward.9} parent=11 // pred_fallthru
        _
    $region12: #{mewb1_forward.9} parent=5 // pred_fallthru
      _
    %p124 = scmp.lt.s32.totalorder %s9, 2
    // Predicated region
    $region21: #{mewb1_forward.9} parent=5 // pred_check
      %p125 = pneg %p124
    $region22: #{mewb1_forward.9} parent=5 // pred_check_branch
      %127 = sbr.rel (%p125) target = $region24
    $region23: #{mewb1_forward.9} parent=5 // pred_region
      // Predicated region
      $region25: #{mewb1_forward.9} parent=23 // pred_check
        %p128 = pneg %p29
      $region26: #{mewb1_forward.9} parent=23 // pred_check_branch
        %130 = sbr.rel (%p128) target = $region28
      $region27: #{mewb1_forward.9} parent=23 // pred_region
        %p131 = scmp.lt.s32.totalorder %s9, 1
        %s132 = scalar_select %p131, %s9, 1
        %s133 = smul.addr %s132, 8
        %s134 = smul.addr %s133, 8
        %s135 = scalar_lea.vmem %s0, %s134
      $region28: #{mewb1_forward.9} parent=23 // pred_fallthru
        _
    $region24: #{mewb1_forward.9} parent=5 // pred_fallthru
      _
    %p136 = scmp.le.s32.totalorder 1, %s9
    %p137 = scmp.lt.s32.totalorder %s9, 3
    %p138 = pnand %p136, %p137
    %p139 = pneg %p138
    // Predicated region
    $region29: #{mewb1_forward.9} parent=5 // pred_check
      _
    $region30: #{mewb1_forward.9} parent=5 // pred_check_branch
      %141 = sbr.rel (%p138) target = $region32
    $region31: #{mewb1_forward.9} parent=5 // pred_region
      %s142 = ssub.s32 %s9, 1
      %p143 = scmp.lt.s32.totalorder %s14, 1
      %s144 = scalar_select %p143, %s14, 1
      %s145 = smul.addr %s144, 8
      %s146 = smul.addr %s145, 8
      %s147 = scalar_lea.vmem %s0, %s146
      %p148 = pneg %p35
      %p149 = pneg %p32
      %p150 = pneg %p56
      %p151 = pneg %p53
      %p152 = pneg %p77
      %p153 = pneg %p74
      %p154 = pneg %p103
      %p155 = pneg %p100
      %p156 = scmp.lt.s32.totalorder %s14, 1
      %s157 = scalar_select %p156, %s14, 1
      %s158 = smul.addr %s157, 8
      %s159 = smul.addr %s158, 8
      %s160 = scalar_lea.vmem %s3, %s159
      %p161 = scmp.lt.s32.totalorder %s14, 1
      %s162 = scalar_select %p161, %s14, 1
      %s163 = smul.addr %s162, 8
      %s164 = smul.addr %s163, 8
      %s165 = scalar_lea.vmem %s0, %s164
      %p166 = scmp.lt.s32.totalorder %s14, 1
      %s167 = scalar_select %p166, %s14, 1
      %s168 = smul.addr %s167, 8
      %s169 = smul.addr %s168, 8
      %s170 = scalar_lea.vmem %s3, %s169
      %vm171 = vcmask 261120
      %172 = vst.msk [vmem:[#allocation2] sm:$0xff] %vm171, 0.0
      %vm173 = vcmask 254976
      %174 = vst.msk [vmem:[#allocation2 + $0x8] sm:$0x3] %vm173, 0.0
      %175 = vst.msk [vmem:[#allocation2 + $0x10] sm:$0xff] %vm171, 0.0
      %176 = vst.msk [vmem:[#allocation2 + $0x18] sm:$0x3] %vm173, 0.0
      %177 = vst.msk [vmem:[#allocation2 + $0x20] sm:$0xff] %vm171, 0.0
      %178 = vst.msk [vmem:[#allocation2 + $0x28] sm:$0x3] %vm173, 0.0
      %179 = vst.msk [vmem:[#allocation2 + $0x30] sm:$0xff] %vm171, 0.0
      %180 = vst.msk [vmem:[#allocation2 + $0x38] sm:$0x3] %vm173, 0.0
      %181 = vst.msk [vmem:[#allocation2 + $0x40] sm:$0xff] %vm171, 0.0
      %182 = vst.msk [vmem:[#allocation2 + $0x48] sm:$0x3] %vm173, 0.0
      %183 = vst.msk [vmem:[#allocation2 + $0x50] sm:$0xff] %vm171, 0.0
      %184 = vst.msk [vmem:[#allocation2 + $0x58] sm:$0x3] %vm173, 0.0
      %185 = vst.msk [vmem:[#allocation2 + $0x60] sm:$0xff] %vm171, 0.0
      %186 = vst.msk [vmem:[#allocation2 + $0x68] sm:$0x3] %vm173, 0.0
      %187 = vst.msk [vmem:[#allocation2 + $0x70] sm:$0xff] %vm171, 0.0
      %188 = vst.msk [vmem:[#allocation2 + $0x78] sm:$0x3] %vm173, 0.0
      %189 = vst.msk [vmem:[#allocation2 + $0x80] sm:$0xff] %vm171, 0.0
      %190 = vst.msk [vmem:[#allocation2 + $0x88] sm:$0x3] %vm173, 0.0
      %191 = vst.msk [vmem:[#allocation2 + $0x90] sm:$0xff] %vm171, 0.0
      %192 = vst.msk [vmem:[#allocation2 + $0x98] sm:$0x3] %vm173, 0.0
      %v193 = vld [vmem:[%s165] sm:$0xff]
      %v194 = vld [vmem:[%s165 + $0x8] sm:$0xff]
      %v195 = vld [vmem:[%s165 + $0x10] sm:$0xff]
      %v196 = vld [vmem:[%s165 + $0x18] sm:$0xff]
      %v197 = vld [vmem:[%s165 + $0x20] sm:$0xff]
      %v198 = vld [vmem:[%s165 + $0x28] sm:$0xff]
      %v199 = vld [vmem:[%s165 + $0x30] sm:$0xff]
      %v200 = vld [vmem:[%s165 + $0x38] sm:$0xff]
      %s201 = scalar_lea.vmem [#allocation2], 16
      %202 = vst.msk [vmem:[%s201 + $0x1] sm:$0xff] %vm171, %v193
      %203 = vst.msk [vmem:[%s201 + $0x11] sm:$0xff] %vm171, %v194
      %204 = vst.msk [vmem:[%s201 + $0x21] sm:$0xff] %vm171, %v195
      %205 = vst.msk [vmem:[%s201 + $0x31] sm:$0xff] %vm171, %v196
      %206 = vst.msk [vmem:[%s201 + $0x41] sm:$0xff] %vm171, %v197
      %207 = vst.msk [vmem:[%s201 + $0x51] sm:$0xff] %vm171, %v198
      %208 = vst.msk [vmem:[%s201 + $0x61] sm:$0xff] %vm171, %v199
      %209 = vst.msk [vmem:[%s201 + $0x71] sm:$0xff] %vm171, %v200
      %v210 = vld [vmem:[#allocation2] sm:$0xff]
      %v211 = vld [vmem:[#allocation2 + $0x10] sm:$0xff]
      %v212 = vld [vmem:[#allocation2 + $0x20] sm:$0xff]
      %v213 = vld [vmem:[#allocation2 + $0x30] sm:$0xff]
      %v214 = vld [vmem:[#allocation2 + $0x40] sm:$0xff]
      %v215 = vld [vmem:[#allocation2 + $0x50] sm:$0xff]
      %v216 = vld [vmem:[#allocation2 + $0x60] sm:$0xff]
      %v217 = vld [vmem:[#allocation2 + $0x70] sm:$0xff]
      %v218 = vld [vmem:[%s1] sm:$0x1]
      %v219 = vperm.slane %v218, 0
      %v220 = vmul.f32 %v210, %v219
      %v221 = vmul.f32 %v211, %v219
      %v222 = vmul.f32 %v212, %v219
      %v223 = vmul.f32 %v213, %v219
      %v224 = vmul.f32 %v214, %v219
      %v225 = vmul.f32 %v215, %v219
      %v226 = vmul.f32 %v216, %v219
      %v227 = vmul.f32 %v217, %v219
      %v228 = vadd.f32 %v220, 0.0
      %v229 = vadd.f32 %v221, 0.0
      %v230 = vadd.f32 %v222, 0.0
      %v231 = vadd.f32 %v223, 0.0
      %v232 = vadd.f32 %v224, 0.0
      %v233 = vadd.f32 %v225, 0.0
      %v234 = vadd.f32 %v226, 0.0
      %v235 = vadd.f32 %v227, 0.0
      %v236 = vld [vmem:[#allocation2 + $0x1] sm:$0xff]
      %v237 = vld [vmem:[#allocation2 + $0x11] sm:$0xff]
      %v238 = vld [vmem:[#allocation2 + $0x21] sm:$0xff]
      %v239 = vld [vmem:[#allocation2 + $0x31] sm:$0xff]
      %v240 = vld [vmem:[#allocation2 + $0x41] sm:$0xff]
      %v241 = vld [vmem:[#allocation2 + $0x51] sm:$0xff]
      %v242 = vld [vmem:[#allocation2 + $0x61] sm:$0xff]
      %v243 = vld [vmem:[#allocation2 + $0x71] sm:$0xff]
      %v244 = vld [vmem:[%s1 + $0x1] sm:$0x1]
      %v245 = vperm.slane %v244, 0
      %v246 = vmul.f32 %v236, %v245
      %v247 = vmul.f32 %v237, %v245
      %v248 = vmul.f32 %v238, %v245
      %v249 = vmul.f32 %v239, %v245
      %v250 = vmul.f32 %v240, %v245
      %v251 = vmul.f32 %v241, %v245
      %v252 = vmul.f32 %v242, %v245
      %v253 = vmul.f32 %v243, %v245
      %v254 = vadd.f32 %v228, %v246
      %v255 = vadd.f32 %v229, %v247
      %v256 = vadd.f32 %v230, %v248
      %v257 = vadd.f32 %v231, %v249
      %v258 = vadd.f32 %v232, %v250
      %v259 = vadd.f32 %v233, %v251
      %v260 = vadd.f32 %v234, %v252
      %v261 = vadd.f32 %v235, %v253
      %v262 = vld [vmem:[#allocation2 + $0x2] sm:$0xff]
      %v263 = vld [vmem:[#allocation2 + $0x12] sm:$0xff]
      %v264 = vld [vmem:[#allocation2 + $0x22] sm:$0xff]
      %v265 = vld [vmem:[#allocation2 + $0x32] sm:$0xff]
      %v266 = vld [vmem:[#allocation2 + $0x42] sm:$0xff]
      %v267 = vld [vmem:[#allocation2 + $0x52] sm:$0xff]
      %v268 = vld [vmem:[#allocation2 + $0x62] sm:$0xff]
      %v269 = vld [vmem:[#allocation2 + $0x72] sm:$0xff]
      %v270 = vld [vmem:[%s1 + $0x2] sm:$0x1]
      %v271 = vperm.slane %v270, 0
      %v272 = vmul.f32 %v262, %v271
      %v273 = vmul.f32 %v263, %v271
      %v274 = vmul.f32 %v264, %v271
      %v275 = vmul.f32 %v265, %v271
      %v276 = vmul.f32 %v266, %v271
      %v277 = vmul.f32 %v267, %v271
      %v278 = vmul.f32 %v268, %v271
      %v279 = vmul.f32 %v269, %v271
      %v280 = vadd.f32 %v254, %v272
      %v281 = vadd.f32 %v255, %v273
      %v282 = vadd.f32 %v256, %v274
      %v283 = vadd.f32 %v257, %v275
      %v284 = vadd.f32 %v258, %v276
      %v285 = vadd.f32 %v259, %v277
      %v286 = vadd.f32 %v260, %v278
      %v287 = vadd.f32 %v261, %v279
      %v288 = vld [vmem:[%s201] sm:$0xff]
      %v289 = vld [vmem:[%s201 + $0x10] sm:$0xff]
      %v290 = vld [vmem:[%s201 + $0x20] sm:$0xff]
      %v291 = vld [vmem:[%s201 + $0x30] sm:$0xff]
      %v292 = vld [vmem:[%s201 + $0x40] sm:$0xff]
      %v293 = vld [vmem:[%s201 + $0x50] sm:$0xff]
      %v294 = vld [vmem:[%s201 + $0x60] sm:$0xff]
      %v295 = vld [vmem:[%s201 + $0x70] sm:$0xff]
      %v296 = vld [vmem:[%s1 + $0x3] sm:$0x1]
      %v297 = vperm.slane %v296, 0
      %v298 = vmul.f32 %v288, %v297
      %v299 = vmul.f32 %v289, %v297
      %v300 = vmul.f32 %v290, %v297
      %v301 = vmul.f32 %v291, %v297
      %v302 = vmul.f32 %v292, %v297
      %v303 = vmul.f32 %v293, %v297
      %v304 = vmul.f32 %v294, %v297
      %v305 = vmul.f32 %v295, %v297
      %v306 = vadd.f32 %v280, %v298
      %v307 = vadd.f32 %v281, %v299
      %v308 = vadd.f32 %v282, %v300
      %v309 = vadd.f32 %v283, %v301
      %v310 = vadd.f32 %v284, %v302
      %v311 = vadd.f32 %v285, %v303
      %v312 = vadd.f32 %v286, %v304
      %v313 = vadd.f32 %v287, %v305
      %v314 = vld [vmem:[%s201 + $0x1] sm:$0xff]
      %v315 = vld [vmem:[%s201 + $0x11] sm:$0xff]
      %v316 = vld [vmem:[%s201 + $0x21] sm:$0xff]
      %v317 = vld [vmem:[%s201 + $0x31] sm:$0xff]
      %v318 = vld [vmem:[%s201 + $0x41] sm:$0xff]
      %v319 = vld [vmem:[%s201 + $0x51] sm:$0xff]
      %v320 = vld [vmem:[%s201 + $0x61] sm:$0xff]
      %v321 = vld [vmem:[%s201 + $0x71] sm:$0xff]
      %v322 = vld [vmem:[%s1 + $0x4] sm:$0x1]
      %v323 = vperm.slane %v322, 0
      %v324 = vmul.f32 %v314, %v323
      %v325 = vmul.f32 %v315, %v323
      %v326 = vmul.f32 %v316, %v323
      %v327 = vmul.f32 %v317, %v323
      %v328 = vmul.f32 %v318, %v323
      %v329 = vmul.f32 %v319, %v323
      %v330 = vmul.f32 %v320, %v323
      %v331 = vmul.f32 %v321, %v323
      %v332 = vadd.f32 %v306, %v324
      %v333 = vadd.f32 %v307, %v325
      %v334 = vadd.f32 %v308, %v326
      %v335 = vadd.f32 %v309, %v327
      %v336 = vadd.f32 %v310, %v328
      %v337 = vadd.f32 %v311, %v329
      %v338 = vadd.f32 %v312, %v330
      %v339 = vadd.f32 %v313, %v331
      %v340 = vld [vmem:[%s201 + $0x2] sm:$0xff]
      %v341 = vld [vmem:[%s201 + $0x12] sm:$0xff]
      %v342 = vld [vmem:[%s201 + $0x22] sm:$0xff]
      %v343 = vld [vmem:[%s201 + $0x32] sm:$0xff]
      %v344 = vld [vmem:[%s201 + $0x42] sm:$0xff]
      %v345 = vld [vmem:[%s201 + $0x52] sm:$0xff]
      %v346 = vld [vmem:[%s201 + $0x62] sm:$0xff]
      %v347 = vld [vmem:[%s201 + $0x72] sm:$0xff]
      %v348 = vld [vmem:[%s1 + $0x5] sm:$0x1]
      %v349 = vperm.slane %v348, 0
      %v350 = vmul.f32 %v340, %v349
      %v351 = vmul.f32 %v341, %v349
      %v352 = vmul.f32 %v342, %v349
      %v353 = vmul.f32 %v343, %v349
      %v354 = vmul.f32 %v344, %v349
      %v355 = vmul.f32 %v345, %v349
      %v356 = vmul.f32 %v346, %v349
      %v357 = vmul.f32 %v347, %v349
      %v358 = vadd.f32 %v332, %v350
      %v359 = vadd.f32 %v333, %v351
      %v360 = vadd.f32 %v334, %v352
      %v361 = vadd.f32 %v335, %v353
      %v362 = vadd.f32 %v336, %v354
      %v363 = vadd.f32 %v337, %v355
      %v364 = vadd.f32 %v338, %v356
      %v365 = vadd.f32 %v339, %v357
      %s366 = scalar_lea.vmem [#allocation2], 32
      %v367 = vld [vmem:[%s366] sm:$0xff]
      %v368 = vld [vmem:[%s366 + $0x10] sm:$0xff]
      %v369 = vld [vmem:[%s366 + $0x20] sm:$0xff]
      %v370 = vld [vmem:[%s366 + $0x30] sm:$0xff]
      %v371 = vld [vmem:[%s366 + $0x40] sm:$0xff]
      %v372 = vld [vmem:[%s366 + $0x50] sm:$0xff]
      %v373 = vld [vmem:[%s366 + $0x60] sm:$0xff]
      %v374 = vld [vmem:[%s366 + $0x70] sm:$0xff]
      %v375 = vld [vmem:[%s1 + $0x6] sm:$0x1]
      %v376 = vperm.slane %v375, 0
      %v377 = vmul.f32 %v367, %v376
      %v378 = vmul.f32 %v368, %v376
      %v379 = vmul.f32 %v369, %v376
      %v380 = vmul.f32 %v370, %v376
      %v381 = vmul.f32 %v371, %v376
      %v382 = vmul.f32 %v372, %v376
      %v383 = vmul.f32 %v373, %v376
      %v384 = vmul.f32 %v374, %v376
      %v385 = vadd.f32 %v358, %v377
      %v386 = vadd.f32 %v359, %v378
      %v387 = vadd.f32 %v360, %v379
      %v388 = vadd.f32 %v361, %v380
      %v389 = vadd.f32 %v362, %v381
      %v390 = vadd.f32 %v363, %v382
      %v391 = vadd.f32 %v364, %v383
      %v392 = vadd.f32 %v365, %v384
      %v393 = vld [vmem:[%s366 + $0x1] sm:$0xff]
      %v394 = vld [vmem:[%s366 + $0x11] sm:$0xff]
      %v395 = vld [vmem:[%s366 + $0x21] sm:$0xff]
      %v396 = vld [vmem:[%s366 + $0x31] sm:$0xff]
      %v397 = vld [vmem:[%s366 + $0x41] sm:$0xff]
      %v398 = vld [vmem:[%s366 + $0x51] sm:$0xff]
      %v399 = vld [vmem:[%s366 + $0x61] sm:$0xff]
      %v400 = vld [vmem:[%s366 + $0x71] sm:$0xff]
      %v401 = vld [vmem:[%s1 + $0x7] sm:$0x1]
      %v402 = vperm.slane %v401, 0
      %v403 = vmul.f32 %v393, %v402
      %v404 = vmul.f32 %v394, %v402
      %v405 = vmul.f32 %v395, %v402
      %v406 = vmul.f32 %v396, %v402
      %v407 = vmul.f32 %v397, %v402
      %v408 = vmul.f32 %v398, %v402
      %v409 = vmul.f32 %v399, %v402
      %v410 = vmul.f32 %v400, %v402
      %v411 = vadd.f32 %v385, %v403
      %v412 = vadd.f32 %v386, %v404
      %v413 = vadd.f32 %v387, %v405
      %v414 = vadd.f32 %v388, %v406
      %v415 = vadd.f32 %v389, %v407
      %v416 = vadd.f32 %v390, %v408
      %v417 = vadd.f32 %v391, %v409
      %v418 = vadd.f32 %v392, %v410
      %v419 = vld [vmem:[%s366 + $0x2] sm:$0xff]
      %v420 = vld [vmem:[%s366 + $0x12] sm:$0xff]
      %v421 = vld [vmem:[%s366 + $0x22] sm:$0xff]
      %v422 = vld [vmem:[%s366 + $0x32] sm:$0xff]
      %v423 = vld [vmem:[%s366 + $0x42] sm:$0xff]
      %v424 = vld [vmem:[%s366 + $0x52] sm:$0xff]
      %v425 = vld [vmem:[%s366 + $0x62] sm:$0xff]
      %v426 = vld [vmem:[%s366 + $0x72] sm:$0xff]
      %v427 = vld [vmem:[%s1 + $0x8] sm:$0x1]
      %v428 = vperm.slane %v427, 0
      %v429 = vmul.f32 %v419, %v428
      %v430 = vmul.f32 %v420, %v428
      %v431 = vmul.f32 %v421, %v428
      %v432 = vmul.f32 %v422, %v428
      %v433 = vmul.f32 %v423, %v428
      %v434 = vmul.f32 %v424, %v428
      %v435 = vmul.f32 %v425, %v428
      %v436 = vmul.f32 %v426, %v428
      %v437 = vadd.f32 %v411, %v429
      %v438 = vadd.f32 %v412, %v430
      %v439 = vadd.f32 %v413, %v431
      %v440 = vadd.f32 %v414, %v432
      %v441 = vadd.f32 %v415, %v433
      %v442 = vadd.f32 %v416, %v434
      %v443 = vadd.f32 %v417, %v435
      %v444 = vadd.f32 %v418, %v436
      %v445 = vld [vmem:[%s2] sm:$0x1]
      %v447 = vperm.slane %v445, 0
      %v449 = vadd.f32 %v437, %v447
      %v450 = vadd.f32 %v438, %v447
      %v451 = vadd.f32 %v439, %v447
      %v452 = vadd.f32 %v440, %v447
      %v453 = vadd.f32 %v441, %v447
      %v454 = vadd.f32 %v442, %v447
      %v455 = vadd.f32 %v443, %v447
      %v456 = vadd.f32 %v444, %v447
      %v457 = vsub.f32 0.0, %v449
      %v458 = vsub.f32 0.0, %v450
      %v459 = vsub.f32 0.0, %v451
      %v460 = vsub.f32 0.0, %v452
      %v461 = vsub.f32 0.0, %v453
      %v462 = vsub.f32 0.0, %v454
      %v463 = vsub.f32 0.0, %v455
      %v464 = vsub.f32 0.0, %v456
      %v465 = vmul.f32 %v457, 1.442695
      %v466 = vpow.pop %v465
      %v467 = vmul.f32 %v458, 1.442695
      %v468 = vpow.pop %v467
      %v469 = vmul.f32 %v459, 1.442695
      %v470 = vpow.pop %v469
      %v471 = vmul.f32 %v460, 1.442695
      %v472 = vpow.pop %v471
      %v473 = vmul.f32 %v461, 1.442695
      %v474 = vpow.pop %v473
      %v475 = vmul.f32 %v462, 1.442695
      %v476 = vpow.pop %v475
      %v477 = vmul.f32 %v463, 1.442695
      %v478 = vpow.pop %v477
      %v479 = vmul.f32 %v464, 1.442695
      %v480 = vpow.pop %v479
      %v481 = vadd.f32 %v466, 1.0
      %v482 = vadd.f32 %v468, 1.0
      %v483 = vadd.f32 %v470, 1.0
      %v484 = vadd.f32 %v472, 1.0
      %v485 = vadd.f32 %v474, 1.0
      %v486 = vadd.f32 %v476, 1.0
      %v487 = vadd.f32 %v478, 1.0
      %v488 = vadd.f32 %v480, 1.0
      %v489 = vrcp.pop %v481
      %v490 = vmul.f32 %v481, %v489
      %v491 = vsub.f32 1.0, %v490
      %v492 = vmul.f32 %v489, %v491
      %v493 = vadd.f32 %v489, %v492
      %vm494 = vweird.f32 %v481
      %vm495 = vweird.f32 %v489
      %vm496 = vmor %vm494, %vm495
      %v497 = vsel %vm496, %v489, %v493
      %v498 = vand.u32 2147483647, %v481
      %vm499 = vcmp.eq.f32.partialorder %v498, 8.507059e+37
      %v500 = vand.u32 %v481, 2147483648
      %v501 = vor.u32 1.1754944e-38, %v500
      %v502 = vsel %vm499, %v501, %v497
      %v503 = vmul.f32 1.0, %v502
      %v504 = vrcp.pop %v482
      %v505 = vmul.f32 %v482, %v504
      %v506 = vsub.f32 1.0, %v505
      %v507 = vmul.f32 %v504, %v506
      %v508 = vadd.f32 %v504, %v507
      %vm509 = vweird.f32 %v482
      %vm510 = vweird.f32 %v504
      %vm511 = vmor %vm509, %vm510
      %v512 = vsel %vm511, %v504, %v508
      %v513 = vand.u32 2147483647, %v482
      %vm514 = vcmp.eq.f32.partialorder %v513, 8.507059e+37
      %v515 = vand.u32 %v482, 2147483648
      %v516 = vor.u32 1.1754944e-38, %v515
      %v517 = vsel %vm514, %v516, %v512
      %v518 = vmul.f32 1.0, %v517
      %v519 = vrcp.pop %v483
      %v520 = vmul.f32 %v483, %v519
      %v521 = vsub.f32 1.0, %v520
      %v522 = vmul.f32 %v519, %v521
      %v523 = vadd.f32 %v519, %v522
      %vm524 = vweird.f32 %v483
      %vm525 = vweird.f32 %v519
      %vm526 = vmor %vm524, %vm525
      %v527 = vsel %vm526, %v519, %v523
      %v528 = vand.u32 2147483647, %v483
      %vm529 = vcmp.eq.f32.partialorder %v528, 8.507059e+37
      %v530 = vand.u32 %v483, 2147483648
      %v531 = vor.u32 1.1754944e-38, %v530
      %v532 = vsel %vm529, %v531, %v527
      %v533 = vmul.f32 1.0, %v532
      %v534 = vrcp.pop %v484
      %v535 = vmul.f32 %v484, %v534
      %v536 = vsub.f32 1.0, %v535
      %v537 = vmul.f32 %v534, %v536
      %v538 = vadd.f32 %v534, %v537
      %vm539 = vweird.f32 %v484
      %vm540 = vweird.f32 %v534
      %vm541 = vmor %vm539, %vm540
      %v542 = vsel %vm541, %v534, %v538
      %v543 = vand.u32 2147483647, %v484
      %vm544 = vcmp.eq.f32.partialorder %v543, 8.507059e+37
      %v545 = vand.u32 %v484, 2147483648
      %v546 = vor.u32 1.1754944e-38, %v545
      %v547 = vsel %vm544, %v546, %v542
      %v548 = vmul.f32 1.0, %v547
      %v549 = vrcp.pop %v485
      %v550 = vmul.f32 %v485, %v549
      %v551 = vsub.f32 1.0, %v550
      %v552 = vmul.f32 %v549, %v551
      %v553 = vadd.f32 %v549, %v552
      %vm554 = vweird.f32 %v485
      %vm555 = vweird.f32 %v549
      %vm556 = vmor %vm554, %vm555
      %v557 = vsel %vm556, %v549, %v553
      %v558 = vand.u32 2147483647, %v485
      %vm559 = vcmp.eq.f32.partialorder %v558, 8.507059e+37
      %v560 = vand.u32 %v485, 2147483648
      %v561 = vor.u32 1.1754944e-38, %v560
      %v562 = vsel %vm559, %v561, %v557
      %v563 = vmul.f32 1.0, %v562
      %v564 = vrcp.pop %v486
      %v565 = vmul.f32 %v486, %v564
      %v566 = vsub.f32 1.0, %v565
      %v567 = vmul.f32 %v564, %v566
      %v568 = vadd.f32 %v564, %v567
      %vm569 = vweird.f32 %v486
      %vm570 = vweird.f32 %v564
      %vm571 = vmor %vm569, %vm570
      %v572 = vsel %vm571, %v564, %v568
      %v573 = vand.u32 2147483647, %v486
      %vm574 = vcmp.eq.f32.partialorder %v573, 8.507059e+37
      %v575 = vand.u32 %v486, 2147483648
      %v576 = vor.u32 1.1754944e-38, %v575
      %v577 = vsel %vm574, %v576, %v572
      %v578 = vmul.f32 1.0, %v577
      %v579 = vrcp.pop %v487
      %v580 = vmul.f32 %v487, %v579
      %v581 = vsub.f32 1.0, %v580
      %v582 = vmul.f32 %v579, %v581
      %v583 = vadd.f32 %v579, %v582
      %vm584 = vweird.f32 %v487
      %vm585 = vweird.f32 %v579
      %vm586 = vmor %vm584, %vm585
      %v587 = vsel %vm586, %v579, %v583
      %v588 = vand.u32 2147483647, %v487
      %vm589 = vcmp.eq.f32.partialorder %v588, 8.507059e+37
      %v590 = vand.u32 %v487, 2147483648
      %v591 = vor.u32 1.1754944e-38, %v590
      %v592 = vsel %vm589, %v591, %v587
      %v593 = vmul.f32 1.0, %v592
      %v594 = vrcp.pop %v488
      %v595 = vmul.f32 %v488, %v594
      %v596 = vsub.f32 1.0, %v595
      %v597 = vmul.f32 %v594, %v596
      %v598 = vadd.f32 %v594, %v597
      %vm599 = vweird.f32 %v488
      %vm600 = vweird.f32 %v594
      %vm601 = vmor %vm599, %vm600
      %v602 = vsel %vm601, %v594, %v598
      %v603 = vand.u32 2147483647, %v488
      %vm604 = vcmp.eq.f32.partialorder %v603, 8.507059e+37
      %v605 = vand.u32 %v488, 2147483648
      %v606 = vor.u32 1.1754944e-38, %v605
      %v607 = vsel %vm604, %v606, %v602
      %v608 = vmul.f32 1.0, %v607
      %v609 = vmul.f32 %v449, %v503
      %v610 = vmul.f32 %v450, %v518
      %v611 = vmul.f32 %v451, %v533
      %v612 = vmul.f32 %v452, %v548
      %v613 = vmul.f32 %v453, %v563
      %v614 = vmul.f32 %v454, %v578
      %v615 = vmul.f32 %v455, %v593
      %v616 = vmul.f32 %v456, %v608
      %617 = vst.msk [vmem:[%s170] sm:$0xff] %vm171, %v609
      %618 = vst.msk [vmem:[%s170 + $0x8] sm:$0xff] %vm171, %v610
      %619 = vst.msk [vmem:[%s170 + $0x10] sm:$0xff] %vm171, %v611
      %620 = vst.msk [vmem:[%s170 + $0x18] sm:$0xff] %vm171, %v612
      %621 = vst.msk [vmem:[%s170 + $0x20] sm:$0xff] %vm171, %v613
      %622 = vst.msk [vmem:[%s170 + $0x28] sm:$0xff] %vm171, %v614
      %623 = vst.msk [vmem:[%s170 + $0x30] sm:$0xff] %vm171, %v615
      %624 = vst.msk [vmem:[%s170 + $0x38] sm:$0xff] %vm171, %v616
      %p625 = scmp.lt.s32.totalorder %s14, 1
      %s626 = scalar_select %p625, %s14, 1
      %s627 = smul.addr %s626, 8
      %s628 = smul.addr %s627, 8
      %s629 = scalar_lea.vmem %s3, %s628
      // Predicated region
      $region33: #{mewb1_forward.9} parent=31 // pred_check
        %p630 = pneg %p100
      $region34: #{mewb1_forward.9} parent=31 // pred_check_branch
        %632 = sbr.rel (%p630) target = $region36
      $region35: #{mewb1_forward.9} parent=31 // pred_region
        _
      $region36: #{mewb1_forward.9} parent=31 // pred_fallthru
        _
    $region32: #{mewb1_forward.9} parent=5 // pred_fallthru
      _
    %p633 = scmp.le.s32.totalorder 2, %s9
    // Predicated region
    $region37: #{mewb1_forward.9} parent=5 // pred_check
      %p634 = pneg %p633
    $region38: #{mewb1_forward.9} parent=5 // pred_check_branch
      %636 = sbr.rel (%p634) target = $region40
    $region39: #{mewb1_forward.9} parent=5 // pred_region
      %s637 = ssub.s32 %s9, 2
      // Predicated region
      $region41: #{mewb1_forward.9} parent=39 // pred_check
        %p638 = pneg %p106
      $region42: #{mewb1_forward.9} parent=39 // pred_check_branch
        %640 = sbr.rel (%p638) target = $region44
      $region43: #{mewb1_forward.9} parent=39 // pred_region
        %p641 = scmp.lt.s32.totalorder %s15, 1
        %s642 = scalar_select %p641, %s15, 1
        %s643 = smul.addr %s642, 8
        %s644 = smul.addr %s643, 8
        %s645 = scalar_lea.vmem %s3, %s644
      $region44: #{mewb1_forward.9} parent=39 // pred_fallthru
        _
    $region40: #{mewb1_forward.9} parent=5 // pred_fallthru
      _
  $region6: #{mewb1_forward.9} parent=0 // loop_footer
    %s13 = sadd.s32 1, %s9
  $region7: #{mewb1_forward.9} parent=0 // loop_footer_branch
    %8 = sbr.rel target = $region3
  $region8: #{mewb1_forward.9} parent=0 // loop_exit
    _

// kernel: mewb1_forward.8
$region0: #{mewb1_forward.8}
  #allocation0 [shape = 'u32[]', space=smem, size = 0x4, offset = 0x4, fixed_abs, tag = 'smem constant byte address 0x4 - core index']
  #allocation1 [shape = 'u32[72,128]{1,0:T(1,128)}', space=vmem, size = 0x9000, scoped, tag = 'internal scratch']
  %s0 = inlined_call_operand.hbm [shape: f32[128,16], index: 0, kind: input, shape index: {}]
  %s1 = inlined_call_operand.vmem [shape: f32[1,16], index: 1, kind: input, shape index: {}]
  %s2 = inlined_call_operand.vmem [shape: f32[1,16], index: 2, kind: input, shape index: {}]
  %s3 = inlined_call_operand.vmem [shape: bf16[16,32], index: 3, kind: input, shape index: {}]
  %s4 = inlined_call_operand.hbm [shape: bf16[16,32], index: 4, kind: input, shape index: {}]
  %s5 = inlined_call_operand.vmem [shape: f32[128,32], index: 5, kind: output, shape index: {0}]
  %s6 = inlined_call_operand.vmem [shape: f32[128,32], index: 6, kind: output, shape index: {1}]
  %7 = xla_tuple %s5, %s6
  %s8 = sld [smem:[#allocation0]]
  $region46: #{mewb1_forward.8} parent=0
    _
  %s10 = ssub.s32 1, %s8
  %s11 = scalar_select 0, %s10, %s8
  $region1: #{mewb1_forward.8} parent=0
    #allocation2 [shape = 'u8[65536]{0}', space=vmem, size = 0x10000, scoped, tag = 'input window, operand 0, single buffered']
    #allocation3 [shape = 's32[1]{0}', space=sflag, size = 0x4, scoped, tag = 'scoped memory for mewb1_forward.8']
    #allocation4 [shape = 'u8[4096]{0}', space=vmem, size = 0x1000, scoped, tag = 'input window, operand 4, single buffered']
    #allocation5 [shape = 's32[1]{0}', space=sflag, size = 0x4, scoped, tag = 'scoped memory for mewb1_forward.8']
    %12 = vsyncpa [#allocation3], 0
    %13 = vsyncpa [#allocation5], 0
    // Predicated region
    $region2: #{mewb1_forward.8} parent=1 // pred_check
      _
    $region3: #{mewb1_forward.8} parent=1 // pred_check_branch
      %15 = sbr.rel (0) target = $region5
    $region4: #{mewb1_forward.8} parent=1 // pred_region
      %17 = vsyncadd [#allocation3], 0
      %s18 = sshll.u32 %s0, 4
      %s19 = int_to_ptr.hbm [resolvable:$true] %s18
      %s20 = sshll.u32 [#allocation2], 4
      %s21 = int_to_ptr.vmem [resolvable:$true] %s20
      %26 = dma.hbm_to_vmem [thread:$0]  %s19, 2048, %s21, [#allocation3], 128, 128, 8
    $region5: #{mewb1_forward.8} parent=1 // pred_fallthru
      _
    // Predicated region
    $region6: #{mewb1_forward.8} parent=1 // pred_check
      _
    $region7: #{mewb1_forward.8} parent=1 // pred_check_branch
      %28 = sbr.rel (0) target = $region9
    $region8: #{mewb1_forward.8} parent=1 // pred_region
      _
    $region9: #{mewb1_forward.8} parent=1 // pred_fallthru
      _
    // Predicated region
    $region10: #{mewb1_forward.8} parent=1 // pred_check
      _
    $region11: #{mewb1_forward.8} parent=1 // pred_check_branch
      %30 = sbr.rel (0) target = $region13
    $region12: #{mewb1_forward.8} parent=1 // pred_region
      _
    $region13: #{mewb1_forward.8} parent=1 // pred_fallthru
      _
    // Predicated region
    $region14: #{mewb1_forward.8} parent=1 // pred_check
      _
    $region15: #{mewb1_forward.8} parent=1 // pred_check_branch
      %32 = sbr.rel (0) target = $region17
    $region16: #{mewb1_forward.8} parent=1 // pred_region
      _
    $region17: #{mewb1_forward.8} parent=1 // pred_fallthru
      _
    // Predicated region
    $region18: #{mewb1_forward.8} parent=1 // pred_check
      _
    $region19: #{mewb1_forward.8} parent=1 // pred_check_branch
      %34 = sbr.rel (0) target = $region21
    $region20: #{mewb1_forward.8} parent=1 // pred_region
      %36 = vsyncadd [#allocation5], 0
      %s37 = sshll.u32 %s4, 4
      %s38 = int_to_ptr.hbm [resolvable:$true] %s37
      %s39 = sshll.u32 [#allocation4], 4
      %s40 = int_to_ptr.vmem [resolvable:$true] %s39
      %45 = dma.hbm_to_vmem [thread:$0]  %s38, 128, %s40, [#allocation5], 64, 64, 4
    $region21: #{mewb1_forward.8} parent=1 // pred_fallthru
      _
    // Predicated region
    $region22: #{mewb1_forward.8} parent=1 // pred_check
      _
    $region23: #{mewb1_forward.8} parent=1 // pred_check_branch
      %47 = sbr.rel (0) target = $region25
    $region24: #{mewb1_forward.8} parent=1 // pred_region
      %49 = dma.done [#allocation3], 2048
    $region25: #{mewb1_forward.8} parent=1 // pred_fallthru
      _
    // Predicated region
    $region26: #{mewb1_forward.8} parent=1 // pred_check
      _
    $region27: #{mewb1_forward.8} parent=1 // pred_check_branch
      %51 = sbr.rel (0) target = $region29
    $region28: #{mewb1_forward.8} parent=1 // pred_region
      %53 = dma.done [#allocation5], 128
    $region29: #{mewb1_forward.8} parent=1 // pred_fallthru
      _
    %v55 = vld [vmem:[#allocation2] sm:$0xff]
    %v56 = vld [vmem:[#allocation2 + $0x8] sm:$0xff]
    %v57 = vld [vmem:[#allocation2 + $0x10] sm:$0xff]
    %v58 = vld [vmem:[#allocation2 + $0x18] sm:$0xff]
    %v59 = vld [vmem:[#allocation2 + $0x20] sm:$0xff]
    %v60 = vld [vmem:[#allocation2 + $0x28] sm:$0xff]
    %v61 = vld [vmem:[#allocation2 + $0x30] sm:$0xff]
    %v62 = vld [vmem:[#allocation2 + $0x38] sm:$0xff]
    %v63 = vld [vmem:[#allocation2 + $0x40] sm:$0xff]
    %v64 = vld [vmem:[#allocation2 + $0x48] sm:$0xff]
    %v65 = vld [vmem:[#allocation2 + $0x50] sm:$0xff]
    %v66 = vld [vmem:[#allocation2 + $0x58] sm:$0xff]
    %v67 = vld [vmem:[#allocation2 + $0x60] sm:$0xff]
    %v68 = vld [vmem:[#allocation2 + $0x68] sm:$0xff]
    %v69 = vld [vmem:[#allocation2 + $0x70] sm:$0xff]
    %v70 = vld [vmem:[#allocation2 + $0x78] sm:$0xff]
    %vm71 = vcmask 130048
    %v72 = vsel %vm71, %v55, 0.0
    %73 = vadd.xlane.f32.xlu0 %v72
    %v74 = vpop.xlane.xlu0 %73
    %v75 = vsel %vm71, %v56, 0.0
    %76 = vadd.xlane.f32.xlu0 %v75
    %v77 = vpop.xlane.xlu0 %76
    %v78 = vsel %vm71, %v57, 0.0
    %79 = vadd.xlane.f32.xlu0 %v78
    %v80 = vpop.xlane.xlu0 %79
    %v81 = vsel %vm71, %v58, 0.0
    %82 = vadd.xlane.f32.xlu0 %v81
    %v83 = vpop.xlane.xlu0 %82
    %v84 = vsel %vm71, %v59, 0.0
    %85 = vadd.xlane.f32.xlu0 %v84
    %v86 = vpop.xlane.xlu0 %85
    %v87 = vsel %vm71, %v60, 0.0
    %88 = vadd.xlane.f32.xlu0 %v87
    %v89 = vpop.xlane.xlu0 %88
    %v90 = vsel %vm71, %v61, 0.0
    %91 = vadd.xlane.f32.xlu0 %v90
    %v92 = vpop.xlane.xlu0 %91
    %v93 = vsel %vm71, %v62, 0.0
    %94 = vadd.xlane.f32.xlu0 %v93
    %v95 = vpop.xlane.xlu0 %94
    %v96 = vsel %vm71, %v63, 0.0
    %97 = vadd.xlane.f32.xlu0 %v96
    %v98 = vpop.xlane.xlu0 %97
    %v99 = vsel %vm71, %v64, 0.0
    %100 = vadd.xlane.f32.xlu0 %v99
    %v101 = vpop.xlane.xlu0 %100
    %v102 = vsel %vm71, %v65, 0.0
    %103 = vadd.xlane.f32.xlu0 %v102
    %v104 = vpop.xlane.xlu0 %103
    %v105 = vsel %vm71, %v66, 0.0
    %106 = vadd.xlane.f32.xlu0 %v105
    %v107 = vpop.xlane.xlu0 %106
    %v108 = vsel %vm71, %v67, 0.0
    %109 = vadd.xlane.f32.xlu0 %v108
    %v110 = vpop.xlane.xlu0 %109
    %v111 = vsel %vm71, %v68, 0.0
    %112 = vadd.xlane.f32.xlu0 %v111
    %v113 = vpop.xlane.xlu0 %112
    %v114 = vsel %vm71, %v69, 0.0
    %115 = vadd.xlane.f32.xlu0 %v114
    %v116 = vpop.xlane.xlu0 %115
    %v117 = vsel %vm71, %v70, 0.0
    %118 = vadd.xlane.f32.xlu0 %v117
    %v119 = vpop.xlane.xlu0 %118
    %v120 = vrcp.pop 16.0
    %v121 = vmul.f32 16.0, %v120
    %v122 = vsub.f32 1.0, %v121
    %v123 = vmul.f32 %v120, %v122
    %v124 = vadd.f32 %v120, %v123
    %vm125 = vweird.f32 %v120
    %v126 = vsel %vm125, %v120, %v124
    %v127 = vmul.f32 %v74, %v126
    %v128 = vmul.f32 %v77, %v126
    %v129 = vmul.f32 %v80, %v126
    %v130 = vmul.f32 %v83, %v126
    %v131 = vmul.f32 %v86, %v126
    %v132 = vmul.f32 %v89, %v126
    %v133 = vmul.f32 %v92, %v126
    %v134 = vmul.f32 %v95, %v126
    %v135 = vmul.f32 %v98, %v126
    %v136 = vmul.f32 %v101, %v126
    %v137 = vmul.f32 %v104, %v126
    %v138 = vmul.f32 %v107, %v126
    %v139 = vmul.f32 %v110, %v126
    %v140 = vmul.f32 %v113, %v126
    %v141 = vmul.f32 %v116, %v126
    %v142 = vmul.f32 %v119, %v126
    %v143 = vsub.f32 %v55, %v127
    %v144 = vsub.f32 %v56, %v128
    %v145 = vsub.f32 %v57, %v129
    %v146 = vsub.f32 %v58, %v130
    %v147 = vsub.f32 %v59, %v131
    %v148 = vsub.f32 %v60, %v132
    %v149 = vsub.f32 %v61, %v133
    %v150 = vsub.f32 %v62, %v134
    %v151 = vsub.f32 %v63, %v135
    %v152 = vsub.f32 %v64, %v136
    %v153 = vsub.f32 %v65, %v137
    %v154 = vsub.f32 %v66, %v138
    %v155 = vsub.f32 %v67, %v139
    %v156 = vsub.f32 %v68, %v140
    %v157 = vsub.f32 %v69, %v141
    %v158 = vsub.f32 %v70, %v142
    %v159 = vmul.f32 %v143, %v143
    %v160 = vmul.f32 %v144, %v144
    %v161 = vmul.f32 %v145, %v145
    %v162 = vmul.f32 %v146, %v146
    %v163 = vmul.f32 %v147, %v147
    %v164 = vmul.f32 %v148, %v148
    %v165 = vmul.f32 %v149, %v149
    %v166 = vmul.f32 %v150, %v150
    %v167 = vmul.f32 %v151, %v151
    %v168 = vmul.f32 %v152, %v152
    %v169 = vmul.f32 %v153, %v153
    %v170 = vmul.f32 %v154, %v154
    %v171 = vmul.f32 %v155, %v155
    %v172 = vmul.f32 %v156, %v156
    %v173 = vmul.f32 %v157, %v157
    %v174 = vmul.f32 %v158, %v158
    %v175 = vsel %vm71, %v159, 0.0
    %176 = vadd.xlane.f32.xlu0 %v175
    %v177 = vpop.xlane.xlu0 %176
    %v178 = vsel %vm71, %v160, 0.0
    %179 = vadd.xlane.f32.xlu0 %v178
    %v180 = vpop.xlane.xlu0 %179
    %v181 = vsel %vm71, %v161, 0.0
    %182 = vadd.xlane.f32.xlu0 %v181
    %v183 = vpop.xlane.xlu0 %182
    %v184 = vsel %vm71, %v162, 0.0
    %185 = vadd.xlane.f32.xlu0 %v184
    %v186 = vpop.xlane.xlu0 %185
    %v187 = vsel %vm71, %v163, 0.0
    %188 = vadd.xlane.f32.xlu0 %v187
    %v189 = vpop.xlane.xlu0 %188
    %v190 = vsel %vm71, %v164, 0.0
    %191 = vadd.xlane.f32.xlu0 %v190
    %v192 = vpop.xlane.xlu0 %191
    %v193 = vsel %vm71, %v165, 0.0
    %194 = vadd.xlane.f32.xlu0 %v193
    %v195 = vpop.xlane.xlu0 %194
    %v196 = vsel %vm71, %v166, 0.0
    %197 = vadd.xlane.f32.xlu0 %v196
    %v198 = vpop.xlane.xlu0 %197
    %v199 = vsel %vm71, %v167, 0.0
    %200 = vadd.xlane.f32.xlu0 %v199
    %v201 = vpop.xlane.xlu0 %200
    %v202 = vsel %vm71, %v168, 0.0
    %203 = vadd.xlane.f32.xlu0 %v202
    %v204 = vpop.xlane.xlu0 %203
    %v205 = vsel %vm71, %v169, 0.0
    %206 = vadd.xlane.f32.xlu0 %v205
    %v207 = vpop.xlane.xlu0 %206
    %v208 = vsel %vm71, %v170, 0.0
    %209 = vadd.xlane.f32.xlu0 %v208
    %v210 = vpop.xlane.xlu0 %209
    %v211 = vsel %vm71, %v171, 0.0
    %212 = vadd.xlane.f32.xlu0 %v211
    %v213 = vpop.xlane.xlu0 %212
    %v214 = vsel %vm71, %v172, 0.0
    %215 = vadd.xlane.f32.xlu0 %v214
    %v216 = vpop.xlane.xlu0 %215
    %v217 = vsel %vm71, %v173, 0.0
    %218 = vadd.xlane.f32.xlu0 %v217
    %v219 = vpop.xlane.xlu0 %218
    %v220 = vsel %vm71, %v174, 0.0
    %221 = vadd.xlane.f32.xlu0 %v220
    %v222 = vpop.xlane.xlu0 %221
    %v223 = vmul.f32 %v177, %v126
    %v224 = vmul.f32 %v180, %v126
    %v225 = vmul.f32 %v183, %v126
    %v226 = vmul.f32 %v186, %v126
    %v227 = vmul.f32 %v189, %v126
    %v228 = vmul.f32 %v192, %v126
    %v229 = vmul.f32 %v195, %v126
    %v230 = vmul.f32 %v198, %v126
    %v231 = vmul.f32 %v201, %v126
    %v232 = vmul.f32 %v204, %v126
    %v233 = vmul.f32 %v207, %v126
    %v234 = vmul.f32 %v210, %v126
    %v235 = vmul.f32 %v213, %v126
    %v236 = vmul.f32 %v216, %v126
    %v237 = vmul.f32 %v219, %v126
    %v238 = vmul.f32 %v222, %v126
    %v239 = vadd.f32 %v223, 1e-05
    %v240 = vadd.f32 %v224, 1e-05
    %v241 = vadd.f32 %v225, 1e-05
    %v242 = vadd.f32 %v226, 1e-05
    %v243 = vadd.f32 %v227, 1e-05
    %v244 = vadd.f32 %v228, 1e-05
    %v245 = vadd.f32 %v229, 1e-05
    %v246 = vadd.f32 %v230, 1e-05
    %v247 = vadd.f32 %v231, 1e-05
    %v248 = vadd.f32 %v232, 1e-05
    %v249 = vadd.f32 %v233, 1e-05
    %v250 = vadd.f32 %v234, 1e-05
    %v251 = vadd.f32 %v235, 1e-05
    %v252 = vadd.f32 %v236, 1e-05
    %v253 = vadd.f32 %v237, 1e-05
    %v254 = vadd.f32 %v238, 1e-05
    %v255 = vrsqrt.pop %v239
    %v256 = vmul.f32 %v255, %v239
    %v257 = vmul.f32 %v256, %v255
    %v258 = vmul.f32 0.5, %v257
    %v259 = vsub.f32 1.5, %v258
    %v260 = vmul.f32 %v255, %v259
    %vm261 = vweird.f32 %v239
    %vm262 = vweird.f32 %v255
    %vm263 = vmor %vm261, %vm262
    %v264 = vsel %vm263, %v255, %v260
    %v265 = vrsqrt.pop %v240
    %v266 = vmul.f32 %v265, %v240
    %v267 = vmul.f32 %v266, %v265
    %v268 = vmul.f32 0.5, %v267
    %v269 = vsub.f32 1.5, %v268
    %v270 = vmul.f32 %v265, %v269
    %vm271 = vweird.f32 %v240
    %vm272 = vweird.f32 %v265
    %vm273 = vmor %vm271, %vm272
    %v274 = vsel %vm273, %v265, %v270
    %v275 = vrsqrt.pop %v241
    %v276 = vmul.f32 %v275, %v241
    %v277 = vmul.f32 %v276, %v275
    %v278 = vmul.f32 0.5, %v277
    %v279 = vsub.f32 1.5, %v278
    %v280 = vmul.f32 %v275, %v279
    %vm281 = vweird.f32 %v241
    %vm282 = vweird.f32 %v275
    %vm283 = vmor %vm281, %vm282
    %v284 = vsel %vm283, %v275, %v280
    %v285 = vrsqrt.pop %v242
    %v286 = vmul.f32 %v285, %v242
    %v287 = vmul.f32 %v286, %v285
    %v288 = vmul.f32 0.5, %v287
    %v289 = vsub.f32 1.5, %v288
    %v290 = vmul.f32 %v285, %v289
    %vm291 = vweird.f32 %v242
    %vm292 = vweird.f32 %v285
    %vm293 = vmor %vm291, %vm292
    %v294 = vsel %vm293, %v285, %v290
    %v295 = vrsqrt.pop %v243
    %v296 = vmul.f32 %v295, %v243
    %v297 = vmul.f32 %v296, %v295
    %v298 = vmul.f32 0.5, %v297
    %v299 = vsub.f32 1.5, %v298
    %v300 = vmul.f32 %v295, %v299
    %vm301 = vweird.f32 %v243
    %vm302 = vweird.f32 %v295
    %vm303 = vmor %vm301, %vm302
    %v304 = vsel %vm303, %v295, %v300
    %v305 = vrsqrt.pop %v244
    %v306 = vmul.f32 %v305, %v244
    %v307 = vmul.f32 %v306, %v305
    %v308 = vmul.f32 0.5, %v307
    %v309 = vsub.f32 1.5, %v308
    %v310 = vmul.f32 %v305, %v309
    %vm311 = vweird.f32 %v244
    %vm312 = vweird.f32 %v305
    %vm313 = vmor %vm311, %vm312
    %v314 = vsel %vm313, %v305, %v310
    %v315 = vrsqrt.pop %v245
    %v316 = vmul.f32 %v315, %v245
    %v317 = vmul.f32 %v316, %v315
    %v318 = vmul.f32 0.5, %v317
    %v319 = vsub.f32 1.5, %v318
    %v320 = vmul.f32 %v315, %v319
    %vm321 = vweird.f32 %v245
    %vm322 = vweird.f32 %v315
    %vm323 = vmor %vm321, %vm322
    %v324 = vsel %vm323, %v315, %v320
    %v325 = vrsqrt.pop %v246
    %v326 = vmul.f32 %v325, %v246
    %v327 = vmul.f32 %v326, %v325
    %v328 = vmul.f32 0.5, %v327
    %v329 = vsub.f32 1.5, %v328
    %v330 = vmul.f32 %v325, %v329
    %vm331 = vweird.f32 %v246
    %vm332 = vweird.f32 %v325
    %vm333 = vmor %vm331, %vm332
    %v334 = vsel %vm333, %v325, %v330
    %v335 = vrsqrt.pop %v247
    %v336 = vmul.f32 %v335, %v247
    %v337 = vmul.f32 %v336, %v335
    %v338 = vmul.f32 0.5, %v337
    %v339 = vsub.f32 1.5, %v338
    %v340 = vmul.f32 %v335, %v339
    %vm341 = vweird.f32 %v247
    %vm342 = vweird.f32 %v335
    %vm343 = vmor %vm341, %vm342
    %v344 = vsel %vm343, %v335, %v340
    %v345 = vrsqrt.pop %v248
    %v346 = vmul.f32 %v345, %v248
    %v347 = vmul.f32 %v346, %v345
    %v348 = vmul.f32 0.5, %v347
    %v349 = vsub.f32 1.5, %v348
    %v350 = vmul.f32 %v345, %v349
    %vm351 = vweird.f32 %v248
    %vm352 = vweird.f32 %v345
    %vm353 = vmor %vm351, %vm352
    %v354 = vsel %vm353, %v345, %v350
    %v355 = vrsqrt.pop %v249
    %v356 = vmul.f32 %v355, %v249
    %v357 = vmul.f32 %v356, %v355
    %v358 = vmul.f32 0.5, %v357
    %v359 = vsub.f32 1.5, %v358
    %v360 = vmul.f32 %v355, %v359
    %vm361 = vweird.f32 %v249
    %vm362 = vweird.f32 %v355
    %vm363 = vmor %vm361, %vm362
    %v364 = vsel %vm363, %v355, %v360
    %v365 = vrsqrt.pop %v250
    %v366 = vmul.f32 %v365, %v250
    %v367 = vmul.f32 %v366, %v365
    %v368 = vmul.f32 0.5, %v367
    %v369 = vsub.f32 1.5, %v368
    %v370 = vmul.f32 %v365, %v369
    %vm371 = vweird.f32 %v250
    %vm372 = vweird.f32 %v365
    %vm373 = vmor %vm371, %vm372
    %v374 = vsel %vm373, %v365, %v370
    %v375 = vrsqrt.pop %v251
    %v376 = vmul.f32 %v375, %v251
    %v377 = vmul.f32 %v376, %v375
    %v378 = vmul.f32 0.5, %v377
    %v379 = vsub.f32 1.5, %v378
    %v380 = vmul.f32 %v375, %v379
    %vm381 = vweird.f32 %v251
    %vm382 = vweird.f32 %v375
    %vm383 = vmor %vm381, %vm382
    %v384 = vsel %vm383, %v375, %v380
    %v385 = vrsqrt.pop %v252
    %v386 = vmul.f32 %v385, %v252
    %v387 = vmul.f32 %v386, %v385
    %v388 = vmul.f32 0.5, %v387
    %v389 = vsub.f32 1.5, %v388
    %v390 = vmul.f32 %v385, %v389
    %vm391 = vweird.f32 %v252
    %vm392 = vweird.f32 %v385
    %vm393 = vmor %vm391, %vm392
    %v394 = vsel %vm393, %v385, %v390
    %v395 = vrsqrt.pop %v253
    %v396 = vmul.f32 %v395, %v253
    %v397 = vmul.f32 %v396, %v395
    %v398 = vmul.f32 0.5, %v397
    %v399 = vsub.f32 1.5, %v398
    %v400 = vmul.f32 %v395, %v399
    %vm401 = vweird.f32 %v253
    %vm402 = vweird.f32 %v395
    %vm403 = vmor %vm401, %vm402
    %v404 = vsel %vm403, %v395, %v400
    %v405 = vrsqrt.pop %v254
    %v406 = vmul.f32 %v405, %v254
    %v407 = vmul.f32 %v406, %v405
    %v408 = vmul.f32 0.5, %v407
    %v409 = vsub.f32 1.5, %v408
    %v410 = vmul.f32 %v405, %v409
    %vm411 = vweird.f32 %v254
    %vm412 = vweird.f32 %v405
    %vm413 = vmor %vm411, %vm412
    %v414 = vsel %vm413, %v405, %v410
    %v415 = vmul.f32 %v143, %v264
    %v416 = vmul.f32 %v144, %v274
    %v417 = vmul.f32 %v145, %v284
    %v418 = vmul.f32 %v146, %v294
    %v419 = vmul.f32 %v147, %v304
    %v420 = vmul.f32 %v148, %v314
    %v421 = vmul.f32 %v149, %v324
    %v422 = vmul.f32 %v150, %v334
    %v423 = vmul.f32 %v151, %v344
    %v424 = vmul.f32 %v152, %v354
    %v425 = vmul.f32 %v153, %v364
    %v426 = vmul.f32 %v154, %v374
    %v427 = vmul.f32 %v155, %v384
    %v428 = vmul.f32 %v156, %v394
    %v429 = vmul.f32 %v157, %v404
    %v430 = vmul.f32 %v158, %v414
    %v431 = vld [vmem:[%s1] sm:$0x1]
    %v433 = vperm.slane %v431, 0
    %v435 = vmul.f32 %v415, %v433
    %v436 = vmul.f32 %v416, %v433
    %v437 = vmul.f32 %v417, %v433
    %v438 = vmul.f32 %v418, %v433
    %v439 = vmul.f32 %v419, %v433
    %v440 = vmul.f32 %v420, %v433
    %v441 = vmul.f32 %v421, %v433
    %v442 = vmul.f32 %v422, %v433
    %v443 = vmul.f32 %v423, %v433
    %v444 = vmul.f32 %v424, %v433
    %v445 = vmul.f32 %v425, %v433
    %v446 = vmul.f32 %v426, %v433
    %v447 = vmul.f32 %v427, %v433
    %v448 = vmul.f32 %v428, %v433
    %v449 = vmul.f32 %v429, %v433
    %v450 = vmul.f32 %v430, %v433
    %v451 = vld [vmem:[%s2] sm:$0x1]
    %v453 = vperm.slane %v451, 0
    %v455 = vadd.f32 %v435, %v453
    %v456 = vadd.f32 %v436, %v453
    %v457 = vadd.f32 %v437, %v453
    %v458 = vadd.f32 %v438, %v453
    %v459 = vadd.f32 %v439, %v453
    %v460 = vadd.f32 %v440, %v453
    %v461 = vadd.f32 %v441, %v453
    %v462 = vadd.f32 %v442, %v453
    %v463 = vadd.f32 %v443, %v453
    %v464 = vadd.f32 %v444, %v453
    %v465 = vadd.f32 %v445, %v453
    %v466 = vadd.f32 %v446, %v453
    %v467 = vadd.f32 %v447, %v453
    %v468 = vadd.f32 %v448, %v453
    %v469 = vadd.f32 %v449, %v453
    %v470 = vadd.f32 %v450, %v453
    %v471 = vpack.c.bf16 %v456, %v455
    %v472 = vpack.c.bf16 %v458, %v457
    %v473 = vpack.c.bf16 %v460, %v459
    %v474 = vpack.c.bf16 %v462, %v461
    %v475 = vpack.c.bf16 %v464, %v463
    %v476 = vpack.c.bf16 %v466, %v465
    %v477 = vpack.c.bf16 %v468, %v467
    %v478 = vpack.c.bf16 %v470, %v469
    %v479 = vld [vmem:[%s3] sm:$0xf]
    %v480 = vld [vmem:[%s3 + $0x4] sm:$0xf]
    %v483 = vunpack.c.l.b16 %v479
    %v484 = vunpack.c.l.b16 %v480
    %v485 = vpack.c.b16 %v484, %v483
    %v488 = vsel %vm71, %v471, 0
    %v491 = vsel %vm71, %v472, 0
    %v494 = vsel %vm71, %v473, 0
    %v497 = vsel %vm71, %v474, 0
    %v500 = vsel %vm71, %v475, 0
    %v503 = vsel %vm71, %v476, 0
    %v506 = vsel %vm71, %v477, 0
    %v509 = vsel %vm71, %v478, 0
    %511 = vmatpush.bf16.msra.mxu0 0
    %512 = vmatpush.bf16.msra.mxu0 0
    %513 = vmatpush.bf16.msra.mxu0 0
    %514 = vmatpush.bf16.msra.mxu0 0
    %515 = vmatpush.bf16.msra.mxu0 0
    %516 = vmatpush.bf16.msra.mxu0 0
    %517 = vmatpush.bf16.msra.mxu0 0
    %518 = vmatpush.bf16.msra.mxu0 %v485
    %519 = vmatmul.bf16.gmra.mxu0 %v488
    %v520 = vpop.f32.mrf.mxu0
    %v521 = vadd.f32 0.0, %v520
    %v522 = vpop.f32.mrf.mxu0
    %v523 = vadd.f32 0.0, %v522
    %524 = vmatmul.bf16.gmra.mxu0 %v491
    %v525 = vpop.f32.mrf.mxu0
    %v526 = vadd.f32 0.0, %v525
    %v527 = vpop.f32.mrf.mxu0
    %v528 = vadd.f32 0.0, %v527
    %529 = vmatmul.bf16.gmra.mxu0 %v494
    %v530 = vpop.f32.mrf.mxu0
    %v531 = vadd.f32 0.0, %v530
    %v532 = vpop.f32.mrf.mxu0
    %v533 = vadd.f32 0.0, %v532
    %534 = vmatmul.bf16.gmra.mxu0 %v497
    %v535 = vpop.f32.mrf.mxu0
    %v536 = vadd.f32 0.0, %v535
    %v537 = vpop.f32.mrf.mxu0
    %v538 = vadd.f32 0.0, %v537
    %539 = vmatmul.bf16.gmra.mxu0 %v500
    %v540 = vpop.f32.mrf.mxu0
    %v541 = vadd.f32 0.0, %v540
    %v542 = vpop.f32.mrf.mxu0
    %v543 = vadd.f32 0.0, %v542
    %544 = vmatmul.bf16.gmra.mxu0 %v503
    %v545 = vpop.f32.mrf.mxu0
    %v546 = vadd.f32 0.0, %v545
    %v547 = vpop.f32.mrf.mxu0
    %v548 = vadd.f32 0.0, %v547
    %549 = vmatmul.bf16.gmra.mxu0 %v506
    %v550 = vpop.f32.mrf.mxu0
    %v551 = vadd.f32 0.0, %v550
    %v552 = vpop.f32.mrf.mxu0
    %v553 = vadd.f32 0.0, %v552
    %554 = vmatmul.bf16.gmra.mxu0 %v509
    %v555 = vpop.f32.mrf.mxu0
    %v556 = vadd.f32 0.0, %v555
    %v557 = vpop.f32.mrf.mxu0
    %v558 = vadd.f32 0.0, %v557
    %559 = vdwg.mxu0
    %vm560 = vcmask 261120
    %561 = vst.msk [vmem:[%s5] sm:$0xff] %vm560, %v521
    %562 = vst.msk [vmem:[%s5 + $0x8] sm:$0xff] %vm560, %v523
    %563 = vst.msk [vmem:[%s5 + $0x10] sm:$0xff] %vm560, %v526
    %564 = vst.msk [vmem:[%s5 + $0x18] sm:$0xff] %vm560, %v528
    %565 = vst.msk [vmem:[%s5 + $0x20] sm:$0xff] %vm560, %v531
    %566 = vst.msk [vmem:[%s5 + $0x28] sm:$0xff] %vm560, %v533
    %567 = vst.msk [vmem:[%s5 + $0x30] sm:$0xff] %vm560, %v536
    %568 = vst.msk [vmem:[%s5 + $0x38] sm:$0xff] %vm560, %v538
    %569 = vst.msk [vmem:[%s5 + $0x40] sm:$0xff] %vm560, %v541
    %570 = vst.msk [vmem:[%s5 + $0x48] sm:$0xff] %vm560, %v543
    %571 = vst.msk [vmem:[%s5 + $0x50] sm:$0xff] %vm560, %v546
    %572 = vst.msk [vmem:[%s5 + $0x58] sm:$0xff] %vm560, %v548
    %573 = vst.msk [vmem:[%s5 + $0x60] sm:$0xff] %vm560, %v551
    %574 = vst.msk [vmem:[%s5 + $0x68] sm:$0xff] %vm560, %v553
    %575 = vst.msk [vmem:[%s5 + $0x70] sm:$0xff] %vm560, %v556
    %576 = vst.msk [vmem:[%s5 + $0x78] sm:$0xff] %vm560, %v558
    %v577 = vld [vmem:[#allocation4] sm:$0xf]
    %v578 = vld [vmem:[#allocation4 + $0x4] sm:$0xf]
    %v581 = vunpack.c.l.b16 %v577
    %v582 = vunpack.c.l.b16 %v578
    %v583 = vpack.c.b16 %v582, %v581
    %585 = vmatpush.bf16.msra.mxu0 0
    %586 = vmatpush.bf16.msra.mxu0 0
    %587 = vmatpush.bf16.msra.mxu0 0
    %588 = vmatpush.bf16.msra.mxu0 0
    %589 = vmatpush.bf16.msra.mxu0 0
    %590 = vmatpush.bf16.msra.mxu0 0
    %591 = vmatpush.bf16.msra.mxu0 0
    %592 = vmatpush.bf16.msra.mxu0 %v583
    %593 = vmatmul.bf16.gmra.mxu0 %v488
    %v594 = vpop.f32.mrf.mxu0
    %v595 = vadd.f32 0.0, %v594
    %v596 = vpop.f32.mrf.mxu0
    %v597 = vadd.f32 0.0, %v596
    %598 = vmatmul.bf16.gmra.mxu0 %v491
    %v599 = vpop.f32.mrf.mxu0
    %v600 = vadd.f32 0.0, %v599
    %v601 = vpop.f32.mrf.mxu0
    %v602 = vadd.f32 0.0, %v601
    %603 = vmatmul.bf16.gmra.mxu0 %v494
    %v604 = vpop.f32.mrf.mxu0
    %v605 = vadd.f32 0.0, %v604
    %v606 = vpop.f32.mrf.mxu0
    %v607 = vadd.f32 0.0, %v606
    %608 = vmatmul.bf16.gmra.mxu0 %v497
    %v609 = vpop.f32.mrf.mxu0
    %v610 = vadd.f32 0.0, %v609
    %v611 = vpop.f32.mrf.mxu0
    %v612 = vadd.f32 0.0, %v611
    %613 = vmatmul.bf16.gmra.mxu0 %v500
    %v614 = vpop.f32.mrf.mxu0
    %v615 = vadd.f32 0.0, %v614
    %v616 = vpop.f32.mrf.mxu0
    %v617 = vadd.f32 0.0, %v616
    %618 = vmatmul.bf16.gmra.mxu0 %v503
    %v619 = vpop.f32.mrf.mxu0
    %v620 = vadd.f32 0.0, %v619
    %v621 = vpop.f32.mrf.mxu0
    %v622 = vadd.f32 0.0, %v621
    %623 = vmatmul.bf16.gmra.mxu0 %v506
    %v624 = vpop.f32.mrf.mxu0
    %v625 = vadd.f32 0.0, %v624
    %v626 = vpop.f32.mrf.mxu0
    %v627 = vadd.f32 0.0, %v626
    %628 = vmatmul.bf16.gmra.mxu0 %v509
    %v629 = vpop.f32.mrf.mxu0
    %v630 = vadd.f32 0.0, %v629
    %v631 = vpop.f32.mrf.mxu0
    %v632 = vadd.f32 0.0, %v631
    %633 = vdwg.mxu0
    %634 = vst.msk [vmem:[%s6] sm:$0xff] %vm560, %v595
    %635 = vst.msk [vmem:[%s6 + $0x8] sm:$0xff] %vm560, %v597
    %636 = vst.msk [vmem:[%s6 + $0x10] sm:$0xff] %vm560, %v600
    %637 = vst.msk [vmem:[%s6 + $0x18] sm:$0xff] %vm560, %v602
    %638 = vst.msk [vmem:[%s6 + $0x20] sm:$0xff] %vm560, %v605
    %639 = vst.msk [vmem:[%s6 + $0x28] sm:$0xff] %vm560, %v607
    %640 = vst.msk [vmem:[%s6 + $0x30] sm:$0xff] %vm560, %v610
    %641 = vst.msk [vmem:[%s6 + $0x38] sm:$0xff] %vm560, %v612
    %642 = vst.msk [vmem:[%s6 + $0x40] sm:$0xff] %vm560, %v615
    %643 = vst.msk [vmem:[%s6 + $0x48] sm:$0xff] %vm560, %v617
    %644 = vst.msk [vmem:[%s6 + $0x50] sm:$0xff] %vm560, %v620
    %645 = vst.msk [vmem:[%s6 + $0x58] sm:$0xff] %vm560, %v622
    %646 = vst.msk [vmem:[%s6 + $0x60] sm:$0xff] %vm560, %v625
    %647 = vst.msk [vmem:[%s6 + $0x68] sm:$0xff] %vm560, %v627
    %648 = vst.msk [vmem:[%s6 + $0x70] sm:$0xff] %vm560, %v630
    %649 = vst.msk [vmem:[%s6 + $0x78] sm:$0xff] %vm560, %v632
    // Predicated region
    $region30: #{mewb1_forward.8} parent=1 // pred_check
      _
    $region31: #{mewb1_forward.8} parent=1 // pred_check_branch
      %651 = sbr.rel (0) target = $region33
    $region32: #{mewb1_forward.8} parent=1 // pred_region
      _
    $region33: #{mewb1_forward.8} parent=1 // pred_fallthru
      _
    // Predicated region
    $region34: #{mewb1_forward.8} parent=1 // pred_check
      _
    $region35: #{mewb1_forward.8} parent=1 // pred_check_branch
      %653 = sbr.rel (0) target = $region37
    $region36: #{mewb1_forward.8} parent=1 // pred_region
      _
    $region37: #{mewb1_forward.8} parent=1 // pred_fallthru
      _
    // Predicated region
    $region38: #{mewb1_forward.8} parent=1 // pred_check
      _
    $region39: #{mewb1_forward.8} parent=1 // pred_check_branch
      %655 = sbr.rel (0) target = $region41
    $region40: #{mewb1_forward.8} parent=1 // pred_region
      _
    $region41: #{mewb1_forward.8} parent=1 // pred_fallthru
      _
    // Predicated region
    $region42: #{mewb1_forward.8} parent=1 // pred_check
      _
    $region43: #{mewb1_forward.8} parent=1 // pred_check_branch
      %657 = sbr.rel (0) target = $region45
    $region44: #{mewb1_forward.8} parent=1 // pred_region
      _
    $region45: #{mewb1_forward.8} parent=1 // pred_fallthru
      _
    %658 = vsyncpa [#allocation3], 1
    %659 = vsyncpa [#allocation5], 1

// kernel: mewb1_forward.11
$region0: #{mewb1_forward.11}
  #allocation0 [shape = 'u32[]', space=smem, size = 0x4, offset = 0x4, fixed_abs, tag = 'smem constant byte address 0x4 - core index']
  #allocation1 [shape = 'u32[72,128]{1,0:T(1,128)}', space=vmem, size = 0x9000, scoped, tag = 'internal scratch']
  %s0 = inlined_call_operand.vmem [shape: f32[128,32], index: 0, kind: input, shape index: {}]
  %s1 = inlined_call_operand.vmem [shape: f32[128,32], index: 1, kind: input, shape index: {}]
  %s2 = inlined_call_operand.vmem [shape: f32[128,32], index: 2, kind: input, shape index: {}]
  %s3 = inlined_call_operand.vmem [shape: f32[128,16], index: 3, kind: input, shape index: {}]
  %s4 = inlined_call_operand.vmem [shape: f32[1,32], index: 4, kind: input, shape index: {}]
  %s5 = inlined_call_operand.vmem [shape: f32[1,32], index: 5, kind: input, shape index: {}]
  %s6 = inlined_call_operand.vmem [shape: bf16[32,16], index: 6, kind: input, shape index: {}]
  %s7 = inlined_call_operand.vmem [shape: f32[128,16], index: 7, kind: output, shape index: {}]
  %s8 = sld [smem:[#allocation0]]
  $region38: #{mewb1_forward.11} parent=0
    _
  %s10 = ssub.s32 1, %s8
  %s11 = scalar_select 0, %s10, %s8
  // Predicated region
  $region2: #{mewb1_forward.11} parent=0 // pred_check
    _
  $region3: #{mewb1_forward.11} parent=0 // pred_check_branch
    %13 = sbr.rel (0) target = $region5
  $region4: #{mewb1_forward.11} parent=0 // pred_region
    _
  $region5: #{mewb1_forward.11} parent=0 // pred_fallthru
    _
  // Predicated region
  $region6: #{mewb1_forward.11} parent=0 // pred_check
    _
  $region7: #{mewb1_forward.11} parent=0 // pred_check_branch
    %15 = sbr.rel (0) target = $region9
  $region8: #{mewb1_forward.11} parent=0 // pred_region
    _
  $region9: #{mewb1_forward.11} parent=0 // pred_fallthru
    _
  // Predicated region
  $region10: #{mewb1_forward.11} parent=0 // pred_check
    _
  $region11: #{mewb1_forward.11} parent=0 // pred_check_branch
    %17 = sbr.rel (0) target = $region13
  $region12: #{mewb1_forward.11} parent=0 // pred_region
    _
  $region13: #{mewb1_forward.11} parent=0 // pred_fallthru
    _
  // Predicated region
  $region14: #{mewb1_forward.11} parent=0 // pred_check
    _
  $region15: #{mewb1_forward.11} parent=0 // pred_check_branch
    %19 = sbr.rel (0) target = $region17
  $region16: #{mewb1_forward.11} parent=0 // pred_region
    _
  $region17: #{mewb1_forward.11} parent=0 // pred_fallthru
    _
  // Predicated region
  $region18: #{mewb1_forward.11} parent=0 // pred_check
    _
  $region19: #{mewb1_forward.11} parent=0 // pred_check_branch
    %21 = sbr.rel (0) target = $region21
  $region20: #{mewb1_forward.11} parent=0 // pred_region
    _
  $region21: #{mewb1_forward.11} parent=0 // pred_fallthru
    _
  // Predicated region
  $region22: #{mewb1_forward.11} parent=0 // pred_check
    _
  $region23: #{mewb1_forward.11} parent=0 // pred_check_branch
    %23 = sbr.rel (0) target = $region25
  $region24: #{mewb1_forward.11} parent=0 // pred_region
    _
  $region25: #{mewb1_forward.11} parent=0 // pred_fallthru
    _
  // Predicated region
  $region26: #{mewb1_forward.11} parent=0 // pred_check
    _
  $region27: #{mewb1_forward.11} parent=0 // pred_check_branch
    %25 = sbr.rel (0) target = $region29
  $region28: #{mewb1_forward.11} parent=0 // pred_region
    _
  $region29: #{mewb1_forward.11} parent=0 // pred_fallthru
    _
  %v27 = vld [vmem:[%s0] sm:$0xff]
  %v28 = vld [vmem:[%s0 + $0x8] sm:$0xff]
  %v29 = vld [vmem:[%s0 + $0x10] sm:$0xff]
  %v30 = vld [vmem:[%s0 + $0x18] sm:$0xff]
  %v31 = vld [vmem:[%s0 + $0x20] sm:$0xff]
  %v32 = vld [vmem:[%s0 + $0x28] sm:$0xff]
  %v33 = vld [vmem:[%s0 + $0x30] sm:$0xff]
  %v34 = vld [vmem:[%s0 + $0x38] sm:$0xff]
  %v35 = vld [vmem:[%s0 + $0x40] sm:$0xff]
  %v36 = vld [vmem:[%s0 + $0x48] sm:$0xff]
  %v37 = vld [vmem:[%s0 + $0x50] sm:$0xff]
  %v38 = vld [vmem:[%s0 + $0x58] sm:$0xff]
  %v39 = vld [vmem:[%s0 + $0x60] sm:$0xff]
  %v40 = vld [vmem:[%s0 + $0x68] sm:$0xff]
  %v41 = vld [vmem:[%s0 + $0x70] sm:$0xff]
  %v42 = vld [vmem:[%s0 + $0x78] sm:$0xff]
  %v43 = vld [vmem:[%s1] sm:$0xff]
  %v44 = vld [vmem:[%s1 + $0x8] sm:$0xff]
  %v45 = vld [vmem:[%s1 + $0x10] sm:$0xff]
  %v46 = vld [vmem:[%s1 + $0x18] sm:$0xff]
  %v47 = vld [vmem:[%s1 + $0x20] sm:$0xff]
  %v48 = vld [vmem:[%s1 + $0x28] sm:$0xff]
  %v49 = vld [vmem:[%s1 + $0x30] sm:$0xff]
  %v50 = vld [vmem:[%s1 + $0x38] sm:$0xff]
  %v51 = vld [vmem:[%s1 + $0x40] sm:$0xff]
  %v52 = vld [vmem:[%s1 + $0x48] sm:$0xff]
  %v53 = vld [vmem:[%s1 + $0x50] sm:$0xff]
  %v54 = vld [vmem:[%s1 + $0x58] sm:$0xff]
  %v55 = vld [vmem:[%s1 + $0x60] sm:$0xff]
  %v56 = vld [vmem:[%s1 + $0x68] sm:$0xff]
  %v57 = vld [vmem:[%s1 + $0x70] sm:$0xff]
  %v58 = vld [vmem:[%s1 + $0x78] sm:$0xff]
  %v59 = vadd.f32 %v27, %v43
  %v60 = vadd.f32 %v28, %v44
  %v61 = vadd.f32 %v29, %v45
  %v62 = vadd.f32 %v30, %v46
  %v63 = vadd.f32 %v31, %v47
  %v64 = vadd.f32 %v32, %v48
  %v65 = vadd.f32 %v33, %v49
  %v66 = vadd.f32 %v34, %v50
  %v67 = vadd.f32 %v35, %v51
  %v68 = vadd.f32 %v36, %v52
  %v69 = vadd.f32 %v37, %v53
  %v70 = vadd.f32 %v38, %v54
  %v71 = vadd.f32 %v39, %v55
  %v72 = vadd.f32 %v40, %v56
  %v73 = vadd.f32 %v41, %v57
  %v74 = vadd.f32 %v42, %v58
  %vm75 = vcmask 261120
  %v76 = vsel %vm75, %v59, 0.0
  %77 = vadd.xlane.f32.xlu0 %v76
  %v78 = vpop.xlane.xlu0 %77
  %v79 = vsel %vm75, %v60, 0.0
  %80 = vadd.xlane.f32.xlu0 %v79
  %v81 = vpop.xlane.xlu0 %80
  %v82 = vsel %vm75, %v61, 0.0
  %83 = vadd.xlane.f32.xlu0 %v82
  %v84 = vpop.xlane.xlu0 %83
  %v85 = vsel %vm75, %v62, 0.0
  %86 = vadd.xlane.f32.xlu0 %v85
  %v87 = vpop.xlane.xlu0 %86
  %v88 = vsel %vm75, %v63, 0.0
  %89 = vadd.xlane.f32.xlu0 %v88
  %v90 = vpop.xlane.xlu0 %89
  %v91 = vsel %vm75, %v64, 0.0
  %92 = vadd.xlane.f32.xlu0 %v91
  %v93 = vpop.xlane.xlu0 %92
  %v94 = vsel %vm75, %v65, 0.0
  %95 = vadd.xlane.f32.xlu0 %v94
  %v96 = vpop.xlane.xlu0 %95
  %v97 = vsel %vm75, %v66, 0.0
  %98 = vadd.xlane.f32.xlu0 %v97
  %v99 = vpop.xlane.xlu0 %98
  %v100 = vsel %vm75, %v67, 0.0
  %101 = vadd.xlane.f32.xlu0 %v100
  %v102 = vpop.xlane.xlu0 %101
  %v103 = vsel %vm75, %v68, 0.0
  %104 = vadd.xlane.f32.xlu0 %v103
  %v105 = vpop.xlane.xlu0 %104
  %v106 = vsel %vm75, %v69, 0.0
  %107 = vadd.xlane.f32.xlu0 %v106
  %v108 = vpop.xlane.xlu0 %107
  %v109 = vsel %vm75, %v70, 0.0
  %110 = vadd.xlane.f32.xlu0 %v109
  %v111 = vpop.xlane.xlu0 %110
  %v112 = vsel %vm75, %v71, 0.0
  %113 = vadd.xlane.f32.xlu0 %v112
  %v114 = vpop.xlane.xlu0 %113
  %v115 = vsel %vm75, %v72, 0.0
  %116 = vadd.xlane.f32.xlu0 %v115
  %v117 = vpop.xlane.xlu0 %116
  %v118 = vsel %vm75, %v73, 0.0
  %119 = vadd.xlane.f32.xlu0 %v118
  %v120 = vpop.xlane.xlu0 %119
  %v121 = vsel %vm75, %v74, 0.0
  %122 = vadd.xlane.f32.xlu0 %v121
  %v123 = vpop.xlane.xlu0 %122
  %v124 = vrcp.pop 32.0
  %v125 = vmul.f32 32.0, %v124
  %v126 = vsub.f32 1.0, %v125
  %v127 = vmul.f32 %v124, %v126
  %v128 = vadd.f32 %v124, %v127
  %vm129 = vweird.f32 %v124
  %v130 = vsel %vm129, %v124, %v128
  %v131 = vmul.f32 %v78, %v130
  %v132 = vmul.f32 %v81, %v130
  %v133 = vmul.f32 %v84, %v130
  %v134 = vmul.f32 %v87, %v130
  %v135 = vmul.f32 %v90, %v130
  %v136 = vmul.f32 %v93, %v130
  %v137 = vmul.f32 %v96, %v130
  %v138 = vmul.f32 %v99, %v130
  %v139 = vmul.f32 %v102, %v130
  %v140 = vmul.f32 %v105, %v130
  %v141 = vmul.f32 %v108, %v130
  %v142 = vmul.f32 %v111, %v130
  %v143 = vmul.f32 %v114, %v130
  %v144 = vmul.f32 %v117, %v130
  %v145 = vmul.f32 %v120, %v130
  %v146 = vmul.f32 %v123, %v130
  %v147 = vsub.f32 %v59, %v131
  %v148 = vsub.f32 %v60, %v132
  %v149 = vsub.f32 %v61, %v133
  %v150 = vsub.f32 %v62, %v134
  %v151 = vsub.f32 %v63, %v135
  %v152 = vsub.f32 %v64, %v136
  %v153 = vsub.f32 %v65, %v137
  %v154 = vsub.f32 %v66, %v138
  %v155 = vsub.f32 %v67, %v139
  %v156 = vsub.f32 %v68, %v140
  %v157 = vsub.f32 %v69, %v141
  %v158 = vsub.f32 %v70, %v142
  %v159 = vsub.f32 %v71, %v143
  %v160 = vsub.f32 %v72, %v144
  %v161 = vsub.f32 %v73, %v145
  %v162 = vsub.f32 %v74, %v146
  %v163 = vmul.f32 %v147, %v147
  %v164 = vmul.f32 %v148, %v148
  %v165 = vmul.f32 %v149, %v149
  %v166 = vmul.f32 %v150, %v150
  %v167 = vmul.f32 %v151, %v151
  %v168 = vmul.f32 %v152, %v152
  %v169 = vmul.f32 %v153, %v153
  %v170 = vmul.f32 %v154, %v154
  %v171 = vmul.f32 %v155, %v155
  %v172 = vmul.f32 %v156, %v156
  %v173 = vmul.f32 %v157, %v157
  %v174 = vmul.f32 %v158, %v158
  %v175 = vmul.f32 %v159, %v159
  %v176 = vmul.f32 %v160, %v160
  %v177 = vmul.f32 %v161, %v161
  %v178 = vmul.f32 %v162, %v162
  %v179 = vsel %vm75, %v163, 0.0
  %180 = vadd.xlane.f32.xlu0 %v179
  %v181 = vpop.xlane.xlu0 %180
  %v182 = vsel %vm75, %v164, 0.0
  %183 = vadd.xlane.f32.xlu0 %v182
  %v184 = vpop.xlane.xlu0 %183
  %v185 = vsel %vm75, %v165, 0.0
  %186 = vadd.xlane.f32.xlu0 %v185
  %v187 = vpop.xlane.xlu0 %186
  %v188 = vsel %vm75, %v166, 0.0
  %189 = vadd.xlane.f32.xlu0 %v188
  %v190 = vpop.xlane.xlu0 %189
  %v191 = vsel %vm75, %v167, 0.0
  %192 = vadd.xlane.f32.xlu0 %v191
  %v193 = vpop.xlane.xlu0 %192
  %v194 = vsel %vm75, %v168, 0.0
  %195 = vadd.xlane.f32.xlu0 %v194
  %v196 = vpop.xlane.xlu0 %195
  %v197 = vsel %vm75, %v169, 0.0
  %198 = vadd.xlane.f32.xlu0 %v197
  %v199 = vpop.xlane.xlu0 %198
  %v200 = vsel %vm75, %v170, 0.0
  %201 = vadd.xlane.f32.xlu0 %v200
  %v202 = vpop.xlane.xlu0 %201
  %v203 = vsel %vm75, %v171, 0.0
  %204 = vadd.xlane.f32.xlu0 %v203
  %v205 = vpop.xlane.xlu0 %204
  %v206 = vsel %vm75, %v172, 0.0
  %207 = vadd.xlane.f32.xlu0 %v206
  %v208 = vpop.xlane.xlu0 %207
  %v209 = vsel %vm75, %v173, 0.0
  %210 = vadd.xlane.f32.xlu0 %v209
  %v211 = vpop.xlane.xlu0 %210
  %v212 = vsel %vm75, %v174, 0.0
  %213 = vadd.xlane.f32.xlu0 %v212
  %v214 = vpop.xlane.xlu0 %213
  %v215 = vsel %vm75, %v175, 0.0
  %216 = vadd.xlane.f32.xlu0 %v215
  %v217 = vpop.xlane.xlu0 %216
  %v218 = vsel %vm75, %v176, 0.0
  %219 = vadd.xlane.f32.xlu0 %v218
  %v220 = vpop.xlane.xlu0 %219
  %v221 = vsel %vm75, %v177, 0.0
  %222 = vadd.xlane.f32.xlu0 %v221
  %v223 = vpop.xlane.xlu0 %222
  %v224 = vsel %vm75, %v178, 0.0
  %225 = vadd.xlane.f32.xlu0 %v224
  %v226 = vpop.xlane.xlu0 %225
  %v227 = vmul.f32 %v181, %v130
  %v228 = vmul.f32 %v184, %v130
  %v229 = vmul.f32 %v187, %v130
  %v230 = vmul.f32 %v190, %v130
  %v231 = vmul.f32 %v193, %v130
  %v232 = vmul.f32 %v196, %v130
  %v233 = vmul.f32 %v199, %v130
  %v234 = vmul.f32 %v202, %v130
  %v235 = vmul.f32 %v205, %v130
  %v236 = vmul.f32 %v208, %v130
  %v237 = vmul.f32 %v211, %v130
  %v238 = vmul.f32 %v214, %v130
  %v239 = vmul.f32 %v217, %v130
  %v240 = vmul.f32 %v220, %v130
  %v241 = vmul.f32 %v223, %v130
  %v242 = vmul.f32 %v226, %v130
  %v243 = vadd.f32 %v227, 1e-05
  %v244 = vadd.f32 %v228, 1e-05
  %v245 = vadd.f32 %v229, 1e-05
  %v246 = vadd.f32 %v230, 1e-05
  %v247 = vadd.f32 %v231, 1e-05
  %v248 = vadd.f32 %v232, 1e-05
  %v249 = vadd.f32 %v233, 1e-05
  %v250 = vadd.f32 %v234, 1e-05
  %v251 = vadd.f32 %v235, 1e-05
  %v252 = vadd.f32 %v236, 1e-05
  %v253 = vadd.f32 %v237, 1e-05
  %v254 = vadd.f32 %v238, 1e-05
  %v255 = vadd.f32 %v239, 1e-05
  %v256 = vadd.f32 %v240, 1e-05
  %v257 = vadd.f32 %v241, 1e-05
  %v258 = vadd.f32 %v242, 1e-05
  %v259 = vrsqrt.pop %v243
  %v260 = vmul.f32 %v259, %v243
  %v261 = vmul.f32 %v260, %v259
  %v262 = vmul.f32 0.5, %v261
  %v263 = vsub.f32 1.5, %v262
  %v264 = vmul.f32 %v259, %v263
  %vm265 = vweird.f32 %v243
  %vm266 = vweird.f32 %v259
  %vm267 = vmor %vm265, %vm266
  %v268 = vsel %vm267, %v259, %v264
  %v269 = vrsqrt.pop %v244
  %v270 = vmul.f32 %v269, %v244
  %v271 = vmul.f32 %v270, %v269
  %v272 = vmul.f32 0.5, %v271
  %v273 = vsub.f32 1.5, %v272
  %v274 = vmul.f32 %v269, %v273
  %vm275 = vweird.f32 %v244
  %vm276 = vweird.f32 %v269
  %vm277 = vmor %vm275, %vm276
  %v278 = vsel %vm277, %v269, %v274
  %v279 = vrsqrt.pop %v245
  %v280 = vmul.f32 %v279, %v245
  %v281 = vmul.f32 %v280, %v279
  %v282 = vmul.f32 0.5, %v281
  %v283 = vsub.f32 1.5, %v282
  %v284 = vmul.f32 %v279, %v283
  %vm285 = vweird.f32 %v245
  %vm286 = vweird.f32 %v279
  %vm287 = vmor %vm285, %vm286
  %v288 = vsel %vm287, %v279, %v284
  %v289 = vrsqrt.pop %v246
  %v290 = vmul.f32 %v289, %v246
  %v291 = vmul.f32 %v290, %v289
  %v292 = vmul.f32 0.5, %v291
  %v293 = vsub.f32 1.5, %v292
  %v294 = vmul.f32 %v289, %v293
  %vm295 = vweird.f32 %v246
  %vm296 = vweird.f32 %v289
  %vm297 = vmor %vm295, %vm296
  %v298 = vsel %vm297, %v289, %v294
  %v299 = vrsqrt.pop %v247
  %v300 = vmul.f32 %v299, %v247
  %v301 = vmul.f32 %v300, %v299
  %v302 = vmul.f32 0.5, %v301
  %v303 = vsub.f32 1.5, %v302
  %v304 = vmul.f32 %v299, %v303
  %vm305 = vweird.f32 %v247
  %vm306 = vweird.f32 %v299
  %vm307 = vmor %vm305, %vm306
  %v308 = vsel %vm307, %v299, %v304
  %v309 = vrsqrt.pop %v248
  %v310 = vmul.f32 %v309, %v248
  %v311 = vmul.f32 %v310, %v309
  %v312 = vmul.f32 0.5, %v311
  %v313 = vsub.f32 1.5, %v312
  %v314 = vmul.f32 %v309, %v313
  %vm315 = vweird.f32 %v248
  %vm316 = vweird.f32 %v309
  %vm317 = vmor %vm315, %vm316
  %v318 = vsel %vm317, %v309, %v314
  %v319 = vrsqrt.pop %v249
  %v320 = vmul.f32 %v319, %v249
  %v321 = vmul.f32 %v320, %v319
  %v322 = vmul.f32 0.5, %v321
  %v323 = vsub.f32 1.5, %v322
  %v324 = vmul.f32 %v319, %v323
  %vm325 = vweird.f32 %v249
  %vm326 = vweird.f32 %v319
  %vm327 = vmor %vm325, %vm326
  %v328 = vsel %vm327, %v319, %v324
  %v329 = vrsqrt.pop %v250
  %v330 = vmul.f32 %v329, %v250
  %v331 = vmul.f32 %v330, %v329
  %v332 = vmul.f32 0.5, %v331
  %v333 = vsub.f32 1.5, %v332
  %v334 = vmul.f32 %v329, %v333
  %vm335 = vweird.f32 %v250
  %vm336 = vweird.f32 %v329
  %vm337 = vmor %vm335, %vm336
  %v338 = vsel %vm337, %v329, %v334
  %v339 = vrsqrt.pop %v251
  %v340 = vmul.f32 %v339, %v251
  %v341 = vmul.f32 %v340, %v339
  %v342 = vmul.f32 0.5, %v341
  %v343 = vsub.f32 1.5, %v342
  %v344 = vmul.f32 %v339, %v343
  %vm345 = vweird.f32 %v251
  %vm346 = vweird.f32 %v339
  %vm347 = vmor %vm345, %vm346
  %v348 = vsel %vm347, %v339, %v344
  %v349 = vrsqrt.pop %v252
  %v350 = vmul.f32 %v349, %v252
  %v351 = vmul.f32 %v350, %v349
  %v352 = vmul.f32 0.5, %v351
  %v353 = vsub.f32 1.5, %v352
  %v354 = vmul.f32 %v349, %v353
  %vm355 = vweird.f32 %v252
  %vm356 = vweird.f32 %v349
  %vm357 = vmor %vm355, %vm356
  %v358 = vsel %vm357, %v349, %v354
  %v359 = vrsqrt.pop %v253
  %v360 = vmul.f32 %v359, %v253
  %v361 = vmul.f32 %v360, %v359
  %v362 = vmul.f32 0.5, %v361
  %v363 = vsub.f32 1.5, %v362
  %v364 = vmul.f32 %v359, %v363
  %vm365 = vweird.f32 %v253
  %vm366 = vweird.f32 %v359
  %vm367 = vmor %vm365, %vm366
  %v368 = vsel %vm367, %v359, %v364
  %v369 = vrsqrt.pop %v254
  %v370 = vmul.f32 %v369, %v254
  %v371 = vmul.f32 %v370, %v369
  %v372 = vmul.f32 0.5, %v371
  %v373 = vsub.f32 1.5, %v372
  %v374 = vmul.f32 %v369, %v373
  %vm375 = vweird.f32 %v254
  %vm376 = vweird.f32 %v369
  %vm377 = vmor %vm375, %vm376
  %v378 = vsel %vm377, %v369, %v374
  %v379 = vrsqrt.pop %v255
  %v380 = vmul.f32 %v379, %v255
  %v381 = vmul.f32 %v380, %v379
  %v382 = vmul.f32 0.5, %v381
  %v383 = vsub.f32 1.5, %v382
  %v384 = vmul.f32 %v379, %v383
  %vm385 = vweird.f32 %v255
  %vm386 = vweird.f32 %v379
  %vm387 = vmor %vm385, %vm386
  %v388 = vsel %vm387, %v379, %v384
  %v389 = vrsqrt.pop %v256
  %v390 = vmul.f32 %v389, %v256
  %v391 = vmul.f32 %v390, %v389
  %v392 = vmul.f32 0.5, %v391
  %v393 = vsub.f32 1.5, %v392
  %v394 = vmul.f32 %v389, %v393
  %vm395 = vweird.f32 %v256
  %vm396 = vweird.f32 %v389
  %vm397 = vmor %vm395, %vm396
  %v398 = vsel %vm397, %v389, %v394
  %v399 = vrsqrt.pop %v257
  %v400 = vmul.f32 %v399, %v257
  %v401 = vmul.f32 %v400, %v399
  %v402 = vmul.f32 0.5, %v401
  %v403 = vsub.f32 1.5, %v402
  %v404 = vmul.f32 %v399, %v403
  %vm405 = vweird.f32 %v257
  %vm406 = vweird.f32 %v399
  %vm407 = vmor %vm405, %vm406
  %v408 = vsel %vm407, %v399, %v404
  %v409 = vrsqrt.pop %v258
  %v410 = vmul.f32 %v409, %v258
  %v411 = vmul.f32 %v410, %v409
  %v412 = vmul.f32 0.5, %v411
  %v413 = vsub.f32 1.5, %v412
  %v414 = vmul.f32 %v409, %v413
  %vm415 = vweird.f32 %v258
  %vm416 = vweird.f32 %v409
  %vm417 = vmor %vm415, %vm416
  %v418 = vsel %vm417, %v409, %v414
  %v419 = vmul.f32 %v147, %v268
  %v420 = vmul.f32 %v148, %v278
  %v421 = vmul.f32 %v149, %v288
  %v422 = vmul.f32 %v150, %v298
  %v423 = vmul.f32 %v151, %v308
  %v424 = vmul.f32 %v152, %v318
  %v425 = vmul.f32 %v153, %v328
  %v426 = vmul.f32 %v154, %v338
  %v427 = vmul.f32 %v155, %v348
  %v428 = vmul.f32 %v156, %v358
  %v429 = vmul.f32 %v157, %v368
  %v430 = vmul.f32 %v158, %v378
  %v431 = vmul.f32 %v159, %v388
  %v432 = vmul.f32 %v160, %v398
  %v433 = vmul.f32 %v161, %v408
  %v434 = vmul.f32 %v162, %v418
  %v435 = vld [vmem:[%s4] sm:$0x1]
  %v437 = vperm.slane %v435, 0
  %v439 = vmul.f32 %v419, %v437
  %v440 = vmul.f32 %v420, %v437
  %v441 = vmul.f32 %v421, %v437
  %v442 = vmul.f32 %v422, %v437
  %v443 = vmul.f32 %v423, %v437
  %v444 = vmul.f32 %v424, %v437
  %v445 = vmul.f32 %v425, %v437
  %v446 = vmul.f32 %v426, %v437
  %v447 = vmul.f32 %v427, %v437
  %v448 = vmul.f32 %v428, %v437
  %v449 = vmul.f32 %v429, %v437
  %v450 = vmul.f32 %v430, %v437
  %v451 = vmul.f32 %v431, %v437
  %v452 = vmul.f32 %v432, %v437
  %v453 = vmul.f32 %v433, %v437
  %v454 = vmul.f32 %v434, %v437
  %v455 = vld [vmem:[%s5] sm:$0x1]
  %v457 = vperm.slane %v455, 0
  %v459 = vadd.f32 %v439, %v457
  %v460 = vadd.f32 %v440, %v457
  %v461 = vadd.f32 %v441, %v457
  %v462 = vadd.f32 %v442, %v457
  %v463 = vadd.f32 %v443, %v457
  %v464 = vadd.f32 %v444, %v457
  %v465 = vadd.f32 %v445, %v457
  %v466 = vadd.f32 %v446, %v457
  %v467 = vadd.f32 %v447, %v457
  %v468 = vadd.f32 %v448, %v457
  %v469 = vadd.f32 %v449, %v457
  %v470 = vadd.f32 %v450, %v457
  %v471 = vadd.f32 %v451, %v457
  %v472 = vadd.f32 %v452, %v457
  %v473 = vadd.f32 %v453, %v457
  %v474 = vadd.f32 %v454, %v457
  %v475 = vld [vmem:[%s2] sm:$0xff]
  %v476 = vld [vmem:[%s2 + $0x8] sm:$0xff]
  %v477 = vld [vmem:[%s2 + $0x10] sm:$0xff]
  %v478 = vld [vmem:[%s2 + $0x18] sm:$0xff]
  %v479 = vld [vmem:[%s2 + $0x20] sm:$0xff]
  %v480 = vld [vmem:[%s2 + $0x28] sm:$0xff]
  %v481 = vld [vmem:[%s2 + $0x30] sm:$0xff]
  %v482 = vld [vmem:[%s2 + $0x38] sm:$0xff]
  %v483 = vld [vmem:[%s2 + $0x40] sm:$0xff]
  %v484 = vld [vmem:[%s2 + $0x48] sm:$0xff]
  %v485 = vld [vmem:[%s2 + $0x50] sm:$0xff]
  %v486 = vld [vmem:[%s2 + $0x58] sm:$0xff]
  %v487 = vld [vmem:[%s2 + $0x60] sm:$0xff]
  %v488 = vld [vmem:[%s2 + $0x68] sm:$0xff]
  %v489 = vld [vmem:[%s2 + $0x70] sm:$0xff]
  %v490 = vld [vmem:[%s2 + $0x78] sm:$0xff]
  %v491 = vsub.f32 0.0, %v475
  %v492 = vsub.f32 0.0, %v476
  %v493 = vsub.f32 0.0, %v477
  %v494 = vsub.f32 0.0, %v478
  %v495 = vsub.f32 0.0, %v479
  %v496 = vsub.f32 0.0, %v480
  %v497 = vsub.f32 0.0, %v481
  %v498 = vsub.f32 0.0, %v482
  %v499 = vsub.f32 0.0, %v483
  %v500 = vsub.f32 0.0, %v484
  %v501 = vsub.f32 0.0, %v485
  %v502 = vsub.f32 0.0, %v486
  %v503 = vsub.f32 0.0, %v487
  %v504 = vsub.f32 0.0, %v488
  %v505 = vsub.f32 0.0, %v489
  %v506 = vsub.f32 0.0, %v490
  %v507 = vmul.f32 %v491, 1.442695
  %v508 = vpow.pop %v507
  %v509 = vmul.f32 %v492, 1.442695
  %v510 = vpow.pop %v509
  %v511 = vmul.f32 %v493, 1.442695
  %v512 = vpow.pop %v511
  %v513 = vmul.f32 %v494, 1.442695
  %v514 = vpow.pop %v513
  %v515 = vmul.f32 %v495, 1.442695
  %v516 = vpow.pop %v515
  %v517 = vmul.f32 %v496, 1.442695
  %v518 = vpow.pop %v517
  %v519 = vmul.f32 %v497, 1.442695
  %v520 = vpow.pop %v519
  %v521 = vmul.f32 %v498, 1.442695
  %v522 = vpow.pop %v521
  %v523 = vmul.f32 %v499, 1.442695
  %v524 = vpow.pop %v523
  %v525 = vmul.f32 %v500, 1.442695
  %v526 = vpow.pop %v525
  %v527 = vmul.f32 %v501, 1.442695
  %v528 = vpow.pop %v527
  %v529 = vmul.f32 %v502, 1.442695
  %v530 = vpow.pop %v529
  %v531 = vmul.f32 %v503, 1.442695
  %v532 = vpow.pop %v531
  %v533 = vmul.f32 %v504, 1.442695
  %v534 = vpow.pop %v533
  %v535 = vmul.f32 %v505, 1.442695
  %v536 = vpow.pop %v535
  %v537 = vmul.f32 %v506, 1.442695
  %v538 = vpow.pop %v537
  %v539 = vadd.f32 %v508, 1.0
  %v540 = vadd.f32 %v510, 1.0
  %v541 = vadd.f32 %v512, 1.0
  %v542 = vadd.f32 %v514, 1.0
  %v543 = vadd.f32 %v516, 1.0
  %v544 = vadd.f32 %v518, 1.0
  %v545 = vadd.f32 %v520, 1.0
  %v546 = vadd.f32 %v522, 1.0
  %v547 = vadd.f32 %v524, 1.0
  %v548 = vadd.f32 %v526, 1.0
  %v549 = vadd.f32 %v528, 1.0
  %v550 = vadd.f32 %v530, 1.0
  %v551 = vadd.f32 %v532, 1.0
  %v552 = vadd.f32 %v534, 1.0
  %v553 = vadd.f32 %v536, 1.0
  %v554 = vadd.f32 %v538, 1.0
  %v555 = vrcp.pop %v539
  %v556 = vmul.f32 %v539, %v555
  %v557 = vsub.f32 1.0, %v556
  %v558 = vmul.f32 %v555, %v557
  %v559 = vadd.f32 %v555, %v558
  %vm560 = vweird.f32 %v539
  %vm561 = vweird.f32 %v555
  %vm562 = vmor %vm560, %vm561
  %v563 = vsel %vm562, %v555, %v559
  %v564 = vand.u32 2147483647, %v539
  %vm565 = vcmp.eq.f32.partialorder %v564, 8.507059e+37
  %v566 = vand.u32 %v539, 2147483648
  %v567 = vor.u32 1.1754944e-38, %v566
  %v568 = vsel %vm565, %v567, %v563
  %v569 = vmul.f32 1.0, %v568
  %v570 = vrcp.pop %v540
  %v571 = vmul.f32 %v540, %v570
  %v572 = vsub.f32 1.0, %v571
  %v573 = vmul.f32 %v570, %v572
  %v574 = vadd.f32 %v570, %v573
  %vm575 = vweird.f32 %v540
  %vm576 = vweird.f32 %v570
  %vm577 = vmor %vm575, %vm576
  %v578 = vsel %vm577, %v570, %v574
  %v579 = vand.u32 2147483647, %v540
  %vm580 = vcmp.eq.f32.partialorder %v579, 8.507059e+37
  %v581 = vand.u32 %v540, 2147483648
  %v582 = vor.u32 1.1754944e-38, %v581
  %v583 = vsel %vm580, %v582, %v578
  %v584 = vmul.f32 1.0, %v583
  %v585 = vrcp.pop %v541
  %v586 = vmul.f32 %v541, %v585
  %v587 = vsub.f32 1.0, %v586
  %v588 = vmul.f32 %v585, %v587
  %v589 = vadd.f32 %v585, %v588
  %vm590 = vweird.f32 %v541
  %vm591 = vweird.f32 %v585
  %vm592 = vmor %vm590, %vm591
  %v593 = vsel %vm592, %v585, %v589
  %v594 = vand.u32 2147483647, %v541
  %vm595 = vcmp.eq.f32.partialorder %v594, 8.507059e+37
  %v596 = vand.u32 %v541, 2147483648
  %v597 = vor.u32 1.1754944e-38, %v596
  %v598 = vsel %vm595, %v597, %v593
  %v599 = vmul.f32 1.0, %v598
  %v600 = vrcp.pop %v542
  %v601 = vmul.f32 %v542, %v600
  %v602 = vsub.f32 1.0, %v601
  %v603 = vmul.f32 %v600, %v602
  %v604 = vadd.f32 %v600, %v603
  %vm605 = vweird.f32 %v542
  %vm606 = vweird.f32 %v600
  %vm607 = vmor %vm605, %vm606
  %v608 = vsel %vm607, %v600, %v604
  %v609 = vand.u32 2147483647, %v542
  %vm610 = vcmp.eq.f32.partialorder %v609, 8.507059e+37
  %v611 = vand.u32 %v542, 2147483648
  %v612 = vor.u32 1.1754944e-38, %v611
  %v613 = vsel %vm610, %v612, %v608
  %v614 = vmul.f32 1.0, %v613
  %v615 = vrcp.pop %v543
  %v616 = vmul.f32 %v543, %v615
  %v617 = vsub.f32 1.0, %v616
  %v618 = vmul.f32 %v615, %v617
  %v619 = vadd.f32 %v615, %v618
  %vm620 = vweird.f32 %v543
  %vm621 = vweird.f32 %v615
  %vm622 = vmor %vm620, %vm621
  %v623 = vsel %vm622, %v615, %v619
  %v624 = vand.u32 2147483647, %v543
  %vm625 = vcmp.eq.f32.partialorder %v624, 8.507059e+37
  %v626 = vand.u32 %v543, 2147483648
  %v627 = vor.u32 1.1754944e-38, %v626
  %v628 = vsel %vm625, %v627, %v623
  %v629 = vmul.f32 1.0, %v628
  %v630 = vrcp.pop %v544
  %v631 = vmul.f32 %v544, %v630
  %v632 = vsub.f32 1.0, %v631
  %v633 = vmul.f32 %v630, %v632
  %v634 = vadd.f32 %v630, %v633
  %vm635 = vweird.f32 %v544
  %vm636 = vweird.f32 %v630
  %vm637 = vmor %vm635, %vm636
  %v638 = vsel %vm637, %v630, %v634
  %v639 = vand.u32 2147483647, %v544
  %vm640 = vcmp.eq.f32.partialorder %v639, 8.507059e+37
  %v641 = vand.u32 %v544, 2147483648
  %v642 = vor.u32 1.1754944e-38, %v641
  %v643 = vsel %vm640, %v642, %v638
  %v644 = vmul.f32 1.0, %v643
  %v645 = vrcp.pop %v545
  %v646 = vmul.f32 %v545, %v645
  %v647 = vsub.f32 1.0, %v646
  %v648 = vmul.f32 %v645, %v647
  %v649 = vadd.f32 %v645, %v648
  %vm650 = vweird.f32 %v545
  %vm651 = vweird.f32 %v645
  %vm652 = vmor %vm650, %vm651
  %v653 = vsel %vm652, %v645, %v649
  %v654 = vand.u32 2147483647, %v545
  %vm655 = vcmp.eq.f32.partialorder %v654, 8.507059e+37
  %v656 = vand.u32 %v545, 2147483648
  %v657 = vor.u32 1.1754944e-38, %v656
  %v658 = vsel %vm655, %v657, %v653
  %v659 = vmul.f32 1.0, %v658
  %v660 = vrcp.pop %v546
  %v661 = vmul.f32 %v546, %v660
  %v662 = vsub.f32 1.0, %v661
  %v663 = vmul.f32 %v660, %v662
  %v664 = vadd.f32 %v660, %v663
  %vm665 = vweird.f32 %v546
  %vm666 = vweird.f32 %v660
  %vm667 = vmor %vm665, %vm666
  %v668 = vsel %vm667, %v660, %v664
  %v669 = vand.u32 2147483647, %v546
  %vm670 = vcmp.eq.f32.partialorder %v669, 8.507059e+37
  %v671 = vand.u32 %v546, 2147483648
  %v672 = vor.u32 1.1754944e-38, %v671
  %v673 = vsel %vm670, %v672, %v668
  %v674 = vmul.f32 1.0, %v673
  %v675 = vrcp.pop %v547
  %v676 = vmul.f32 %v547, %v675
  %v677 = vsub.f32 1.0, %v676
  %v678 = vmul.f32 %v675, %v677
  %v679 = vadd.f32 %v675, %v678
  %vm680 = vweird.f32 %v547
  %vm681 = vweird.f32 %v675
  %vm682 = vmor %vm680, %vm681
  %v683 = vsel %vm682, %v675, %v679
  %v684 = vand.u32 2147483647, %v547
  %vm685 = vcmp.eq.f32.partialorder %v684, 8.507059e+37
  %v686 = vand.u32 %v547, 2147483648
  %v687 = vor.u32 1.1754944e-38, %v686
  %v688 = vsel %vm685, %v687, %v683
  %v689 = vmul.f32 1.0, %v688
  %v690 = vrcp.pop %v548
  %v691 = vmul.f32 %v548, %v690
  %v692 = vsub.f32 1.0, %v691
  %v693 = vmul.f32 %v690, %v692
  %v694 = vadd.f32 %v690, %v693
  %vm695 = vweird.f32 %v548
  %vm696 = vweird.f32 %v690
  %vm697 = vmor %vm695, %vm696
  %v698 = vsel %vm697, %v690, %v694
  %v699 = vand.u32 2147483647, %v548
  %vm700 = vcmp.eq.f32.partialorder %v699, 8.507059e+37
  %v701 = vand.u32 %v548, 2147483648
  %v702 = vor.u32 1.1754944e-38, %v701
  %v703 = vsel %vm700, %v702, %v698
  %v704 = vmul.f32 1.0, %v703
  %v705 = vrcp.pop %v549
  %v706 = vmul.f32 %v549, %v705
  %v707 = vsub.f32 1.0, %v706
  %v708 = vmul.f32 %v705, %v707
  %v709 = vadd.f32 %v705, %v708
  %vm710 = vweird.f32 %v549
  %vm711 = vweird.f32 %v705
  %vm712 = vmor %vm710, %vm711
  %v713 = vsel %vm712, %v705, %v709
  %v714 = vand.u32 2147483647, %v549
  %vm715 = vcmp.eq.f32.partialorder %v714, 8.507059e+37
  %v716 = vand.u32 %v549, 2147483648
  %v717 = vor.u32 1.1754944e-38, %v716
  %v718 = vsel %vm715, %v717, %v713
  %v719 = vmul.f32 1.0, %v718
  %v720 = vrcp.pop %v550
  %v721 = vmul.f32 %v550, %v720
  %v722 = vsub.f32 1.0, %v721
  %v723 = vmul.f32 %v720, %v722
  %v724 = vadd.f32 %v720, %v723
  %vm725 = vweird.f32 %v550
  %vm726 = vweird.f32 %v720
  %vm727 = vmor %vm725, %vm726
  %v728 = vsel %vm727, %v720, %v724
  %v729 = vand.u32 2147483647, %v550
  %vm730 = vcmp.eq.f32.partialorder %v729, 8.507059e+37
  %v731 = vand.u32 %v550, 2147483648
  %v732 = vor.u32 1.1754944e-38, %v731
  %v733 = vsel %vm730, %v732, %v728
  %v734 = vmul.f32 1.0, %v733
  %v735 = vrcp.pop %v551
  %v736 = vmul.f32 %v551, %v735
  %v737 = vsub.f32 1.0, %v736
  %v738 = vmul.f32 %v735, %v737
  %v739 = vadd.f32 %v735, %v738
  %vm740 = vweird.f32 %v551
  %vm741 = vweird.f32 %v735
  %vm742 = vmor %vm740, %vm741
  %v743 = vsel %vm742, %v735, %v739
  %v744 = vand.u32 2147483647, %v551
  %vm745 = vcmp.eq.f32.partialorder %v744, 8.507059e+37
  %v746 = vand.u32 %v551, 2147483648
  %v747 = vor.u32 1.1754944e-38, %v746
  %v748 = vsel %vm745, %v747, %v743
  %v749 = vmul.f32 1.0, %v748
  %v750 = vrcp.pop %v552
  %v751 = vmul.f32 %v552, %v750
  %v752 = vsub.f32 1.0, %v751
  %v753 = vmul.f32 %v750, %v752
  %v754 = vadd.f32 %v750, %v753
  %vm755 = vweird.f32 %v552
  %vm756 = vweird.f32 %v750
  %vm757 = vmor %vm755, %vm756
  %v758 = vsel %vm757, %v750, %v754
  %v759 = vand.u32 2147483647, %v552
  %vm760 = vcmp.eq.f32.partialorder %v759, 8.507059e+37
  %v761 = vand.u32 %v552, 2147483648
  %v762 = vor.u32 1.1754944e-38, %v761
  %v763 = vsel %vm760, %v762, %v758
  %v764 = vmul.f32 1.0, %v763
  %v765 = vrcp.pop %v553
  %v766 = vmul.f32 %v553, %v765
  %v767 = vsub.f32 1.0, %v766
  %v768 = vmul.f32 %v765, %v767
  %v769 = vadd.f32 %v765, %v768
  %vm770 = vweird.f32 %v553
  %vm771 = vweird.f32 %v765
  %vm772 = vmor %vm770, %vm771
  %v773 = vsel %vm772, %v765, %v769
  %v774 = vand.u32 2147483647, %v553
  %vm775 = vcmp.eq.f32.partialorder %v774, 8.507059e+37
  %v776 = vand.u32 %v553, 2147483648
  %v777 = vor.u32 1.1754944e-38, %v776
  %v778 = vsel %vm775, %v777, %v773
  %v779 = vmul.f32 1.0, %v778
  %v780 = vrcp.pop %v554
  %v781 = vmul.f32 %v554, %v780
  %v782 = vsub.f32 1.0, %v781
  %v783 = vmul.f32 %v780, %v782
  %v784 = vadd.f32 %v780, %v783
  %vm785 = vweird.f32 %v554
  %vm786 = vweird.f32 %v780
  %vm787 = vmor %vm785, %vm786
  %v788 = vsel %vm787, %v780, %v784
  %v789 = vand.u32 2147483647, %v554
  %vm790 = vcmp.eq.f32.partialorder %v789, 8.507059e+37
  %v791 = vand.u32 %v554, 2147483648
  %v792 = vor.u32 1.1754944e-38, %v791
  %v793 = vsel %vm790, %v792, %v788
  %v794 = vmul.f32 1.0, %v793
  %v795 = vmul.f32 %v475, %v569
  %v796 = vmul.f32 %v476, %v584
  %v797 = vmul.f32 %v477, %v599
  %v798 = vmul.f32 %v478, %v614
  %v799 = vmul.f32 %v479, %v629
  %v800 = vmul.f32 %v480, %v644
  %v801 = vmul.f32 %v481, %v659
  %v802 = vmul.f32 %v482, %v674
  %v803 = vmul.f32 %v483, %v689
  %v804 = vmul.f32 %v484, %v704
  %v805 = vmul.f32 %v485, %v719
  %v806 = vmul.f32 %v486, %v734
  %v807 = vmul.f32 %v487, %v749
  %v808 = vmul.f32 %v488, %v764
  %v809 = vmul.f32 %v489, %v779
  %v810 = vmul.f32 %v490, %v794
  %v811 = vmul.f32 %v459, %v795
  %v812 = vmul.f32 %v460, %v796
  %v813 = vmul.f32 %v461, %v797
  %v814 = vmul.f32 %v462, %v798
  %v815 = vmul.f32 %v463, %v799
  %v816 = vmul.f32 %v464, %v800
  %v817 = vmul.f32 %v465, %v801
  %v818 = vmul.f32 %v466, %v802
  %v819 = vmul.f32 %v467, %v803
  %v820 = vmul.f32 %v468, %v804
  %v821 = vmul.f32 %v469, %v805
  %v822 = vmul.f32 %v470, %v806
  %v823 = vmul.f32 %v471, %v807
  %v824 = vmul.f32 %v472, %v808
  %v825 = vmul.f32 %v473, %v809
  %v826 = vmul.f32 %v474, %v810
  %v827 = vpack.c.bf16 %v812, %v811
  %v828 = vpack.c.bf16 %v814, %v813
  %v829 = vpack.c.bf16 %v816, %v815
  %v830 = vpack.c.bf16 %v818, %v817
  %v831 = vpack.c.bf16 %v820, %v819
  %v832 = vpack.c.bf16 %v822, %v821
  %v833 = vpack.c.bf16 %v824, %v823
  %v834 = vpack.c.bf16 %v826, %v825
  %v835 = vld [vmem:[%s6] sm:$0xf]
  %v836 = vld [vmem:[%s6 + $0x4] sm:$0xf]
  %v837 = vld [vmem:[%s6 + $0x8] sm:$0xf]
  %v838 = vld [vmem:[%s6 + $0xc] sm:$0xf]
  %v839 = vld [vmem:[%s3] sm:$0xff]
  %v840 = vld [vmem:[%s3 + $0x8] sm:$0xff]
  %v841 = vld [vmem:[%s3 + $0x10] sm:$0xff]
  %v842 = vld [vmem:[%s3 + $0x18] sm:$0xff]
  %v843 = vld [vmem:[%s3 + $0x20] sm:$0xff]
  %v844 = vld [vmem:[%s3 + $0x28] sm:$0xff]
  %v845 = vld [vmem:[%s3 + $0x30] sm:$0xff]
  %v846 = vld [vmem:[%s3 + $0x38] sm:$0xff]
  %v847 = vld [vmem:[%s3 + $0x40] sm:$0xff]
  %v848 = vld [vmem:[%s3 + $0x48] sm:$0xff]
  %v849 = vld [vmem:[%s3 + $0x50] sm:$0xff]
  %v850 = vld [vmem:[%s3 + $0x58] sm:$0xff]
  %v851 = vld [vmem:[%s3 + $0x60] sm:$0xff]
  %v852 = vld [vmem:[%s3 + $0x68] sm:$0xff]
  %v853 = vld [vmem:[%s3 + $0x70] sm:$0xff]
  %v854 = vld [vmem:[%s3 + $0x78] sm:$0xff]
  %v859 = vunpack.c.l.b16 %v835
  %v860 = vunpack.c.l.b16 %v836
  %v861 = vunpack.c.l.b16 %v837
  %v862 = vunpack.c.l.b16 %v838
  %v863 = vpack.c.b16 %v860, %v859
  %v864 = vpack.c.b16 %v862, %v861
  %v868 = vsel %vm75, %v827, 0
  %v871 = vsel %vm75, %v828, 0
  %v874 = vsel %vm75, %v829, 0
  %v877 = vsel %vm75, %v830, 0
  %v880 = vsel %vm75, %v831, 0
  %v883 = vsel %vm75, %v832, 0
  %v886 = vsel %vm75, %v833, 0
  %v889 = vsel %vm75, %v834, 0
  %891 = vmatpush.bf16.msra.mxu0 0
  %892 = vmatpush.bf16.msra.mxu0 0
  %893 = vmatpush.bf16.msra.mxu0 0
  %894 = vmatpush.bf16.msra.mxu0 0
  %895 = vmatpush.bf16.msra.mxu0 0
  %896 = vmatpush.bf16.msra.mxu0 0
  %897 = vmatpush.bf16.msra.mxu0 %v864
  %898 = vmatpush.bf16.msra.mxu0 %v863
  %899 = vmatmul.bf16.gmra.mxu0 %v868
  %v900 = vpop.f32.mrf.mxu0
  %v901 = vadd.f32 %v839, %v900
  %v902 = vpop.f32.mrf.mxu0
  %v903 = vadd.f32 %v840, %v902
  %904 = vmatmul.bf16.gmra.mxu0 %v871
  %v905 = vpop.f32.mrf.mxu0
  %v906 = vadd.f32 %v841, %v905
  %v907 = vpop.f32.mrf.mxu0
  %v908 = vadd.f32 %v842, %v907
  %909 = vmatmul.bf16.gmra.mxu0 %v874
  %v910 = vpop.f32.mrf.mxu0
  %v911 = vadd.f32 %v843, %v910
  %v912 = vpop.f32.mrf.mxu0
  %v913 = vadd.f32 %v844, %v912
  %914 = vmatmul.bf16.gmra.mxu0 %v877
  %v915 = vpop.f32.mrf.mxu0
  %v916 = vadd.f32 %v845, %v915
  %v917 = vpop.f32.mrf.mxu0
  %v918 = vadd.f32 %v846, %v917
  %919 = vmatmul.bf16.gmra.mxu0 %v880
  %v920 = vpop.f32.mrf.mxu0
  %v921 = vadd.f32 %v847, %v920
  %v922 = vpop.f32.mrf.mxu0
  %v923 = vadd.f32 %v848, %v922
  %924 = vmatmul.bf16.gmra.mxu0 %v883
  %v925 = vpop.f32.mrf.mxu0
  %v926 = vadd.f32 %v849, %v925
  %v927 = vpop.f32.mrf.mxu0
  %v928 = vadd.f32 %v850, %v927
  %929 = vmatmul.bf16.gmra.mxu0 %v886
  %v930 = vpop.f32.mrf.mxu0
  %v931 = vadd.f32 %v851, %v930
  %v932 = vpop.f32.mrf.mxu0
  %v933 = vadd.f32 %v852, %v932
  %934 = vmatmul.bf16.gmra.mxu0 %v889
  %v935 = vpop.f32.mrf.mxu0
  %v936 = vadd.f32 %v853, %v935
  %v937 = vpop.f32.mrf.mxu0
  %v938 = vadd.f32 %v854, %v937
  %939 = vdwg.mxu0
  %vm940 = vcmask 130048
  %941 = vst.msk [vmem:[%s7] sm:$0xff] %vm940, %v901
  %942 = vst.msk [vmem:[%s7 + $0x8] sm:$0xff] %vm940, %v903
  %943 = vst.msk [vmem:[%s7 + $0x10] sm:$0xff] %vm940, %v906
  %944 = vst.msk [vmem:[%s7 + $0x18] sm:$0xff] %vm940, %v908
  %945 = vst.msk [vmem:[%s7 + $0x20] sm:$0xff] %vm940, %v911
  %946 = vst.msk [vmem:[%s7 + $0x28] sm:$0xff] %vm940, %v913
  %947 = vst.msk [vmem:[%s7 + $0x30] sm:$0xff] %vm940, %v916
  %948 = vst.msk [vmem:[%s7 + $0x38] sm:$0xff] %vm940, %v918
  %949 = vst.msk [vmem:[%s7 + $0x40] sm:$0xff] %vm940, %v921
  %950 = vst.msk [vmem:[%s7 + $0x48] sm:$0xff] %vm940, %v923
  %951 = vst.msk [vmem:[%s7 + $0x50] sm:$0xff] %vm940, %v926
  %952 = vst.msk [vmem:[%s7 + $0x58] sm:$0xff] %vm940, %v928
  %953 = vst.msk [vmem:[%s7 + $0x60] sm:$0xff] %vm940, %v931
  %954 = vst.msk [vmem:[%s7 + $0x68] sm:$0xff] %vm940, %v933
  %955 = vst.msk [vmem:[%s7 + $0x70] sm:$0xff] %vm940, %v936
  %956 = vst.msk [vmem:[%s7 + $0x78] sm:$0xff] %vm940, %v938
  // Predicated region
  $region30: #{mewb1_forward.11} parent=0 // pred_check
    _
  $region31: #{mewb1_forward.11} parent=0 // pred_check_branch
    %958 = sbr.rel (0) target = $region33
  $region32: #{mewb1_forward.11} parent=0 // pred_region
    _
  $region33: #{mewb1_forward.11} parent=0 // pred_fallthru
    _
  // Predicated region
  $region34: #{mewb1_forward.11} parent=0 // pred_check
    _
  $region35: #{mewb1_forward.11} parent=0 // pred_check_branch
    %960 = sbr.rel (0) target = $region37
  $region36: #{mewb1_forward.11} parent=0 // pred_region
    _
  $region37: #{mewb1_forward.11} parent=0 // pred_fallthru
    _

// kernel: mewb1_forward.12
$region0: #{mewb1_forward.12}
  #allocation0 [shape = 'u32[]', space=smem, size = 0x4, offset = 0x4, fixed_abs, tag = 'smem constant byte address 0x4 - core index']
  #allocation1 [shape = 'u32[72,128]{1,0:T(1,128)}', space=vmem, size = 0x9000, scoped, tag = 'internal scratch']
  %s0 = inlined_call_operand.vmem [shape: f32[128,16], index: 0, kind: input, shape index: {}]
  %s1 = inlined_call_operand.vmem [shape: f32[1,16], index: 1, kind: input, shape index: {}]
  %s2 = inlined_call_operand.vmem [shape: f32[1,16], index: 2, kind: input, shape index: {}]
  %s3 = inlined_call_operand.vmem [shape: bf16[16,32], index: 3, kind: input, shape index: {}]
  %s4 = inlined_call_operand.vmem [shape: bf16[16,32], index: 4, kind: input, shape index: {}]
  %s5 = inlined_call_operand.vmem [shape: f32[128,32], index: 5, kind: output, shape index: {0}]
  %s6 = inlined_call_operand.vmem [shape: f32[128,32], index: 6, kind: output, shape index: {1}]
  %7 = xla_tuple %s5, %s6
  %s8 = sld [smem:[#allocation0]]
  $region38: #{mewb1_forward.12} parent=0
    _
  %s10 = ssub.s32 1, %s8
  %s11 = scalar_select 0, %s10, %s8
  // Predicated region
  $region2: #{mewb1_forward.12} parent=0 // pred_check
    _
  $region3: #{mewb1_forward.12} parent=0 // pred_check_branch
    %13 = sbr.rel (0) target = $region5
  $region4: #{mewb1_forward.12} parent=0 // pred_region
    _
  $region5: #{mewb1_forward.12} parent=0 // pred_fallthru
    _
  // Predicated region
  $region6: #{mewb1_forward.12} parent=0 // pred_check
    _
  $region7: #{mewb1_forward.12} parent=0 // pred_check_branch
    %15 = sbr.rel (0) target = $region9
  $region8: #{mewb1_forward.12} parent=0 // pred_region
    _
  $region9: #{mewb1_forward.12} parent=0 // pred_fallthru
    _
  // Predicated region
  $region10: #{mewb1_forward.12} parent=0 // pred_check
    _
  $region11: #{mewb1_forward.12} parent=0 // pred_check_branch
    %17 = sbr.rel (0) target = $region13
  $region12: #{mewb1_forward.12} parent=0 // pred_region
    _
  $region13: #{mewb1_forward.12} parent=0 // pred_fallthru
    _
  // Predicated region
  $region14: #{mewb1_forward.12} parent=0 // pred_check
    _
  $region15: #{mewb1_forward.12} parent=0 // pred_check_branch
    %19 = sbr.rel (0) target = $region17
  $region16: #{mewb1_forward.12} parent=0 // pred_region
    _
  $region17: #{mewb1_forward.12} parent=0 // pred_fallthru
    _
  // Predicated region
  $region18: #{mewb1_forward.12} parent=0 // pred_check
    _
  $region19: #{mewb1_forward.12} parent=0 // pred_check_branch
    %21 = sbr.rel (0) target = $region21
  $region20: #{mewb1_forward.12} parent=0 // pred_region
    _
  $region21: #{mewb1_forward.12} parent=0 // pred_fallthru
    _
  %v23 = vld [vmem:[%s0] sm:$0xff]
  %v24 = vld [vmem:[%s0 + $0x8] sm:$0xff]
  %v25 = vld [vmem:[%s0 + $0x10] sm:$0xff]
  %v26 = vld [vmem:[%s0 + $0x18] sm:$0xff]
  %v27 = vld [vmem:[%s0 + $0x20] sm:$0xff]
  %v28 = vld [vmem:[%s0 + $0x28] sm:$0xff]
  %v29 = vld [vmem:[%s0 + $0x30] sm:$0xff]
  %v30 = vld [vmem:[%s0 + $0x38] sm:$0xff]
  %v31 = vld [vmem:[%s0 + $0x40] sm:$0xff]
  %v32 = vld [vmem:[%s0 + $0x48] sm:$0xff]
  %v33 = vld [vmem:[%s0 + $0x50] sm:$0xff]
  %v34 = vld [vmem:[%s0 + $0x58] sm:$0xff]
  %v35 = vld [vmem:[%s0 + $0x60] sm:$0xff]
  %v36 = vld [vmem:[%s0 + $0x68] sm:$0xff]
  %v37 = vld [vmem:[%s0 + $0x70] sm:$0xff]
  %v38 = vld [vmem:[%s0 + $0x78] sm:$0xff]
  %vm39 = vcmask 130048
  %v40 = vsel %vm39, %v23, 0.0
  %41 = vadd.xlane.f32.xlu0 %v40
  %v42 = vpop.xlane.xlu0 %41
  %v43 = vsel %vm39, %v24, 0.0
  %44 = vadd.xlane.f32.xlu0 %v43
  %v45 = vpop.xlane.xlu0 %44
  %v46 = vsel %vm39, %v25, 0.0
  %47 = vadd.xlane.f32.xlu0 %v46
  %v48 = vpop.xlane.xlu0 %47
  %v49 = vsel %vm39, %v26, 0.0
  %50 = vadd.xlane.f32.xlu0 %v49
  %v51 = vpop.xlane.xlu0 %50
  %v52 = vsel %vm39, %v27, 0.0
  %53 = vadd.xlane.f32.xlu0 %v52
  %v54 = vpop.xlane.xlu0 %53
  %v55 = vsel %vm39, %v28, 0.0
  %56 = vadd.xlane.f32.xlu0 %v55
  %v57 = vpop.xlane.xlu0 %56
  %v58 = vsel %vm39, %v29, 0.0
  %59 = vadd.xlane.f32.xlu0 %v58
  %v60 = vpop.xlane.xlu0 %59
  %v61 = vsel %vm39, %v30, 0.0
  %62 = vadd.xlane.f32.xlu0 %v61
  %v63 = vpop.xlane.xlu0 %62
  %v64 = vsel %vm39, %v31, 0.0
  %65 = vadd.xlane.f32.xlu0 %v64
  %v66 = vpop.xlane.xlu0 %65
  %v67 = vsel %vm39, %v32, 0.0
  %68 = vadd.xlane.f32.xlu0 %v67
  %v69 = vpop.xlane.xlu0 %68
  %v70 = vsel %vm39, %v33, 0.0
  %71 = vadd.xlane.f32.xlu0 %v70
  %v72 = vpop.xlane.xlu0 %71
  %v73 = vsel %vm39, %v34, 0.0
  %74 = vadd.xlane.f32.xlu0 %v73
  %v75 = vpop.xlane.xlu0 %74
  %v76 = vsel %vm39, %v35, 0.0
  %77 = vadd.xlane.f32.xlu0 %v76
  %v78 = vpop.xlane.xlu0 %77
  %v79 = vsel %vm39, %v36, 0.0
  %80 = vadd.xlane.f32.xlu0 %v79
  %v81 = vpop.xlane.xlu0 %80
  %v82 = vsel %vm39, %v37, 0.0
  %83 = vadd.xlane.f32.xlu0 %v82
  %v84 = vpop.xlane.xlu0 %83
  %v85 = vsel %vm39, %v38, 0.0
  %86 = vadd.xlane.f32.xlu0 %v85
  %v87 = vpop.xlane.xlu0 %86
  %v88 = vrcp.pop 16.0
  %v89 = vmul.f32 16.0, %v88
  %v90 = vsub.f32 1.0, %v89
  %v91 = vmul.f32 %v88, %v90
  %v92 = vadd.f32 %v88, %v91
  %vm93 = vweird.f32 %v88
  %v94 = vsel %vm93, %v88, %v92
  %v95 = vmul.f32 %v42, %v94
  %v96 = vmul.f32 %v45, %v94
  %v97 = vmul.f32 %v48, %v94
  %v98 = vmul.f32 %v51, %v94
  %v99 = vmul.f32 %v54, %v94
  %v100 = vmul.f32 %v57, %v94
  %v101 = vmul.f32 %v60, %v94
  %v102 = vmul.f32 %v63, %v94
  %v103 = vmul.f32 %v66, %v94
  %v104 = vmul.f32 %v69, %v94
  %v105 = vmul.f32 %v72, %v94
  %v106 = vmul.f32 %v75, %v94
  %v107 = vmul.f32 %v78, %v94
  %v108 = vmul.f32 %v81, %v94
  %v109 = vmul.f32 %v84, %v94
  %v110 = vmul.f32 %v87, %v94
  %v111 = vsub.f32 %v23, %v95
  %v112 = vsub.f32 %v24, %v96
  %v113 = vsub.f32 %v25, %v97
  %v114 = vsub.f32 %v26, %v98
  %v115 = vsub.f32 %v27, %v99
  %v116 = vsub.f32 %v28, %v100
  %v117 = vsub.f32 %v29, %v101
  %v118 = vsub.f32 %v30, %v102
  %v119 = vsub.f32 %v31, %v103
  %v120 = vsub.f32 %v32, %v104
  %v121 = vsub.f32 %v33, %v105
  %v122 = vsub.f32 %v34, %v106
  %v123 = vsub.f32 %v35, %v107
  %v124 = vsub.f32 %v36, %v108
  %v125 = vsub.f32 %v37, %v109
  %v126 = vsub.f32 %v38, %v110
  %v127 = vmul.f32 %v111, %v111
  %v128 = vmul.f32 %v112, %v112
  %v129 = vmul.f32 %v113, %v113
  %v130 = vmul.f32 %v114, %v114
  %v131 = vmul.f32 %v115, %v115
  %v132 = vmul.f32 %v116, %v116
  %v133 = vmul.f32 %v117, %v117
  %v134 = vmul.f32 %v118, %v118
  %v135 = vmul.f32 %v119, %v119
  %v136 = vmul.f32 %v120, %v120
  %v137 = vmul.f32 %v121, %v121
  %v138 = vmul.f32 %v122, %v122
  %v139 = vmul.f32 %v123, %v123
  %v140 = vmul.f32 %v124, %v124
  %v141 = vmul.f32 %v125, %v125
  %v142 = vmul.f32 %v126, %v126
  %v143 = vsel %vm39, %v127, 0.0
  %144 = vadd.xlane.f32.xlu0 %v143
  %v145 = vpop.xlane.xlu0 %144
  %v146 = vsel %vm39, %v128, 0.0
  %147 = vadd.xlane.f32.xlu0 %v146
  %v148 = vpop.xlane.xlu0 %147
  %v149 = vsel %vm39, %v129, 0.0
  %150 = vadd.xlane.f32.xlu0 %v149
  %v151 = vpop.xlane.xlu0 %150
  %v152 = vsel %vm39, %v130, 0.0
  %153 = vadd.xlane.f32.xlu0 %v152
  %v154 = vpop.xlane.xlu0 %153
  %v155 = vsel %vm39, %v131, 0.0
  %156 = vadd.xlane.f32.xlu0 %v155
  %v157 = vpop.xlane.xlu0 %156
  %v158 = vsel %vm39, %v132, 0.0
  %159 = vadd.xlane.f32.xlu0 %v158
  %v160 = vpop.xlane.xlu0 %159
  %v161 = vsel %vm39, %v133, 0.0
  %162 = vadd.xlane.f32.xlu0 %v161
  %v163 = vpop.xlane.xlu0 %162
  %v164 = vsel %vm39, %v134, 0.0
  %165 = vadd.xlane.f32.xlu0 %v164
  %v166 = vpop.xlane.xlu0 %165
  %v167 = vsel %vm39, %v135, 0.0
  %168 = vadd.xlane.f32.xlu0 %v167
  %v169 = vpop.xlane.xlu0 %168
  %v170 = vsel %vm39, %v136, 0.0
  %171 = vadd.xlane.f32.xlu0 %v170
  %v172 = vpop.xlane.xlu0 %171
  %v173 = vsel %vm39, %v137, 0.0
  %174 = vadd.xlane.f32.xlu0 %v173
  %v175 = vpop.xlane.xlu0 %174
  %v176 = vsel %vm39, %v138, 0.0
  %177 = vadd.xlane.f32.xlu0 %v176
  %v178 = vpop.xlane.xlu0 %177
  %v179 = vsel %vm39, %v139, 0.0
  %180 = vadd.xlane.f32.xlu0 %v179
  %v181 = vpop.xlane.xlu0 %180
  %v182 = vsel %vm39, %v140, 0.0
  %183 = vadd.xlane.f32.xlu0 %v182
  %v184 = vpop.xlane.xlu0 %183
  %v185 = vsel %vm39, %v141, 0.0
  %186 = vadd.xlane.f32.xlu0 %v185
  %v187 = vpop.xlane.xlu0 %186
  %v188 = vsel %vm39, %v142, 0.0
  %189 = vadd.xlane.f32.xlu0 %v188
  %v190 = vpop.xlane.xlu0 %189
  %v191 = vmul.f32 %v145, %v94
  %v192 = vmul.f32 %v148, %v94
  %v193 = vmul.f32 %v151, %v94
  %v194 = vmul.f32 %v154, %v94
  %v195 = vmul.f32 %v157, %v94
  %v196 = vmul.f32 %v160, %v94
  %v197 = vmul.f32 %v163, %v94
  %v198 = vmul.f32 %v166, %v94
  %v199 = vmul.f32 %v169, %v94
  %v200 = vmul.f32 %v172, %v94
  %v201 = vmul.f32 %v175, %v94
  %v202 = vmul.f32 %v178, %v94
  %v203 = vmul.f32 %v181, %v94
  %v204 = vmul.f32 %v184, %v94
  %v205 = vmul.f32 %v187, %v94
  %v206 = vmul.f32 %v190, %v94
  %v207 = vadd.f32 %v191, 1e-05
  %v208 = vadd.f32 %v192, 1e-05
  %v209 = vadd.f32 %v193, 1e-05
  %v210 = vadd.f32 %v194, 1e-05
  %v211 = vadd.f32 %v195, 1e-05
  %v212 = vadd.f32 %v196, 1e-05
  %v213 = vadd.f32 %v197, 1e-05
  %v214 = vadd.f32 %v198, 1e-05
  %v215 = vadd.f32 %v199, 1e-05
  %v216 = vadd.f32 %v200, 1e-05
  %v217 = vadd.f32 %v201, 1e-05
  %v218 = vadd.f32 %v202, 1e-05
  %v219 = vadd.f32 %v203, 1e-05
  %v220 = vadd.f32 %v204, 1e-05
  %v221 = vadd.f32 %v205, 1e-05
  %v222 = vadd.f32 %v206, 1e-05
  %v223 = vrsqrt.pop %v207
  %v224 = vmul.f32 %v223, %v207
  %v225 = vmul.f32 %v224, %v223
  %v226 = vmul.f32 0.5, %v225
  %v227 = vsub.f32 1.5, %v226
  %v228 = vmul.f32 %v223, %v227
  %vm229 = vweird.f32 %v207
  %vm230 = vweird.f32 %v223
  %vm231 = vmor %vm229, %vm230
  %v232 = vsel %vm231, %v223, %v228
  %v233 = vrsqrt.pop %v208
  %v234 = vmul.f32 %v233, %v208
  %v235 = vmul.f32 %v234, %v233
  %v236 = vmul.f32 0.5, %v235
  %v237 = vsub.f32 1.5, %v236
  %v238 = vmul.f32 %v233, %v237
  %vm239 = vweird.f32 %v208
  %vm240 = vweird.f32 %v233
  %vm241 = vmor %vm239, %vm240
  %v242 = vsel %vm241, %v233, %v238
  %v243 = vrsqrt.pop %v209
  %v244 = vmul.f32 %v243, %v209
  %v245 = vmul.f32 %v244, %v243
  %v246 = vmul.f32 0.5, %v245
  %v247 = vsub.f32 1.5, %v246
  %v248 = vmul.f32 %v243, %v247
  %vm249 = vweird.f32 %v209
  %vm250 = vweird.f32 %v243
  %vm251 = vmor %vm249, %vm250
  %v252 = vsel %vm251, %v243, %v248
  %v253 = vrsqrt.pop %v210
  %v254 = vmul.f32 %v253, %v210
  %v255 = vmul.f32 %v254, %v253
  %v256 = vmul.f32 0.5, %v255
  %v257 = vsub.f32 1.5, %v256
  %v258 = vmul.f32 %v253, %v257
  %vm259 = vweird.f32 %v210
  %vm260 = vweird.f32 %v253
  %vm261 = vmor %vm259, %vm260
  %v262 = vsel %vm261, %v253, %v258
  %v263 = vrsqrt.pop %v211
  %v264 = vmul.f32 %v263, %v211
  %v265 = vmul.f32 %v264, %v263
  %v266 = vmul.f32 0.5, %v265
  %v267 = vsub.f32 1.5, %v266
  %v268 = vmul.f32 %v263, %v267
  %vm269 = vweird.f32 %v211
  %vm270 = vweird.f32 %v263
  %vm271 = vmor %vm269, %vm270
  %v272 = vsel %vm271, %v263, %v268
  %v273 = vrsqrt.pop %v212
  %v274 = vmul.f32 %v273, %v212
  %v275 = vmul.f32 %v274, %v273
  %v276 = vmul.f32 0.5, %v275
  %v277 = vsub.f32 1.5, %v276
  %v278 = vmul.f32 %v273, %v277
  %vm279 = vweird.f32 %v212
  %vm280 = vweird.f32 %v273
  %vm281 = vmor %vm279, %vm280
  %v282 = vsel %vm281, %v273, %v278
  %v283 = vrsqrt.pop %v213
  %v284 = vmul.f32 %v283, %v213
  %v285 = vmul.f32 %v284, %v283
  %v286 = vmul.f32 0.5, %v285
  %v287 = vsub.f32 1.5, %v286
  %v288 = vmul.f32 %v283, %v287
  %vm289 = vweird.f32 %v213
  %vm290 = vweird.f32 %v283
  %vm291 = vmor %vm289, %vm290
  %v292 = vsel %vm291, %v283, %v288
  %v293 = vrsqrt.pop %v214
  %v294 = vmul.f32 %v293, %v214
  %v295 = vmul.f32 %v294, %v293
  %v296 = vmul.f32 0.5, %v295
  %v297 = vsub.f32 1.5, %v296
  %v298 = vmul.f32 %v293, %v297
  %vm299 = vweird.f32 %v214
  %vm300 = vweird.f32 %v293
  %vm301 = vmor %vm299, %vm300
  %v302 = vsel %vm301, %v293, %v298
  %v303 = vrsqrt.pop %v215
  %v304 = vmul.f32 %v303, %v215
  %v305 = vmul.f32 %v304, %v303
  %v306 = vmul.f32 0.5, %v305
  %v307 = vsub.f32 1.5, %v306
  %v308 = vmul.f32 %v303, %v307
  %vm309 = vweird.f32 %v215
  %vm310 = vweird.f32 %v303
  %vm311 = vmor %vm309, %vm310
  %v312 = vsel %vm311, %v303, %v308
  %v313 = vrsqrt.pop %v216
  %v314 = vmul.f32 %v313, %v216
  %v315 = vmul.f32 %v314, %v313
  %v316 = vmul.f32 0.5, %v315
  %v317 = vsub.f32 1.5, %v316
  %v318 = vmul.f32 %v313, %v317
  %vm319 = vweird.f32 %v216
  %vm320 = vweird.f32 %v313
  %vm321 = vmor %vm319, %vm320
  %v322 = vsel %vm321, %v313, %v318
  %v323 = vrsqrt.pop %v217
  %v324 = vmul.f32 %v323, %v217
  %v325 = vmul.f32 %v324, %v323
  %v326 = vmul.f32 0.5, %v325
  %v327 = vsub.f32 1.5, %v326
  %v328 = vmul.f32 %v323, %v327
  %vm329 = vweird.f32 %v217
  %vm330 = vweird.f32 %v323
  %vm331 = vmor %vm329, %vm330
  %v332 = vsel %vm331, %v323, %v328
  %v333 = vrsqrt.pop %v218
  %v334 = vmul.f32 %v333, %v218
  %v335 = vmul.f32 %v334, %v333
  %v336 = vmul.f32 0.5, %v335
  %v337 = vsub.f32 1.5, %v336
  %v338 = vmul.f32 %v333, %v337
  %vm339 = vweird.f32 %v218
  %vm340 = vweird.f32 %v333
  %vm341 = vmor %vm339, %vm340
  %v342 = vsel %vm341, %v333, %v338
  %v343 = vrsqrt.pop %v219
  %v344 = vmul.f32 %v343, %v219
  %v345 = vmul.f32 %v344, %v343
  %v346 = vmul.f32 0.5, %v345
  %v347 = vsub.f32 1.5, %v346
  %v348 = vmul.f32 %v343, %v347
  %vm349 = vweird.f32 %v219
  %vm350 = vweird.f32 %v343
  %vm351 = vmor %vm349, %vm350
  %v352 = vsel %vm351, %v343, %v348
  %v353 = vrsqrt.pop %v220
  %v354 = vmul.f32 %v353, %v220
  %v355 = vmul.f32 %v354, %v353
  %v356 = vmul.f32 0.5, %v355
  %v357 = vsub.f32 1.5, %v356
  %v358 = vmul.f32 %v353, %v357
  %vm359 = vweird.f32 %v220
  %vm360 = vweird.f32 %v353
  %vm361 = vmor %vm359, %vm360
  %v362 = vsel %vm361, %v353, %v358
  %v363 = vrsqrt.pop %v221
  %v364 = vmul.f32 %v363, %v221
  %v365 = vmul.f32 %v364, %v363
  %v366 = vmul.f32 0.5, %v365
  %v367 = vsub.f32 1.5, %v366
  %v368 = vmul.f32 %v363, %v367
  %vm369 = vweird.f32 %v221
  %vm370 = vweird.f32 %v363
  %vm371 = vmor %vm369, %vm370
  %v372 = vsel %vm371, %v363, %v368
  %v373 = vrsqrt.pop %v222
  %v374 = vmul.f32 %v373, %v222
  %v375 = vmul.f32 %v374, %v373
  %v376 = vmul.f32 0.5, %v375
  %v377 = vsub.f32 1.5, %v376
  %v378 = vmul.f32 %v373, %v377
  %vm379 = vweird.f32 %v222
  %vm380 = vweird.f32 %v373
  %vm381 = vmor %vm379, %vm380
  %v382 = vsel %vm381, %v373, %v378
  %v383 = vmul.f32 %v111, %v232
  %v384 = vmul.f32 %v112, %v242
  %v385 = vmul.f32 %v113, %v252
  %v386 = vmul.f32 %v114, %v262
  %v387 = vmul.f32 %v115, %v272
  %v388 = vmul.f32 %v116, %v282
  %v389 = vmul.f32 %v117, %v292
  %v390 = vmul.f32 %v118, %v302
  %v391 = vmul.f32 %v119, %v312
  %v392 = vmul.f32 %v120, %v322
  %v393 = vmul.f32 %v121, %v332
  %v394 = vmul.f32 %v122, %v342
  %v395 = vmul.f32 %v123, %v352
  %v396 = vmul.f32 %v124, %v362
  %v397 = vmul.f32 %v125, %v372
  %v398 = vmul.f32 %v126, %v382
  %v399 = vld [vmem:[%s1] sm:$0x1]
  %v401 = vperm.slane %v399, 0
  %v403 = vmul.f32 %v383, %v401
  %v404 = vmul.f32 %v384, %v401
  %v405 = vmul.f32 %v385, %v401
  %v406 = vmul.f32 %v386, %v401
  %v407 = vmul.f32 %v387, %v401
  %v408 = vmul.f32 %v388, %v401
  %v409 = vmul.f32 %v389, %v401
  %v410 = vmul.f32 %v390, %v401
  %v411 = vmul.f32 %v391, %v401
  %v412 = vmul.f32 %v392, %v401
  %v413 = vmul.f32 %v393, %v401
  %v414 = vmul.f32 %v394, %v401
  %v415 = vmul.f32 %v395, %v401
  %v416 = vmul.f32 %v396, %v401
  %v417 = vmul.f32 %v397, %v401
  %v418 = vmul.f32 %v398, %v401
  %v419 = vld [vmem:[%s2] sm:$0x1]
  %v421 = vperm.slane %v419, 0
  %v423 = vadd.f32 %v403, %v421
  %v424 = vadd.f32 %v404, %v421
  %v425 = vadd.f32 %v405, %v421
  %v426 = vadd.f32 %v406, %v421
  %v427 = vadd.f32 %v407, %v421
  %v428 = vadd.f32 %v408, %v421
  %v429 = vadd.f32 %v409, %v421
  %v430 = vadd.f32 %v410, %v421
  %v431 = vadd.f32 %v411, %v421
  %v432 = vadd.f32 %v412, %v421
  %v433 = vadd.f32 %v413, %v421
  %v434 = vadd.f32 %v414, %v421
  %v435 = vadd.f32 %v415, %v421
  %v436 = vadd.f32 %v416, %v421
  %v437 = vadd.f32 %v417, %v421
  %v438 = vadd.f32 %v418, %v421
  %v439 = vpack.c.bf16 %v424, %v423
  %v440 = vpack.c.bf16 %v426, %v425
  %v441 = vpack.c.bf16 %v428, %v427
  %v442 = vpack.c.bf16 %v430, %v429
  %v443 = vpack.c.bf16 %v432, %v431
  %v444 = vpack.c.bf16 %v434, %v433
  %v445 = vpack.c.bf16 %v436, %v435
  %v446 = vpack.c.bf16 %v438, %v437
  %v447 = vld [vmem:[%s3] sm:$0xf]
  %v448 = vld [vmem:[%s3 + $0x4] sm:$0xf]
  %v451 = vunpack.c.l.b16 %v447
  %v452 = vunpack.c.l.b16 %v448
  %v453 = vpack.c.b16 %v452, %v451
  %v456 = vsel %vm39, %v439, 0
  %v459 = vsel %vm39, %v440, 0
  %v462 = vsel %vm39, %v441, 0
  %v465 = vsel %vm39, %v442, 0
  %v468 = vsel %vm39, %v443, 0
  %v471 = vsel %vm39, %v444, 0
  %v474 = vsel %vm39, %v445, 0
  %v477 = vsel %vm39, %v446, 0
  %479 = vmatpush.bf16.msra.mxu0 0
  %480 = vmatpush.bf16.msra.mxu0 0
  %481 = vmatpush.bf16.msra.mxu0 0
  %482 = vmatpush.bf16.msra.mxu0 0
  %483 = vmatpush.bf16.msra.mxu0 0
  %484 = vmatpush.bf16.msra.mxu0 0
  %485 = vmatpush.bf16.msra.mxu0 0
  %486 = vmatpush.bf16.msra.mxu0 %v453
  %487 = vmatmul.bf16.gmra.mxu0 %v456
  %v488 = vpop.f32.mrf.mxu0
  %v489 = vadd.f32 0.0, %v488
  %v490 = vpop.f32.mrf.mxu0
  %v491 = vadd.f32 0.0, %v490
  %492 = vmatmul.bf16.gmra.mxu0 %v459
  %v493 = vpop.f32.mrf.mxu0
  %v494 = vadd.f32 0.0, %v493
  %v495 = vpop.f32.mrf.mxu0
  %v496 = vadd.f32 0.0, %v495
  %497 = vmatmul.bf16.gmra.mxu0 %v462
  %v498 = vpop.f32.mrf.mxu0
  %v499 = vadd.f32 0.0, %v498
  %v500 = vpop.f32.mrf.mxu0
  %v501 = vadd.f32 0.0, %v500
  %502 = vmatmul.bf16.gmra.mxu0 %v465
  %v503 = vpop.f32.mrf.mxu0
  %v504 = vadd.f32 0.0, %v503
  %v505 = vpop.f32.mrf.mxu0
  %v506 = vadd.f32 0.0, %v505
  %507 = vmatmul.bf16.gmra.mxu0 %v468
  %v508 = vpop.f32.mrf.mxu0
  %v509 = vadd.f32 0.0, %v508
  %v510 = vpop.f32.mrf.mxu0
  %v511 = vadd.f32 0.0, %v510
  %512 = vmatmul.bf16.gmra.mxu0 %v471
  %v513 = vpop.f32.mrf.mxu0
  %v514 = vadd.f32 0.0, %v513
  %v515 = vpop.f32.mrf.mxu0
  %v516 = vadd.f32 0.0, %v515
  %517 = vmatmul.bf16.gmra.mxu0 %v474
  %v518 = vpop.f32.mrf.mxu0
  %v519 = vadd.f32 0.0, %v518
  %v520 = vpop.f32.mrf.mxu0
  %v521 = vadd.f32 0.0, %v520
  %522 = vmatmul.bf16.gmra.mxu0 %v477
  %v523 = vpop.f32.mrf.mxu0
  %v524 = vadd.f32 0.0, %v523
  %v525 = vpop.f32.mrf.mxu0
  %v526 = vadd.f32 0.0, %v525
  %527 = vdwg.mxu0
  %vm528 = vcmask 261120
  %529 = vst.msk [vmem:[%s5] sm:$0xff] %vm528, %v489
  %530 = vst.msk [vmem:[%s5 + $0x8] sm:$0xff] %vm528, %v491
  %531 = vst.msk [vmem:[%s5 + $0x10] sm:$0xff] %vm528, %v494
  %532 = vst.msk [vmem:[%s5 + $0x18] sm:$0xff] %vm528, %v496
  %533 = vst.msk [vmem:[%s5 + $0x20] sm:$0xff] %vm528, %v499
  %534 = vst.msk [vmem:[%s5 + $0x28] sm:$0xff] %vm528, %v501
  %535 = vst.msk [vmem:[%s5 + $0x30] sm:$0xff] %vm528, %v504
  %536 = vst.msk [vmem:[%s5 + $0x38] sm:$0xff] %vm528, %v506
  %537 = vst.msk [vmem:[%s5 + $0x40] sm:$0xff] %vm528, %v509
  %538 = vst.msk [vmem:[%s5 + $0x48] sm:$0xff] %vm528, %v511
  %539 = vst.msk [vmem:[%s5 + $0x50] sm:$0xff] %vm528, %v514
  %540 = vst.msk [vmem:[%s5 + $0x58] sm:$0xff] %vm528, %v516
  %541 = vst.msk [vmem:[%s5 + $0x60] sm:$0xff] %vm528, %v519
  %542 = vst.msk [vmem:[%s5 + $0x68] sm:$0xff] %vm528, %v521
  %543 = vst.msk [vmem:[%s5 + $0x70] sm:$0xff] %vm528, %v524
  %544 = vst.msk [vmem:[%s5 + $0x78] sm:$0xff] %vm528, %v526
  %v545 = vld [vmem:[%s4] sm:$0xf]
  %v546 = vld [vmem:[%s4 + $0x4] sm:$0xf]
  %v549 = vunpack.c.l.b16 %v545
  %v550 = vunpack.c.l.b16 %v546
  %v551 = vpack.c.b16 %v550, %v549
  %553 = vmatpush.bf16.msra.mxu0 0
  %554 = vmatpush.bf16.msra.mxu0 0
  %555 = vmatpush.bf16.msra.mxu0 0
  %556 = vmatpush.bf16.msra.mxu0 0
  %557 = vmatpush.bf16.msra.mxu0 0
  %558 = vmatpush.bf16.msra.mxu0 0
  %559 = vmatpush.bf16.msra.mxu0 0
  %560 = vmatpush.bf16.msra.mxu0 %v551
  %561 = vmatmul.bf16.gmra.mxu0 %v456
  %v562 = vpop.f32.mrf.mxu0
  %v563 = vadd.f32 0.0, %v562
  %v564 = vpop.f32.mrf.mxu0
  %v565 = vadd.f32 0.0, %v564
  %566 = vmatmul.bf16.gmra.mxu0 %v459
  %v567 = vpop.f32.mrf.mxu0
  %v568 = vadd.f32 0.0, %v567
  %v569 = vpop.f32.mrf.mxu0
  %v570 = vadd.f32 0.0, %v569
  %571 = vmatmul.bf16.gmra.mxu0 %v462
  %v572 = vpop.f32.mrf.mxu0
  %v573 = vadd.f32 0.0, %v572
  %v574 = vpop.f32.mrf.mxu0
  %v575 = vadd.f32 0.0, %v574
  %576 = vmatmul.bf16.gmra.mxu0 %v465
  %v577 = vpop.f32.mrf.mxu0
  %v578 = vadd.f32 0.0, %v577
  %v579 = vpop.f32.mrf.mxu0
  %v580 = vadd.f32 0.0, %v579
  %581 = vmatmul.bf16.gmra.mxu0 %v468
  %v582 = vpop.f32.mrf.mxu0
  %v583 = vadd.f32 0.0, %v582
  %v584 = vpop.f32.mrf.mxu0
  %v585 = vadd.f32 0.0, %v584
  %586 = vmatmul.bf16.gmra.mxu0 %v471
  %v587 = vpop.f32.mrf.mxu0
  %v588 = vadd.f32 0.0, %v587
  %v589 = vpop.f32.mrf.mxu0
  %v590 = vadd.f32 0.0, %v589
  %591 = vmatmul.bf16.gmra.mxu0 %v474
  %v592 = vpop.f32.mrf.mxu0
  %v593 = vadd.f32 0.0, %v592
  %v594 = vpop.f32.mrf.mxu0
  %v595 = vadd.f32 0.0, %v594
  %596 = vmatmul.bf16.gmra.mxu0 %v477
  %v597 = vpop.f32.mrf.mxu0
  %v598 = vadd.f32 0.0, %v597
  %v599 = vpop.f32.mrf.mxu0
  %v600 = vadd.f32 0.0, %v599
  %601 = vdwg.mxu0
  %602 = vst.msk [vmem:[%s6] sm:$0xff] %vm528, %v563
  %603 = vst.msk [vmem:[%s6 + $0x8] sm:$0xff] %vm528, %v565
  %604 = vst.msk [vmem:[%s6 + $0x10] sm:$0xff] %vm528, %v568
  %605 = vst.msk [vmem:[%s6 + $0x18] sm:$0xff] %vm528, %v570
  %606 = vst.msk [vmem:[%s6 + $0x20] sm:$0xff] %vm528, %v573
  %607 = vst.msk [vmem:[%s6 + $0x28] sm:$0xff] %vm528, %v575
  %608 = vst.msk [vmem:[%s6 + $0x30] sm:$0xff] %vm528, %v578
  %609 = vst.msk [vmem:[%s6 + $0x38] sm:$0xff] %vm528, %v580
  %610 = vst.msk [vmem:[%s6 + $0x40] sm:$0xff] %vm528, %v583
  %611 = vst.msk [vmem:[%s6 + $0x48] sm:$0xff] %vm528, %v585
  %612 = vst.msk [vmem:[%s6 + $0x50] sm:$0xff] %vm528, %v588
  %613 = vst.msk [vmem:[%s6 + $0x58] sm:$0xff] %vm528, %v590
  %614 = vst.msk [vmem:[%s6 + $0x60] sm:$0xff] %vm528, %v593
  %615 = vst.msk [vmem:[%s6 + $0x68] sm:$0xff] %vm528, %v595
  %616 = vst.msk [vmem:[%s6 + $0x70] sm:$0xff] %vm528, %v598
  %617 = vst.msk [vmem:[%s6 + $0x78] sm:$0xff] %vm528, %v600
  // Predicated region
  $region22: #{mewb1_forward.12} parent=0 // pred_check
    _
  $region23: #{mewb1_forward.12} parent=0 // pred_check_branch
    %619 = sbr.rel (0) target = $region25
  $region24: #{mewb1_forward.12} parent=0 // pred_region
    _
  $region25: #{mewb1_forward.12} parent=0 // pred_fallthru
    _
  // Predicated region
  $region26: #{mewb1_forward.12} parent=0 // pred_check
    _
  $region27: #{mewb1_forward.12} parent=0 // pred_check_branch
    %621 = sbr.rel (0) target = $region29
  $region28: #{mewb1_forward.12} parent=0 // pred_region
    _
  $region29: #{mewb1_forward.12} parent=0 // pred_fallthru
    _
  // Predicated region
  $region30: #{mewb1_forward.12} parent=0 // pred_check
    _
  $region31: #{mewb1_forward.12} parent=0 // pred_check_branch
    %623 = sbr.rel (0) target = $region33
  $region32: #{mewb1_forward.12} parent=0 // pred_region
    _
  $region33: #{mewb1_forward.12} parent=0 // pred_fallthru
    _
  // Predicated region
  $region34: #{mewb1_forward.12} parent=0 // pred_check
    _
  $region35: #{mewb1_forward.12} parent=0 // pred_check_branch
    %625 = sbr.rel (0) target = $region37
  $region36: #{mewb1_forward.12} parent=0 // pred_region
    _
  $region37: #{mewb1_forward.12} parent=0 // pred_fallthru
    _

// kernel: mewb1_forward.10
$region0: #{mewb1_forward.10}
  #allocation0 [shape = 'u32[]', space=smem, size = 0x4, offset = 0x4, fixed_abs, tag = 'smem constant byte address 0x4 - core index']
  #allocation1 [shape = 'u32[72,128]{1,0:T(1,128)}', space=vmem, size = 0x9000, scoped, tag = 'internal scratch']
  #allocation2 [shape = 'f32[2,64,16,32]{3,2,1,0:T(8,128)}', space=vmem, size = 0x100000, scoped, tag = 'scratch operand']
  #allocation3 [shape = 'f32[2,64,32]{2,1,0:T(8,128)}', space=vmem, size = 0x10000, scoped, tag = 'scratch operand']
  #allocation4 [shape = 'f32[2,64,32]{2,1,0:T(8,128)}', space=vmem, size = 0x10000, scoped, tag = 'scratch operand']
  #allocation5 [shape = 'f32[2,16,32]{2,1,0:T(8,128)}', space=vmem, size = 0x4000, scoped, tag = 'scratch operand']
  %s0 = inlined_call_operand.vmem [shape: f32[2,2,64,32], index: 0, kind: input, shape index: {}, may-alias: {0,1}]
  %s1 = inlined_call_operand.vmem [shape: f32[2,2,64,32], index: 1, kind: input, shape index: {}, may-alias: {0,1}]
  %s2 = inlined_call_operand.vmem [shape: bf16[2,2,32,32], index: 2, kind: input, shape index: {}]
  %s3 = inlined_call_operand.vmem [shape: bf16[2,2,32,32], index: 3, kind: input, shape index: {}]
  %s4 = inlined_call_operand.vmem [shape: f32[2,2,32], index: 4, kind: input, shape index: {}]
  %s5 = inlined_call_operand.vmem [shape: f32[2,2,16,32], index: 5, kind: input, shape index: {}]
  %s6 = inlined_call_operand.vmem [shape: f32[2,2,32], index: 6, kind: input, shape index: {}]
  %s7 = inlined_call_operand.vmem [shape: f32[2,2,64,32], index: 7, kind: output, shape index: {0}]
  %s8 = inlined_call_operand.vmem [shape: f32[2,2,64,32], index: 8, kind: output, shape index: {1}]
  %9 = xla_tuple %s7, %s8
  %s10 = sld [smem:[#allocation0]]
  $region80: #{mewb1_forward.10} parent=0
    _
  %s12 = ssub.s32 1, %s10
  %s13 = scalar_select 0, %s12, %s10
  loop: start=0, step=1, limit=6
  $region2: #{mewb1_forward.10} parent=0 // loop_pre_header
    _
  $region3: #{mewb1_forward.10} parent=0 // loop_header
    %s15 = sphi 0, %s19
    %p16 = scmp.ge.s32.totalorder %s15, 6
    %s22 = sphi 0, %s41
    %s23 = sphi 0, %s37
    %s24 = sphi 0, %s33
    %s25 = sphi 0, %s22
    %s26 = sphi 0, %s23
    %s27 = sphi 0, %s24
    %s28 = sphi 0, %s25
    %s29 = sphi 0, %s26
    %s30 = sphi 0, %s27
    %s48 = sphi 0, %s50
    %s51 = sphi 0, %s48
    %s52 = sphi 0, %s51
    %s68 = sphi 0, %s52
    %s80 = sphi 0, %s82
    %s83 = sphi 0, %s80
    %s84 = sphi 0, %s83
    %s100 = sphi 0, %s84
    %s106 = sphi 0, %s108
    %s109 = sphi 0, %s106
    %s110 = sphi 0, %s109
    %s126 = sphi 0, %s110
    %s132 = sphi 0, %s134
    %s135 = sphi 0, %s132
    %s136 = sphi 0, %s135
    %s152 = sphi 0, %s136
    %s158 = sphi 0, %s160
    %s161 = sphi 0, %s158
    %s162 = sphi 0, %s161
    %s178 = sphi 0, %s162
    %s184 = sphi 0, %s186
    %s187 = sphi 0, %s184
    %s188 = sphi 0, %s187
    %s204 = sphi 0, %s188
    %s210 = sphi 0, %s212
    %s213 = sphi 0, %s210
    %s214 = sphi 0, %s213
    %s230 = sphi 0, %s214
    %s240 = sphi 0, %s242
    %s243 = sphi 0, %s240
    %s244 = sphi 0, %s243
    %s260 = sphi 0, %s244
    %s272 = sphi 0, %s274
    %s275 = sphi 0, %s272
    %s276 = sphi 0, %s275
    %s292 = sphi 0, %s276
  $region4: #{mewb1_forward.10} parent=0 // loop_header_branch
    %18 = sbr.rel (%p16) target = $region8
  $region5: #{mewb1_forward.10} parent=0 // loop_body
    %s20 = ssub.s32 %s15, 1
    %s21 = ssub.s32 %s15, 2
    %s31 = sadd.s32 1, %s24
    %p32 = scmp.ge.s32.totalorder %s31, 1
    %s33 = scalar_select %p32, 0, %s31
    %s34 = sadd.s32 1, %s23
    %s35 = scalar_select %p32, %s34, %s23
    %p36 = scmp.ge.s32.totalorder %s35, 2
    %s37 = scalar_select %p36, 0, %s35
    %s38 = sadd.s32 1, %s22
    %s39 = scalar_select %p36, %s38, %s22
    %p40 = scmp.ge.s32.totalorder %s39, 2
    %s41 = scalar_select %p40, 0, %s39
    %s42 = ssub.s32 %s22, %s41
    %s43 = ssub.s32 %s23, %s37
    %s44 = sor.u32 %s42, %s43
    %s45 = ssub.s32 %s24, %s33
    %s46 = sor.u32 %s44, %s45
    %p47 = scmp.eq.s32.totalorder %s46, 0
    %s49 = sadd.s32 %s48, 1
    %s50 = scalar_select %p47, %s48, %s49
    %p53 = pneg %p47
    %p54 = scmp.eq.s32.totalorder %s15, 3
    %p55 = por %p53, %p54
    %p56 = scmp.ne.s32.totalorder %s48, %s51
    %p57 = scmp.eq.s32.totalorder %s15, 0
    %p58 = por %p56, %p57
    %p59 = scmp.ne.s32.totalorder %s48, %s51
    %p60 = scmp.eq.s32.totalorder %s20, 3
    %p61 = por %p59, %p60
    %p62 = scmp.ne.s32.totalorder %s51, %s52
    %p63 = scmp.eq.s32.totalorder %s20, 0
    %p64 = por %p62, %p63
    %p65 = scmp.ne.s32.totalorder %s51, %s52
    %p66 = scmp.eq.s32.totalorder %s21, 3
    %p67 = por %p65, %p66
    %p69 = scmp.ne.s32.totalorder %s52, %s68
    %p70 = scmp.eq.s32.totalorder %s21, 0
    %p71 = por %p69, %p70
    %s72 = ssub.s32 0, %s24
    %s73 = ssub.s32 0, %s33
    %s74 = ssub.s32 %s22, %s41
    %s75 = ssub.s32 %s23, %s37
    %s76 = sor.u32 %s74, %s75
    %s77 = ssub.s32 %s72, %s73
    %s78 = sor.u32 %s76, %s77
    %p79 = scmp.eq.s32.totalorder %s78, 0
    %s81 = sadd.s32 %s80, 1
    %s82 = scalar_select %p79, %s80, %s81
    %p85 = pneg %p79
    %p86 = scmp.eq.s32.totalorder %s15, 3
    %p87 = por %p85, %p86
    %p88 = scmp.ne.s32.totalorder %s80, %s83
    %p89 = scmp.eq.s32.totalorder %s15, 0
    %p90 = por %p88, %p89
    %p91 = scmp.ne.s32.totalorder %s80, %s83
    %p92 = scmp.eq.s32.totalorder %s20, 3
    %p93 = por %p91, %p92
    %p94 = scmp.ne.s32.totalorder %s83, %s84
    %p95 = scmp.eq.s32.totalorder %s20, 0
    %p96 = por %p94, %p95
    %p97 = scmp.ne.s32.totalorder %s83, %s84
    %p98 = scmp.eq.s32.totalorder %s21, 3
    %p99 = por %p97, %p98
    %p101 = scmp.ne.s32.totalorder %s84, %s100
    %p102 = scmp.eq.s32.totalorder %s21, 0
    %p103 = por %p101, %p102
    %s104 = ssub.s32 %s23, %s37
    %p105 = scmp.eq.s32.totalorder %s104, 0
    %s107 = sadd.s32 %s106, 1
    %s108 = scalar_select %p105, %s106, %s107
    %p111 = pneg %p105
    %p112 = scmp.eq.s32.totalorder %s15, 3
    %p113 = por %p111, %p112
    %p114 = scmp.ne.s32.totalorder %s106, %s109
    %p115 = scmp.eq.s32.totalorder %s15, 0
    %p116 = por %p114, %p115
    %p117 = scmp.ne.s32.totalorder %s106, %s109
    %p118 = scmp.eq.s32.totalorder %s20, 3
    %p119 = por %p117, %p118
    %p120 = scmp.ne.s32.totalorder %s109, %s110
    %p121 = scmp.eq.s32.totalorder %s20, 0
    %p122 = por %p120, %p121
    %p123 = scmp.ne.s32.totalorder %s109, %s110
    %p124 = scmp.eq.s32.totalorder %s21, 3
    %p125 = por %p123, %p124
    %p127 = scmp.ne.s32.totalorder %s110, %s126
    %p128 = scmp.eq.s32.totalorder %s21, 0
    %p129 = por %p127, %p128
    %s130 = ssub.s32 %s23, %s37
    %p131 = scmp.eq.s32.totalorder %s130, 0
    %s133 = sadd.s32 %s132, 1
    %s134 = scalar_select %p131, %s132, %s133
    %p137 = pneg %p131
    %p138 = scmp.eq.s32.totalorder %s15, 3
    %p139 = por %p137, %p138
    %p140 = scmp.ne.s32.totalorder %s132, %s135
    %p141 = scmp.eq.s32.totalorder %s15, 0
    %p142 = por %p140, %p141
    %p143 = scmp.ne.s32.totalorder %s132, %s135
    %p144 = scmp.eq.s32.totalorder %s20, 3
    %p145 = por %p143, %p144
    %p146 = scmp.ne.s32.totalorder %s135, %s136
    %p147 = scmp.eq.s32.totalorder %s20, 0
    %p148 = por %p146, %p147
    %p149 = scmp.ne.s32.totalorder %s135, %s136
    %p150 = scmp.eq.s32.totalorder %s21, 3
    %p151 = por %p149, %p150
    %p153 = scmp.ne.s32.totalorder %s136, %s152
    %p154 = scmp.eq.s32.totalorder %s21, 0
    %p155 = por %p153, %p154
    %s156 = ssub.s32 %s23, %s37
    %p157 = scmp.eq.s32.totalorder %s156, 0
    %s159 = sadd.s32 %s158, 1
    %s160 = scalar_select %p157, %s158, %s159
    %p163 = pneg %p157
    %p164 = scmp.eq.s32.totalorder %s15, 3
    %p165 = por %p163, %p164
    %p166 = scmp.ne.s32.totalorder %s158, %s161
    %p167 = scmp.eq.s32.totalorder %s15, 0
    %p168 = por %p166, %p167
    %p169 = scmp.ne.s32.totalorder %s158, %s161
    %p170 = scmp.eq.s32.totalorder %s20, 3
    %p171 = por %p169, %p170
    %p172 = scmp.ne.s32.totalorder %s161, %s162
    %p173 = scmp.eq.s32.totalorder %s20, 0
    %p174 = por %p172, %p173
    %p175 = scmp.ne.s32.totalorder %s161, %s162
    %p176 = scmp.eq.s32.totalorder %s21, 3
    %p177 = por %p175, %p176
    %p179 = scmp.ne.s32.totalorder %s162, %s178
    %p180 = scmp.eq.s32.totalorder %s21, 0
    %p181 = por %p179, %p180
    %s182 = ssub.s32 %s23, %s37
    %p183 = scmp.eq.s32.totalorder %s182, 0
    %s185 = sadd.s32 %s184, 1
    %s186 = scalar_select %p183, %s184, %s185
    %p189 = pneg %p183
    %p190 = scmp.eq.s32.totalorder %s15, 3
    %p191 = por %p189, %p190
    %p192 = scmp.ne.s32.totalorder %s184, %s187
    %p193 = scmp.eq.s32.totalorder %s15, 0
    %p194 = por %p192, %p193
    %p195 = scmp.ne.s32.totalorder %s184, %s187
    %p196 = scmp.eq.s32.totalorder %s20, 3
    %p197 = por %p195, %p196
    %p198 = scmp.ne.s32.totalorder %s187, %s188
    %p199 = scmp.eq.s32.totalorder %s20, 0
    %p200 = por %p198, %p199
    %p201 = scmp.ne.s32.totalorder %s187, %s188
    %p202 = scmp.eq.s32.totalorder %s21, 3
    %p203 = por %p201, %p202
    %p205 = scmp.ne.s32.totalorder %s188, %s204
    %p206 = scmp.eq.s32.totalorder %s21, 0
    %p207 = por %p205, %p206
    %s208 = ssub.s32 %s23, %s37
    %p209 = scmp.eq.s32.totalorder %s208, 0
    %s211 = sadd.s32 %s210, 1
    %s212 = scalar_select %p209, %s210, %s211
    %p215 = pneg %p209
    %p216 = scmp.eq.s32.totalorder %s15, 3
    %p217 = por %p215, %p216
    %p218 = scmp.ne.s32.totalorder %s210, %s213
    %p219 = scmp.eq.s32.totalorder %s15, 0
    %p220 = por %p218, %p219
    %p221 = scmp.ne.s32.totalorder %s210, %s213
    %p222 = scmp.eq.s32.totalorder %s20, 3
    %p223 = por %p221, %p222
    %p224 = scmp.ne.s32.totalorder %s213, %s214
    %p225 = scmp.eq.s32.totalorder %s20, 0
    %p226 = por %p224, %p225
    %p227 = scmp.ne.s32.totalorder %s213, %s214
    %p228 = scmp.eq.s32.totalorder %s21, 3
    %p229 = por %p227, %p228
    %p231 = scmp.ne.s32.totalorder %s214, %s230
    %p232 = scmp.eq.s32.totalorder %s21, 0
    %p233 = por %p231, %p232
    %s234 = ssub.s32 %s22, %s41
    %s235 = ssub.s32 %s23, %s37
    %s236 = sor.u32 %s234, %s235
    %s237 = ssub.s32 %s24, %s33
    %s238 = sor.u32 %s236, %s237
    %p239 = scmp.eq.s32.totalorder %s238, 0
    %s241 = sadd.s32 %s240, 1
    %s242 = scalar_select %p239, %s240, %s241
    %p245 = pneg %p239
    %p246 = scmp.eq.s32.totalorder %s15, 3
    %p247 = por %p245, %p246
    %p248 = scmp.ne.s32.totalorder %s240, %s243
    %p249 = scmp.eq.s32.totalorder %s15, 0
    %p250 = por %p248, %p249
    %p251 = scmp.ne.s32.totalorder %s240, %s243
    %p252 = scmp.eq.s32.totalorder %s20, 3
    %p253 = por %p251, %p252
    %p254 = scmp.ne.s32.totalorder %s243, %s244
    %p255 = scmp.eq.s32.totalorder %s20, 0
    %p256 = por %p254, %p255
    %p257 = scmp.ne.s32.totalorder %s243, %s244
    %p258 = scmp.eq.s32.totalorder %s21, 3
    %p259 = por %p257, %p258
    %p261 = scmp.ne.s32.totalorder %s244, %s260
    %p262 = scmp.eq.s32.totalorder %s21, 0
    %p263 = por %p261, %p262
    %s264 = ssub.s32 0, %s24
    %s265 = ssub.s32 0, %s33
    %s266 = ssub.s32 %s22, %s41
    %s267 = ssub.s32 %s23, %s37
    %s268 = sor.u32 %s266, %s267
    %s269 = ssub.s32 %s264, %s265
    %s270 = sor.u32 %s268, %s269
    %p271 = scmp.eq.s32.totalorder %s270, 0
    %s273 = sadd.s32 %s272, 1
    %s274 = scalar_select %p271, %s272, %s273
    %p277 = pneg %p271
    %p278 = scmp.eq.s32.totalorder %s15, 3
    %p279 = por %p277, %p278
    %p280 = scmp.ne.s32.totalorder %s272, %s275
    %p281 = scmp.eq.s32.totalorder %s15, 0
    %p282 = por %p280, %p281
    %p283 = scmp.ne.s32.totalorder %s272, %s275
    %p284 = scmp.eq.s32.totalorder %s20, 3
    %p285 = por %p283, %p284
    %p286 = scmp.ne.s32.totalorder %s275, %s276
    %p287 = scmp.eq.s32.totalorder %s20, 0
    %p288 = por %p286, %p287
    %p289 = scmp.ne.s32.totalorder %s275, %s276
    %p290 = scmp.eq.s32.totalorder %s21, 3
    %p291 = por %p289, %p290
    %p293 = scmp.ne.s32.totalorder %s276, %s292
    %p294 = scmp.eq.s32.totalorder %s21, 0
    %p295 = por %p293, %p294
    %p296 = scmp.le.s32.totalorder 1, %s15
    %p297 = scmp.lt.s32.totalorder %s15, 5
    %p298 = pnand %p296, %p297
    %p299 = pneg %p298
    // Predicated region
    $region9: #{mewb1_forward.10} parent=5 // pred_check
      _
    $region10: #{mewb1_forward.10} parent=5 // pred_check_branch
      %301 = sbr.rel (%p298) target = $region12
    $region11: #{mewb1_forward.10} parent=5 // pred_region
      %s302 = ssub.s32 %s15, 1
    $region12: #{mewb1_forward.10} parent=5 // pred_fallthru
      _
    %p303 = scmp.lt.s32.totalorder %s15, 4
    // Predicated region
    $region13: #{mewb1_forward.10} parent=5 // pred_check
      %p304 = pneg %p303
    $region14: #{mewb1_forward.10} parent=5 // pred_check_branch
      %306 = sbr.rel (%p304) target = $region16
    $region15: #{mewb1_forward.10} parent=5 // pred_region
      // Predicated region
      $region17: #{mewb1_forward.10} parent=15 // pred_check
        %p307 = pneg %p58
      $region18: #{mewb1_forward.10} parent=15 // pred_check_branch
        %309 = sbr.rel (%p307) target = $region20
      $region19: #{mewb1_forward.10} parent=15 // pred_region
        %s310 = smul.u32 8, %s24
        %p311 = scmp.lt.s32.totalorder %s22, 1
        %s312 = scalar_select %p311, %s22, 1
        %p313 = scmp.lt.s32.totalorder %s23, 1
        %s314 = scalar_select %p313, %s23, 1
        %p315 = scmp.lt.s32.totalorder %s310, 7
        %s316 = scalar_select %p315, %s310, 7
        %s317 = smul.addr %s314, 8
        %s318 = sadd.s32 %s316, %s317
        %s319 = smul.addr %s312, 16
        %s320 = sadd.s32 %s318, %s319
        %s321 = smul.addr %s320, 8
        %s322 = scalar_lea.vmem %s0, %s321
        %s323 = smul.u32 8, %s24
      $region20: #{mewb1_forward.10} parent=15 // pred_fallthru
        _
      // Predicated region
      $region21: #{mewb1_forward.10} parent=15 // pred_check
        %p324 = pneg %p90
      $region22: #{mewb1_forward.10} parent=15 // pred_check_branch
        %326 = sbr.rel (%p324) target = $region24
      $region23: #{mewb1_forward.10} parent=15 // pred_region
        %s327 = ssub.s32 0, %s24
        %s328 = smul.u32 8, %s327
        %p329 = scmp.lt.s32.totalorder %s22, 1
        %s330 = scalar_select %p329, %s22, 1
        %p331 = scmp.lt.s32.totalorder %s23, 1
        %s332 = scalar_select %p331, %s23, 1
        %p333 = scmp.lt.s32.totalorder %s328, 7
        %s334 = scalar_select %p333, %s328, 7
        %s335 = smul.addr %s332, 8
        %s336 = sadd.s32 %s334, %s335
        %s337 = smul.addr %s330, 16
        %s338 = sadd.s32 %s336, %s337
        %s339 = smul.addr %s338, 8
        %s340 = scalar_lea.vmem %s1, %s339
        %s341 = ssub.s32 0, %s24
        %s342 = smul.u32 8, %s341
      $region24: #{mewb1_forward.10} parent=15 // pred_fallthru
        _
      // Predicated region
      $region25: #{mewb1_forward.10} parent=15 // pred_check
        %p343 = pneg %p116
      $region26: #{mewb1_forward.10} parent=15 // pred_check_branch
        %345 = sbr.rel (%p343) target = $region28
      $region27: #{mewb1_forward.10} parent=15 // pred_region
        %p346 = scmp.lt.s32.totalorder %s23, 1
        %s347 = scalar_select %p346, %s23, 1
        %s348 = smul.addr %s347, 8
        %s349 = smul.addr %s348, 4
        %s350 = scalar_lea.vmem %s2, %s349
      $region28: #{mewb1_forward.10} parent=15 // pred_fallthru
        _
      // Predicated region
      $region29: #{mewb1_forward.10} parent=15 // pred_check
        %p351 = pneg %p142
      $region30: #{mewb1_forward.10} parent=15 // pred_check_branch
        %353 = sbr.rel (%p351) target = $region32
      $region31: #{mewb1_forward.10} parent=15 // pred_region
        %p354 = scmp.lt.s32.totalorder %s23, 1
        %s355 = scalar_select %p354, %s23, 1
        %s356 = smul.addr %s355, 8
        %s357 = smul.addr %s356, 4
        %s358 = scalar_lea.vmem %s3, %s357
      $region32: #{mewb1_forward.10} parent=15 // pred_fallthru
        _
      // Predicated region
      $region33: #{mewb1_forward.10} parent=15 // pred_check
        %p359 = pneg %p168
      $region34: #{mewb1_forward.10} parent=15 // pred_check_branch
        %361 = sbr.rel (%p359) target = $region36
      $region35: #{mewb1_forward.10} parent=15 // pred_region
        %p362 = scmp.lt.s32.totalorder %s23, 1
        %s363 = scalar_select %p362, %s23, 1
        %s364 = smul.addr %s363, 2
        %s365 = scalar_lea.vmem %s4, %s364
      $region36: #{mewb1_forward.10} parent=15 // pred_fallthru
        _
      // Predicated region
      $region37: #{mewb1_forward.10} parent=15 // pred_check
        %p366 = pneg %p194
      $region38: #{mewb1_forward.10} parent=15 // pred_check_branch
        %368 = sbr.rel (%p366) target = $region40
      $region39: #{mewb1_forward.10} parent=15 // pred_region
        %p369 = scmp.lt.s32.totalorder %s23, 1
        %s370 = scalar_select %p369, %s23, 1
        %s371 = smul.addr %s370, 4
        %s372 = smul.addr %s371, 8
        %s373 = scalar_lea.vmem %s5, %s372
      $region40: #{mewb1_forward.10} parent=15 // pred_fallthru
        _
      // Predicated region
      $region41: #{mewb1_forward.10} parent=15 // pred_check
        %p374 = pneg %p220
      $region42: #{mewb1_forward.10} parent=15 // pred_check_branch
        %376 = sbr.rel (%p374) target = $region44
      $region43: #{mewb1_forward.10} parent=15 // pred_region
        %p377 = scmp.lt.s32.totalorder %s23, 1
        %s378 = scalar_select %p377, %s23, 1
        %s379 = smul.addr %s378, 2
        %s380 = scalar_lea.vmem %s6, %s379
      $region44: #{mewb1_forward.10} parent=15 // pred_fallthru
        _
    $region16: #{mewb1_forward.10} parent=5 // pred_fallthru
      _
    %p381 = scmp.le.s32.totalorder 1, %s15
    %p382 = scmp.lt.s32.totalorder %s15, 5
    %p383 = pnand %p381, %p382
    %p384 = pneg %p383
    // Predicated region
    $region45: #{mewb1_forward.10} parent=5 // pred_check
      _
    $region46: #{mewb1_forward.10} parent=5 // pred_check_branch
      %386 = sbr.rel (%p383) target = $region48
    $region47: #{mewb1_forward.10} parent=5 // pred_region
      %s387 = ssub.s32 %s15, 1
      %s388 = smul.u32 8, %s27
      %p389 = scmp.lt.s32.totalorder %s25, 1
      %s390 = scalar_select %p389, %s25, 1
      %p391 = scmp.lt.s32.totalorder %s26, 1
      %s392 = scalar_select %p391, %s26, 1
      %p393 = scmp.lt.s32.totalorder %s388, 7
      %s394 = scalar_select %p393, %s388, 7
      %s395 = smul.addr %s392, 8
      %s396 = sadd.s32 %s394, %s395
      %s397 = smul.addr %s390, 16
      %s398 = sadd.s32 %s396, %s397
      %s399 = smul.addr %s398, 8
      %s400 = scalar_lea.vmem %s0, %s399
      %p401 = pneg %p64
      %p402 = pneg %p61
      %s403 = ssub.s32 0, %s27
      %s404 = smul.u32 8, %s403
      %p405 = scmp.lt.s32.totalorder %s25, 1
      %s406 = scalar_select %p405, %s25, 1
      %p407 = scmp.lt.s32.totalorder %s26, 1
      %s408 = scalar_select %p407, %s26, 1
      %p409 = scmp.lt.s32.totalorder %s404, 7
      %s410 = scalar_select %p409, %s404, 7
      %s411 = smul.addr %s408, 8
      %s412 = sadd.s32 %s410, %s411
      %s413 = smul.addr %s406, 16
      %s414 = sadd.s32 %s412, %s413
      %s415 = smul.addr %s414, 8
      %s416 = scalar_lea.vmem %s1, %s415
      %p417 = pneg %p96
      %p418 = pneg %p93
      %p419 = scmp.lt.s32.totalorder %s26, 1
      %s420 = scalar_select %p419, %s26, 1
      %s421 = smul.addr %s420, 8
      %s422 = smul.addr %s421, 4
      %s423 = scalar_lea.vmem %s2, %s422
      %p424 = pneg %p122
      %p425 = pneg %p119
      %p426 = scmp.lt.s32.totalorder %s26, 1
      %s427 = scalar_select %p426, %s26, 1
      %s428 = smul.addr %s427, 8
      %s429 = smul.addr %s428, 4
      %s430 = scalar_lea.vmem %s3, %s429
      %p431 = pneg %p148
      %p432 = pneg %p145
      %p433 = scmp.lt.s32.totalorder %s26, 1
      %s434 = scalar_select %p433, %s26, 1
      %s435 = smul.addr %s434, 2
      %s436 = scalar_lea.vmem %s4, %s435
      %p437 = pneg %p174
      %p438 = pneg %p171
      %p439 = scmp.lt.s32.totalorder %s26, 1
      %s440 = scalar_select %p439, %s26, 1
      %s441 = smul.addr %s440, 4
      %s442 = smul.addr %s441, 8
      %s443 = scalar_lea.vmem %s5, %s442
      %p444 = pneg %p200
      %p445 = pneg %p197
      %p446 = scmp.lt.s32.totalorder %s26, 1
      %s447 = scalar_select %p446, %s26, 1
      %s448 = smul.addr %s447, 2
      %s449 = scalar_lea.vmem %s6, %s448
      %p450 = pneg %p226
      %p451 = pneg %p223
      %p452 = pneg %p256
      %p453 = pneg %p253
      %s454 = smul.u32 8, %s27
      %p455 = scmp.lt.s32.totalorder %s25, 1
      %s456 = scalar_select %p455, %s25, 1
      %p457 = scmp.lt.s32.totalorder %s26, 1
      %s458 = scalar_select %p457, %s26, 1
      %p459 = scmp.lt.s32.totalorder %s454, 7
      %s460 = scalar_select %p459, %s454, 7
      %s461 = smul.addr %s458, 8
      %s462 = sadd.s32 %s460, %s461
      %s463 = smul.addr %s456, 16
      %s464 = sadd.s32 %s462, %s463
      %s465 = smul.addr %s464, 8
      %s466 = scalar_lea.vmem %s7, %s465
      %p467 = pneg %p288
      %p468 = pneg %p285
      %s469 = ssub.s32 0, %s27
      %s470 = smul.u32 8, %s469
      %p471 = scmp.lt.s32.totalorder %s25, 1
      %s472 = scalar_select %p471, %s25, 1
      %p473 = scmp.lt.s32.totalorder %s26, 1
      %s474 = scalar_select %p473, %s26, 1
      %p475 = scmp.lt.s32.totalorder %s470, 7
      %s476 = scalar_select %p475, %s470, 7
      %s477 = smul.addr %s474, 8
      %s478 = sadd.s32 %s476, %s477
      %s479 = smul.addr %s472, 16
      %s480 = sadd.s32 %s478, %s479
      %s481 = smul.addr %s480, 8
      %s482 = scalar_lea.vmem %s8, %s481
      %s483 = smul.u32 8, %s27
      %p484 = scmp.lt.s32.totalorder %s25, 1
      %s485 = scalar_select %p484, %s25, 1
      %p486 = scmp.lt.s32.totalorder %s26, 1
      %s487 = scalar_select %p486, %s26, 1
      %p488 = scmp.lt.s32.totalorder %s483, 7
      %s489 = scalar_select %p488, %s483, 7
      %s490 = smul.addr %s487, 8
      %s491 = sadd.s32 %s489, %s490
      %s492 = smul.addr %s485, 16
      %s493 = sadd.s32 %s491, %s492
      %s494 = smul.addr %s493, 8
      %s495 = scalar_lea.vmem %s0, %s494
      %s496 = smul.u32 8, %s27
      %s497 = ssub.s32 0, %s27
      %s498 = smul.u32 8, %s497
      %p499 = scmp.lt.s32.totalorder %s25, 1
      %s500 = scalar_select %p499, %s25, 1
      %p501 = scmp.lt.s32.totalorder %s26, 1
      %s502 = scalar_select %p501, %s26, 1
      %p503 = scmp.lt.s32.totalorder %s498, 7
      %s504 = scalar_select %p503, %s498, 7
      %s505 = smul.addr %s502, 8
      %s506 = sadd.s32 %s504, %s505
      %s507 = smul.addr %s500, 16
      %s508 = sadd.s32 %s506, %s507
      %s509 = smul.addr %s508, 8
      %s510 = scalar_lea.vmem %s1, %s509
      %s511 = ssub.s32 0, %s27
      %s512 = smul.u32 8, %s511
      %p513 = scmp.lt.s32.totalorder %s26, 1
      %s514 = scalar_select %p513, %s26, 1
      %s515 = smul.addr %s514, 8
      %s516 = smul.addr %s515, 4
      %s517 = scalar_lea.vmem %s2, %s516
      %p518 = scmp.lt.s32.totalorder %s26, 1
      %s519 = scalar_select %p518, %s26, 1
      %s520 = smul.addr %s519, 8
      %s521 = smul.addr %s520, 4
      %s522 = scalar_lea.vmem %s3, %s521
      %p523 = scmp.lt.s32.totalorder %s26, 1
      %s524 = scalar_select %p523, %s26, 1
      %s525 = smul.addr %s524, 2
      %s526 = scalar_lea.vmem %s4, %s525
      %p527 = scmp.lt.s32.totalorder %s26, 1
      %s528 = scalar_select %p527, %s26, 1
      %s529 = smul.addr %s528, 4
      %s530 = smul.addr %s529, 8
      %s531 = scalar_lea.vmem %s5, %s530
      %p532 = scmp.lt.s32.totalorder %s26, 1
      %s533 = scalar_select %p532, %s26, 1
      %s534 = smul.addr %s533, 2
      %s535 = scalar_lea.vmem %s6, %s534
      %s536 = smul.u32 8, %s27
      %p537 = scmp.lt.s32.totalorder %s25, 1
      %s538 = scalar_select %p537, %s25, 1
      %p539 = scmp.lt.s32.totalorder %s26, 1
      %s540 = scalar_select %p539, %s26, 1
      %p541 = scmp.lt.s32.totalorder %s536, 7
      %s542 = scalar_select %p541, %s536, 7
      %s543 = smul.addr %s540, 8
      %s544 = sadd.s32 %s542, %s543
      %s545 = smul.addr %s538, 16
      %s546 = sadd.s32 %s544, %s545
      %s547 = smul.addr %s546, 8
      %s548 = scalar_lea.vmem %s7, %s547
      %s549 = smul.u32 8, %s27
      %s550 = ssub.s32 0, %s27
      %s551 = smul.u32 8, %s550
      %p552 = scmp.lt.s32.totalorder %s25, 1
      %s553 = scalar_select %p552, %s25, 1
      %p554 = scmp.lt.s32.totalorder %s26, 1
      %s555 = scalar_select %p554, %s26, 1
      %p556 = scmp.lt.s32.totalorder %s551, 7
      %s557 = scalar_select %p556, %s551, 7
      %s558 = smul.addr %s555, 8
      %s559 = sadd.s32 %s557, %s558
      %s560 = smul.addr %s553, 16
      %s561 = sadd.s32 %s559, %s560
      %s562 = smul.addr %s561, 8
      %s563 = scalar_lea.vmem %s8, %s562
      %s564 = ssub.s32 0, %s27
      %s565 = smul.u32 8, %s564
      %p567 = scmp.eq.s32.totalorder %s27, 0
      // Predicated region
      $region49: #{mewb1_forward.10} parent=47 // pred_check
        %p568 = pneg %p567
      $region50: #{mewb1_forward.10} parent=47 // pred_check_branch
        %570 = sbr.rel (%p568) target = $region52
      $region51: #{mewb1_forward.10} parent=47 // pred_region
        %vm571 = vcmask 261120
        %572 = vst.msk [vmem:[#allocation5] sm:$0xff] %vm571, 0.0
        %573 = vst.msk [vmem:[#allocation5 + $0x8] sm:$0xff] %vm571, 0.0
        %574 = vst.msk [vmem:[#allocation5 + $0x10] sm:$0xff] %vm571, 0.0
        %575 = vst.msk [vmem:[#allocation5 + $0x18] sm:$0xff] %vm571, 0.0
      $region52: #{mewb1_forward.10} parent=47 // pred_fallthru
        _
      %v576 = vld [vmem:[%s495] sm:$0xff]
      %v577 = vld [vmem:[%s495 + $0x8] sm:$0xff]
      %v578 = vld [vmem:[%s495 + $0x10] sm:$0xff]
      %v579 = vld [vmem:[%s495 + $0x18] sm:$0xff]
      %v580 = vld [vmem:[%s495 + $0x20] sm:$0xff]
      %v581 = vld [vmem:[%s495 + $0x28] sm:$0xff]
      %v582 = vld [vmem:[%s495 + $0x30] sm:$0xff]
      %v583 = vld [vmem:[%s495 + $0x38] sm:$0xff]
      %v584 = vpack.c.bf16 %v577, %v576
      %v585 = vpack.c.bf16 %v579, %v578
      %v586 = vpack.c.bf16 %v581, %v580
      %v587 = vpack.c.bf16 %v583, %v582
      %v588 = vld [vmem:[%s517] sm:$0xf]
      %v589 = vld [vmem:[%s517 + $0x4] sm:$0xf]
      %v590 = vld [vmem:[%s517 + $0x8] sm:$0xf]
      %v591 = vld [vmem:[%s517 + $0xc] sm:$0xf]
      %v592 = vld [vmem:[%s526] sm:$0x1]
      %v593 = vperm.slane %v592, 0
      %v598 = vunpack.c.l.b16 %v588
      %v599 = vunpack.c.l.b16 %v589
      %v600 = vunpack.c.l.b16 %v590
      %v601 = vunpack.c.l.b16 %v591
      %v602 = vpack.c.b16 %v599, %v598
      %v603 = vpack.c.b16 %v601, %v600
      %vm606 = vcmask 261120
      %v608 = vsel %vm606, %v584, 0
      %v611 = vsel %vm606, %v585, 0
      %v614 = vsel %vm606, %v586, 0
      %v617 = vsel %vm606, %v587, 0
      %619 = vmatpush.bf16.msra.mxu0 0
      %620 = vmatpush.bf16.msra.mxu0 0
      %621 = vmatpush.bf16.msra.mxu0 0
      %622 = vmatpush.bf16.msra.mxu0 0
      %623 = vmatpush.bf16.msra.mxu0 0
      %624 = vmatpush.bf16.msra.mxu0 0
      %625 = vmatpush.bf16.msra.mxu0 %v603
      %626 = vmatpush.bf16.msra.mxu0 %v602
      %627 = vmatmul.bf16.gmra.mxu0 %v608
      %v628 = vpop.f32.mrf.mxu0
      %v629 = vadd.f32 %v593, %v628
      %v630 = vpop.f32.mrf.mxu0
      %v631 = vadd.f32 %v593, %v630
      %632 = vmatmul.bf16.gmra.mxu0 %v611
      %v633 = vpop.f32.mrf.mxu0
      %v634 = vadd.f32 %v593, %v633
      %v635 = vpop.f32.mrf.mxu0
      %v636 = vadd.f32 %v593, %v635
      %637 = vmatmul.bf16.gmra.mxu0 %v614
      %v638 = vpop.f32.mrf.mxu0
      %v639 = vadd.f32 %v593, %v638
      %v640 = vpop.f32.mrf.mxu0
      %v641 = vadd.f32 %v593, %v640
      %642 = vmatmul.bf16.gmra.mxu0 %v617
      %v643 = vpop.f32.mrf.mxu0
      %v644 = vadd.f32 %v593, %v643
      %v645 = vpop.f32.mrf.mxu0
      %v646 = vadd.f32 %v593, %v645
      %647 = vdwg.mxu0
      %v648 = vmax.f32 %v629, 0.0
      %v649 = vmax.f32 %v631, 0.0
      %v650 = vmax.f32 %v634, 0.0
      %v651 = vmax.f32 %v636, 0.0
      %v652 = vmax.f32 %v639, 0.0
      %v653 = vmax.f32 %v641, 0.0
      %v654 = vmax.f32 %v644, 0.0
      %v655 = vmax.f32 %v646, 0.0
      %v656 = vand.u32 2147483647, %v629
      %v657 = vand.u32 2147483647, %v631
      %v658 = vand.u32 2147483647, %v634
      %v659 = vand.u32 2147483647, %v636
      %v660 = vand.u32 2147483647, %v639
      %v661 = vand.u32 2147483647, %v641
      %v662 = vand.u32 2147483647, %v644
      %v663 = vand.u32 2147483647, %v646
      %v664 = vsub.f32 0.0, %v656
      %v665 = vsub.f32 0.0, %v657
      %v666 = vsub.f32 0.0, %v658
      %v667 = vsub.f32 0.0, %v659
      %v668 = vsub.f32 0.0, %v660
      %v669 = vsub.f32 0.0, %v661
      %v670 = vsub.f32 0.0, %v662
      %v671 = vsub.f32 0.0, %v663
      %v672 = vmul.f32 %v664, 1.442695
      %v673 = vpow.pop %v672
      %v674 = vmul.f32 %v665, 1.442695
      %v675 = vpow.pop %v674
      %v676 = vmul.f32 %v666, 1.442695
      %v677 = vpow.pop %v676
      %v678 = vmul.f32 %v667, 1.442695
      %v679 = vpow.pop %v678
      %v680 = vmul.f32 %v668, 1.442695
      %v681 = vpow.pop %v680
      %v682 = vmul.f32 %v669, 1.442695
      %v683 = vpow.pop %v682
      %v684 = vmul.f32 %v670, 1.442695
      %v685 = vpow.pop %v684
      %v686 = vmul.f32 %v671, 1.442695
      %v687 = vpow.pop %v686
      %v688 = vadd.f32 %v673, 1.0
      %v689 = vadd.f32 %v675, 1.0
      %v690 = vadd.f32 %v677, 1.0
      %v691 = vadd.f32 %v679, 1.0
      %v692 = vadd.f32 %v681, 1.0
      %v693 = vadd.f32 %v683, 1.0
      %v694 = vadd.f32 %v685, 1.0
      %v695 = vadd.f32 %v687, 1.0
      %v696 = vlog2.pop %v688
      %v697 = vmul.f32 %v696, 0.6931472
      %v698 = vlog2.pop %v689
      %v699 = vmul.f32 %v698, 0.6931472
      %v700 = vlog2.pop %v690
      %v701 = vmul.f32 %v700, 0.6931472
      %v702 = vlog2.pop %v691
      %v703 = vmul.f32 %v702, 0.6931472
      %v704 = vlog2.pop %v692
      %v705 = vmul.f32 %v704, 0.6931472
      %v706 = vlog2.pop %v693
      %v707 = vmul.f32 %v706, 0.6931472
      %v708 = vlog2.pop %v694
      %v709 = vmul.f32 %v708, 0.6931472
      %v710 = vlog2.pop %v695
      %v711 = vmul.f32 %v710, 0.6931472
      %v712 = vadd.f32 %v648, %v697
      %v713 = vadd.f32 %v649, %v699
      %v714 = vadd.f32 %v650, %v701
      %v715 = vadd.f32 %v651, %v703
      %v716 = vadd.f32 %v652, %v705
      %v717 = vadd.f32 %v653, %v707
      %v718 = vadd.f32 %v654, %v709
      %v719 = vadd.f32 %v655, %v711
      %v728 = vrot.slane %v712, 1
      %v729 = vrot.slane %v712, 2
      %v730 = vrot.slane %v712, 3
      %v731 = vrot.slane %v712, 4
      %v732 = vrot.slane %v712, 5
      %v733 = vrot.slane %v712, 6
      %v734 = vrot.slane %v712, 7
      %v735 = vrot.slane %v713, 1
      %v736 = vrot.slane %v713, 2
      %v737 = vrot.slane %v713, 3
      %v738 = vrot.slane %v713, 4
      %v739 = vrot.slane %v713, 5
      %v740 = vrot.slane %v713, 6
      %v741 = vrot.slane %v713, 7
      %v742 = vrot.slane %v714, 1
      %v743 = vrot.slane %v714, 2
      %v744 = vrot.slane %v714, 3
      %v745 = vrot.slane %v714, 4
      %v746 = vrot.slane %v714, 5
      %v747 = vrot.slane %v714, 6
      %v748 = vrot.slane %v714, 7
      %v749 = vrot.slane %v715, 1
      %v750 = vrot.slane %v715, 2
      %v751 = vrot.slane %v715, 3
      %v752 = vrot.slane %v715, 4
      %v753 = vrot.slane %v715, 5
      %v754 = vrot.slane %v715, 6
      %v755 = vrot.slane %v715, 7
      %v756 = vrot.slane %v716, 1
      %v757 = vrot.slane %v716, 2
      %v758 = vrot.slane %v716, 3
      %v759 = vrot.slane %v716, 4
      %v760 = vrot.slane %v716, 5
      %v761 = vrot.slane %v716, 6
      %v762 = vrot.slane %v716, 7
      %v763 = vrot.slane %v717, 1
      %v764 = vrot.slane %v717, 2
      %v765 = vrot.slane %v717, 3
      %v766 = vrot.slane %v717, 4
      %v767 = vrot.slane %v717, 5
      %v768 = vrot.slane %v717, 6
      %v769 = vrot.slane %v717, 7
      %v770 = vrot.slane %v718, 1
      %v771 = vrot.slane %v718, 2
      %v772 = vrot.slane %v718, 3
      %v773 = vrot.slane %v718, 4
      %v774 = vrot.slane %v718, 5
      %v775 = vrot.slane %v718, 6
      %v776 = vrot.slane %v718, 7
      %v777 = vrot.slane %v719, 1
      %v778 = vrot.slane %v719, 2
      %v779 = vrot.slane %v719, 3
      %v780 = vrot.slane %v719, 4
      %v781 = vrot.slane %v719, 5
      %v782 = vrot.slane %v719, 6
      %v783 = vrot.slane %v719, 7
      %v784 = vld [vmem:[%s531] sm:$0xff]
      %v785 = vld [vmem:[%s531 + $0x8] sm:$0xff]
      %v786 = vperm.slane %v712, 0
      %v787 = vperm.slane %v728, 0
      %v788 = vperm.slane %v729, 0
      %v789 = vperm.slane %v730, 0
      %v790 = vperm.slane %v731, 0
      %v791 = vperm.slane %v732, 0
      %v792 = vperm.slane %v733, 0
      %v793 = vperm.slane %v734, 0
      %v794 = vperm.slane %v713, 0
      %v795 = vperm.slane %v735, 0
      %v796 = vperm.slane %v736, 0
      %v797 = vperm.slane %v737, 0
      %v798 = vperm.slane %v738, 0
      %v799 = vperm.slane %v739, 0
      %v800 = vperm.slane %v740, 0
      %v801 = vperm.slane %v741, 0
      %v802 = vperm.slane %v714, 0
      %v803 = vperm.slane %v742, 0
      %v804 = vperm.slane %v743, 0
      %v805 = vperm.slane %v744, 0
      %v806 = vperm.slane %v745, 0
      %v807 = vperm.slane %v746, 0
      %v808 = vperm.slane %v747, 0
      %v809 = vperm.slane %v748, 0
      %v810 = vperm.slane %v715, 0
      %v811 = vperm.slane %v749, 0
      %v812 = vperm.slane %v750, 0
      %v813 = vperm.slane %v751, 0
      %v814 = vperm.slane %v752, 0
      %v815 = vperm.slane %v753, 0
      %v816 = vperm.slane %v754, 0
      %v817 = vperm.slane %v755, 0
      %v818 = vperm.slane %v716, 0
      %v819 = vperm.slane %v756, 0
      %v820 = vperm.slane %v757, 0
      %v821 = vperm.slane %v758, 0
      %v822 = vperm.slane %v759, 0
      %v823 = vperm.slane %v760, 0
      %v824 = vperm.slane %v761, 0
      %v825 = vperm.slane %v762, 0
      %v826 = vperm.slane %v717, 0
      %v827 = vperm.slane %v763, 0
      %v828 = vperm.slane %v764, 0
      %v829 = vperm.slane %v765, 0
      %v830 = vperm.slane %v766, 0
      %v831 = vperm.slane %v767, 0
      %v832 = vperm.slane %v768, 0
      %v833 = vperm.slane %v769, 0
      %v834 = vperm.slane %v718, 0
      %v835 = vperm.slane %v770, 0
      %v836 = vperm.slane %v771, 0
      %v837 = vperm.slane %v772, 0
      %v838 = vperm.slane %v773, 0
      %v839 = vperm.slane %v774, 0
      %v840 = vperm.slane %v775, 0
      %v841 = vperm.slane %v776, 0
      %v842 = vperm.slane %v719, 0
      %v843 = vperm.slane %v777, 0
      %v844 = vperm.slane %v778, 0
      %v845 = vperm.slane %v779, 0
      %v846 = vperm.slane %v780, 0
      %v847 = vperm.slane %v781, 0
      %v848 = vperm.slane %v782, 0
      %v849 = vperm.slane %v783, 0
      %v914 = vmul.f32 %v786, %v784
      %v915 = vmul.f32 %v786, %v785
      %v916 = vmul.f32 %v787, %v784
      %v917 = vmul.f32 %v787, %v785
      %v918 = vmul.f32 %v788, %v784
      %v919 = vmul.f32 %v788, %v785
      %v920 = vmul.f32 %v789, %v784
      %v921 = vmul.f32 %v789, %v785
      %v922 = vmul.f32 %v790, %v784
      %v923 = vmul.f32 %v790, %v785
      %v924 = vmul.f32 %v791, %v784
      %v925 = vmul.f32 %v791, %v785
      %v926 = vmul.f32 %v792, %v784
      %v927 = vmul.f32 %v792, %v785
      %v928 = vmul.f32 %v793, %v784
      %v929 = vmul.f32 %v793, %v785
      %v930 = vmul.f32 %v794, %v784
      %v931 = vmul.f32 %v794, %v785
      %v932 = vmul.f32 %v795, %v784
      %v933 = vmul.f32 %v795, %v785
      %v934 = vmul.f32 %v796, %v784
      %v935 = vmul.f32 %v796, %v785
      %v936 = vmul.f32 %v797, %v784
      %v937 = vmul.f32 %v797, %v785
      %v938 = vmul.f32 %v798, %v784
      %v939 = vmul.f32 %v798, %v785
      %v940 = vmul.f32 %v799, %v784
      %v941 = vmul.f32 %v799, %v785
      %v942 = vmul.f32 %v800, %v784
      %v943 = vmul.f32 %v800, %v785
      %v944 = vmul.f32 %v801, %v784
      %v945 = vmul.f32 %v801, %v785
      %v946 = vmul.f32 %v802, %v784
      %v947 = vmul.f32 %v802, %v785
      %v948 = vmul.f32 %v803, %v784
      %v949 = vmul.f32 %v803, %v785
      %v950 = vmul.f32 %v804, %v784
      %v951 = vmul.f32 %v804, %v785
      %v952 = vmul.f32 %v805, %v784
      %v953 = vmul.f32 %v805, %v785
      %v954 = vmul.f32 %v806, %v784
      %v955 = vmul.f32 %v806, %v785
      %v956 = vmul.f32 %v807, %v784
      %v957 = vmul.f32 %v807, %v785
      %v958 = vmul.f32 %v808, %v784
      %v959 = vmul.f32 %v808, %v785
      %v960 = vmul.f32 %v809, %v784
      %v961 = vmul.f32 %v809, %v785
      %v962 = vmul.f32 %v810, %v784
      %v963 = vmul.f32 %v810, %v785
      %v964 = vmul.f32 %v811, %v784
      %v965 = vmul.f32 %v811, %v785
      %v966 = vmul.f32 %v812, %v784
      %v967 = vmul.f32 %v812, %v785
      %v968 = vmul.f32 %v813, %v784
      %v969 = vmul.f32 %v813, %v785
      %v970 = vmul.f32 %v814, %v784
      %v971 = vmul.f32 %v814, %v785
      %v972 = vmul.f32 %v815, %v784
      %v973 = vmul.f32 %v815, %v785
      %v974 = vmul.f32 %v816, %v784
      %v975 = vmul.f32 %v816, %v785
      %v976 = vmul.f32 %v817, %v784
      %v977 = vmul.f32 %v817, %v785
      %v978 = vmul.f32 %v818, %v784
      %v979 = vmul.f32 %v818, %v785
      %v980 = vmul.f32 %v819, %v784
      %v981 = vmul.f32 %v819, %v785
      %v982 = vmul.f32 %v820, %v784
      %v983 = vmul.f32 %v820, %v785
      %v984 = vmul.f32 %v821, %v784
      %v985 = vmul.f32 %v821, %v785
      %v986 = vmul.f32 %v822, %v784
      %v987 = vmul.f32 %v822, %v785
      %v988 = vmul.f32 %v823, %v784
      %v989 = vmul.f32 %v823, %v785
      %v990 = vmul.f32 %v824, %v784
      %v991 = vmul.f32 %v824, %v785
      %v992 = vmul.f32 %v825, %v784
      %v993 = vmul.f32 %v825, %v785
      %v994 = vmul.f32 %v826, %v784
      %v995 = vmul.f32 %v826, %v785
      %v996 = vmul.f32 %v827, %v784
      %v997 = vmul.f32 %v827, %v785
      %v998 = vmul.f32 %v828, %v784
      %v999 = vmul.f32 %v828, %v785
      %v1000 = vmul.f32 %v829, %v784
      %v1001 = vmul.f32 %v829, %v785
      %v1002 = vmul.f32 %v830, %v784
      %v1003 = vmul.f32 %v830, %v785
      %v1004 = vmul.f32 %v831, %v784
      %v1005 = vmul.f32 %v831, %v785
      %v1006 = vmul.f32 %v832, %v784
      %v1007 = vmul.f32 %v832, %v785
      %v1008 = vmul.f32 %v833, %v784
      %v1009 = vmul.f32 %v833, %v785
      %v1010 = vmul.f32 %v834, %v784
      %v1011 = vmul.f32 %v834, %v785
      %v1012 = vmul.f32 %v835, %v784
      %v1013 = vmul.f32 %v835, %v785
      %v1014 = vmul.f32 %v836, %v784
      %v1015 = vmul.f32 %v836, %v785
      %v1016 = vmul.f32 %v837, %v784
      %v1017 = vmul.f32 %v837, %v785
      %v1018 = vmul.f32 %v838, %v784
      %v1019 = vmul.f32 %v838, %v785
      %v1020 = vmul.f32 %v839, %v784
      %v1021 = vmul.f32 %v839, %v785
      %v1022 = vmul.f32 %v840, %v784
      %v1023 = vmul.f32 %v840, %v785
      %v1024 = vmul.f32 %v841, %v784
      %v1025 = vmul.f32 %v841, %v785
      %v1026 = vmul.f32 %v842, %v784
      %v1027 = vmul.f32 %v842, %v785
      %v1028 = vmul.f32 %v843, %v784
      %v1029 = vmul.f32 %v843, %v785
      %v1030 = vmul.f32 %v844, %v784
      %v1031 = vmul.f32 %v844, %v785
      %v1032 = vmul.f32 %v845, %v784
      %v1033 = vmul.f32 %v845, %v785
      %v1034 = vmul.f32 %v846, %v784
      %v1035 = vmul.f32 %v846, %v785
      %v1036 = vmul.f32 %v847, %v784
      %v1037 = vmul.f32 %v847, %v785
      %v1038 = vmul.f32 %v848, %v784
      %v1039 = vmul.f32 %v848, %v785
      %v1040 = vmul.f32 %v849, %v784
      %v1041 = vmul.f32 %v849, %v785
      %v1042 = vmul.f32 %v914, 1.442695
      %v1043 = vpow.pop %v1042
      %v1044 = vmul.f32 %v915, 1.442695
      %v1045 = vpow.pop %v1044
      %v1046 = vmul.f32 %v916, 1.442695
      %v1047 = vpow.pop %v1046
      %v1048 = vmul.f32 %v917, 1.442695
      %v1049 = vpow.pop %v1048
      %v1050 = vmul.f32 %v918, 1.442695
      %v1051 = vpow.pop %v1050
      %v1052 = vmul.f32 %v919, 1.442695
      %v1053 = vpow.pop %v1052
      %v1054 = vmul.f32 %v920, 1.442695
      %v1055 = vpow.pop %v1054
      %v1056 = vmul.f32 %v921, 1.442695
      %v1057 = vpow.pop %v1056
      %v1058 = vmul.f32 %v922, 1.442695
      %v1059 = vpow.pop %v1058
      %v1060 = vmul.f32 %v923, 1.442695
      %v1061 = vpow.pop %v1060
      %v1062 = vmul.f32 %v924, 1.442695
      %v1063 = vpow.pop %v1062
      %v1064 = vmul.f32 %v925, 1.442695
      %v1065 = vpow.pop %v1064
      %v1066 = vmul.f32 %v926, 1.442695
      %v1067 = vpow.pop %v1066
      %v1068 = vmul.f32 %v927, 1.442695
      %v1069 = vpow.pop %v1068
      %v1070 = vmul.f32 %v928, 1.442695
      %v1071 = vpow.pop %v1070
      %v1072 = vmul.f32 %v929, 1.442695
      %v1073 = vpow.pop %v1072
      %v1074 = vmul.f32 %v930, 1.442695
      %v1075 = vpow.pop %v1074
      %v1076 = vmul.f32 %v931, 1.442695
      %v1077 = vpow.pop %v1076
      %v1078 = vmul.f32 %v932, 1.442695
      %v1079 = vpow.pop %v1078
      %v1080 = vmul.f32 %v933, 1.442695
      %v1081 = vpow.pop %v1080
      %v1082 = vmul.f32 %v934, 1.442695
      %v1083 = vpow.pop %v1082
      %v1084 = vmul.f32 %v935, 1.442695
      %v1085 = vpow.pop %v1084
      %v1086 = vmul.f32 %v936, 1.442695
      %v1087 = vpow.pop %v1086
      %v1088 = vmul.f32 %v937, 1.442695
      %v1089 = vpow.pop %v1088
      %v1090 = vmul.f32 %v938, 1.442695
      %v1091 = vpow.pop %v1090
      %v1092 = vmul.f32 %v939, 1.442695
      %v1093 = vpow.pop %v1092
      %v1094 = vmul.f32 %v940, 1.442695
      %v1095 = vpow.pop %v1094
      %v1096 = vmul.f32 %v941, 1.442695
      %v1097 = vpow.pop %v1096
      %v1098 = vmul.f32 %v942, 1.442695
      %v1099 = vpow.pop %v1098
      %v1100 = vmul.f32 %v943, 1.442695
      %v1101 = vpow.pop %v1100
      %v1102 = vmul.f32 %v944, 1.442695
      %v1103 = vpow.pop %v1102
      %v1104 = vmul.f32 %v945, 1.442695
      %v1105 = vpow.pop %v1104
      %v1106 = vmul.f32 %v946, 1.442695
      %v1107 = vpow.pop %v1106
      %v1108 = vmul.f32 %v947, 1.442695
      %v1109 = vpow.pop %v1108
      %v1110 = vmul.f32 %v948, 1.442695
      %v1111 = vpow.pop %v1110
      %v1112 = vmul.f32 %v949, 1.442695
      %v1113 = vpow.pop %v1112
      %v1114 = vmul.f32 %v950, 1.442695
      %v1115 = vpow.pop %v1114
      %v1116 = vmul.f32 %v951, 1.442695
      %v1117 = vpow.pop %v1116
      %v1118 = vmul.f32 %v952, 1.442695
      %v1119 = vpow.pop %v1118
      %v1120 = vmul.f32 %v953, 1.442695
      %v1121 = vpow.pop %v1120
      %v1122 = vmul.f32 %v954, 1.442695
      %v1123 = vpow.pop %v1122
      %v1124 = vmul.f32 %v955, 1.442695
      %v1125 = vpow.pop %v1124
      %v1126 = vmul.f32 %v956, 1.442695
      %v1127 = vpow.pop %v1126
      %v1128 = vmul.f32 %v957, 1.442695
      %v1129 = vpow.pop %v1128
      %v1130 = vmul.f32 %v958, 1.442695
      %v1131 = vpow.pop %v1130
      %v1132 = vmul.f32 %v959, 1.442695
      %v1133 = vpow.pop %v1132
      %v1134 = vmul.f32 %v960, 1.442695
      %v1135 = vpow.pop %v1134
      %v1136 = vmul.f32 %v961, 1.442695
      %v1137 = vpow.pop %v1136
      %v1138 = vmul.f32 %v962, 1.442695
      %v1139 = vpow.pop %v1138
      %v1140 = vmul.f32 %v963, 1.442695
      %v1141 = vpow.pop %v1140
      %v1142 = vmul.f32 %v964, 1.442695
      %v1143 = vpow.pop %v1142
      %v1144 = vmul.f32 %v965, 1.442695
      %v1145 = vpow.pop %v1144
      %v1146 = vmul.f32 %v966, 1.442695
      %v1147 = vpow.pop %v1146
      %v1148 = vmul.f32 %v967, 1.442695
      %v1149 = vpow.pop %v1148
      %v1150 = vmul.f32 %v968, 1.442695
      %v1151 = vpow.pop %v1150
      %v1152 = vmul.f32 %v969, 1.442695
      %v1153 = vpow.pop %v1152
      %v1154 = vmul.f32 %v970, 1.442695
      %v1155 = vpow.pop %v1154
      %v1156 = vmul.f32 %v971, 1.442695
      %v1157 = vpow.pop %v1156
      %v1158 = vmul.f32 %v972, 1.442695
      %v1159 = vpow.pop %v1158
      %v1160 = vmul.f32 %v973, 1.442695
      %v1161 = vpow.pop %v1160
      %v1162 = vmul.f32 %v974, 1.442695
      %v1163 = vpow.pop %v1162
      %v1164 = vmul.f32 %v975, 1.442695
      %v1165 = vpow.pop %v1164
      %v1166 = vmul.f32 %v976, 1.442695
      %v1167 = vpow.pop %v1166
      %v1168 = vmul.f32 %v977, 1.442695
      %v1169 = vpow.pop %v1168
      %v1170 = vmul.f32 %v978, 1.442695
      %v1171 = vpow.pop %v1170
      %v1172 = vmul.f32 %v979, 1.442695
      %v1173 = vpow.pop %v1172
      %v1174 = vmul.f32 %v980, 1.442695
      %v1175 = vpow.pop %v1174
      %v1176 = vmul.f32 %v981, 1.442695
      %v1177 = vpow.pop %v1176
      %v1178 = vmul.f32 %v982, 1.442695
      %v1179 = vpow.pop %v1178
      %v1180 = vmul.f32 %v983, 1.442695
      %v1181 = vpow.pop %v1180
      %v1182 = vmul.f32 %v984, 1.442695
      %v1183 = vpow.pop %v1182
      %v1184 = vmul.f32 %v985, 1.442695
      %v1185 = vpow.pop %v1184
      %v1186 = vmul.f32 %v986, 1.442695
      %v1187 = vpow.pop %v1186
      %v1188 = vmul.f32 %v987, 1.442695
      %v1189 = vpow.pop %v1188
      %v1190 = vmul.f32 %v988, 1.442695
      %v1191 = vpow.pop %v1190
      %v1192 = vmul.f32 %v989, 1.442695
      %v1193 = vpow.pop %v1192
      %v1194 = vmul.f32 %v990, 1.442695
      %v1195 = vpow.pop %v1194
      %v1196 = vmul.f32 %v991, 1.442695
      %v1197 = vpow.pop %v1196
      %v1198 = vmul.f32 %v992, 1.442695
      %v1199 = vpow.pop %v1198
      %v1200 = vmul.f32 %v993, 1.442695
      %v1201 = vpow.pop %v1200
      %v1202 = vmul.f32 %v994, 1.442695
      %v1203 = vpow.pop %v1202
      %v1204 = vmul.f32 %v995, 1.442695
      %v1205 = vpow.pop %v1204
      %v1206 = vmul.f32 %v996, 1.442695
      %v1207 = vpow.pop %v1206
      %v1208 = vmul.f32 %v997, 1.442695
      %v1209 = vpow.pop %v1208
      %v1210 = vmul.f32 %v998, 1.442695
      %v1211 = vpow.pop %v1210
      %v1212 = vmul.f32 %v999, 1.442695
      %v1213 = vpow.pop %v1212
      %v1214 = vmul.f32 %v1000, 1.442695
      %v1215 = vpow.pop %v1214
      %v1216 = vmul.f32 %v1001, 1.442695
      %v1217 = vpow.pop %v1216
      %v1218 = vmul.f32 %v1002, 1.442695
      %v1219 = vpow.pop %v1218
      %v1220 = vmul.f32 %v1003, 1.442695
      %v1221 = vpow.pop %v1220
      %v1222 = vmul.f32 %v1004, 1.442695
      %v1223 = vpow.pop %v1222
      %v1224 = vmul.f32 %v1005, 1.442695
      %v1225 = vpow.pop %v1224
      %v1226 = vmul.f32 %v1006, 1.442695
      %v1227 = vpow.pop %v1226
      %v1228 = vmul.f32 %v1007, 1.442695
      %v1229 = vpow.pop %v1228
      %v1230 = vmul.f32 %v1008, 1.442695
      %v1231 = vpow.pop %v1230
      %v1232 = vmul.f32 %v1009, 1.442695
      %v1233 = vpow.pop %v1232
      %v1234 = vmul.f32 %v1010, 1.442695
      %v1235 = vpow.pop %v1234
      %v1236 = vmul.f32 %v1011, 1.442695
      %v1237 = vpow.pop %v1236
      %v1238 = vmul.f32 %v1012, 1.442695
      %v1239 = vpow.pop %v1238
      %v1240 = vmul.f32 %v1013, 1.442695
      %v1241 = vpow.pop %v1240
      %v1242 = vmul.f32 %v1014, 1.442695
      %v1243 = vpow.pop %v1242
      %v1244 = vmul.f32 %v1015, 1.442695
      %v1245 = vpow.pop %v1244
      %v1246 = vmul.f32 %v1016, 1.442695
      %v1247 = vpow.pop %v1246
      %v1248 = vmul.f32 %v1017, 1.442695
      %v1249 = vpow.pop %v1248
      %v1250 = vmul.f32 %v1018, 1.442695
      %v1251 = vpow.pop %v1250
      %v1252 = vmul.f32 %v1019, 1.442695
      %v1253 = vpow.pop %v1252
      %v1254 = vmul.f32 %v1020, 1.442695
      %v1255 = vpow.pop %v1254
      %v1256 = vmul.f32 %v1021, 1.442695
      %v1257 = vpow.pop %v1256
      %v1258 = vmul.f32 %v1022, 1.442695
      %v1259 = vpow.pop %v1258
      %v1260 = vmul.f32 %v1023, 1.442695
      %v1261 = vpow.pop %v1260
      %v1262 = vmul.f32 %v1024, 1.442695
      %v1263 = vpow.pop %v1262
      %v1264 = vmul.f32 %v1025, 1.442695
      %v1265 = vpow.pop %v1264
      %v1266 = vmul.f32 %v1026, 1.442695
      %v1267 = vpow.pop %v1266
      %v1268 = vmul.f32 %v1027, 1.442695
      %v1269 = vpow.pop %v1268
      %v1270 = vmul.f32 %v1028, 1.442695
      %v1271 = vpow.pop %v1270
      %v1272 = vmul.f32 %v1029, 1.442695
      %v1273 = vpow.pop %v1272
      %v1274 = vmul.f32 %v1030, 1.442695
      %v1275 = vpow.pop %v1274
      %v1276 = vmul.f32 %v1031, 1.442695
      %v1277 = vpow.pop %v1276
      %v1278 = vmul.f32 %v1032, 1.442695
      %v1279 = vpow.pop %v1278
      %v1280 = vmul.f32 %v1033, 1.442695
      %v1281 = vpow.pop %v1280
      %v1282 = vmul.f32 %v1034, 1.442695
      %v1283 = vpow.pop %v1282
      %v1284 = vmul.f32 %v1035, 1.442695
      %v1285 = vpow.pop %v1284
      %v1286 = vmul.f32 %v1036, 1.442695
      %v1287 = vpow.pop %v1286
      %v1288 = vmul.f32 %v1037, 1.442695
      %v1289 = vpow.pop %v1288
      %v1290 = vmul.f32 %v1038, 1.442695
      %v1291 = vpow.pop %v1290
      %v1292 = vmul.f32 %v1039, 1.442695
      %v1293 = vpow.pop %v1292
      %v1294 = vmul.f32 %v1040, 1.442695
      %v1295 = vpow.pop %v1294
      %v1296 = vmul.f32 %v1041, 1.442695
      %v1297 = vpow.pop %v1296
      %1298 = vst.msk [vmem:[#allocation2] sm:$0xff] %vm606, %v1043
      %1299 = vst.msk [vmem:[#allocation2 + $0x8] sm:$0xff] %vm606, %v1045
      %1300 = vst.msk [vmem:[#allocation2 + $0x10] sm:$0xff] %vm606, %v1047
      %1301 = vst.msk [vmem:[#allocation2 + $0x18] sm:$0xff] %vm606, %v1049
      %1302 = vst.msk [vmem:[#allocation2 + $0x20] sm:$0xff] %vm606, %v1051
      %1303 = vst.msk [vmem:[#allocation2 + $0x28] sm:$0xff] %vm606, %v1053
      %1304 = vst.msk [vmem:[#allocation2 + $0x30] sm:$0xff] %vm606, %v1055
      %1305 = vst.msk [vmem:[#allocation2 + $0x38] sm:$0xff] %vm606, %v1057
      %1306 = vst.msk [vmem:[#allocation2 + $0x40] sm:$0xff] %vm606, %v1059
      %1307 = vst.msk [vmem:[#allocation2 + $0x48] sm:$0xff] %vm606, %v1061
      %1308 = vst.msk [vmem:[#allocation2 + $0x50] sm:$0xff] %vm606, %v1063
      %1309 = vst.msk [vmem:[#allocation2 + $0x58] sm:$0xff] %vm606, %v1065
      %1310 = vst.msk [vmem:[#allocation2 + $0x60] sm:$0xff] %vm606, %v1067
      %1311 = vst.msk [vmem:[#allocation2 + $0x68] sm:$0xff] %vm606, %v1069
      %1312 = vst.msk [vmem:[#allocation2 + $0x70] sm:$0xff] %vm606, %v1071
      %1313 = vst.msk [vmem:[#allocation2 + $0x78] sm:$0xff] %vm606, %v1073
      %1314 = vst.msk [vmem:[#allocation2 + $0x80] sm:$0xff] %vm606, %v1075
      %1315 = vst.msk [vmem:[#allocation2 + $0x88] sm:$0xff] %vm606, %v1077
      %1316 = vst.msk [vmem:[#allocation2 + $0x90] sm:$0xff] %vm606, %v1079
      %1317 = vst.msk [vmem:[#allocation2 + $0x98] sm:$0xff] %vm606, %v1081
      %1318 = vst.msk [vmem:[#allocation2 + $0xa0] sm:$0xff] %vm606, %v1083
      %1319 = vst.msk [vmem:[#allocation2 + $0xa8] sm:$0xff] %vm606, %v1085
      %1320 = vst.msk [vmem:[#allocation2 + $0xb0] sm:$0xff] %vm606, %v1087
      %1321 = vst.msk [vmem:[#allocation2 + $0xb8] sm:$0xff] %vm606, %v1089
      %1322 = vst.msk [vmem:[#allocation2 + $0xc0] sm:$0xff] %vm606, %v1091
      %1323 = vst.msk [vmem:[#allocation2 + $0xc8] sm:$0xff] %vm606, %v1093
      %1324 = vst.msk [vmem:[#allocation2 + $0xd0] sm:$0xff] %vm606, %v1095
      %1325 = vst.msk [vmem:[#allocation2 + $0xd8] sm:$0xff] %vm606, %v1097
      %1326 = vst.msk [vmem:[#allocation2 + $0xe0] sm:$0xff] %vm606, %v1099
      %1327 = vst.msk [vmem:[#allocation2 + $0xe8] sm:$0xff] %vm606, %v1101
      %1328 = vst.msk [vmem:[#allocation2 + $0xf0] sm:$0xff] %vm606, %v1103
      %1329 = vst.msk [vmem:[#allocation2 + $0xf8] sm:$0xff] %vm606, %v1105
      %1330 = vst.msk [vmem:[#allocation2 + $0x100] sm:$0xff] %vm606, %v1107
      %1331 = vst.msk [vmem:[#allocation2 + $0x108] sm:$0xff] %vm606, %v1109
      %1332 = vst.msk [vmem:[#allocation2 + $0x110] sm:$0xff] %vm606, %v1111
      %1333 = vst.msk [vmem:[#allocation2 + $0x118] sm:$0xff] %vm606, %v1113
      %1334 = vst.msk [vmem:[#allocation2 + $0x120] sm:$0xff] %vm606, %v1115
      %1335 = vst.msk [vmem:[#allocation2 + $0x128] sm:$0xff] %vm606, %v1117
      %1336 = vst.msk [vmem:[#allocation2 + $0x130] sm:$0xff] %vm606, %v1119
      %1337 = vst.msk [vmem:[#allocation2 + $0x138] sm:$0xff] %vm606, %v1121
      %1338 = vst.msk [vmem:[#allocation2 + $0x140] sm:$0xff] %vm606, %v1123
      %1339 = vst.msk [vmem:[#allocation2 + $0x148] sm:$0xff] %vm606, %v1125
      %1340 = vst.msk [vmem:[#allocation2 + $0x150] sm:$0xff] %vm606, %v1127
      %1341 = vst.msk [vmem:[#allocation2 + $0x158] sm:$0xff] %vm606, %v1129
      %1342 = vst.msk [vmem:[#allocation2 + $0x160] sm:$0xff] %vm606, %v1131
      %1343 = vst.msk [vmem:[#allocation2 + $0x168] sm:$0xff] %vm606, %v1133
      %1344 = vst.msk [vmem:[#allocation2 + $0x170] sm:$0xff] %vm606, %v1135
      %1345 = vst.msk [vmem:[#allocation2 + $0x178] sm:$0xff] %vm606, %v1137
      %1346 = vst.msk [vmem:[#allocation2 + $0x180] sm:$0xff] %vm606, %v1139
      %1347 = vst.msk [vmem:[#allocation2 + $0x188] sm:$0xff] %vm606, %v1141
      %1348 = vst.msk [vmem:[#allocation2 + $0x190] sm:$0xff] %vm606, %v1143
      %1349 = vst.msk [vmem:[#allocation2 + $0x198] sm:$0xff] %vm606, %v1145
      %1350 = vst.msk [vmem:[#allocation2 + $0x1a0] sm:$0xff] %vm606, %v1147
      %1351 = vst.msk [vmem:[#allocation2 + $0x1a8] sm:$0xff] %vm606, %v1149
      %1352 = vst.msk [vmem:[#allocation2 + $0x1b0] sm:$0xff] %vm606, %v1151
      %1353 = vst.msk [vmem:[#allocation2 + $0x1b8] sm:$0xff] %vm606, %v1153
      %1354 = vst.msk [vmem:[#allocation2 + $0x1c0] sm:$0xff] %vm606, %v1155
      %1355 = vst.msk [vmem:[#allocation2 + $0x1c8] sm:$0xff] %vm606, %v1157
      %1356 = vst.msk [vmem:[#allocation2 + $0x1d0] sm:$0xff] %vm606, %v1159
      %1357 = vst.msk [vmem:[#allocation2 + $0x1d8] sm:$0xff] %vm606, %v1161
      %1358 = vst.msk [vmem:[#allocation2 + $0x1e0] sm:$0xff] %vm606, %v1163
      %1359 = vst.msk [vmem:[#allocation2 + $0x1e8] sm:$0xff] %vm606, %v1165
      %1360 = vst.msk [vmem:[#allocation2 + $0x1f0] sm:$0xff] %vm606, %v1167
      %1361 = vst.msk [vmem:[#allocation2 + $0x1f8] sm:$0xff] %vm606, %v1169
      %1362 = vst.msk [vmem:[#allocation2 + $0x200] sm:$0xff] %vm606, %v1171
      %1363 = vst.msk [vmem:[#allocation2 + $0x208] sm:$0xff] %vm606, %v1173
      %1364 = vst.msk [vmem:[#allocation2 + $0x210] sm:$0xff] %vm606, %v1175
      %1365 = vst.msk [vmem:[#allocation2 + $0x218] sm:$0xff] %vm606, %v1177
      %1366 = vst.msk [vmem:[#allocation2 + $0x220] sm:$0xff] %vm606, %v1179
      %1367 = vst.msk [vmem:[#allocation2 + $0x228] sm:$0xff] %vm606, %v1181
      %1368 = vst.msk [vmem:[#allocation2 + $0x230] sm:$0xff] %vm606, %v1183
      %1369 = vst.msk [vmem:[#allocation2 + $0x238] sm:$0xff] %vm606, %v1185
      %1370 = vst.msk [vmem:[#allocation2 + $0x240] sm:$0xff] %vm606, %v1187
      %1371 = vst.msk [vmem:[#allocation2 + $0x248] sm:$0xff] %vm606, %v1189
      %1372 = vst.msk [vmem:[#allocation2 + $0x250] sm:$0xff] %vm606, %v1191
      %1373 = vst.msk [vmem:[#allocation2 + $0x258] sm:$0xff] %vm606, %v1193
      %1374 = vst.msk [vmem:[#allocation2 + $0x260] sm:$0xff] %vm606, %v1195
      %1375 = vst.msk [vmem:[#allocation2 + $0x268] sm:$0xff] %vm606, %v1197
      %1376 = vst.msk [vmem:[#allocation2 + $0x270] sm:$0xff] %vm606, %v1199
      %1377 = vst.msk [vmem:[#allocation2 + $0x278] sm:$0xff] %vm606, %v1201
      %1378 = vst.msk [vmem:[#allocation2 + $0x280] sm:$0xff] %vm606, %v1203
      %1379 = vst.msk [vmem:[#allocation2 + $0x288] sm:$0xff] %vm606, %v1205
      %1380 = vst.msk [vmem:[#allocation2 + $0x290] sm:$0xff] %vm606, %v1207
      %1381 = vst.msk [vmem:[#allocation2 + $0x298] sm:$0xff] %vm606, %v1209
      %1382 = vst.msk [vmem:[#allocation2 + $0x2a0] sm:$0xff] %vm606, %v1211
      %1383 = vst.msk [vmem:[#allocation2 + $0x2a8] sm:$0xff] %vm606, %v1213
      %1384 = vst.msk [vmem:[#allocation2 + $0x2b0] sm:$0xff] %vm606, %v1215
      %1385 = vst.msk [vmem:[#allocation2 + $0x2b8] sm:$0xff] %vm606, %v1217
      %1386 = vst.msk [vmem:[#allocation2 + $0x2c0] sm:$0xff] %vm606, %v1219
      %1387 = vst.msk [vmem:[#allocation2 + $0x2c8] sm:$0xff] %vm606, %v1221
      %1388 = vst.msk [vmem:[#allocation2 + $0x2d0] sm:$0xff] %vm606, %v1223
      %1389 = vst.msk [vmem:[#allocation2 + $0x2d8] sm:$0xff] %vm606, %v1225
      %1390 = vst.msk [vmem:[#allocation2 + $0x2e0] sm:$0xff] %vm606, %v1227
      %1391 = vst.msk [vmem:[#allocation2 + $0x2e8] sm:$0xff] %vm606, %v1229
      %1392 = vst.msk [vmem:[#allocation2 + $0x2f0] sm:$0xff] %vm606, %v1231
      %1393 = vst.msk [vmem:[#allocation2 + $0x2f8] sm:$0xff] %vm606, %v1233
      %1394 = vst.msk [vmem:[#allocation2 + $0x300] sm:$0xff] %vm606, %v1235
      %1395 = vst.msk [vmem:[#allocation2 + $0x308] sm:$0xff] %vm606, %v1237
      %1396 = vst.msk [vmem:[#allocation2 + $0x310] sm:$0xff] %vm606, %v1239
      %1397 = vst.msk [vmem:[#allocation2 + $0x318] sm:$0xff] %vm606, %v1241
      %1398 = vst.msk [vmem:[#allocation2 + $0x320] sm:$0xff] %vm606, %v1243
      %1399 = vst.msk [vmem:[#allocation2 + $0x328] sm:$0xff] %vm606, %v1245
      %1400 = vst.msk [vmem:[#allocation2 + $0x330] sm:$0xff] %vm606, %v1247
      %1401 = vst.msk [vmem:[#allocation2 + $0x338] sm:$0xff] %vm606, %v1249
      %1402 = vst.msk [vmem:[#allocation2 + $0x340] sm:$0xff] %vm606, %v1251
      %1403 = vst.msk [vmem:[#allocation2 + $0x348] sm:$0xff] %vm606, %v1253
      %1404 = vst.msk [vmem:[#allocation2 + $0x350] sm:$0xff] %vm606, %v1255
      %1405 = vst.msk [vmem:[#allocation2 + $0x358] sm:$0xff] %vm606, %v1257
      %1406 = vst.msk [vmem:[#allocation2 + $0x360] sm:$0xff] %vm606, %v1259
      %1407 = vst.msk [vmem:[#allocation2 + $0x368] sm:$0xff] %vm606, %v1261
      %1408 = vst.msk [vmem:[#allocation2 + $0x370] sm:$0xff] %vm606, %v1263
      %1409 = vst.msk [vmem:[#allocation2 + $0x378] sm:$0xff] %vm606, %v1265
      %1410 = vst.msk [vmem:[#allocation2 + $0x380] sm:$0xff] %vm606, %v1267
      %1411 = vst.msk [vmem:[#allocation2 + $0x388] sm:$0xff] %vm606, %v1269
      %1412 = vst.msk [vmem:[#allocation2 + $0x390] sm:$0xff] %vm606, %v1271
      %1413 = vst.msk [vmem:[#allocation2 + $0x398] sm:$0xff] %vm606, %v1273
      %1414 = vst.msk [vmem:[#allocation2 + $0x3a0] sm:$0xff] %vm606, %v1275
      %1415 = vst.msk [vmem:[#allocation2 + $0x3a8] sm:$0xff] %vm606, %v1277
      %1416 = vst.msk [vmem:[#allocation2 + $0x3b0] sm:$0xff] %vm606, %v1279
      %1417 = vst.msk [vmem:[#allocation2 + $0x3b8] sm:$0xff] %vm606, %v1281
      %1418 = vst.msk [vmem:[#allocation2 + $0x3c0] sm:$0xff] %vm606, %v1283
      %1419 = vst.msk [vmem:[#allocation2 + $0x3c8] sm:$0xff] %vm606, %v1285
      %1420 = vst.msk [vmem:[#allocation2 + $0x3d0] sm:$0xff] %vm606, %v1287
      %1421 = vst.msk [vmem:[#allocation2 + $0x3d8] sm:$0xff] %vm606, %v1289
      %1422 = vst.msk [vmem:[#allocation2 + $0x3e0] sm:$0xff] %vm606, %v1291
      %1423 = vst.msk [vmem:[#allocation2 + $0x3e8] sm:$0xff] %vm606, %v1293
      %1424 = vst.msk [vmem:[#allocation2 + $0x3f0] sm:$0xff] %vm606, %v1295
      %1425 = vst.msk [vmem:[#allocation2 + $0x3f8] sm:$0xff] %vm606, %v1297
      %v1426 = vmul.f32 %v712, %v576
      %v1427 = vmul.f32 %v713, %v577
      %v1428 = vmul.f32 %v714, %v578
      %v1429 = vmul.f32 %v715, %v579
      %v1430 = vmul.f32 %v716, %v580
      %v1431 = vmul.f32 %v717, %v581
      %v1432 = vmul.f32 %v718, %v582
      %v1433 = vmul.f32 %v719, %v583
      %1434 = vst.msk [vmem:[#allocation3] sm:$0xff] %vm606, %v1426
      %1435 = vst.msk [vmem:[#allocation3 + $0x8] sm:$0xff] %vm606, %v1427
      %1436 = vst.msk [vmem:[#allocation3 + $0x10] sm:$0xff] %vm606, %v1428
      %1437 = vst.msk [vmem:[#allocation3 + $0x18] sm:$0xff] %vm606, %v1429
      %1438 = vst.msk [vmem:[#allocation3 + $0x20] sm:$0xff] %vm606, %v1430
      %1439 = vst.msk [vmem:[#allocation3 + $0x28] sm:$0xff] %vm606, %v1431
      %1440 = vst.msk [vmem:[#allocation3 + $0x30] sm:$0xff] %vm606, %v1432
      %1441 = vst.msk [vmem:[#allocation3 + $0x38] sm:$0xff] %vm606, %v1433
      %v1442 = vld [vmem:[%s522] sm:$0xf]
      %v1443 = vld [vmem:[%s522 + $0x4] sm:$0xf]
      %v1444 = vld [vmem:[%s522 + $0x8] sm:$0xf]
      %v1445 = vld [vmem:[%s522 + $0xc] sm:$0xf]
      %v1450 = vunpack.c.l.b16 %v1442
      %v1451 = vunpack.c.l.b16 %v1443
      %v1452 = vunpack.c.l.b16 %v1444
      %v1453 = vunpack.c.l.b16 %v1445
      %v1454 = vpack.c.b16 %v1451, %v1450
      %v1455 = vpack.c.b16 %v1453, %v1452
      %1458 = vmatpush.bf16.msra.mxu0 0
      %1459 = vmatpush.bf16.msra.mxu0 0
      %1460 = vmatpush.bf16.msra.mxu0 0
      %1461 = vmatpush.bf16.msra.mxu0 0
      %1462 = vmatpush.bf16.msra.mxu0 0
      %1463 = vmatpush.bf16.msra.mxu0 0
      %1464 = vmatpush.bf16.msra.mxu0 %v1455
      %1465 = vmatpush.bf16.msra.mxu0 %v1454
      %1466 = vmatmul.bf16.gmra.mxu0 %v608
      %v1467 = vpop.f32.mrf.mxu0
      %v1468 = vadd.f32 0.0, %v1467
      %v1469 = vpop.f32.mrf.mxu0
      %v1470 = vadd.f32 0.0, %v1469
      %1471 = vmatmul.bf16.gmra.mxu0 %v611
      %v1472 = vpop.f32.mrf.mxu0
      %v1473 = vadd.f32 0.0, %v1472
      %v1474 = vpop.f32.mrf.mxu0
      %v1475 = vadd.f32 0.0, %v1474
      %1476 = vmatmul.bf16.gmra.mxu0 %v614
      %v1477 = vpop.f32.mrf.mxu0
      %v1478 = vadd.f32 0.0, %v1477
      %v1479 = vpop.f32.mrf.mxu0
      %v1480 = vadd.f32 0.0, %v1479
      %1481 = vmatmul.bf16.gmra.mxu0 %v617
      %v1482 = vpop.f32.mrf.mxu0
      %v1483 = vadd.f32 0.0, %v1482
      %v1484 = vpop.f32.mrf.mxu0
      %v1485 = vadd.f32 0.0, %v1484
      %1486 = vdwg.mxu0
      %1487 = vst.msk [vmem:[#allocation4] sm:$0xff] %vm606, %v1468
      %1488 = vst.msk [vmem:[#allocation4 + $0x8] sm:$0xff] %vm606, %v1470
      %1489 = vst.msk [vmem:[#allocation4 + $0x10] sm:$0xff] %vm606, %v1473
      %1490 = vst.msk [vmem:[#allocation4 + $0x18] sm:$0xff] %vm606, %v1475
      %1491 = vst.msk [vmem:[#allocation4 + $0x20] sm:$0xff] %vm606, %v1478
      %1492 = vst.msk [vmem:[#allocation4 + $0x28] sm:$0xff] %vm606, %v1480
      %1493 = vst.msk [vmem:[#allocation4 + $0x30] sm:$0xff] %vm606, %v1483
      %1494 = vst.msk [vmem:[#allocation4 + $0x38] sm:$0xff] %vm606, %v1485
      %v1495 = vld [vmem:[%s510] sm:$0xff]
      %v1496 = vld [vmem:[%s510 + $0x8] sm:$0xff]
      %v1497 = vld [vmem:[%s510 + $0x10] sm:$0xff]
      %v1498 = vld [vmem:[%s510 + $0x18] sm:$0xff]
      %v1499 = vld [vmem:[%s510 + $0x20] sm:$0xff]
      %v1500 = vld [vmem:[%s510 + $0x28] sm:$0xff]
      %v1501 = vld [vmem:[%s510 + $0x30] sm:$0xff]
      %v1502 = vld [vmem:[%s510 + $0x38] sm:$0xff]
      %v1503 = vpack.c.bf16 %v1496, %v1495
      %v1504 = vpack.c.bf16 %v1498, %v1497
      %v1505 = vpack.c.bf16 %v1500, %v1499
      %v1506 = vpack.c.bf16 %v1502, %v1501
      %s1507 = scalar_lea.vmem %s517, 16
      %v1508 = vld [vmem:[%s1507] sm:$0xf]
      %v1509 = vld [vmem:[%s1507 + $0x4] sm:$0xf]
      %v1510 = vld [vmem:[%s1507 + $0x8] sm:$0xf]
      %v1511 = vld [vmem:[%s1507 + $0xc] sm:$0xf]
      %v1512 = vld [vmem:[%s526 + $0x1] sm:$0x1]
      %v1513 = vperm.slane %v1512, 0
      %v1518 = vunpack.c.l.b16 %v1508
      %v1519 = vunpack.c.l.b16 %v1509
      %v1520 = vunpack.c.l.b16 %v1510
      %v1521 = vunpack.c.l.b16 %v1511
      %v1522 = vpack.c.b16 %v1519, %v1518
      %v1523 = vpack.c.b16 %v1521, %v1520
      %v1527 = vsel %vm606, %v1503, 0
      %v1530 = vsel %vm606, %v1504, 0
      %v1533 = vsel %vm606, %v1505, 0
      %v1536 = vsel %vm606, %v1506, 0
      %1538 = vmatpush.bf16.msra.mxu0 0
      %1539 = vmatpush.bf16.msra.mxu0 0
      %1540 = vmatpush.bf16.msra.mxu0 0
      %1541 = vmatpush.bf16.msra.mxu0 0
      %1542 = vmatpush.bf16.msra.mxu0 0
      %1543 = vmatpush.bf16.msra.mxu0 0
      %1544 = vmatpush.bf16.msra.mxu0 %v1523
      %1545 = vmatpush.bf16.msra.mxu0 %v1522
      %1546 = vmatmul.bf16.gmra.mxu0 %v1527
      %v1547 = vpop.f32.mrf.mxu0
      %v1548 = vadd.f32 %v1513, %v1547
      %v1549 = vpop.f32.mrf.mxu0
      %v1550 = vadd.f32 %v1513, %v1549
      %1551 = vmatmul.bf16.gmra.mxu0 %v1530
      %v1552 = vpop.f32.mrf.mxu0
      %v1553 = vadd.f32 %v1513, %v1552
      %v1554 = vpop.f32.mrf.mxu0
      %v1555 = vadd.f32 %v1513, %v1554
      %1556 = vmatmul.bf16.gmra.mxu0 %v1533
      %v1557 = vpop.f32.mrf.mxu0
      %v1558 = vadd.f32 %v1513, %v1557
      %v1559 = vpop.f32.mrf.mxu0
      %v1560 = vadd.f32 %v1513, %v1559
      %1561 = vmatmul.bf16.gmra.mxu0 %v1536
      %v1562 = vpop.f32.mrf.mxu0
      %v1563 = vadd.f32 %v1513, %v1562
      %v1564 = vpop.f32.mrf.mxu0
      %v1565 = vadd.f32 %v1513, %v1564
      %1566 = vdwg.mxu0
      %v1567 = vmax.f32 %v1548, 0.0
      %v1568 = vmax.f32 %v1550, 0.0
      %v1569 = vmax.f32 %v1553, 0.0
      %v1570 = vmax.f32 %v1555, 0.0
      %v1571 = vmax.f32 %v1558, 0.0
      %v1572 = vmax.f32 %v1560, 0.0
      %v1573 = vmax.f32 %v1563, 0.0
      %v1574 = vmax.f32 %v1565, 0.0
      %v1575 = vand.u32 2147483647, %v1548
      %v1576 = vand.u32 2147483647, %v1550
      %v1577 = vand.u32 2147483647, %v1553
      %v1578 = vand.u32 2147483647, %v1555
      %v1579 = vand.u32 2147483647, %v1558
      %v1580 = vand.u32 2147483647, %v1560
      %v1581 = vand.u32 2147483647, %v1563
      %v1582 = vand.u32 2147483647, %v1565
      %v1583 = vsub.f32 0.0, %v1575
      %v1584 = vsub.f32 0.0, %v1576
      %v1585 = vsub.f32 0.0, %v1577
      %v1586 = vsub.f32 0.0, %v1578
      %v1587 = vsub.f32 0.0, %v1579
      %v1588 = vsub.f32 0.0, %v1580
      %v1589 = vsub.f32 0.0, %v1581
      %v1590 = vsub.f32 0.0, %v1582
      %v1591 = vmul.f32 %v1583, 1.442695
      %v1592 = vpow.pop %v1591
      %v1593 = vmul.f32 %v1584, 1.442695
      %v1594 = vpow.pop %v1593
      %v1595 = vmul.f32 %v1585, 1.442695
      %v1596 = vpow.pop %v1595
      %v1597 = vmul.f32 %v1586, 1.442695
      %v1598 = vpow.pop %v1597
      %v1599 = vmul.f32 %v1587, 1.442695
      %v1600 = vpow.pop %v1599
      %v1601 = vmul.f32 %v1588, 1.442695
      %v1602 = vpow.pop %v1601
      %v1603 = vmul.f32 %v1589, 1.442695
      %v1604 = vpow.pop %v1603
      %v1605 = vmul.f32 %v1590, 1.442695
      %v1606 = vpow.pop %v1605
      %v1607 = vadd.f32 %v1592, 1.0
      %v1608 = vadd.f32 %v1594, 1.0
      %v1609 = vadd.f32 %v1596, 1.0
      %v1610 = vadd.f32 %v1598, 1.0
      %v1611 = vadd.f32 %v1600, 1.0
      %v1612 = vadd.f32 %v1602, 1.0
      %v1613 = vadd.f32 %v1604, 1.0
      %v1614 = vadd.f32 %v1606, 1.0
      %v1615 = vlog2.pop %v1607
      %v1616 = vmul.f32 %v1615, 0.6931472
      %v1617 = vlog2.pop %v1608
      %v1618 = vmul.f32 %v1617, 0.6931472
      %v1619 = vlog2.pop %v1609
      %v1620 = vmul.f32 %v1619, 0.6931472
      %v1621 = vlog2.pop %v1610
      %v1622 = vmul.f32 %v1621, 0.6931472
      %v1623 = vlog2.pop %v1611
      %v1624 = vmul.f32 %v1623, 0.6931472
      %v1625 = vlog2.pop %v1612
      %v1626 = vmul.f32 %v1625, 0.6931472
      %v1627 = vlog2.pop %v1613
      %v1628 = vmul.f32 %v1627, 0.6931472
      %v1629 = vlog2.pop %v1614
      %v1630 = vmul.f32 %v1629, 0.6931472
      %v1631 = vadd.f32 %v1567, %v1616
      %v1632 = vadd.f32 %v1568, %v1618
      %v1633 = vadd.f32 %v1569, %v1620
      %v1634 = vadd.f32 %v1570, %v1622
      %v1635 = vadd.f32 %v1571, %v1624
      %v1636 = vadd.f32 %v1572, %v1626
      %v1637 = vadd.f32 %v1573, %v1628
      %v1638 = vadd.f32 %v1574, %v1630
      %v1647 = vrot.slane %v1631, 1
      %v1648 = vrot.slane %v1631, 2
      %v1649 = vrot.slane %v1631, 3
      %v1650 = vrot.slane %v1631, 4
      %v1651 = vrot.slane %v1631, 5
      %v1652 = vrot.slane %v1631, 6
      %v1653 = vrot.slane %v1631, 7
      %v1654 = vrot.slane %v1632, 1
      %v1655 = vrot.slane %v1632, 2
      %v1656 = vrot.slane %v1632, 3
      %v1657 = vrot.slane %v1632, 4
      %v1658 = vrot.slane %v1632, 5
      %v1659 = vrot.slane %v1632, 6
      %v1660 = vrot.slane %v1632, 7
      %v1661 = vrot.slane %v1633, 1
      %v1662 = vrot.slane %v1633, 2
      %v1663 = vrot.slane %v1633, 3
      %v1664 = vrot.slane %v1633, 4
      %v1665 = vrot.slane %v1633, 5
      %v1666 = vrot.slane %v1633, 6
      %v1667 = vrot.slane %v1633, 7
      %v1668 = vrot.slane %v1634, 1
      %v1669 = vrot.slane %v1634, 2
      %v1670 = vrot.slane %v1634, 3
      %v1671 = vrot.slane %v1634, 4
      %v1672 = vrot.slane %v1634, 5
      %v1673 = vrot.slane %v1634, 6
      %v1674 = vrot.slane %v1634, 7
      %v1675 = vrot.slane %v1635, 1
      %v1676 = vrot.slane %v1635, 2
      %v1677 = vrot.slane %v1635, 3
      %v1678 = vrot.slane %v1635, 4
      %v1679 = vrot.slane %v1635, 5
      %v1680 = vrot.slane %v1635, 6
      %v1681 = vrot.slane %v1635, 7
      %v1682 = vrot.slane %v1636, 1
      %v1683 = vrot.slane %v1636, 2
      %v1684 = vrot.slane %v1636, 3
      %v1685 = vrot.slane %v1636, 4
      %v1686 = vrot.slane %v1636, 5
      %v1687 = vrot.slane %v1636, 6
      %v1688 = vrot.slane %v1636, 7
      %v1689 = vrot.slane %v1637, 1
      %v1690 = vrot.slane %v1637, 2
      %v1691 = vrot.slane %v1637, 3
      %v1692 = vrot.slane %v1637, 4
      %v1693 = vrot.slane %v1637, 5
      %v1694 = vrot.slane %v1637, 6
      %v1695 = vrot.slane %v1637, 7
      %v1696 = vrot.slane %v1638, 1
      %v1697 = vrot.slane %v1638, 2
      %v1698 = vrot.slane %v1638, 3
      %v1699 = vrot.slane %v1638, 4
      %v1700 = vrot.slane %v1638, 5
      %v1701 = vrot.slane %v1638, 6
      %v1702 = vrot.slane %v1638, 7
      %s1703 = scalar_lea.vmem %s531, 16
      %v1704 = vld [vmem:[%s1703] sm:$0xff]
      %v1705 = vld [vmem:[%s1703 + $0x8] sm:$0xff]
      %v1706 = vperm.slane %v1631, 0
      %v1707 = vperm.slane %v1647, 0
      %v1708 = vperm.slane %v1648, 0
      %v1709 = vperm.slane %v1649, 0
      %v1710 = vperm.slane %v1650, 0
      %v1711 = vperm.slane %v1651, 0
      %v1712 = vperm.slane %v1652, 0
      %v1713 = vperm.slane %v1653, 0
      %v1714 = vperm.slane %v1632, 0
      %v1715 = vperm.slane %v1654, 0
      %v1716 = vperm.slane %v1655, 0
      %v1717 = vperm.slane %v1656, 0
      %v1718 = vperm.slane %v1657, 0
      %v1719 = vperm.slane %v1658, 0
      %v1720 = vperm.slane %v1659, 0
      %v1721 = vperm.slane %v1660, 0
      %v1722 = vperm.slane %v1633, 0
      %v1723 = vperm.slane %v1661, 0
      %v1724 = vperm.slane %v1662, 0
      %v1725 = vperm.slane %v1663, 0
      %v1726 = vperm.slane %v1664, 0
      %v1727 = vperm.slane %v1665, 0
      %v1728 = vperm.slane %v1666, 0
      %v1729 = vperm.slane %v1667, 0
      %v1730 = vperm.slane %v1634, 0
      %v1731 = vperm.slane %v1668, 0
      %v1732 = vperm.slane %v1669, 0
      %v1733 = vperm.slane %v1670, 0
      %v1734 = vperm.slane %v1671, 0
      %v1735 = vperm.slane %v1672, 0
      %v1736 = vperm.slane %v1673, 0
      %v1737 = vperm.slane %v1674, 0
      %v1738 = vperm.slane %v1635, 0
      %v1739 = vperm.slane %v1675, 0
      %v1740 = vperm.slane %v1676, 0
      %v1741 = vperm.slane %v1677, 0
      %v1742 = vperm.slane %v1678, 0
      %v1743 = vperm.slane %v1679, 0
      %v1744 = vperm.slane %v1680, 0
      %v1745 = vperm.slane %v1681, 0
      %v1746 = vperm.slane %v1636, 0
      %v1747 = vperm.slane %v1682, 0
      %v1748 = vperm.slane %v1683, 0
      %v1749 = vperm.slane %v1684, 0
      %v1750 = vperm.slane %v1685, 0
      %v1751 = vperm.slane %v1686, 0
      %v1752 = vperm.slane %v1687, 0
      %v1753 = vperm.slane %v1688, 0
      %v1754 = vperm.slane %v1637, 0
      %v1755 = vperm.slane %v1689, 0
      %v1756 = vperm.slane %v1690, 0
      %v1757 = vperm.slane %v1691, 0
      %v1758 = vperm.slane %v1692, 0
      %v1759 = vperm.slane %v1693, 0
      %v1760 = vperm.slane %v1694, 0
      %v1761 = vperm.slane %v1695, 0
      %v1762 = vperm.slane %v1638, 0
      %v1763 = vperm.slane %v1696, 0
      %v1764 = vperm.slane %v1697, 0
      %v1765 = vperm.slane %v1698, 0
      %v1766 = vperm.slane %v1699, 0
      %v1767 = vperm.slane %v1700, 0
      %v1768 = vperm.slane %v1701, 0
      %v1769 = vperm.slane %v1702, 0
      %v1834 = vmul.f32 %v1706, %v1704
      %v1835 = vmul.f32 %v1706, %v1705
      %v1836 = vmul.f32 %v1707, %v1704
      %v1837 = vmul.f32 %v1707, %v1705
      %v1838 = vmul.f32 %v1708, %v1704
      %v1839 = vmul.f32 %v1708, %v1705
      %v1840 = vmul.f32 %v1709, %v1704
      %v1841 = vmul.f32 %v1709, %v1705
      %v1842 = vmul.f32 %v1710, %v1704
      %v1843 = vmul.f32 %v1710, %v1705
      %v1844 = vmul.f32 %v1711, %v1704
      %v1845 = vmul.f32 %v1711, %v1705
      %v1846 = vmul.f32 %v1712, %v1704
      %v1847 = vmul.f32 %v1712, %v1705
      %v1848 = vmul.f32 %v1713, %v1704
      %v1849 = vmul.f32 %v1713, %v1705
      %v1850 = vmul.f32 %v1714, %v1704
      %v1851 = vmul.f32 %v1714, %v1705
      %v1852 = vmul.f32 %v1715, %v1704
      %v1853 = vmul.f32 %v1715, %v1705
      %v1854 = vmul.f32 %v1716, %v1704
      %v1855 = vmul.f32 %v1716, %v1705
      %v1856 = vmul.f32 %v1717, %v1704
      %v1857 = vmul.f32 %v1717, %v1705
      %v1858 = vmul.f32 %v1718, %v1704
      %v1859 = vmul.f32 %v1718, %v1705
      %v1860 = vmul.f32 %v1719, %v1704
      %v1861 = vmul.f32 %v1719, %v1705
      %v1862 = vmul.f32 %v1720, %v1704
      %v1863 = vmul.f32 %v1720, %v1705
      %v1864 = vmul.f32 %v1721, %v1704
      %v1865 = vmul.f32 %v1721, %v1705
      %v1866 = vmul.f32 %v1722, %v1704
      %v1867 = vmul.f32 %v1722, %v1705
      %v1868 = vmul.f32 %v1723, %v1704
      %v1869 = vmul.f32 %v1723, %v1705
      %v1870 = vmul.f32 %v1724, %v1704
      %v1871 = vmul.f32 %v1724, %v1705
      %v1872 = vmul.f32 %v1725, %v1704
      %v1873 = vmul.f32 %v1725, %v1705
      %v1874 = vmul.f32 %v1726, %v1704
      %v1875 = vmul.f32 %v1726, %v1705
      %v1876 = vmul.f32 %v1727, %v1704
      %v1877 = vmul.f32 %v1727, %v1705
      %v1878 = vmul.f32 %v1728, %v1704
      %v1879 = vmul.f32 %v1728, %v1705
      %v1880 = vmul.f32 %v1729, %v1704
      %v1881 = vmul.f32 %v1729, %v1705
      %v1882 = vmul.f32 %v1730, %v1704
      %v1883 = vmul.f32 %v1730, %v1705
      %v1884 = vmul.f32 %v1731, %v1704
      %v1885 = vmul.f32 %v1731, %v1705
      %v1886 = vmul.f32 %v1732, %v1704
      %v1887 = vmul.f32 %v1732, %v1705
      %v1888 = vmul.f32 %v1733, %v1704
      %v1889 = vmul.f32 %v1733, %v1705
      %v1890 = vmul.f32 %v1734, %v1704
      %v1891 = vmul.f32 %v1734, %v1705
      %v1892 = vmul.f32 %v1735, %v1704
      %v1893 = vmul.f32 %v1735, %v1705
      %v1894 = vmul.f32 %v1736, %v1704
      %v1895 = vmul.f32 %v1736, %v1705
      %v1896 = vmul.f32 %v1737, %v1704
      %v1897 = vmul.f32 %v1737, %v1705
      %v1898 = vmul.f32 %v1738, %v1704
      %v1899 = vmul.f32 %v1738, %v1705
      %v1900 = vmul.f32 %v1739, %v1704
      %v1901 = vmul.f32 %v1739, %v1705
      %v1902 = vmul.f32 %v1740, %v1704
      %v1903 = vmul.f32 %v1740, %v1705
      %v1904 = vmul.f32 %v1741, %v1704
      %v1905 = vmul.f32 %v1741, %v1705
      %v1906 = vmul.f32 %v1742, %v1704
      %v1907 = vmul.f32 %v1742, %v1705
      %v1908 = vmul.f32 %v1743, %v1704
      %v1909 = vmul.f32 %v1743, %v1705
      %v1910 = vmul.f32 %v1744, %v1704
      %v1911 = vmul.f32 %v1744, %v1705
      %v1912 = vmul.f32 %v1745, %v1704
      %v1913 = vmul.f32 %v1745, %v1705
      %v1914 = vmul.f32 %v1746, %v1704
      %v1915 = vmul.f32 %v1746, %v1705
      %v1916 = vmul.f32 %v1747, %v1704
      %v1917 = vmul.f32 %v1747, %v1705
      %v1918 = vmul.f32 %v1748, %v1704
      %v1919 = vmul.f32 %v1748, %v1705
      %v1920 = vmul.f32 %v1749, %v1704
      %v1921 = vmul.f32 %v1749, %v1705
      %v1922 = vmul.f32 %v1750, %v1704
      %v1923 = vmul.f32 %v1750, %v1705
      %v1924 = vmul.f32 %v1751, %v1704
      %v1925 = vmul.f32 %v1751, %v1705
      %v1926 = vmul.f32 %v1752, %v1704
      %v1927 = vmul.f32 %v1752, %v1705
      %v1928 = vmul.f32 %v1753, %v1704
      %v1929 = vmul.f32 %v1753, %v1705
      %v1930 = vmul.f32 %v1754, %v1704
      %v1931 = vmul.f32 %v1754, %v1705
      %v1932 = vmul.f32 %v1755, %v1704
      %v1933 = vmul.f32 %v1755, %v1705
      %v1934 = vmul.f32 %v1756, %v1704
      %v1935 = vmul.f32 %v1756, %v1705
      %v1936 = vmul.f32 %v1757, %v1704
      %v1937 = vmul.f32 %v1757, %v1705
      %v1938 = vmul.f32 %v1758, %v1704
      %v1939 = vmul.f32 %v1758, %v1705
      %v1940 = vmul.f32 %v1759, %v1704
      %v1941 = vmul.f32 %v1759, %v1705
      %v1942 = vmul.f32 %v1760, %v1704
      %v1943 = vmul.f32 %v1760, %v1705
      %v1944 = vmul.f32 %v1761, %v1704
      %v1945 = vmul.f32 %v1761, %v1705
      %v1946 = vmul.f32 %v1762, %v1704
      %v1947 = vmul.f32 %v1762, %v1705
      %v1948 = vmul.f32 %v1763, %v1704
      %v1949 = vmul.f32 %v1763, %v1705
      %v1950 = vmul.f32 %v1764, %v1704
      %v1951 = vmul.f32 %v1764, %v1705
      %v1952 = vmul.f32 %v1765, %v1704
      %v1953 = vmul.f32 %v1765, %v1705
      %v1954 = vmul.f32 %v1766, %v1704
      %v1955 = vmul.f32 %v1766, %v1705
      %v1956 = vmul.f32 %v1767, %v1704
      %v1957 = vmul.f32 %v1767, %v1705
      %v1958 = vmul.f32 %v1768, %v1704
      %v1959 = vmul.f32 %v1768, %v1705
      %v1960 = vmul.f32 %v1769, %v1704
      %v1961 = vmul.f32 %v1769, %v1705
      %v1962 = vmul.f32 %v1834, 1.442695
      %v1963 = vpow.pop %v1962
      %v1964 = vmul.f32 %v1835, 1.442695
      %v1965 = vpow.pop %v1964
      %v1966 = vmul.f32 %v1836, 1.442695
      %v1967 = vpow.pop %v1966
      %v1968 = vmul.f32 %v1837, 1.442695
      %v1969 = vpow.pop %v1968
      %v1970 = vmul.f32 %v1838, 1.442695
      %v1971 = vpow.pop %v1970
      %v1972 = vmul.f32 %v1839, 1.442695
      %v1973 = vpow.pop %v1972
      %v1974 = vmul.f32 %v1840, 1.442695
      %v1975 = vpow.pop %v1974
      %v1976 = vmul.f32 %v1841, 1.442695
      %v1977 = vpow.pop %v1976
      %v1978 = vmul.f32 %v1842, 1.442695
      %v1979 = vpow.pop %v1978
      %v1980 = vmul.f32 %v1843, 1.442695
      %v1981 = vpow.pop %v1980
      %v1982 = vmul.f32 %v1844, 1.442695
      %v1983 = vpow.pop %v1982
      %v1984 = vmul.f32 %v1845, 1.442695
      %v1985 = vpow.pop %v1984
      %v1986 = vmul.f32 %v1846, 1.442695
      %v1987 = vpow.pop %v1986
      %v1988 = vmul.f32 %v1847, 1.442695
      %v1989 = vpow.pop %v1988
      %v1990 = vmul.f32 %v1848, 1.442695
      %v1991 = vpow.pop %v1990
      %v1992 = vmul.f32 %v1849, 1.442695
      %v1993 = vpow.pop %v1992
      %v1994 = vmul.f32 %v1850, 1.442695
      %v1995 = vpow.pop %v1994
      %v1996 = vmul.f32 %v1851, 1.442695
      %v1997 = vpow.pop %v1996
      %v1998 = vmul.f32 %v1852, 1.442695
      %v1999 = vpow.pop %v1998
      %v2000 = vmul.f32 %v1853, 1.442695
      %v2001 = vpow.pop %v2000
      %v2002 = vmul.f32 %v1854, 1.442695
      %v2003 = vpow.pop %v2002
      %v2004 = vmul.f32 %v1855, 1.442695
      %v2005 = vpow.pop %v2004
      %v2006 = vmul.f32 %v1856, 1.442695
      %v2007 = vpow.pop %v2006
      %v2008 = vmul.f32 %v1857, 1.442695
      %v2009 = vpow.pop %v2008
      %v2010 = vmul.f32 %v1858, 1.442695
      %v2011 = vpow.pop %v2010
      %v2012 = vmul.f32 %v1859, 1.442695
      %v2013 = vpow.pop %v2012
      %v2014 = vmul.f32 %v1860, 1.442695
      %v2015 = vpow.pop %v2014
      %v2016 = vmul.f32 %v1861, 1.442695
      %v2017 = vpow.pop %v2016
      %v2018 = vmul.f32 %v1862, 1.442695
      %v2019 = vpow.pop %v2018
      %v2020 = vmul.f32 %v1863, 1.442695
      %v2021 = vpow.pop %v2020
      %v2022 = vmul.f32 %v1864, 1.442695
      %v2023 = vpow.pop %v2022
      %v2024 = vmul.f32 %v1865, 1.442695
      %v2025 = vpow.pop %v2024
      %v2026 = vmul.f32 %v1866, 1.442695
      %v2027 = vpow.pop %v2026
      %v2028 = vmul.f32 %v1867, 1.442695
      %v2029 = vpow.pop %v2028
      %v2030 = vmul.f32 %v1868, 1.442695
      %v2031 = vpow.pop %v2030
      %v2032 = vmul.f32 %v1869, 1.442695
      %v2033 = vpow.pop %v2032
      %v2034 = vmul.f32 %v1870, 1.442695
      %v2035 = vpow.pop %v2034
      %v2036 = vmul.f32 %v1871, 1.442695
      %v2037 = vpow.pop %v2036
      %v2038 = vmul.f32 %v1872, 1.442695
      %v2039 = vpow.pop %v2038
      %v2040 = vmul.f32 %v1873, 1.442695
      %v2041 = vpow.pop %v2040
      %v2042 = vmul.f32 %v1874, 1.442695
      %v2043 = vpow.pop %v2042
      %v2044 = vmul.f32 %v1875, 1.442695
      %v2045 = vpow.pop %v2044
      %v2046 = vmul.f32 %v1876, 1.442695
      %v2047 = vpow.pop %v2046
      %v2048 = vmul.f32 %v1877, 1.442695
      %v2049 = vpow.pop %v2048
      %v2050 = vmul.f32 %v1878, 1.442695
      %v2051 = vpow.pop %v2050
      %v2052 = vmul.f32 %v1879, 1.442695
      %v2053 = vpow.pop %v2052
      %v2054 = vmul.f32 %v1880, 1.442695
      %v2055 = vpow.pop %v2054
      %v2056 = vmul.f32 %v1881, 1.442695
      %v2057 = vpow.pop %v2056
      %v2058 = vmul.f32 %v1882, 1.442695
      %v2059 = vpow.pop %v2058
      %v2060 = vmul.f32 %v1883, 1.442695
      %v2061 = vpow.pop %v2060
      %v2062 = vmul.f32 %v1884, 1.442695
      %v2063 = vpow.pop %v2062
      %v2064 = vmul.f32 %v1885, 1.442695
      %v2065 = vpow.pop %v2064
      %v2066 = vmul.f32 %v1886, 1.442695
      %v2067 = vpow.pop %v2066
      %v2068 = vmul.f32 %v1887, 1.442695
      %v2069 = vpow.pop %v2068
      %v2070 = vmul.f32 %v1888, 1.442695
      %v2071 = vpow.pop %v2070
      %v2072 = vmul.f32 %v1889, 1.442695
      %v2073 = vpow.pop %v2072
      %v2074 = vmul.f32 %v1890, 1.442695
      %v2075 = vpow.pop %v2074
      %v2076 = vmul.f32 %v1891, 1.442695
      %v2077 = vpow.pop %v2076
      %v2078 = vmul.f32 %v1892, 1.442695
      %v2079 = vpow.pop %v2078
      %v2080 = vmul.f32 %v1893, 1.442695
      %v2081 = vpow.pop %v2080
      %v2082 = vmul.f32 %v1894, 1.442695
      %v2083 = vpow.pop %v2082
      %v2084 = vmul.f32 %v1895, 1.442695
      %v2085 = vpow.pop %v2084
      %v2086 = vmul.f32 %v1896, 1.442695
      %v2087 = vpow.pop %v2086
      %v2088 = vmul.f32 %v1897, 1.442695
      %v2089 = vpow.pop %v2088
      %v2090 = vmul.f32 %v1898, 1.442695
      %v2091 = vpow.pop %v2090
      %v2092 = vmul.f32 %v1899, 1.442695
      %v2093 = vpow.pop %v2092
      %v2094 = vmul.f32 %v1900, 1.442695
      %v2095 = vpow.pop %v2094
      %v2096 = vmul.f32 %v1901, 1.442695
      %v2097 = vpow.pop %v2096
      %v2098 = vmul.f32 %v1902, 1.442695
      %v2099 = vpow.pop %v2098
      %v2100 = vmul.f32 %v1903, 1.442695
      %v2101 = vpow.pop %v2100
      %v2102 = vmul.f32 %v1904, 1.442695
      %v2103 = vpow.pop %v2102
      %v2104 = vmul.f32 %v1905, 1.442695
      %v2105 = vpow.pop %v2104
      %v2106 = vmul.f32 %v1906, 1.442695
      %v2107 = vpow.pop %v2106
      %v2108 = vmul.f32 %v1907, 1.442695
      %v2109 = vpow.pop %v2108
      %v2110 = vmul.f32 %v1908, 1.442695
      %v2111 = vpow.pop %v2110
      %v2112 = vmul.f32 %v1909, 1.442695
      %v2113 = vpow.pop %v2112
      %v2114 = vmul.f32 %v1910, 1.442695
      %v2115 = vpow.pop %v2114
      %v2116 = vmul.f32 %v1911, 1.442695
      %v2117 = vpow.pop %v2116
      %v2118 = vmul.f32 %v1912, 1.442695
      %v2119 = vpow.pop %v2118
      %v2120 = vmul.f32 %v1913, 1.442695
      %v2121 = vpow.pop %v2120
      %v2122 = vmul.f32 %v1914, 1.442695
      %v2123 = vpow.pop %v2122
      %v2124 = vmul.f32 %v1915, 1.442695
      %v2125 = vpow.pop %v2124
      %v2126 = vmul.f32 %v1916, 1.442695
      %v2127 = vpow.pop %v2126
      %v2128 = vmul.f32 %v1917, 1.442695
      %v2129 = vpow.pop %v2128
      %v2130 = vmul.f32 %v1918, 1.442695
      %v2131 = vpow.pop %v2130
      %v2132 = vmul.f32 %v1919, 1.442695
      %v2133 = vpow.pop %v2132
      %v2134 = vmul.f32 %v1920, 1.442695
      %v2135 = vpow.pop %v2134
      %v2136 = vmul.f32 %v1921, 1.442695
      %v2137 = vpow.pop %v2136
      %v2138 = vmul.f32 %v1922, 1.442695
      %v2139 = vpow.pop %v2138
      %v2140 = vmul.f32 %v1923, 1.442695
      %v2141 = vpow.pop %v2140
      %v2142 = vmul.f32 %v1924, 1.442695
      %v2143 = vpow.pop %v2142
      %v2144 = vmul.f32 %v1925, 1.442695
      %v2145 = vpow.pop %v2144
      %v2146 = vmul.f32 %v1926, 1.442695
      %v2147 = vpow.pop %v2146
      %v2148 = vmul.f32 %v1927, 1.442695
      %v2149 = vpow.pop %v2148
      %v2150 = vmul.f32 %v1928, 1.442695
      %v2151 = vpow.pop %v2150
      %v2152 = vmul.f32 %v1929, 1.442695
      %v2153 = vpow.pop %v2152
      %v2154 = vmul.f32 %v1930, 1.442695
      %v2155 = vpow.pop %v2154
      %v2156 = vmul.f32 %v1931, 1.442695
      %v2157 = vpow.pop %v2156
      %v2158 = vmul.f32 %v1932, 1.442695
      %v2159 = vpow.pop %v2158
      %v2160 = vmul.f32 %v1933, 1.442695
      %v2161 = vpow.pop %v2160
      %v2162 = vmul.f32 %v1934, 1.442695
      %v2163 = vpow.pop %v2162
      %v2164 = vmul.f32 %v1935, 1.442695
      %v2165 = vpow.pop %v2164
      %v2166 = vmul.f32 %v1936, 1.442695
      %v2167 = vpow.pop %v2166
      %v2168 = vmul.f32 %v1937, 1.442695
      %v2169 = vpow.pop %v2168
      %v2170 = vmul.f32 %v1938, 1.442695
      %v2171 = vpow.pop %v2170
      %v2172 = vmul.f32 %v1939, 1.442695
      %v2173 = vpow.pop %v2172
      %v2174 = vmul.f32 %v1940, 1.442695
      %v2175 = vpow.pop %v2174
      %v2176 = vmul.f32 %v1941, 1.442695
      %v2177 = vpow.pop %v2176
      %v2178 = vmul.f32 %v1942, 1.442695
      %v2179 = vpow.pop %v2178
      %v2180 = vmul.f32 %v1943, 1.442695
      %v2181 = vpow.pop %v2180
      %v2182 = vmul.f32 %v1944, 1.442695
      %v2183 = vpow.pop %v2182
      %v2184 = vmul.f32 %v1945, 1.442695
      %v2185 = vpow.pop %v2184
      %v2186 = vmul.f32 %v1946, 1.442695
      %v2187 = vpow.pop %v2186
      %v2188 = vmul.f32 %v1947, 1.442695
      %v2189 = vpow.pop %v2188
      %v2190 = vmul.f32 %v1948, 1.442695
      %v2191 = vpow.pop %v2190
      %v2192 = vmul.f32 %v1949, 1.442695
      %v2193 = vpow.pop %v2192
      %v2194 = vmul.f32 %v1950, 1.442695
      %v2195 = vpow.pop %v2194
      %v2196 = vmul.f32 %v1951, 1.442695
      %v2197 = vpow.pop %v2196
      %v2198 = vmul.f32 %v1952, 1.442695
      %v2199 = vpow.pop %v2198
      %v2200 = vmul.f32 %v1953, 1.442695
      %v2201 = vpow.pop %v2200
      %v2202 = vmul.f32 %v1954, 1.442695
      %v2203 = vpow.pop %v2202
      %v2204 = vmul.f32 %v1955, 1.442695
      %v2205 = vpow.pop %v2204
      %v2206 = vmul.f32 %v1956, 1.442695
      %v2207 = vpow.pop %v2206
      %v2208 = vmul.f32 %v1957, 1.442695
      %v2209 = vpow.pop %v2208
      %v2210 = vmul.f32 %v1958, 1.442695
      %v2211 = vpow.pop %v2210
      %v2212 = vmul.f32 %v1959, 1.442695
      %v2213 = vpow.pop %v2212
      %v2214 = vmul.f32 %v1960, 1.442695
      %v2215 = vpow.pop %v2214
      %v2216 = vmul.f32 %v1961, 1.442695
      %v2217 = vpow.pop %v2216
      %s2218 = scalar_lea.vmem [#allocation2], 1024
      %2219 = vst.msk [vmem:[%s2218] sm:$0xff] %vm606, %v1963
      %2220 = vst.msk [vmem:[%s2218 + $0x8] sm:$0xff] %vm606, %v1965
      %2221 = vst.msk [vmem:[%s2218 + $0x10] sm:$0xff] %vm606, %v1967
      %2222 = vst.msk [vmem:[%s2218 + $0x18] sm:$0xff] %vm606, %v1969
      %2223 = vst.msk [vmem:[%s2218 + $0x20] sm:$0xff] %vm606, %v1971
      %2224 = vst.msk [vmem:[%s2218 + $0x28] sm:$0xff] %vm606, %v1973
      %2225 = vst.msk [vmem:[%s2218 + $0x30] sm:$0xff] %vm606, %v1975
      %2226 = vst.msk [vmem:[%s2218 + $0x38] sm:$0xff] %vm606, %v1977
      %2227 = vst.msk [vmem:[%s2218 + $0x40] sm:$0xff] %vm606, %v1979
      %2228 = vst.msk [vmem:[%s2218 + $0x48] sm:$0xff] %vm606, %v1981
      %2229 = vst.msk [vmem:[%s2218 + $0x50] sm:$0xff] %vm606, %v1983
      %2230 = vst.msk [vmem:[%s2218 + $0x58] sm:$0xff] %vm606, %v1985
      %2231 = vst.msk [vmem:[%s2218 + $0x60] sm:$0xff] %vm606, %v1987
      %2232 = vst.msk [vmem:[%s2218 + $0x68] sm:$0xff] %vm606, %v1989
      %2233 = vst.msk [vmem:[%s2218 + $0x70] sm:$0xff] %vm606, %v1991
      %2234 = vst.msk [vmem:[%s2218 + $0x78] sm:$0xff] %vm606, %v1993
      %2235 = vst.msk [vmem:[%s2218 + $0x80] sm:$0xff] %vm606, %v1995
      %2236 = vst.msk [vmem:[%s2218 + $0x88] sm:$0xff] %vm606, %v1997
      %2237 = vst.msk [vmem:[%s2218 + $0x90] sm:$0xff] %vm606, %v1999
      %2238 = vst.msk [vmem:[%s2218 + $0x98] sm:$0xff] %vm606, %v2001
      %2239 = vst.msk [vmem:[%s2218 + $0xa0] sm:$0xff] %vm606, %v2003
      %2240 = vst.msk [vmem:[%s2218 + $0xa8] sm:$0xff] %vm606, %v2005
      %2241 = vst.msk [vmem:[%s2218 + $0xb0] sm:$0xff] %vm606, %v2007
      %2242 = vst.msk [vmem:[%s2218 + $0xb8] sm:$0xff] %vm606, %v2009
      %2243 = vst.msk [vmem:[%s2218 + $0xc0] sm:$0xff] %vm606, %v2011
      %2244 = vst.msk [vmem:[%s2218 + $0xc8] sm:$0xff] %vm606, %v2013
      %2245 = vst.msk [vmem:[%s2218 + $0xd0] sm:$0xff] %vm606, %v2015
      %2246 = vst.msk [vmem:[%s2218 + $0xd8] sm:$0xff] %vm606, %v2017
      %2247 = vst.msk [vmem:[%s2218 + $0xe0] sm:$0xff] %vm606, %v2019
      %2248 = vst.msk [vmem:[%s2218 + $0xe8] sm:$0xff] %vm606, %v2021
      %2249 = vst.msk [vmem:[%s2218 + $0xf0] sm:$0xff] %vm606, %v2023
      %2250 = vst.msk [vmem:[%s2218 + $0xf8] sm:$0xff] %vm606, %v2025
      %2251 = vst.msk [vmem:[%s2218 + $0x100] sm:$0xff] %vm606, %v2027
      %2252 = vst.msk [vmem:[%s2218 + $0x108] sm:$0xff] %vm606, %v2029
      %2253 = vst.msk [vmem:[%s2218 + $0x110] sm:$0xff] %vm606, %v2031
      %2254 = vst.msk [vmem:[%s2218 + $0x118] sm:$0xff] %vm606, %v2033
      %2255 = vst.msk [vmem:[%s2218 + $0x120] sm:$0xff] %vm606, %v2035
      %2256 = vst.msk [vmem:[%s2218 + $0x128] sm:$0xff] %vm606, %v2037
      %2257 = vst.msk [vmem:[%s2218 + $0x130] sm:$0xff] %vm606, %v2039
      %2258 = vst.msk [vmem:[%s2218 + $0x138] sm:$0xff] %vm606, %v2041
      %2259 = vst.msk [vmem:[%s2218 + $0x140] sm:$0xff] %vm606, %v2043
      %2260 = vst.msk [vmem:[%s2218 + $0x148] sm:$0xff] %vm606, %v2045
      %2261 = vst.msk [vmem:[%s2218 + $0x150] sm:$0xff] %vm606, %v2047
      %2262 = vst.msk [vmem:[%s2218 + $0x158] sm:$0xff] %vm606, %v2049
      %2263 = vst.msk [vmem:[%s2218 + $0x160] sm:$0xff] %vm606, %v2051
      %2264 = vst.msk [vmem:[%s2218 + $0x168] sm:$0xff] %vm606, %v2053
      %2265 = vst.msk [vmem:[%s2218 + $0x170] sm:$0xff] %vm606, %v2055
      %2266 = vst.msk [vmem:[%s2218 + $0x178] sm:$0xff] %vm606, %v2057
      %2267 = vst.msk [vmem:[%s2218 + $0x180] sm:$0xff] %vm606, %v2059
      %2268 = vst.msk [vmem:[%s2218 + $0x188] sm:$0xff] %vm606, %v2061
      %2269 = vst.msk [vmem:[%s2218 + $0x190] sm:$0xff] %vm606, %v2063
      %2270 = vst.msk [vmem:[%s2218 + $0x198] sm:$0xff] %vm606, %v2065
      %2271 = vst.msk [vmem:[%s2218 + $0x1a0] sm:$0xff] %vm606, %v2067
      %2272 = vst.msk [vmem:[%s2218 + $0x1a8] sm:$0xff] %vm606, %v2069
      %2273 = vst.msk [vmem:[%s2218 + $0x1b0] sm:$0xff] %vm606, %v2071
      %2274 = vst.msk [vmem:[%s2218 + $0x1b8] sm:$0xff] %vm606, %v2073
      %2275 = vst.msk [vmem:[%s2218 + $0x1c0] sm:$0xff] %vm606, %v2075
      %2276 = vst.msk [vmem:[%s2218 + $0x1c8] sm:$0xff] %vm606, %v2077
      %2277 = vst.msk [vmem:[%s2218 + $0x1d0] sm:$0xff] %vm606, %v2079
      %2278 = vst.msk [vmem:[%s2218 + $0x1d8] sm:$0xff] %vm606, %v2081
      %2279 = vst.msk [vmem:[%s2218 + $0x1e0] sm:$0xff] %vm606, %v2083
      %2280 = vst.msk [vmem:[%s2218 + $0x1e8] sm:$0xff] %vm606, %v2085
      %2281 = vst.msk [vmem:[%s2218 + $0x1f0] sm:$0xff] %vm606, %v2087
      %2282 = vst.msk [vmem:[%s2218 + $0x1f8] sm:$0xff] %vm606, %v2089
      %2283 = vst.msk [vmem:[%s2218 + $0x200] sm:$0xff] %vm606, %v2091
      %2284 = vst.msk [vmem:[%s2218 + $0x208] sm:$0xff] %vm606, %v2093
      %2285 = vst.msk [vmem:[%s2218 + $0x210] sm:$0xff] %vm606, %v2095
      %2286 = vst.msk [vmem:[%s2218 + $0x218] sm:$0xff] %vm606, %v2097
      %2287 = vst.msk [vmem:[%s2218 + $0x220] sm:$0xff] %vm606, %v2099
      %2288 = vst.msk [vmem:[%s2218 + $0x228] sm:$0xff] %vm606, %v2101
      %2289 = vst.msk [vmem:[%s2218 + $0x230] sm:$0xff] %vm606, %v2103
      %2290 = vst.msk [vmem:[%s2218 + $0x238] sm:$0xff] %vm606, %v2105
      %2291 = vst.msk [vmem:[%s2218 + $0x240] sm:$0xff] %vm606, %v2107
      %2292 = vst.msk [vmem:[%s2218 + $0x248] sm:$0xff] %vm606, %v2109
      %2293 = vst.msk [vmem:[%s2218 + $0x250] sm:$0xff] %vm606, %v2111
      %2294 = vst.msk [vmem:[%s2218 + $0x258] sm:$0xff] %vm606, %v2113
      %2295 = vst.msk [vmem:[%s2218 + $0x260] sm:$0xff] %vm606, %v2115
      %2296 = vst.msk [vmem:[%s2218 + $0x268] sm:$0xff] %vm606, %v2117
      %2297 = vst.msk [vmem:[%s2218 + $0x270] sm:$0xff] %vm606, %v2119
      %2298 = vst.msk [vmem:[%s2218 + $0x278] sm:$0xff] %vm606, %v2121
      %2299 = vst.msk [vmem:[%s2218 + $0x280] sm:$0xff] %vm606, %v2123
      %2300 = vst.msk [vmem:[%s2218 + $0x288] sm:$0xff] %vm606, %v2125
      %2301 = vst.msk [vmem:[%s2218 + $0x290] sm:$0xff] %vm606, %v2127
      %2302 = vst.msk [vmem:[%s2218 + $0x298] sm:$0xff] %vm606, %v2129
      %2303 = vst.msk [vmem:[%s2218 + $0x2a0] sm:$0xff] %vm606, %v2131
      %2304 = vst.msk [vmem:[%s2218 + $0x2a8] sm:$0xff] %vm606, %v2133
      %2305 = vst.msk [vmem:[%s2218 + $0x2b0] sm:$0xff] %vm606, %v2135
      %2306 = vst.msk [vmem:[%s2218 + $0x2b8] sm:$0xff] %vm606, %v2137
      %2307 = vst.msk [vmem:[%s2218 + $0x2c0] sm:$0xff] %vm606, %v2139
      %2308 = vst.msk [vmem:[%s2218 + $0x2c8] sm:$0xff] %vm606, %v2141
      %2309 = vst.msk [vmem:[%s2218 + $0x2d0] sm:$0xff] %vm606, %v2143
      %2310 = vst.msk [vmem:[%s2218 + $0x2d8] sm:$0xff] %vm606, %v2145
      %2311 = vst.msk [vmem:[%s2218 + $0x2e0] sm:$0xff] %vm606, %v2147
      %2312 = vst.msk [vmem:[%s2218 + $0x2e8] sm:$0xff] %vm606, %v2149
      %2313 = vst.msk [vmem:[%s2218 + $0x2f0] sm:$0xff] %vm606, %v2151
      %2314 = vst.msk [vmem:[%s2218 + $0x2f8] sm:$0xff] %vm606, %v2153
      %2315 = vst.msk [vmem:[%s2218 + $0x300] sm:$0xff] %vm606, %v2155
      %2316 = vst.msk [vmem:[%s2218 + $0x308] sm:$0xff] %vm606, %v2157
      %2317 = vst.msk [vmem:[%s2218 + $0x310] sm:$0xff] %vm606, %v2159
      %2318 = vst.msk [vmem:[%s2218 + $0x318] sm:$0xff] %vm606, %v2161
      %2319 = vst.msk [vmem:[%s2218 + $0x320] sm:$0xff] %vm606, %v2163
      %2320 = vst.msk [vmem:[%s2218 + $0x328] sm:$0xff] %vm606, %v2165
      %2321 = vst.msk [vmem:[%s2218 + $0x330] sm:$0xff] %vm606, %v2167
      %2322 = vst.msk [vmem:[%s2218 + $0x338] sm:$0xff] %vm606, %v2169
      %2323 = vst.msk [vmem:[%s2218 + $0x340] sm:$0xff] %vm606, %v2171
      %2324 = vst.msk [vmem:[%s2218 + $0x348] sm:$0xff] %vm606, %v2173
      %2325 = vst.msk [vmem:[%s2218 + $0x350] sm:$0xff] %vm606, %v2175
      %2326 = vst.msk [vmem:[%s2218 + $0x358] sm:$0xff] %vm606, %v2177
      %2327 = vst.msk [vmem:[%s2218 + $0x360] sm:$0xff] %vm606, %v2179
      %2328 = vst.msk [vmem:[%s2218 + $0x368] sm:$0xff] %vm606, %v2181
      %2329 = vst.msk [vmem:[%s2218 + $0x370] sm:$0xff] %vm606, %v2183
      %2330 = vst.msk [vmem:[%s2218 + $0x378] sm:$0xff] %vm606, %v2185
      %2331 = vst.msk [vmem:[%s2218 + $0x380] sm:$0xff] %vm606, %v2187
      %2332 = vst.msk [vmem:[%s2218 + $0x388] sm:$0xff] %vm606, %v2189
      %2333 = vst.msk [vmem:[%s2218 + $0x390] sm:$0xff] %vm606, %v2191
      %2334 = vst.msk [vmem:[%s2218 + $0x398] sm:$0xff] %vm606, %v2193
      %2335 = vst.msk [vmem:[%s2218 + $0x3a0] sm:$0xff] %vm606, %v2195
      %2336 = vst.msk [vmem:[%s2218 + $0x3a8] sm:$0xff] %vm606, %v2197
      %2337 = vst.msk [vmem:[%s2218 + $0x3b0] sm:$0xff] %vm606, %v2199
      %2338 = vst.msk [vmem:[%s2218 + $0x3b8] sm:$0xff] %vm606, %v2201
      %2339 = vst.msk [vmem:[%s2218 + $0x3c0] sm:$0xff] %vm606, %v2203
      %2340 = vst.msk [vmem:[%s2218 + $0x3c8] sm:$0xff] %vm606, %v2205
      %2341 = vst.msk [vmem:[%s2218 + $0x3d0] sm:$0xff] %vm606, %v2207
      %2342 = vst.msk [vmem:[%s2218 + $0x3d8] sm:$0xff] %vm606, %v2209
      %2343 = vst.msk [vmem:[%s2218 + $0x3e0] sm:$0xff] %vm606, %v2211
      %2344 = vst.msk [vmem:[%s2218 + $0x3e8] sm:$0xff] %vm606, %v2213
      %2345 = vst.msk [vmem:[%s2218 + $0x3f0] sm:$0xff] %vm606, %v2215
      %2346 = vst.msk [vmem:[%s2218 + $0x3f8] sm:$0xff] %vm606, %v2217
      %v2347 = vmul.f32 %v1631, %v1495
      %v2348 = vmul.f32 %v1632, %v1496
      %v2349 = vmul.f32 %v1633, %v1497
      %v2350 = vmul.f32 %v1634, %v1498
      %v2351 = vmul.f32 %v1635, %v1499
      %v2352 = vmul.f32 %v1636, %v1500
      %v2353 = vmul.f32 %v1637, %v1501
      %v2354 = vmul.f32 %v1638, %v1502
      %s2355 = scalar_lea.vmem [#allocation3], 64
      %2356 = vst.msk [vmem:[%s2355] sm:$0xff] %vm606, %v2347
      %2357 = vst.msk [vmem:[%s2355 + $0x8] sm:$0xff] %vm606, %v2348
      %2358 = vst.msk [vmem:[%s2355 + $0x10] sm:$0xff] %vm606, %v2349
      %2359 = vst.msk [vmem:[%s2355 + $0x18] sm:$0xff] %vm606, %v2350
      %2360 = vst.msk [vmem:[%s2355 + $0x20] sm:$0xff] %vm606, %v2351
      %2361 = vst.msk [vmem:[%s2355 + $0x28] sm:$0xff] %vm606, %v2352
      %2362 = vst.msk [vmem:[%s2355 + $0x30] sm:$0xff] %vm606, %v2353
      %2363 = vst.msk [vmem:[%s2355 + $0x38] sm:$0xff] %vm606, %v2354
      %s2364 = scalar_lea.vmem %s522, 16
      %v2365 = vld [vmem:[%s2364] sm:$0xf]
      %v2366 = vld [vmem:[%s2364 + $0x4] sm:$0xf]
      %v2367 = vld [vmem:[%s2364 + $0x8] sm:$0xf]
      %v2368 = vld [vmem:[%s2364 + $0xc] sm:$0xf]
      %v2373 = vunpack.c.l.b16 %v2365
      %v2374 = vunpack.c.l.b16 %v2366
      %v2375 = vunpack.c.l.b16 %v2367
      %v2376 = vunpack.c.l.b16 %v2368
      %v2377 = vpack.c.b16 %v2374, %v2373
      %v2378 = vpack.c.b16 %v2376, %v2375
      %2381 = vmatpush.bf16.msra.mxu0 0
      %2382 = vmatpush.bf16.msra.mxu0 0
      %2383 = vmatpush.bf16.msra.mxu0 0
      %2384 = vmatpush.bf16.msra.mxu0 0
      %2385 = vmatpush.bf16.msra.mxu0 0
      %2386 = vmatpush.bf16.msra.mxu0 0
      %2387 = vmatpush.bf16.msra.mxu0 %v2378
      %2388 = vmatpush.bf16.msra.mxu0 %v2377
      %2389 = vmatmul.bf16.gmra.mxu0 %v1527
      %v2390 = vpop.f32.mrf.mxu0
      %v2391 = vadd.f32 0.0, %v2390
      %v2392 = vpop.f32.mrf.mxu0
      %v2393 = vadd.f32 0.0, %v2392
      %2394 = vmatmul.bf16.gmra.mxu0 %v1530
      %v2395 = vpop.f32.mrf.mxu0
      %v2396 = vadd.f32 0.0, %v2395
      %v2397 = vpop.f32.mrf.mxu0
      %v2398 = vadd.f32 0.0, %v2397
      %2399 = vmatmul.bf16.gmra.mxu0 %v1533
      %v2400 = vpop.f32.mrf.mxu0
      %v2401 = vadd.f32 0.0, %v2400
      %v2402 = vpop.f32.mrf.mxu0
      %v2403 = vadd.f32 0.0, %v2402
      %2404 = vmatmul.bf16.gmra.mxu0 %v1536
      %v2405 = vpop.f32.mrf.mxu0
      %v2406 = vadd.f32 0.0, %v2405
      %v2407 = vpop.f32.mrf.mxu0
      %v2408 = vadd.f32 0.0, %v2407
      %2409 = vdwg.mxu0
      %s2410 = scalar_lea.vmem [#allocation4], 64
      %2411 = vst.msk [vmem:[%s2410] sm:$0xff] %vm606, %v2391
      %2412 = vst.msk [vmem:[%s2410 + $0x8] sm:$0xff] %vm606, %v2393
      %2413 = vst.msk [vmem:[%s2410 + $0x10] sm:$0xff] %vm606, %v2396
      %2414 = vst.msk [vmem:[%s2410 + $0x18] sm:$0xff] %vm606, %v2398
      %2415 = vst.msk [vmem:[%s2410 + $0x20] sm:$0xff] %vm606, %v2401
      %2416 = vst.msk [vmem:[%s2410 + $0x28] sm:$0xff] %vm606, %v2403
      %2417 = vst.msk [vmem:[%s2410 + $0x30] sm:$0xff] %vm606, %v2406
      %2418 = vst.msk [vmem:[%s2410 + $0x38] sm:$0xff] %vm606, %v2408
      %v2419 = vld [vmem:[#allocation5] sm:$0xff]
      %v2420 = vld [vmem:[#allocation5 + $0x8] sm:$0xff]
      %s2421 = scalar_lea.vmem [#allocation5], 16
      %v2422 = vld [vmem:[%s2421] sm:$0xff]
      %v2423 = vld [vmem:[%s2421 + $0x8] sm:$0xff]
      loop: start=0, step=1, limit=8
      $region53: #{mewb1_forward.10} parent=47 // loop_pre_header
        _
      $region54: #{mewb1_forward.10} parent=47 // loop_header
        %s2425 = sphi 0, %s2429
        %p2426 = scmp.ge.s32.totalorder %s2425, 8
        %v2430 = vphi %v2419, %v2766
        %v2431 = vphi %v2420, %v2767
        %v2432 = vphi %v2422, %v3142
        %v2433 = vphi %v2423, %v3143
      $region55: #{mewb1_forward.10} parent=47 // loop_header_branch
        %2428 = sbr.rel (%p2426) target = $region59
      $region56: #{mewb1_forward.10} parent=47 // loop_body
        %s2434 = smul.u32 %s2425, 8
        %s2435 = ssub.s32 56, %s2434
        %s2436 = scalar_lea.vmem [#allocation4], %s2434
        %v2437 = vld [vmem:[%s2436] sm:$0xff]
        %2438 = vxpose.xlu0.b32.start [1/16] %v2437, 128
        %2439 = vxpose.xlu0.b32.cont [2/16] 0.0, 128
        %2440 = vxpose.xlu0.b32.cont [3/16] 0.0, 128
        %2441 = vxpose.xlu0.b32.cont [4/16] 0.0, 128
        %2442 = vxpose.xlu0.b32.cont [5/16] 0.0, 128
        %2443 = vxpose.xlu0.b32.cont [6/16] 0.0, 128
        %2444 = vxpose.xlu0.b32.cont [7/16] 0.0, 128
        %2445 = vxpose.xlu0.b32.cont [8/16] 0.0, 128
        %2446 = vxpose.xlu0.b32.cont [9/16] 0.0, 128
        %2447 = vxpose.xlu0.b32.cont [10/16] 0.0, 128
        %2448 = vxpose.xlu0.b32.cont [11/16] 0.0, 128
        %2449 = vxpose.xlu0.b32.cont [12/16] 0.0, 128
        %2450 = vxpose.xlu0.b32.cont [13/16] 0.0, 128
        %2451 = vxpose.xlu0.b32.cont [14/16] 0.0, 128
        %2452 = vxpose.xlu0.b32.cont [15/16] 0.0, 128
        %2453 = vxpose.xlu0.b32.end [16/16] 0.0, 128
        %v2454 = vpop.trf.xlu0
        %v2455 = vpop.trf.xlu0
        %v2456 = vpop.trf.xlu0
        %v2457 = vpop.trf.xlu0
        %v2458 = vpop.trf.xlu0
        %v2459 = vpop.trf.xlu0
        %v2460 = vpop.trf.xlu0
        %v2461 = vpop.trf.xlu0
        %v2462 = vpop.trf.xlu0
        %v2463 = vpop.trf.xlu0
        %v2464 = vpop.trf.xlu0
        %v2465 = vpop.trf.xlu0
        %v2466 = vpop.trf.xlu0
        %v2467 = vpop.trf.xlu0
        %v2468 = vpop.trf.xlu0
        %v2469 = vpop.trf.xlu0
        %s2470 = scalar_lea.vmem [#allocation3], %s2434
        %v2471 = vld [vmem:[%s2470] sm:$0xff]
        %s2472 = smul.u32 %s2434, 16
        %s2473 = scalar_lea.vmem [#allocation2], %s2472
        %v2474 = vld [vmem:[%s2473] sm:$0xff]
        %v2475 = vld [vmem:[%s2473 + $0x8] sm:$0xff]
        %v2476 = vmul.f32 %v2474, %v2430
        %v2477 = vmul.f32 %v2475, %v2431
        %2479 = vset.pattern.permute.xlu0 0
        %2480 = vperm.xlu0 %2479, %v2454
        %v2481 = vpop.permute.xlu0 %2480
        %2484 = vset.pattern.permute.xlu0 0
        %2485 = vperm.xlu0 %2484, %v2455
        %v2486 = vpop.permute.xlu0 %2485
        %v2488 = vperm.slane %v2471, 0
        %v2489 = vmul.f32 %v2481, %v2488
        %v2490 = vmul.f32 %v2486, %v2488
        %v2491 = vadd.f32 %v2476, %v2489
        %v2492 = vadd.f32 %v2477, %v2490
        %2494 = vset.pattern.permute.xlu0 0
        %2495 = vperm.xlu0 %2494, %v2456
        %v2496 = vpop.permute.xlu0 %2495
        %2499 = vset.pattern.permute.xlu0 0
        %2500 = vperm.xlu0 %2499, %v2457
        %v2501 = vpop.permute.xlu0 %2500
        %v2503 = vmul.f32 %v2496, %v2491
        %v2504 = vmul.f32 %v2501, %v2492
        %v2505 = vsel %vm606, %v2503, 0.0
        %v2506 = vsel %vm606, %v2504, 0.0
        %v2507 = vadd.f32 %v2505, %v2506
        %v2508 = vrot.slane %v2507, 4
        %v2509 = vadd.f32 %v2507, %v2508
        %v2510 = vrot.slane %v2509, 2
        %v2511 = vadd.f32 %v2509, %v2510
        %v2512 = vrot.slane %v2511, 1
        %v2513 = vadd.f32 %v2511, %v2512
        %s2514 = sadd.s32 %s2434, 1
        %s2515 = smul.u32 %s2514, 16
        %s2516 = scalar_lea.vmem [#allocation2], %s2515
        %v2517 = vld [vmem:[%s2516] sm:$0xff]
        %v2518 = vld [vmem:[%s2516 + $0x8] sm:$0xff]
        %v2519 = vmul.f32 %v2517, %v2491
        %v2520 = vmul.f32 %v2518, %v2492
        %2521 = vset.pattern.permute.xlu0 1
        %2522 = vperm.xlu0 %2521, %v2454
        %v2523 = vpop.permute.xlu0 %2522
        %2525 = vset.pattern.permute.xlu0 1
        %2526 = vperm.xlu0 %2525, %v2455
        %v2527 = vpop.permute.xlu0 %2526
        %v2529 = vperm.slane %v2471, 1
        %v2530 = vmul.f32 %v2523, %v2529
        %v2531 = vmul.f32 %v2527, %v2529
        %v2532 = vadd.f32 %v2519, %v2530
        %v2533 = vadd.f32 %v2520, %v2531
        %2534 = vset.pattern.permute.xlu0 1
        %2535 = vperm.xlu0 %2534, %v2456
        %v2536 = vpop.permute.xlu0 %2535
        %2538 = vset.pattern.permute.xlu0 1
        %2539 = vperm.xlu0 %2538, %v2457
        %v2540 = vpop.permute.xlu0 %2539
        %v2542 = vmul.f32 %v2536, %v2532
        %v2543 = vmul.f32 %v2540, %v2533
        %v2544 = vsel %vm606, %v2542, 0.0
        %v2545 = vsel %vm606, %v2543, 0.0
        %v2546 = vadd.f32 %v2544, %v2545
        %v2547 = vrot.slane %v2546, 4
        %v2548 = vadd.f32 %v2546, %v2547
        %v2549 = vrot.slane %v2548, 2
        %v2550 = vadd.f32 %v2548, %v2549
        %v2551 = vrot.slane %v2550, 1
        %v2552 = vadd.f32 %v2550, %v2551
        %s2553 = sadd.s32 %s2434, 2
        %s2554 = smul.u32 %s2553, 16
        %s2555 = scalar_lea.vmem [#allocation2], %s2554
        %v2556 = vld [vmem:[%s2555] sm:$0xff]
        %v2557 = vld [vmem:[%s2555 + $0x8] sm:$0xff]
        %v2558 = vmul.f32 %v2556, %v2532
        %v2559 = vmul.f32 %v2557, %v2533
        %2560 = vset.pattern.permute.xlu0 2
        %2561 = vperm.xlu0 %2560, %v2454
        %v2562 = vpop.permute.xlu0 %2561
        %2564 = vset.pattern.permute.xlu0 2
        %2565 = vperm.xlu0 %2564, %v2455
        %v2566 = vpop.permute.xlu0 %2565
        %v2568 = vperm.slane %v2471, 2
        %v2569 = vmul.f32 %v2562, %v2568
        %v2570 = vmul.f32 %v2566, %v2568
        %v2571 = vadd.f32 %v2558, %v2569
        %v2572 = vadd.f32 %v2559, %v2570
        %2573 = vset.pattern.permute.xlu0 2
        %2574 = vperm.xlu0 %2573, %v2456
        %v2575 = vpop.permute.xlu0 %2574
        %2577 = vset.pattern.permute.xlu0 2
        %2578 = vperm.xlu0 %2577, %v2457
        %v2579 = vpop.permute.xlu0 %2578
        %v2581 = vmul.f32 %v2575, %v2571
        %v2582 = vmul.f32 %v2579, %v2572
        %v2583 = vsel %vm606, %v2581, 0.0
        %v2584 = vsel %vm606, %v2582, 0.0
        %v2585 = vadd.f32 %v2583, %v2584
        %v2586 = vrot.slane %v2585, 4
        %v2587 = vadd.f32 %v2585, %v2586
        %v2588 = vrot.slane %v2587, 2
        %v2589 = vadd.f32 %v2587, %v2588
        %v2590 = vrot.slane %v2589, 1
        %v2591 = vadd.f32 %v2589, %v2590
        %s2592 = sadd.s32 %s2434, 3
        %s2593 = smul.u32 %s2592, 16
        %s2594 = scalar_lea.vmem [#allocation2], %s2593
        %v2595 = vld [vmem:[%s2594] sm:$0xff]
        %v2596 = vld [vmem:[%s2594 + $0x8] sm:$0xff]
        %v2597 = vmul.f32 %v2595, %v2571
        %v2598 = vmul.f32 %v2596, %v2572
        %2599 = vset.pattern.permute.xlu0 3
        %2600 = vperm.xlu0 %2599, %v2454
        %v2601 = vpop.permute.xlu0 %2600
        %2603 = vset.pattern.permute.xlu0 3
        %2604 = vperm.xlu0 %2603, %v2455
        %v2605 = vpop.permute.xlu0 %2604
        %v2607 = vperm.slane %v2471, 3
        %v2608 = vmul.f32 %v2601, %v2607
        %v2609 = vmul.f32 %v2605, %v2607
        %v2610 = vadd.f32 %v2597, %v2608
        %v2611 = vadd.f32 %v2598, %v2609
        %2612 = vset.pattern.permute.xlu0 3
        %2613 = vperm.xlu0 %2612, %v2456
        %v2614 = vpop.permute.xlu0 %2613
        %2616 = vset.pattern.permute.xlu0 3
        %2617 = vperm.xlu0 %2616, %v2457
        %v2618 = vpop.permute.xlu0 %2617
        %v2620 = vmul.f32 %v2614, %v2610
        %v2621 = vmul.f32 %v2618, %v2611
        %v2622 = vsel %vm606, %v2620, 0.0
        %v2623 = vsel %vm606, %v2621, 0.0
        %v2624 = vadd.f32 %v2622, %v2623
        %v2625 = vrot.slane %v2624, 4
        %v2626 = vadd.f32 %v2624, %v2625
        %v2627 = vrot.slane %v2626, 2
        %v2628 = vadd.f32 %v2626, %v2627
        %v2629 = vrot.slane %v2628, 1
        %v2630 = vadd.f32 %v2628, %v2629
        %s2631 = sadd.s32 %s2434, 4
        %s2632 = smul.u32 %s2631, 16
        %s2633 = scalar_lea.vmem [#allocation2], %s2632
        %v2634 = vld [vmem:[%s2633] sm:$0xff]
        %v2635 = vld [vmem:[%s2633 + $0x8] sm:$0xff]
        %v2636 = vmul.f32 %v2634, %v2610
        %v2637 = vmul.f32 %v2635, %v2611
        %2638 = vset.pattern.permute.xlu0 4
        %2639 = vperm.xlu0 %2638, %v2454
        %v2640 = vpop.permute.xlu0 %2639
        %2642 = vset.pattern.permute.xlu0 4
        %2643 = vperm.xlu0 %2642, %v2455
        %v2644 = vpop.permute.xlu0 %2643
        %v2646 = vperm.slane %v2471, 4
        %v2647 = vmul.f32 %v2640, %v2646
        %v2648 = vmul.f32 %v2644, %v2646
        %v2649 = vadd.f32 %v2636, %v2647
        %v2650 = vadd.f32 %v2637, %v2648
        %2651 = vset.pattern.permute.xlu0 4
        %2652 = vperm.xlu0 %2651, %v2456
        %v2653 = vpop.permute.xlu0 %2652
        %2655 = vset.pattern.permute.xlu0 4
        %2656 = vperm.xlu0 %2655, %v2457
        %v2657 = vpop.permute.xlu0 %2656
        %v2659 = vmul.f32 %v2653, %v2649
        %v2660 = vmul.f32 %v2657, %v2650
        %v2661 = vsel %vm606, %v2659, 0.0
        %v2662 = vsel %vm606, %v2660, 0.0
        %v2663 = vadd.f32 %v2661, %v2662
        %v2664 = vrot.slane %v2663, 4
        %v2665 = vadd.f32 %v2663, %v2664
        %v2666 = vrot.slane %v2665, 2
        %v2667 = vadd.f32 %v2665, %v2666
        %v2668 = vrot.slane %v2667, 1
        %v2669 = vadd.f32 %v2667, %v2668
        %s2670 = sadd.s32 %s2434, 5
        %s2671 = smul.u32 %s2670, 16
        %s2672 = scalar_lea.vmem [#allocation2], %s2671
        %v2673 = vld [vmem:[%s2672] sm:$0xff]
        %v2674 = vld [vmem:[%s2672 + $0x8] sm:$0xff]
        %v2675 = vmul.f32 %v2673, %v2649
        %v2676 = vmul.f32 %v2674, %v2650
        %2677 = vset.pattern.permute.xlu0 5
        %2678 = vperm.xlu0 %2677, %v2454
        %v2679 = vpop.permute.xlu0 %2678
        %2681 = vset.pattern.permute.xlu0 5
        %2682 = vperm.xlu0 %2681, %v2455
        %v2683 = vpop.permute.xlu0 %2682
        %v2685 = vperm.slane %v2471, 5
        %v2686 = vmul.f32 %v2679, %v2685
        %v2687 = vmul.f32 %v2683, %v2685
        %v2688 = vadd.f32 %v2675, %v2686
        %v2689 = vadd.f32 %v2676, %v2687
        %2690 = vset.pattern.permute.xlu0 5
        %2691 = vperm.xlu0 %2690, %v2456
        %v2692 = vpop.permute.xlu0 %2691
        %2694 = vset.pattern.permute.xlu0 5
        %2695 = vperm.xlu0 %2694, %v2457
        %v2696 = vpop.permute.xlu0 %2695
        %v2698 = vmul.f32 %v2692, %v2688
        %v2699 = vmul.f32 %v2696, %v2689
        %v2700 = vsel %vm606, %v2698, 0.0
        %v2701 = vsel %vm606, %v2699, 0.0
        %v2702 = vadd.f32 %v2700, %v2701
        %v2703 = vrot.slane %v2702, 4
        %v2704 = vadd.f32 %v2702, %v2703
        %v2705 = vrot.slane %v2704, 2
        %v2706 = vadd.f32 %v2704, %v2705
        %v2707 = vrot.slane %v2706, 1
        %v2708 = vadd.f32 %v2706, %v2707
        %s2709 = sadd.s32 %s2434, 6
        %s2710 = smul.u32 %s2709, 16
        %s2711 = scalar_lea.vmem [#allocation2], %s2710
        %v2712 = vld [vmem:[%s2711] sm:$0xff]
        %v2713 = vld [vmem:[%s2711 + $0x8] sm:$0xff]
        %v2714 = vmul.f32 %v2712, %v2688
        %v2715 = vmul.f32 %v2713, %v2689
        %2716 = vset.pattern.permute.xlu0 6
        %2717 = vperm.xlu0 %2716, %v2454
        %v2718 = vpop.permute.xlu0 %2717
        %2720 = vset.pattern.permute.xlu0 6
        %2721 = vperm.xlu0 %2720, %v2455
        %v2722 = vpop.permute.xlu0 %2721
        %v2724 = vperm.slane %v2471, 6
        %v2725 = vmul.f32 %v2718, %v2724
        %v2726 = vmul.f32 %v2722, %v2724
        %v2727 = vadd.f32 %v2714, %v2725
        %v2728 = vadd.f32 %v2715, %v2726
        %2729 = vset.pattern.permute.xlu0 6
        %2730 = vperm.xlu0 %2729, %v2456
        %v2731 = vpop.permute.xlu0 %2730
        %2733 = vset.pattern.permute.xlu0 6
        %2734 = vperm.xlu0 %2733, %v2457
        %v2735 = vpop.permute.xlu0 %2734
        %v2737 = vmul.f32 %v2731, %v2727
        %v2738 = vmul.f32 %v2735, %v2728
        %v2739 = vsel %vm606, %v2737, 0.0
        %v2740 = vsel %vm606, %v2738, 0.0
        %v2741 = vadd.f32 %v2739, %v2740
        %v2742 = vrot.slane %v2741, 4
        %v2743 = vadd.f32 %v2741, %v2742
        %v2744 = vrot.slane %v2743, 2
        %v2745 = vadd.f32 %v2743, %v2744
        %v2746 = vrot.slane %v2745, 1
        %v2747 = vadd.f32 %v2745, %v2746
        %s2748 = sadd.s32 %s2434, 7
        %s2749 = smul.u32 %s2748, 16
        %s2750 = scalar_lea.vmem [#allocation2], %s2749
        %v2751 = vld [vmem:[%s2750] sm:$0xff]
        %v2752 = vld [vmem:[%s2750 + $0x8] sm:$0xff]
        %v2753 = vmul.f32 %v2751, %v2727
        %v2754 = vmul.f32 %v2752, %v2728
        %2755 = vset.pattern.permute.xlu0 7
        %2756 = vperm.xlu0 %2755, %v2454
        %v2757 = vpop.permute.xlu0 %2756
        %2759 = vset.pattern.permute.xlu0 7
        %2760 = vperm.xlu0 %2759, %v2455
        %v2761 = vpop.permute.xlu0 %2760
        %v2763 = vperm.slane %v2471, 7
        %v2764 = vmul.f32 %v2757, %v2763
        %v2765 = vmul.f32 %v2761, %v2763
        %v2766 = vadd.f32 %v2753, %v2764
        %v2767 = vadd.f32 %v2754, %v2765
        %2768 = vset.pattern.permute.xlu0 7
        %2769 = vperm.xlu0 %2768, %v2456
        %v2770 = vpop.permute.xlu0 %2769
        %2772 = vset.pattern.permute.xlu0 7
        %2773 = vperm.xlu0 %2772, %v2457
        %v2774 = vpop.permute.xlu0 %2773
        %v2776 = vmul.f32 %v2770, %v2766
        %v2777 = vmul.f32 %v2774, %v2767
        %v2778 = vsel %vm606, %v2776, 0.0
        %v2779 = vsel %vm606, %v2777, 0.0
        %v2780 = vadd.f32 %v2778, %v2779
        %v2781 = vrot.slane %v2780, 4
        %v2782 = vadd.f32 %v2780, %v2781
        %v2783 = vrot.slane %v2782, 2
        %v2784 = vadd.f32 %v2782, %v2783
        %v2785 = vrot.slane %v2784, 1
        %v2786 = vadd.f32 %v2784, %v2785
        %vm2787 = vcmask 1040384
        %v2788 = vsel %vm2787, %v2513, %v2552
        %vm2789 = vcmask 1041408
        %v2790 = vsel %vm2789, %v2788, %v2591
        %vm2791 = vcmask 1042432
        %v2792 = vsel %vm2791, %v2790, %v2630
        %vm2793 = vcmask 1043456
        %v2794 = vsel %vm2793, %v2792, %v2669
        %vm2795 = vcmask 1044480
        %v2796 = vsel %vm2795, %v2794, %v2708
        %vm2797 = vcmask 1045504
        %v2798 = vsel %vm2797, %v2796, %v2747
        %vm2799 = vcmask 1046528
        %v2800 = vsel %vm2799, %v2798, %v2786
        %s2801 = scalar_lea.vmem %s548, %s2434
        %2802 = vst.msk [vmem:[%s2801] sm:$0xff] %vm606, %v2800
        %s2803 = sadd.s32 %s2435, 64
        %s2804 = scalar_lea.vmem [#allocation4], %s2803
        %v2805 = vld [vmem:[%s2804] sm:$0xff]
        %2806 = vxpose.xlu0.b32.start [1/16] %v2805, 128
        %2807 = vxpose.xlu0.b32.cont [2/16] 0.0, 128
        %2808 = vxpose.xlu0.b32.cont [3/16] 0.0, 128
        %2809 = vxpose.xlu0.b32.cont [4/16] 0.0, 128
        %2810 = vxpose.xlu0.b32.cont [5/16] 0.0, 128
        %2811 = vxpose.xlu0.b32.cont [6/16] 0.0, 128
        %2812 = vxpose.xlu0.b32.cont [7/16] 0.0, 128
        %2813 = vxpose.xlu0.b32.cont [8/16] 0.0, 128
        %2814 = vxpose.xlu0.b32.cont [9/16] 0.0, 128
        %2815 = vxpose.xlu0.b32.cont [10/16] 0.0, 128
        %2816 = vxpose.xlu0.b32.cont [11/16] 0.0, 128
        %2817 = vxpose.xlu0.b32.cont [12/16] 0.0, 128
        %2818 = vxpose.xlu0.b32.cont [13/16] 0.0, 128
        %2819 = vxpose.xlu0.b32.cont [14/16] 0.0, 128
        %2820 = vxpose.xlu0.b32.cont [15/16] 0.0, 128
        %2821 = vxpose.xlu0.b32.end [16/16] 0.0, 128
        %v2822 = vpop.trf.xlu0
        %v2823 = vpop.trf.xlu0
        %v2824 = vpop.trf.xlu0
        %v2825 = vpop.trf.xlu0
        %v2826 = vpop.trf.xlu0
        %v2827 = vpop.trf.xlu0
        %v2828 = vpop.trf.xlu0
        %v2829 = vpop.trf.xlu0
        %v2830 = vpop.trf.xlu0
        %v2831 = vpop.trf.xlu0
        %v2832 = vpop.trf.xlu0
        %v2833 = vpop.trf.xlu0
        %v2834 = vpop.trf.xlu0
        %v2835 = vpop.trf.xlu0
        %v2836 = vpop.trf.xlu0
        %v2837 = vpop.trf.xlu0
        %s2838 = scalar_lea.vmem [#allocation3], %s2803
        %v2839 = vld [vmem:[%s2838] sm:$0xff]
        %s2840 = sadd.s32 %s2435, 7
        %s2841 = smul.u32 %s2840, 16
        %s2842 = sadd.s32 %s2841, 1024
        %s2843 = scalar_lea.vmem [#allocation2], %s2842
        %v2844 = vld [vmem:[%s2843] sm:$0xff]
        %v2845 = vld [vmem:[%s2843 + $0x8] sm:$0xff]
        %v2846 = vmul.f32 %v2844, %v2432
        %v2847 = vmul.f32 %v2845, %v2433
        %2849 = vset.pattern.permute.xlu0 7
        %2850 = vperm.xlu0 %2849, %v2822
        %v2851 = vpop.permute.xlu0 %2850
        %2854 = vset.pattern.permute.xlu0 7
        %2855 = vperm.xlu0 %2854, %v2823
        %v2856 = vpop.permute.xlu0 %2855
        %v2858 = vperm.slane %v2839, 7
        %v2859 = vmul.f32 %v2851, %v2858
        %v2860 = vmul.f32 %v2856, %v2858
        %v2861 = vadd.f32 %v2846, %v2859
        %v2862 = vadd.f32 %v2847, %v2860
        %2864 = vset.pattern.permute.xlu0 7
        %2865 = vperm.xlu0 %2864, %v2824
        %v2866 = vpop.permute.xlu0 %2865
        %2869 = vset.pattern.permute.xlu0 7
        %2870 = vperm.xlu0 %2869, %v2825
        %v2871 = vpop.permute.xlu0 %2870
        %v2873 = vmul.f32 %v2866, %v2861
        %v2874 = vmul.f32 %v2871, %v2862
        %v2875 = vsel %vm606, %v2873, 0.0
        %v2876 = vsel %vm606, %v2874, 0.0
        %v2877 = vadd.f32 %v2875, %v2876
        %v2878 = vrot.slane %v2877, 4
        %v2879 = vadd.f32 %v2877, %v2878
        %v2880 = vrot.slane %v2879, 2
        %v2881 = vadd.f32 %v2879, %v2880
        %v2882 = vrot.slane %v2881, 1
        %v2883 = vadd.f32 %v2881, %v2882
        %s2884 = sadd.s32 %s2435, 6
        %s2885 = smul.u32 %s2884, 16
        %s2886 = sadd.s32 %s2885, 1024
        %s2887 = scalar_lea.vmem [#allocation2], %s2886
        %v2888 = vld [vmem:[%s2887] sm:$0xff]
        %v2889 = vld [vmem:[%s2887 + $0x8] sm:$0xff]
        %v2890 = vmul.f32 %v2888, %v2861
        %v2891 = vmul.f32 %v2889, %v2862
        %2892 = vset.pattern.permute.xlu0 6
        %2893 = vperm.xlu0 %2892, %v2822
        %v2894 = vpop.permute.xlu0 %2893
        %2896 = vset.pattern.permute.xlu0 6
        %2897 = vperm.xlu0 %2896, %v2823
        %v2898 = vpop.permute.xlu0 %2897
        %v2900 = vperm.slane %v2839, 6
        %v2901 = vmul.f32 %v2894, %v2900
        %v2902 = vmul.f32 %v2898, %v2900
        %v2903 = vadd.f32 %v2890, %v2901
        %v2904 = vadd.f32 %v2891, %v2902
        %2905 = vset.pattern.permute.xlu0 6
        %2906 = vperm.xlu0 %2905, %v2824
        %v2907 = vpop.permute.xlu0 %2906
        %2909 = vset.pattern.permute.xlu0 6
        %2910 = vperm.xlu0 %2909, %v2825
        %v2911 = vpop.permute.xlu0 %2910
        %v2913 = vmul.f32 %v2907, %v2903
        %v2914 = vmul.f32 %v2911, %v2904
        %v2915 = vsel %vm606, %v2913, 0.0
        %v2916 = vsel %vm606, %v2914, 0.0
        %v2917 = vadd.f32 %v2915, %v2916
        %v2918 = vrot.slane %v2917, 4
        %v2919 = vadd.f32 %v2917, %v2918
        %v2920 = vrot.slane %v2919, 2
        %v2921 = vadd.f32 %v2919, %v2920
        %v2922 = vrot.slane %v2921, 1
        %v2923 = vadd.f32 %v2921, %v2922
        %s2924 = sadd.s32 %s2435, 5
        %s2925 = smul.u32 %s2924, 16
        %s2926 = sadd.s32 %s2925, 1024
        %s2927 = scalar_lea.vmem [#allocation2], %s2926
        %v2928 = vld [vmem:[%s2927] sm:$0xff]
        %v2929 = vld [vmem:[%s2927 + $0x8] sm:$0xff]
        %v2930 = vmul.f32 %v2928, %v2903
        %v2931 = vmul.f32 %v2929, %v2904
        %2932 = vset.pattern.permute.xlu0 5
        %2933 = vperm.xlu0 %2932, %v2822
        %v2934 = vpop.permute.xlu0 %2933
        %2936 = vset.pattern.permute.xlu0 5
        %2937 = vperm.xlu0 %2936, %v2823
        %v2938 = vpop.permute.xlu0 %2937
        %v2940 = vperm.slane %v2839, 5
        %v2941 = vmul.f32 %v2934, %v2940
        %v2942 = vmul.f32 %v2938, %v2940
        %v2943 = vadd.f32 %v2930, %v2941
        %v2944 = vadd.f32 %v2931, %v2942
        %2945 = vset.pattern.permute.xlu0 5
        %2946 = vperm.xlu0 %2945, %v2824
        %v2947 = vpop.permute.xlu0 %2946
        %2949 = vset.pattern.permute.xlu0 5
        %2950 = vperm.xlu0 %2949, %v2825
        %v2951 = vpop.permute.xlu0 %2950
        %v2953 = vmul.f32 %v2947, %v2943
        %v2954 = vmul.f32 %v2951, %v2944
        %v2955 = vsel %vm606, %v2953, 0.0
        %v2956 = vsel %vm606, %v2954, 0.0
        %v2957 = vadd.f32 %v2955, %v2956
        %v2958 = vrot.slane %v2957, 4
        %v2959 = vadd.f32 %v2957, %v2958
        %v2960 = vrot.slane %v2959, 2
        %v2961 = vadd.f32 %v2959, %v2960
        %v2962 = vrot.slane %v2961, 1
        %v2963 = vadd.f32 %v2961, %v2962
        %s2964 = sadd.s32 %s2435, 4
        %s2965 = smul.u32 %s2964, 16
        %s2966 = sadd.s32 %s2965, 1024
        %s2967 = scalar_lea.vmem [#allocation2], %s2966
        %v2968 = vld [vmem:[%s2967] sm:$0xff]
        %v2969 = vld [vmem:[%s2967 + $0x8] sm:$0xff]
        %v2970 = vmul.f32 %v2968, %v2943
        %v2971 = vmul.f32 %v2969, %v2944
        %2972 = vset.pattern.permute.xlu0 4
        %2973 = vperm.xlu0 %2972, %v2822
        %v2974 = vpop.permute.xlu0 %2973
        %2976 = vset.pattern.permute.xlu0 4
        %2977 = vperm.xlu0 %2976, %v2823
        %v2978 = vpop.permute.xlu0 %2977
        %v2980 = vperm.slane %v2839, 4
        %v2981 = vmul.f32 %v2974, %v2980
        %v2982 = vmul.f32 %v2978, %v2980
        %v2983 = vadd.f32 %v2970, %v2981
        %v2984 = vadd.f32 %v2971, %v2982
        %2985 = vset.pattern.permute.xlu0 4
        %2986 = vperm.xlu0 %2985, %v2824
        %v2987 = vpop.permute.xlu0 %2986
        %2989 = vset.pattern.permute.xlu0 4
        %2990 = vperm.xlu0 %2989, %v2825
        %v2991 = vpop.permute.xlu0 %2990
        %v2993 = vmul.f32 %v2987, %v2983
        %v2994 = vmul.f32 %v2991, %v2984
        %v2995 = vsel %vm606, %v2993, 0.0
        %v2996 = vsel %vm606, %v2994, 0.0
        %v2997 = vadd.f32 %v2995, %v2996
        %v2998 = vrot.slane %v2997, 4
        %v2999 = vadd.f32 %v2997, %v2998
        %v3000 = vrot.slane %v2999, 2
        %v3001 = vadd.f32 %v2999, %v3000
        %v3002 = vrot.slane %v3001, 1
        %v3003 = vadd.f32 %v3001, %v3002
        %s3004 = sadd.s32 %s2435, 3
        %s3005 = smul.u32 %s3004, 16
        %s3006 = sadd.s32 %s3005, 1024
        %s3007 = scalar_lea.vmem [#allocation2], %s3006
        %v3008 = vld [vmem:[%s3007] sm:$0xff]
        %v3009 = vld [vmem:[%s3007 + $0x8] sm:$0xff]
        %v3010 = vmul.f32 %v3008, %v2983
        %v3011 = vmul.f32 %v3009, %v2984
        %3012 = vset.pattern.permute.xlu0 3
        %3013 = vperm.xlu0 %3012, %v2822
        %v3014 = vpop.permute.xlu0 %3013
        %3016 = vset.pattern.permute.xlu0 3
        %3017 = vperm.xlu0 %3016, %v2823
        %v3018 = vpop.permute.xlu0 %3017
        %v3020 = vperm.slane %v2839, 3
        %v3021 = vmul.f32 %v3014, %v3020
        %v3022 = vmul.f32 %v3018, %v3020
        %v3023 = vadd.f32 %v3010, %v3021
        %v3024 = vadd.f32 %v3011, %v3022
        %3025 = vset.pattern.permute.xlu0 3
        %3026 = vperm.xlu0 %3025, %v2824
        %v3027 = vpop.permute.xlu0 %3026
        %3029 = vset.pattern.permute.xlu0 3
        %3030 = vperm.xlu0 %3029, %v2825
        %v3031 = vpop.permute.xlu0 %3030
        %v3033 = vmul.f32 %v3027, %v3023
        %v3034 = vmul.f32 %v3031, %v3024
        %v3035 = vsel %vm606, %v3033, 0.0
        %v3036 = vsel %vm606, %v3034, 0.0
        %v3037 = vadd.f32 %v3035, %v3036
        %v3038 = vrot.slane %v3037, 4
        %v3039 = vadd.f32 %v3037, %v3038
        %v3040 = vrot.slane %v3039, 2
        %v3041 = vadd.f32 %v3039, %v3040
        %v3042 = vrot.slane %v3041, 1
        %v3043 = vadd.f32 %v3041, %v3042
        %s3044 = sadd.s32 %s2435, 2
        %s3045 = smul.u32 %s3044, 16
        %s3046 = sadd.s32 %s3045, 1024
        %s3047 = scalar_lea.vmem [#allocation2], %s3046
        %v3048 = vld [vmem:[%s3047] sm:$0xff]
        %v3049 = vld [vmem:[%s3047 + $0x8] sm:$0xff]
        %v3050 = vmul.f32 %v3048, %v3023
        %v3051 = vmul.f32 %v3049, %v3024
        %3052 = vset.pattern.permute.xlu0 2
        %3053 = vperm.xlu0 %3052, %v2822
        %v3054 = vpop.permute.xlu0 %3053
        %3056 = vset.pattern.permute.xlu0 2
        %3057 = vperm.xlu0 %3056, %v2823
        %v3058 = vpop.permute.xlu0 %3057
        %v3060 = vperm.slane %v2839, 2
        %v3061 = vmul.f32 %v3054, %v3060
        %v3062 = vmul.f32 %v3058, %v3060
        %v3063 = vadd.f32 %v3050, %v3061
        %v3064 = vadd.f32 %v3051, %v3062
        %3065 = vset.pattern.permute.xlu0 2
        %3066 = vperm.xlu0 %3065, %v2824
        %v3067 = vpop.permute.xlu0 %3066
        %3069 = vset.pattern.permute.xlu0 2
        %3070 = vperm.xlu0 %3069, %v2825
        %v3071 = vpop.permute.xlu0 %3070
        %v3073 = vmul.f32 %v3067, %v3063
        %v3074 = vmul.f32 %v3071, %v3064
        %v3075 = vsel %vm606, %v3073, 0.0
        %v3076 = vsel %vm606, %v3074, 0.0
        %v3077 = vadd.f32 %v3075, %v3076
        %v3078 = vrot.slane %v3077, 4
        %v3079 = vadd.f32 %v3077, %v3078
        %v3080 = vrot.slane %v3079, 2
        %v3081 = vadd.f32 %v3079, %v3080
        %v3082 = vrot.slane %v3081, 1
        %v3083 = vadd.f32 %v3081, %v3082
        %s3084 = sadd.s32 %s2435, 1
        %s3085 = smul.u32 %s3084, 16
        %s3086 = sadd.s32 %s3085, 1024
        %s3087 = scalar_lea.vmem [#allocation2], %s3086
        %v3088 = vld [vmem:[%s3087] sm:$0xff]
        %v3089 = vld [vmem:[%s3087 + $0x8] sm:$0xff]
        %v3090 = vmul.f32 %v3088, %v3063
        %v3091 = vmul.f32 %v3089, %v3064
        %3092 = vset.pattern.permute.xlu0 1
        %3093 = vperm.xlu0 %3092, %v2822
        %v3094 = vpop.permute.xlu0 %3093
        %3096 = vset.pattern.permute.xlu0 1
        %3097 = vperm.xlu0 %3096, %v2823
        %v3098 = vpop.permute.xlu0 %3097
        %v3100 = vperm.slane %v2839, 1
        %v3101 = vmul.f32 %v3094, %v3100
        %v3102 = vmul.f32 %v3098, %v3100
        %v3103 = vadd.f32 %v3090, %v3101
        %v3104 = vadd.f32 %v3091, %v3102
        %3105 = vset.pattern.permute.xlu0 1
        %3106 = vperm.xlu0 %3105, %v2824
        %v3107 = vpop.permute.xlu0 %3106
        %3109 = vset.pattern.permute.xlu0 1
        %3110 = vperm.xlu0 %3109, %v2825
        %v3111 = vpop.permute.xlu0 %3110
        %v3113 = vmul.f32 %v3107, %v3103
        %v3114 = vmul.f32 %v3111, %v3104
        %v3115 = vsel %vm606, %v3113, 0.0
        %v3116 = vsel %vm606, %v3114, 0.0
        %v3117 = vadd.f32 %v3115, %v3116
        %v3118 = vrot.slane %v3117, 4
        %v3119 = vadd.f32 %v3117, %v3118
        %v3120 = vrot.slane %v3119, 2
        %v3121 = vadd.f32 %v3119, %v3120
        %v3122 = vrot.slane %v3121, 1
        %v3123 = vadd.f32 %v3121, %v3122
        %s3124 = smul.u32 %s2435, 16
        %s3125 = sadd.s32 %s3124, 1024
        %s3126 = scalar_lea.vmem [#allocation2], %s3125
        %v3127 = vld [vmem:[%s3126] sm:$0xff]
        %v3128 = vld [vmem:[%s3126 + $0x8] sm:$0xff]
        %v3129 = vmul.f32 %v3127, %v3103
        %v3130 = vmul.f32 %v3128, %v3104
        %3131 = vset.pattern.permute.xlu0 0
        %3132 = vperm.xlu0 %3131, %v2822
        %v3133 = vpop.permute.xlu0 %3132
        %3135 = vset.pattern.permute.xlu0 0
        %3136 = vperm.xlu0 %3135, %v2823
        %v3137 = vpop.permute.xlu0 %3136
        %v3139 = vperm.slane %v2839, 0
        %v3140 = vmul.f32 %v3133, %v3139
        %v3141 = vmul.f32 %v3137, %v3139
        %v3142 = vadd.f32 %v3129, %v3140
        %v3143 = vadd.f32 %v3130, %v3141
        %3144 = vset.pattern.permute.xlu0 0
        %3145 = vperm.xlu0 %3144, %v2824
        %v3146 = vpop.permute.xlu0 %3145
        %3148 = vset.pattern.permute.xlu0 0
        %3149 = vperm.xlu0 %3148, %v2825
        %v3150 = vpop.permute.xlu0 %3149
        %v3152 = vmul.f32 %v3146, %v3142
        %v3153 = vmul.f32 %v3150, %v3143
        %v3154 = vsel %vm606, %v3152, 0.0
        %v3155 = vsel %vm606, %v3153, 0.0
        %v3156 = vadd.f32 %v3154, %v3155
        %v3157 = vrot.slane %v3156, 4
        %v3158 = vadd.f32 %v3156, %v3157
        %v3159 = vrot.slane %v3158, 2
        %v3160 = vadd.f32 %v3158, %v3159
        %v3161 = vrot.slane %v3160, 1
        %v3162 = vadd.f32 %v3160, %v3161
        %v3163 = vsel %vm2787, %v3162, %v3123
        %v3164 = vsel %vm2789, %v3163, %v3083
        %v3165 = vsel %vm2791, %v3164, %v3043
        %v3166 = vsel %vm2793, %v3165, %v3003
        %v3167 = vsel %vm2795, %v3166, %v2963
        %v3168 = vsel %vm2797, %v3167, %v2923
        %v3169 = vsel %vm2799, %v3168, %v2883
        %s3170 = scalar_lea.vmem %s563, %s2435
        %3171 = vst.msk [vmem:[%s3170] sm:$0xff] %vm606, %v3169
      $region57: #{mewb1_forward.10} parent=47 // loop_footer
        %s2429 = sadd.s32 1, %s2425
      $region58: #{mewb1_forward.10} parent=47 // loop_footer_branch
        %2424 = sbr.rel target = $region54
      $region59: #{mewb1_forward.10} parent=47 // loop_exit
        _
      %3172 = vst.msk [vmem:[#allocation5] sm:$0xff] %vm606, %v2430
      %3173 = vst.msk [vmem:[#allocation5 + $0x8] sm:$0xff] %vm606, %v2431
      %3174 = vst.msk [vmem:[%s2421] sm:$0xff] %vm606, %v2432
      %3175 = vst.msk [vmem:[%s2421 + $0x8] sm:$0xff] %vm606, %v2433
      %v3176 = vld [vmem:[%s548] sm:$0xff]
      %v3177 = vld [vmem:[%s548 + $0x8] sm:$0xff]
      %v3178 = vld [vmem:[%s548 + $0x10] sm:$0xff]
      %v3179 = vld [vmem:[%s548 + $0x18] sm:$0xff]
      %v3180 = vld [vmem:[%s548 + $0x20] sm:$0xff]
      %v3181 = vld [vmem:[%s548 + $0x28] sm:$0xff]
      %v3182 = vld [vmem:[%s548 + $0x30] sm:$0xff]
      %v3183 = vld [vmem:[%s548 + $0x38] sm:$0xff]
      %v3184 = vld [vmem:[%s535] sm:$0x1]
      %v3185 = vld [vmem:[%s495] sm:$0xff]
      %v3186 = vld [vmem:[%s495 + $0x8] sm:$0xff]
      %v3187 = vld [vmem:[%s495 + $0x10] sm:$0xff]
      %v3188 = vld [vmem:[%s495 + $0x18] sm:$0xff]
      %v3189 = vld [vmem:[%s495 + $0x20] sm:$0xff]
      %v3190 = vld [vmem:[%s495 + $0x28] sm:$0xff]
      %v3191 = vld [vmem:[%s495 + $0x30] sm:$0xff]
      %v3192 = vld [vmem:[%s495 + $0x38] sm:$0xff]
      %v3193 = vperm.slane %v3184, 0
      %v3194 = vmul.f32 %v3193, %v3185
      %v3195 = vmul.f32 %v3193, %v3186
      %v3196 = vmul.f32 %v3193, %v3187
      %v3197 = vmul.f32 %v3193, %v3188
      %v3198 = vmul.f32 %v3193, %v3189
      %v3199 = vmul.f32 %v3193, %v3190
      %v3200 = vmul.f32 %v3193, %v3191
      %v3201 = vmul.f32 %v3193, %v3192
      %v3202 = vadd.f32 %v3176, %v3194
      %v3203 = vadd.f32 %v3177, %v3195
      %v3204 = vadd.f32 %v3178, %v3196
      %v3205 = vadd.f32 %v3179, %v3197
      %v3206 = vadd.f32 %v3180, %v3198
      %v3207 = vadd.f32 %v3181, %v3199
      %v3208 = vadd.f32 %v3182, %v3200
      %v3209 = vadd.f32 %v3183, %v3201
      %3210 = vst.msk [vmem:[%s548] sm:$0xff] %vm606, %v3202
      %3211 = vst.msk [vmem:[%s548 + $0x8] sm:$0xff] %vm606, %v3203
      %3212 = vst.msk [vmem:[%s548 + $0x10] sm:$0xff] %vm606, %v3204
      %3213 = vst.msk [vmem:[%s548 + $0x18] sm:$0xff] %vm606, %v3205
      %3214 = vst.msk [vmem:[%s548 + $0x20] sm:$0xff] %vm606, %v3206
      %3215 = vst.msk [vmem:[%s548 + $0x28] sm:$0xff] %vm606, %v3207
      %3216 = vst.msk [vmem:[%s548 + $0x30] sm:$0xff] %vm606, %v3208
      %3217 = vst.msk [vmem:[%s548 + $0x38] sm:$0xff] %vm606, %v3209
      %v3218 = vld [vmem:[%s563] sm:$0xff]
      %v3219 = vld [vmem:[%s563 + $0x8] sm:$0xff]
      %v3220 = vld [vmem:[%s563 + $0x10] sm:$0xff]
      %v3221 = vld [vmem:[%s563 + $0x18] sm:$0xff]
      %v3222 = vld [vmem:[%s563 + $0x20] sm:$0xff]
      %v3223 = vld [vmem:[%s563 + $0x28] sm:$0xff]
      %v3224 = vld [vmem:[%s563 + $0x30] sm:$0xff]
      %v3225 = vld [vmem:[%s563 + $0x38] sm:$0xff]
      %v3226 = vld [vmem:[%s535 + $0x1] sm:$0x1]
      %v3227 = vld [vmem:[%s510] sm:$0xff]
      %v3228 = vld [vmem:[%s510 + $0x8] sm:$0xff]
      %v3229 = vld [vmem:[%s510 + $0x10] sm:$0xff]
      %v3230 = vld [vmem:[%s510 + $0x18] sm:$0xff]
      %v3231 = vld [vmem:[%s510 + $0x20] sm:$0xff]
      %v3232 = vld [vmem:[%s510 + $0x28] sm:$0xff]
      %v3233 = vld [vmem:[%s510 + $0x30] sm:$0xff]
      %v3234 = vld [vmem:[%s510 + $0x38] sm:$0xff]
      %v3235 = vperm.slane %v3226, 0
      %v3236 = vmul.f32 %v3235, %v3227
      %v3237 = vmul.f32 %v3235, %v3228
      %v3238 = vmul.f32 %v3235, %v3229
      %v3239 = vmul.f32 %v3235, %v3230
      %v3240 = vmul.f32 %v3235, %v3231
      %v3241 = vmul.f32 %v3235, %v3232
      %v3242 = vmul.f32 %v3235, %v3233
      %v3243 = vmul.f32 %v3235, %v3234
      %v3244 = vadd.f32 %v3218, %v3236
      %v3245 = vadd.f32 %v3219, %v3237
      %v3246 = vadd.f32 %v3220, %v3238
      %v3247 = vadd.f32 %v3221, %v3239
      %v3248 = vadd.f32 %v3222, %v3240
      %v3249 = vadd.f32 %v3223, %v3241
      %v3250 = vadd.f32 %v3224, %v3242
      %v3251 = vadd.f32 %v3225, %v3243
      %3252 = vst.msk [vmem:[%s563] sm:$0xff] %vm606, %v3244
      %3253 = vst.msk [vmem:[%s563 + $0x8] sm:$0xff] %vm606, %v3245
      %3254 = vst.msk [vmem:[%s563 + $0x10] sm:$0xff] %vm606, %v3246
      %3255 = vst.msk [vmem:[%s563 + $0x18] sm:$0xff] %vm606, %v3247
      %3256 = vst.msk [vmem:[%s563 + $0x20] sm:$0xff] %vm606, %v3248
      %3257 = vst.msk [vmem:[%s563 + $0x28] sm:$0xff] %vm606, %v3249
      %3258 = vst.msk [vmem:[%s563 + $0x30] sm:$0xff] %vm606, %v3250
      %3259 = vst.msk [vmem:[%s563 + $0x38] sm:$0xff] %vm606, %v3251
      %s3260 = smul.u32 8, %s27
      %p3261 = scmp.lt.s32.totalorder %s25, 1
      %s3262 = scalar_select %p3261, %s25, 1
      %p3263 = scmp.lt.s32.totalorder %s26, 1
      %s3264 = scalar_select %p3263, %s26, 1
      %p3265 = scmp.lt.s32.totalorder %s3260, 7
      %s3266 = scalar_select %p3265, %s3260, 7
      %s3267 = smul.addr %s3264, 8
      %s3268 = sadd.s32 %s3266, %s3267
      %s3269 = smul.addr %s3262, 16
      %s3270 = sadd.s32 %s3268, %s3269
      %s3271 = smul.addr %s3270, 8
      %s3272 = scalar_lea.vmem %s7, %s3271
      %s3273 = ssub.s32 0, %s27
      %s3274 = smul.u32 8, %s3273
      %p3275 = scmp.lt.s32.totalorder %s25, 1
      %s3276 = scalar_select %p3275, %s25, 1
      %p3277 = scmp.lt.s32.totalorder %s26, 1
      %s3278 = scalar_select %p3277, %s26, 1
      %p3279 = scmp.lt.s32.totalorder %s3274, 7
      %s3280 = scalar_select %p3279, %s3274, 7
      %s3281 = smul.addr %s3278, 8
      %s3282 = sadd.s32 %s3280, %s3281
      %s3283 = smul.addr %s3276, 16
      %s3284 = sadd.s32 %s3282, %s3283
      %s3285 = smul.addr %s3284, 8
      %s3286 = scalar_lea.vmem %s8, %s3285
      // Predicated region
      $region60: #{mewb1_forward.10} parent=47 // pred_check
        %p3287 = pneg %p253
      $region61: #{mewb1_forward.10} parent=47 // pred_check_branch
        %3289 = sbr.rel (%p3287) target = $region63
      $region62: #{mewb1_forward.10} parent=47 // pred_region
        %s3290 = smul.u32 8, %s27
      $region63: #{mewb1_forward.10} parent=47 // pred_fallthru
        _
      // Predicated region
      $region64: #{mewb1_forward.10} parent=47 // pred_check
        %p3291 = pneg %p285
      $region65: #{mewb1_forward.10} parent=47 // pred_check_branch
        %3293 = sbr.rel (%p3291) target = $region67
      $region66: #{mewb1_forward.10} parent=47 // pred_region
        %s3294 = ssub.s32 0, %s27
        %s3295 = smul.u32 8, %s3294
      $region67: #{mewb1_forward.10} parent=47 // pred_fallthru
        _
    $region48: #{mewb1_forward.10} parent=5 // pred_fallthru
      _
    %p3296 = scmp.le.s32.totalorder 2, %s15
    // Predicated region
    $region68: #{mewb1_forward.10} parent=5 // pred_check
      %p3297 = pneg %p3296
    $region69: #{mewb1_forward.10} parent=5 // pred_check_branch
      %3299 = sbr.rel (%p3297) target = $region71
    $region70: #{mewb1_forward.10} parent=5 // pred_region
      %s3300 = ssub.s32 %s15, 2
      // Predicated region
      $region72: #{mewb1_forward.10} parent=70 // pred_check
        %p3301 = pneg %p259
      $region73: #{mewb1_forward.10} parent=70 // pred_check_branch
        %3303 = sbr.rel (%p3301) target = $region75
      $region74: #{mewb1_forward.10} parent=70 // pred_region
        %s3304 = smul.u32 8, %s30
        %p3305 = scmp.lt.s32.totalorder %s28, 1
        %s3306 = scalar_select %p3305, %s28, 1
        %p3307 = scmp.lt.s32.totalorder %s29, 1
        %s3308 = scalar_select %p3307, %s29, 1
        %p3309 = scmp.lt.s32.totalorder %s3304, 7
        %s3310 = scalar_select %p3309, %s3304, 7
        %s3311 = smul.addr %s3308, 8
        %s3312 = sadd.s32 %s3310, %s3311
        %s3313 = smul.addr %s3306, 16
        %s3314 = sadd.s32 %s3312, %s3313
        %s3315 = smul.addr %s3314, 8
        %s3316 = scalar_lea.vmem %s7, %s3315
      $region75: #{mewb1_forward.10} parent=70 // pred_fallthru
        _
      // Predicated region
      $region76: #{mewb1_forward.10} parent=70 // pred_check
        %p3317 = pneg %p291
      $region77: #{mewb1_forward.10} parent=70 // pred_check_branch
        %3319 = sbr.rel (%p3317) target = $region79
      $region78: #{mewb1_forward.10} parent=70 // pred_region
        %s3320 = ssub.s32 0, %s30
        %s3321 = smul.u32 8, %s3320
        %p3322 = scmp.lt.s32.totalorder %s28, 1
        %s3323 = scalar_select %p3322, %s28, 1
        %p3324 = scmp.lt.s32.totalorder %s29, 1
        %s3325 = scalar_select %p3324, %s29, 1
        %p3326 = scmp.lt.s32.totalorder %s3321, 7
        %s3327 = scalar_select %p3326, %s3321, 7
        %s3328 = smul.addr %s3325, 8
        %s3329 = sadd.s32 %s3327, %s3328
        %s3330 = smul.addr %s3323, 16
        %s3331 = sadd.s32 %s3329, %s3330
        %s3332 = smul.addr %s3331, 8
        %s3333 = scalar_lea.vmem %s8, %s3332
      $region79: #{mewb1_forward.10} parent=70 // pred_fallthru
        _
    $region71: #{mewb1_forward.10} parent=5 // pred_fallthru
      _
  $region6: #{mewb1_forward.10} parent=0 // loop_footer
    %s19 = sadd.s32 1, %s15
  $region7: #{mewb1_forward.10} parent=0 // loop_footer_branch
    %14 = sbr.rel target = $region3
  $region8: #{mewb1_forward.10} parent=0 // loop_exit
    _

</llo_original>
